<compile_context>
chip_gen: v7x
topology: tpu7x:2x2x1
jax: 0.10.0
libtpu: 0.0.40
codegen_flags: <defaults>
</compile_context>

<pallas_src>
import functools
import re

import jax
import jax.numpy as jnp
from jax.experimental import pallas as pl
from jax.experimental.pallas import tpu as pltpu


def _round_up(a, b):
    return (a + b - 1) // b * b


def _tpu_generation():
    """Best-effort TPU generation (5, 6, 7, ...) from device_kind; default 6."""
    try:
        kind = jax.devices()[0].device_kind.lower()
    except Exception:
        return 6
    m = re.search(r"(\d+)", kind)
    return int(m.group(1)) if m else 6


def scorenet_kernel(ai_ref, aj_ref, w2_ref, t2_ref, w3_ref, t3_ref,
                    w4_ref, b4_ref, o_ref, *, ew_dtype):
    ti = ai_ref.shape[1]
    tj = aj_ref.shape[1]
    k1 = ai_ref.shape[2]

    # A_i carries the folded layer-1 shift t1; streamed in bf16 (f32 escape
    # hatch).  Casts below are no-ops whenever ew_dtype matches the stream dtype.
    ai = ai_ref[0].astype(ew_dtype)                               # (ti, 256)
    aj = aj_ref[0].astype(ew_dtype)                               # (tj, 256)

    # Layer 1 (hoisted conv1 + folded bn1): single fused broadcast-add + ReLU +
    # reshape so only ONE (ti*tj, 256) buffer is materialized (bf16 on v6e/v7x).
    h = jnp.maximum(ai[:, None, :] + aj[None, :, :], 0).reshape(ti * tj, k1)
    h = h.astype(w2_ref.dtype)                                    # no-op on bf16 path

    # Layer 2: conv2 + folded bn2 + relu (MXU, f32 accumulate)
    h = jnp.dot(h, w2_ref[...], preferred_element_type=jnp.float32)
    h = jnp.maximum(h + t2_ref[...], 0.0).astype(w3_ref.dtype)

    # Layer 3: conv3 + folded bn3 + relu
    h = jnp.dot(h, w3_ref[...], preferred_element_type=jnp.float32)
    h3 = jnp.maximum(h + t3_ref[...], 0.0)                        # (ti*tj, 64) f32

    # Layer 4: 64 -> 1 on the VPU/XLU (multiply + lane reduce) so the store is a
    # lane-dense (ti, tj >= 128) slab instead of a (rows, 1) masked-store matmul.
    h3 = h3.reshape(ti, tj, h3.shape[-1])
    score = jnp.sum(h3 * w4_ref[...].reshape(1, 1, -1), axis=-1) + b4_ref[0]
    o_ref[0] = score.astype(o_ref.dtype)


def _fold_bn(bias, gamma, beta, mean, var, eps=1e-5):
    scale = gamma / jnp.sqrt(var + eps)
    shift = (bias - mean) * scale + beta
    return scale, shift


@functools.partial(jax.jit, static_argnames=("tile_i", "tile_j", "compute_dtype"))
def scorenet_forward(x, params, *, tile_i=None, tile_j=None,
                     compute_dtype=jnp.bfloat16):
    """x: (B, C, N) float32.  Returns (B, N, N) float32 (== ScoreNet(x)[:, 0])."""
    B, C, N = x.shape
    f32 = jnp.float32
    gen = _tpu_generation()
    is_f32 = jnp.dtype(compute_dtype) == jnp.dtype(jnp.float32)

    # Per-generation dtype policy:
    #  * A_i / A_j streamed in bf16 on every generation (halves HBM traffic and
    #    pipeline VMEM; the tiny per-tile bf16->f32 cast on v5e is cheap).
    #  * The big layer-1 broadcast-add/ReLU runs in bf16 only where a native
    #    bf16 VPU exists (v6e / v7x); v5e keeps f32 elementwise.
    if is_f32:
        stream_dtype = f32
        ew_dtype = f32
    else:
        stream_dtype = jnp.bfloat16
        ew_dtype = jnp.bfloat16 if gen >= 6 else f32

    # Per-generation tiles / VMEM cap (v7x: 64 MiB per TC; v5e/v6e: 128 MiB).
    if tile_i is None:
        tile_i = 128
        if gen >= 7 and is_f32:
            tile_i = 64            # f32 temporaries ~2x bigger; stay well under 64 MiB/TC
    if tile_j is None:
        tile_j = 128               # lane-dense output store; never shrink this
    vmem_limit = (40 << 20) if gen >= 7 else (64 << 20)

    # Eval-mode BN folded into per-channel scale/shift; scale folded into each
    # layer's OWN weights (pre-ReLU only -- scale may be negative, so never fold
    # across the ReLU into the next layer).
    s1, t1 = _fold_bn(params["b1"], params["g1"], params["be1"], params["m1"], params["v1"])
    s2, t2 = _fold_bn(params["b2"], params["g2"], params["be2"], params["m2"], params["v2"])
    s3, t3 = _fold_bn(params["b3"], params["g3"], params["be3"], params["m3"], params["v3"])
    w1s = params["w1"] * s1[:, None]          # (256, 2C)
    w2s = params["w2"] * s2[:, None]          # (128, 256)
    w3s = params["w3"] * s3[:, None]          # (64, 128)

    # Layer 1 hoisted out of the N^2 domain:
    #   conv1(concat(x_i, x_j)) = x_i @ W1a^T + x_j @ W1b^T  (+ folded shift t1)
    # computed in f32, then quantized ONCE to the streaming dtype.
    xt = jnp.transpose(x, (0, 2, 1)).astype(f32)                  # (B, N, C)
    a_i = (jnp.einsum("bnc,kc->bnk", xt, w1s[:, :C]) + t1).astype(stream_dtype)
    a_j = jnp.einsum("bnc,kc->bnk", xt, w1s[:, C:]).astype(stream_dtype)

    # Tiles: lane-dense j tile (>=128); pad the point axis so tiles divide evenly
    # (padded rows/cols produce finite garbage that is sliced away at the end).
    tile_i = min(tile_i, _round_up(N, 16))
    tile_j = min(tile_j, _round_up(N, 128))
    n_i = _round_up(N, tile_i)
    n_j = _round_up(N, tile_j)
    a_i = jnp.pad(a_i, ((0, 0), (0, n_i - N), (0, 0)))
    a_j = jnp.pad(a_j, ((0, 0), (0, n_j - N), (0, 0)))
    k1 = a_i.shape[-1]

    w2t = w2s.T.astype(compute_dtype)                             # (256, 128)
    w3t = w3s.T.astype(compute_dtype)                             # (128, 64)
    w4r = params["w4"].reshape(1, -1).astype(f32)                 # (1, 64)
    t2r = t2.reshape(1, -1).astype(f32)                           # (1, 128)
    t3r = t3.reshape(1, -1).astype(f32)                           # (1, 64)
    b4 = params["b4"].reshape(1).astype(f32)                      # (1,)  -> SMEM

    # Grid: i innermost so only the (tile_i, 256) A_i block is re-DMA'd per step;
    # the A_j block and all weights stay resident across the inner loop.
    grid = (B, n_j // tile_j, n_i // tile_i)
    const2d = lambda arr: pl.BlockSpec(arr.shape, lambda b, j, i: (0, 0))

    itemsize = jnp.dtype(stream_dtype).itemsize
    cost = pl.CostEstimate(
        flops=int(2 * B * n_i * n_j * (k1 * 128 + 128 * 64 + 64)
                  + B * n_i * n_j * k1),
        transcendentals=0,
        bytes_accessed=int(a_i.size * itemsize * (n_j // tile_j)
                           + a_j.size * itemsize
                           + B * n_i * n_j * 4),
    )

    out = pl.pallas_call(
        functools.partial(scorenet_kernel, ew_dtype=ew_dtype),
        out_shape=jax.ShapeDtypeStruct((B, n_i, n_j), f32),
        grid_spec=pltpu.PrefetchScalarGridSpec(
            num_scalar_prefetch=0,
            grid=grid,
            in_specs=[
                pl.BlockSpec((1, tile_i, k1), lambda b, j, i: (b, i, 0)),
                pl.BlockSpec((1, tile_j, k1), lambda b, j, i: (b, j, 0)),
                const2d(w2t), const2d(t2r),
                const2d(w3t), const2d(t3r),
                const2d(w4r),
                pl.BlockSpec(memory_space=pltpu.MemorySpace.SMEM),
            ],
            out_specs=pl.BlockSpec((1, tile_i, tile_j), lambda b, j, i: (b, i, j)),
        ),
        compiler_params=pltpu.CompilerParams(
            dimension_semantics=("parallel", "parallel", "parallel"),
            vmem_limit_bytes=vmem_limit,
        ),
        cost_estimate=cost,
    )(a_i, a_j, w2t, t2r, w3t, t3r, w4r, b4)

    return out[:, :N, :N]


def _reference(x, params):
    """Pure-JAX reference of the same (eval-mode BN) forward, PyTorch op order."""
    B, C, N = x.shape
    xt = jnp.transpose(x, (0, 2, 1))
    fi = jnp.broadcast_to(xt[:, :, None, :], (B, N, N, C))
    fj = jnp.broadcast_to(xt[:, None, :, :], (B, N, N, C))
    h = jnp.concatenate([fi, fj], axis=-1)    # (B, N, N, 2C)

    def layer(h, w, b, g, be, m, v):
        y = jnp.einsum("bijc,oc->bijo", h, w) + b
        y = g * (y - m) / jnp.sqrt(v + 1e-5) + be
        return jnp.maximum(y, 0.0)

    h = layer(h, params["w1"], params["b1"], params["g1"], params["be1"], params["m1"], params["v1"])
    h = layer(h, params["w2"], params["b2"], params["g2"], params["be2"], params["m2"], params["v2"])
    h = layer(h, params["w3"], params["b3"], params["g3"], params["be3"], params["m3"], params["v3"])
    y = jnp.einsum("bijc,oc->bijo", h, params["w4"]) + params["b4"]
    return y[..., 0]


def make_params(key, in_ch):
    """Deterministic synthetic parameters (shapes per ScoreNet.__init__, in_ch = 2*C)."""
    ks = jax.random.split(key, 16)
    dims = [(256, in_ch), (128, 256), (64, 128), (1, 64)]
    p = {}
    for li, (co, ci) in enumerate(dims, start=1):
        p[f"w{li}"] = (jax.random.normal(ks[2 * li - 2], (co, ci), jnp.float32)
                       * (1.0 / jnp.sqrt(ci)))
        p[f"b{li}"] = jax.random.normal(ks[2 * li - 1], (co,), jnp.float32) * 0.1
    for li, co in zip((1, 2, 3), (256, 128, 64)):
        kk = jax.random.split(jax.random.fold_in(key, 100 + li), 4)
        p[f"g{li}"] = 1.0 + 0.1 * jax.random.normal(kk[0], (co,), jnp.float32)
        p[f"be{li}"] = 0.1 * jax.random.normal(kk[1], (co,), jnp.float32)
        p[f"m{li}"] = 0.05 * jax.random.normal(kk[2], (co,), jnp.float32)
        p[f"v{li}"] = 1.0 + 0.1 * jax.nn.softplus(jax.random.normal(kk[3], (co,), jnp.float32))
    return p


if __name__ == "__main__":
    key = jax.random.PRNGKey(0)
    B, C, N = 2, 4, 16                 # x: (batch, channels, n_points); conv1 in_ch = 2*C = 8
    in_ch = 2 * C

    kx, kp = jax.random.split(key)
    x = jax.random.normal(kx, (B, C, N), jnp.float32)
    params = make_params(kp, in_ch)

    ref = _reference(x, params)

    # f32 path: tight-ish check of kernel structure / BN folding.  Tolerance is
    # 5e-3 (not 1e-6) because TPU f32 matmuls at default precision may use bf16
    # passes and the folded-scale / split-layer-1 associations round differently.
    out_f32 = jax.block_until_ready(
        scorenet_forward(x, params, compute_dtype=jnp.float32))
    assert out_f32.shape == (B, N, N)
    assert jnp.allclose(out_f32, ref, atol=5e-3, rtol=5e-3), "f32 kernel mismatch vs reference"

    # bf16 path (default / fast): looser tolerance for bf16 streaming + (on
    # v6e/v7x) bf16 layer-1 elementwise.
    out_bf16 = jax.block_until_ready(scorenet_forward(x, params))
    assert out_bf16.shape == (B, N, N)
    err = jnp.max(jnp.abs(out_bf16 - ref))
    scale = jnp.maximum(1.0, jnp.max(jnp.abs(ref)))
    assert err <= 5e-2 * scale, f"bf16 kernel mismatch vs reference (max err {err})"

    print("KERNEL_OK")
</pallas_src>

<mosaic_0001>
module attributes {stable_mosaic.version = 11 : i64} {
  func.func @scorenet_kernel(%arg0: i32, %arg1: i32, %arg2: i32, %arg3: memref<1x16x256xf32, #tpu.memory_space<vmem>>, %arg4: memref<1x128x256xf32, #tpu.memory_space<vmem>>, %arg5: memref<256x128xf32, #tpu.memory_space<vmem>>, %arg6: memref<1x128xf32, #tpu.memory_space<vmem>>, %arg7: memref<128x64xf32, #tpu.memory_space<vmem>>, %arg8: memref<1x64xf32, #tpu.memory_space<vmem>>, %arg9: memref<1x64xf32, #tpu.memory_space<vmem>>, %arg10: memref<1xf32, #tpu.memory_space<smem>>, %arg11: memref<1x16x128xf32, #tpu.memory_space<vmem>>) attributes {dimension_semantics = [#tpu.dimension_semantics<parallel>, #tpu.dimension_semantics<parallel>, #tpu.dimension_semantics<parallel>], iteration_bounds = array<i64: 2, 1, 1>, scalar_prefetch = 0 : i64, scratch_operands = 0 : i64, tpu.core_type = #tpu.core_type<tc>, window_params = [{transform_indices = @transform_0, window_bounds = array<i64: 1, 16, 256>}, {transform_indices = @transform_1, window_bounds = array<i64: 1, 128, 256>}, {pipeline_mode = #tpu.pipeline_mode<synchronous>, transform_indices = @transform_2, window_bounds = array<i64: 256, 128>}, {pipeline_mode = #tpu.pipeline_mode<synchronous>, transform_indices = @transform_3, window_bounds = array<i64: 1, 128>}, {pipeline_mode = #tpu.pipeline_mode<synchronous>, transform_indices = @transform_4, window_bounds = array<i64: 128, 64>}, {pipeline_mode = #tpu.pipeline_mode<synchronous>, transform_indices = @transform_5, window_bounds = array<i64: 1, 64>}, {pipeline_mode = #tpu.pipeline_mode<synchronous>, transform_indices = @transform_6, window_bounds = array<i64: 1, 64>}, {transform_indices = @transform_7, window_bounds = array<i64: 1>}, {transform_indices = @transform_8, window_bounds = array<i64: 1, 16, 128>}]} {
    %c0 = arith.constant 0 : index
    %c0_0 = arith.constant 0 : index
    %c0_1 = arith.constant 0 : index
    %0 = vector.load %arg3[%c0, %c0_0, %c0_1] : memref<1x16x256xf32, #tpu.memory_space<vmem>>, vector<1x16x256xf32>
    %1 = vector.shape_cast %0 : vector<1x16x256xf32> to vector<16x256xf32>
    %c0_2 = arith.constant 0 : index
    %c0_3 = arith.constant 0 : index
    %c0_4 = arith.constant 0 : index
    %2 = vector.load %arg4[%c0_2, %c0_3, %c0_4] : memref<1x128x256xf32, #tpu.memory_space<vmem>>, vector<1x128x256xf32>
    %3 = vector.shape_cast %2 : vector<1x128x256xf32> to vector<128x256xf32>
    %4 = vector.shape_cast %1 : vector<16x256xf32> to vector<16x1x256xf32>
    %5 = vector.shape_cast %3 : vector<128x256xf32> to vector<1x128x256xf32>
    %6 = vector.broadcast %4 : vector<16x1x256xf32> to vector<16x128x256xf32>
    %7 = vector.broadcast %5 : vector<1x128x256xf32> to vector<16x128x256xf32>
    %8 = arith.addf %6, %7 : vector<16x128x256xf32>
    %cst = arith.constant 0.000000e+00 : f32
    %9 = vector.broadcast %cst : f32 to vector<16x128x256xf32>
    %10 = arith.maximumf %8, %9 : vector<16x128x256xf32>
    %11 = vector.shape_cast %10 : vector<16x128x256xf32> to vector<2048x256xf32>
    %c0_5 = arith.constant 0 : index
    %c0_6 = arith.constant 0 : index
    %12 = vector.load %arg5[%c0_5, %c0_6] : memref<256x128xf32, #tpu.memory_space<vmem>>, vector<256x128xf32>
    %cst_7 = arith.constant dense<0.000000e+00> : vector<2048x128xf32>
    %13 = tpu.matmul %11, %12, %cst_7 {dimension_numbers = #tpu.dot_dimension_numbers<[1], [0], [0], [1], [0, 0, 1, 1], [], []>} : vector<2048x256xf32>, vector<256x128xf32>, vector<2048x128xf32> -> vector<2048x128xf32>
    %c0_8 = arith.constant 0 : index
    %c0_9 = arith.constant 0 : index
    %14 = vector.load %arg6[%c0_8, %c0_9] : memref<1x128xf32, #tpu.memory_space<vmem>>, vector<1x128xf32>
    %15 = vector.broadcast %14 : vector<1x128xf32> to vector<2048x128xf32>
    %16 = arith.addf %13, %15 : vector<2048x128xf32>
    %cst_10 = arith.constant 0.000000e+00 : f32
    %17 = vector.broadcast %cst_10 : f32 to vector<2048x128xf32>
    %18 = arith.maximumf %16, %17 : vector<2048x128xf32>
    %c0_11 = arith.constant 0 : index
    %c0_12 = arith.constant 0 : index
    %19 = vector.load %arg7[%c0_11, %c0_12] : memref<128x64xf32, #tpu.memory_space<vmem>>, vector<128x64xf32>
    %cst_13 = arith.constant dense<0.000000e+00> : vector<2048x64xf32>
    %20 = tpu.matmul %18, %19, %cst_13 {dimension_numbers = #tpu.dot_dimension_numbers<[1], [0], [0], [1], [0, 0, 1, 1], [], []>} : vector<2048x128xf32>, vector<128x64xf32>, vector<2048x64xf32> -> vector<2048x64xf32>
    %c0_14 = arith.constant 0 : index
    %c0_15 = arith.constant 0 : index
    %21 = vector.load %arg8[%c0_14, %c0_15] : memref<1x64xf32, #tpu.memory_space<vmem>>, vector<1x64xf32>
    %22 = vector.broadcast %21 : vector<1x64xf32> to vector<2048x64xf32>
    %23 = arith.addf %20, %22 : vector<2048x64xf32>
    %cst_16 = arith.constant 0.000000e+00 : f32
    %24 = vector.broadcast %cst_16 : f32 to vector<2048x64xf32>
    %25 = arith.maximumf %23, %24 : vector<2048x64xf32>
    %26 = vector.shape_cast %25 : vector<2048x64xf32> to vector<16x128x64xf32>
    %c0_17 = arith.constant 0 : index
    %c0_18 = arith.constant 0 : index
    %27 = vector.load %arg9[%c0_17, %c0_18] : memref<1x64xf32, #tpu.memory_space<vmem>>, vector<1x64xf32>
    %28 = vector.shape_cast %27 : vector<1x64xf32> to vector<1x1x64xf32>
    %29 = vector.broadcast %28 : vector<1x1x64xf32> to vector<16x128x64xf32>
    %30 = arith.mulf %26, %29 : vector<16x128x64xf32>
    %cst_19 = arith.constant dense<0.000000e+00> : vector<16x128xf32>
    %31 = vector.multi_reduction <add>, %30, %cst_19 [2] : vector<16x128x64xf32> to vector<16x128xf32>
    %c0_20 = arith.constant 0 : index
    %32 = memref.load %arg10[%c0_20] : memref<1xf32, #tpu.memory_space<smem>>
    %33 = vector.broadcast %32 : f32 to vector<16x128xf32>
    %34 = arith.addf %31, %33 : vector<16x128xf32>
    %c0_21 = arith.constant 0 : index
    %c0_22 = arith.constant 0 : index
    %c0_23 = arith.constant 0 : index
    %35 = vector.load %arg11[%c0_21, %c0_22, %c0_23] : memref<1x16x128xf32, #tpu.memory_space<vmem>>, vector<1x16x128xf32>
    %36 = vector.shape_cast %35 : vector<1x16x128xf32> to vector<16x128xf32>
    %37 = vector.shape_cast %34 : vector<16x128xf32> to vector<1x16x128xf32>
    tpu.vector_store %arg11[%c0_21, %c0_22, %c0_23], %37 {strides = array<i32>} : memref<1x16x128xf32, #tpu.memory_space<vmem>>, vector<1x16x128xf32>,
    return
  }
  func.func @transform_0(%arg0: i32, %arg1: i32, %arg2: i32) -> (i32, i32, i32) {
    %c0_i32 = arith.constant 0 : i32
    %c0_i32_0 = arith.constant 0 : i32
    return %arg0, %arg2, %c0_i32 : i32, i32, i32
  }
  func.func @transform_1(%arg0: i32, %arg1: i32, %arg2: i32) -> (i32, i32, i32) {
    %c0_i32 = arith.constant 0 : i32
    %c0_i32_0 = arith.constant 0 : i32
    return %arg0, %arg1, %c0_i32 : i32, i32, i32
  }
  func.func @transform_2(%arg0: i32, %arg1: i32, %arg2: i32) -> (i32, i32) {
    %c0_i32 = arith.constant 0 : i32
    %c0_i32_0 = arith.constant 0 : i32
    %c0_i32_1 = arith.constant 0 : i32
    return %c0_i32, %c0_i32_0 : i32, i32
  }
  func.func @transform_3(%arg0: i32, %arg1: i32, %arg2: i32) -> (i32, i32) {
    %c0_i32 = arith.constant 0 : i32
    %c0_i32_0 = arith.constant 0 : i32
    %c0_i32_1 = arith.constant 0 : i32
    return %c0_i32, %c0_i32_0 : i32, i32
  }
  func.func @transform_4(%arg0: i32, %arg1: i32, %arg2: i32) -> (i32, i32) {
    %c0_i32 = arith.constant 0 : i32
    %c0_i32_0 = arith.constant 0 : i32
    %c0_i32_1 = arith.constant 0 : i32
    return %c0_i32, %c0_i32_0 : i32, i32
  }
  func.func @transform_5(%arg0: i32, %arg1: i32, %arg2: i32) -> (i32, i32) {
    %c0_i32 = arith.constant 0 : i32
    %c0_i32_0 = arith.constant 0 : i32
    %c0_i32_1 = arith.constant 0 : i32
    return %c0_i32, %c0_i32_0 : i32, i32
  }
  func.func @transform_6(%arg0: i32, %arg1: i32, %arg2: i32) -> (i32, i32) {
    %c0_i32 = arith.constant 0 : i32
    %c0_i32_0 = arith.constant 0 : i32
    %c0_i32_1 = arith.constant 0 : i32
    return %c0_i32, %c0_i32_0 : i32, i32
  }
  func.func @transform_7(%arg0: i32, %arg1: i32, %arg2: i32) -> i32 {
    %c0_i32 = arith.constant 0 : i32
    %c0_i32_0 = arith.constant 0 : i32
    return %c0_i32 : i32
  }
  func.func @transform_8(%arg0: i32, %arg1: i32, %arg2: i32) -> (i32, i32, i32) {
    %c0_i32 = arith.constant 0 : i32
    return %arg0, %arg2, %arg1 : i32, i32, i32
  }
}

</mosaic_0001>

<llo_original>
// kernel: scorenet_forward.1
$region0: #{scorenet_forward.1}
  #allocation0 [shape = 'u32[]', space=smem, size = 0x4, offset = 0x4, fixed_abs, tag = 'smem constant byte address 0x4 - core index']
  #allocation1 [shape = 'u32[144,128]{1,0:T(1,128)}', space=vmem, size = 0x12000, scoped, tag = 'internal scratch']
  #allocation2 [shape = 'f32[1]{0:T(128)S(6)}', space=smem, size = 0x200, scoped, tag = 'scoped memory for scorenet_forward.1']
  %s0 = inlined_call_operand.hbm [shape: f32[2,16,256], index: 0, kind: input, shape index: {}]
  %s1 = inlined_call_operand.hbm [shape: f32[2,128,256], index: 1, kind: input, shape index: {}]
  %s2 = inlined_call_operand.hbm [shape: f32[256,128], index: 2, kind: input, shape index: {}]
  %s3 = inlined_call_operand.hbm [shape: f32[1,128], index: 3, kind: input, shape index: {}]
  %s4 = inlined_call_operand.hbm [shape: f32[128,64], index: 4, kind: input, shape index: {}]
  %s5 = inlined_call_operand.hbm [shape: f32[1,64], index: 5, kind: input, shape index: {}]
  %s6 = inlined_call_operand.hbm [shape: f32[1,64], index: 6, kind: input, shape index: {}]
  %s7 = inlined_call_operand.<no memory space> [shape: f32[1], index: 7, kind: input, shape index: {}]
  %s8 = inlined_call_operand.hbm [shape: f32[2,16,128], index: 8, kind: output, shape index: {}]
  %s9 = sld [smem:[#allocation0]]
  $region93: #{scorenet_forward.1} parent=0
    _
  %s11 = ssub.s32 1, %s9
  %s12 = scalar_select 0, %s11, %s9
  %13 = sst [smem:[#allocation2]] %s7
  $region1: #{scorenet_forward.1} parent=0
    #allocation3 [shape = 'u8[32768]{0}', space=vmem, size = 0x8000, scoped, tag = 'input window, operand 0']
    #allocation4 [shape = 's32[2]{0}', space=sflag, size = 0x8, scoped, tag = 'scoped memory for scorenet_forward.1']
    #allocation5 [shape = 's32[2]{0}', space=sflag, size = 0x8, scoped, tag = 'scoped memory for scorenet_forward.1']
    #allocation6 [shape = 'u8[262144]{0}', space=vmem, size = 0x40000, scoped, tag = 'input window, operand 1']
    #allocation7 [shape = 's32[2]{0}', space=sflag, size = 0x8, scoped, tag = 'scoped memory for scorenet_forward.1']
    #allocation8 [shape = 'u8[131072]{0}', space=vmem, size = 0x20000, scoped, tag = 'input window, operand 2, single buffered']
    #allocation9 [shape = 'u8[512]{0}', space=vmem, size = 0x400, scoped, tag = 'input window, operand 3, single buffered']
    #allocation10 [shape = 's32[1]{0}', space=sflag, size = 0x4, scoped, tag = 'scoped memory for scorenet_forward.1']
    #allocation11 [shape = 'u8[65536]{0}', space=vmem, size = 0x10000, scoped, tag = 'input window, operand 4, single buffered']
    #allocation12 [shape = 'u8[512]{0}', space=vmem, size = 0x400, scoped, tag = 'input window, operand 5, single buffered']
    #allocation13 [shape = 's32[1]{0}', space=sflag, size = 0x4, scoped, tag = 'scoped memory for scorenet_forward.1']
    #allocation14 [shape = 'u8[512]{0}', space=vmem, size = 0x400, scoped, tag = 'input window, operand 6, single buffered']
    #allocation15 [shape = 'u8[16384]{0}', space=vmem, size = 0x4000, scoped, tag = 'output window, operand 0']
    %14 = vsyncpa [#allocation4], 0
    %s15 = scalar_lea.sflag [#allocation4], 1
    %16 = vsyncpa %s15, 0
    %17 = vsyncpa [#allocation7], 0
    %s18 = scalar_lea.sflag [#allocation7], 1
    %19 = vsyncpa %s18, 0
    %20 = vsyncpa [#allocation10], 0
    %21 = vsyncpa [#allocation13], 0
    %22 = vsyncpa [#allocation5], 0
    %s23 = scalar_lea.sflag [#allocation5], 1
    %24 = vsyncpa %s23, 0
    loop: start=0, step=1, limit=4
    $region2: #{scorenet_forward.1} parent=1 // loop_pre_header
      _
    $region3: #{scorenet_forward.1} parent=1 // loop_header
      %s26 = sphi 0, %s30
      %p27 = scmp.ge.s32.totalorder %s26, 4
      %s33 = sphi 0, %s52
      %s34 = sphi 0, %s48
      %s35 = sphi 0, %s44
      %s36 = sphi 0, %s33
      %s37 = sphi 0, %s34
      %s38 = sphi 0, %s35
      %s39 = sphi 0, %s36
      %s40 = sphi 0, %s37
      %s41 = sphi 0, %s38
      %s57 = sphi 0, %s59
      %s60 = sphi 0, %s57
      %s61 = sphi 0, %s60
      %s77 = sphi 0, %s61
      %s85 = sphi 0, %s87
      %s88 = sphi 0, %s85
      %s89 = sphi 0, %s88
      %s105 = sphi 0, %s89
      %s109 = sphi 0, %s109
      %s111 = sphi 0, %s109
      %s112 = sphi 0, %s111
      %s126 = sphi 0, %s112
      %s130 = sphi 0, %s130
      %s132 = sphi 0, %s130
      %s133 = sphi 0, %s132
      %s147 = sphi 0, %s133
      %s151 = sphi 0, %s151
      %s153 = sphi 0, %s151
      %s154 = sphi 0, %s153
      %s168 = sphi 0, %s154
      %s172 = sphi 0, %s172
      %s174 = sphi 0, %s172
      %s175 = sphi 0, %s174
      %s189 = sphi 0, %s175
      %s193 = sphi 0, %s193
      %s195 = sphi 0, %s193
      %s196 = sphi 0, %s195
      %s210 = sphi 0, %s196
      %s214 = sphi 0, %s214
      %s216 = sphi 0, %s214
      %s217 = sphi 0, %s216
      %s231 = sphi 0, %s217
      %s241 = sphi 0, %s243
      %s244 = sphi 0, %s241
      %s245 = sphi 0, %s244
      %s261 = sphi 0, %s245
    $region4: #{scorenet_forward.1} parent=1 // loop_header_branch
      %29 = sbr.rel (%p27) target = $region8
    $region5: #{scorenet_forward.1} parent=1 // loop_body
      %s31 = ssub.s32 %s26, 1
      %s32 = ssub.s32 %s26, 2
      %s42 = sadd.s32 1, %s35
      %p43 = scmp.ge.s32.totalorder %s42, 1
      %s44 = scalar_select %p43, 0, %s42
      %s45 = sadd.s32 1, %s34
      %s46 = scalar_select %p43, %s45, %s34
      %p47 = scmp.ge.s32.totalorder %s46, 1
      %s48 = scalar_select %p47, 0, %s46
      %s49 = sadd.s32 1, %s33
      %s50 = scalar_select %p47, %s49, %s33
      %p51 = scmp.ge.s32.totalorder %s50, 2
      %s52 = scalar_select %p51, 0, %s50
      %s53 = ssub.s32 %s33, %s52
      %s54 = ssub.s32 %s35, %s44
      %s55 = sor.u32 %s53, %s54
      %p56 = scmp.eq.s32.totalorder %s55, 0
      %s58 = sadd.s32 %s57, 1
      %s59 = scalar_select %p56, %s57, %s58
      %p62 = pneg %p56
      %p63 = scmp.eq.s32.totalorder %s26, 1
      %p64 = por %p62, %p63
      %p65 = scmp.ne.s32.totalorder %s57, %s60
      %p66 = scmp.eq.s32.totalorder %s26, 0
      %p67 = por %p65, %p66
      %p68 = scmp.ne.s32.totalorder %s57, %s60
      %p69 = scmp.eq.s32.totalorder %s31, 1
      %p70 = por %p68, %p69
      %p71 = scmp.ne.s32.totalorder %s60, %s61
      %p72 = scmp.eq.s32.totalorder %s31, 0
      %p73 = por %p71, %p72
      %p74 = scmp.ne.s32.totalorder %s60, %s61
      %p75 = scmp.eq.s32.totalorder %s32, 1
      %p76 = por %p74, %p75
      %p78 = scmp.ne.s32.totalorder %s61, %s77
      %p79 = scmp.eq.s32.totalorder %s32, 0
      %p80 = por %p78, %p79
      %s81 = ssub.s32 %s33, %s52
      %s82 = ssub.s32 %s34, %s48
      %s83 = sor.u32 %s81, %s82
      %p84 = scmp.eq.s32.totalorder %s83, 0
      %s86 = sadd.s32 %s85, 1
      %s87 = scalar_select %p84, %s85, %s86
      %p90 = pneg %p84
      %p91 = scmp.eq.s32.totalorder %s26, 1
      %p92 = por %p90, %p91
      %p93 = scmp.ne.s32.totalorder %s85, %s88
      %p94 = scmp.eq.s32.totalorder %s26, 0
      %p95 = por %p93, %p94
      %p96 = scmp.ne.s32.totalorder %s85, %s88
      %p97 = scmp.eq.s32.totalorder %s31, 1
      %p98 = por %p96, %p97
      %p99 = scmp.ne.s32.totalorder %s88, %s89
      %p100 = scmp.eq.s32.totalorder %s31, 0
      %p101 = por %p99, %p100
      %p102 = scmp.ne.s32.totalorder %s88, %s89
      %p103 = scmp.eq.s32.totalorder %s32, 1
      %p104 = por %p102, %p103
      %p106 = scmp.ne.s32.totalorder %s89, %s105
      %p107 = scmp.eq.s32.totalorder %s32, 0
      %p108 = por %p106, %p107
      %s110 = sadd.s32 %s109, 1
      %p113 = scmp.eq.s32.totalorder %s26, 1
      %p114 = scmp.ne.s32.totalorder %s109, %s111
      %p115 = scmp.eq.s32.totalorder %s26, 0
      %p116 = por %p114, %p115
      %p117 = scmp.ne.s32.totalorder %s109, %s111
      %p118 = scmp.eq.s32.totalorder %s31, 1
      %p119 = por %p117, %p118
      %p120 = scmp.ne.s32.totalorder %s111, %s112
      %p121 = scmp.eq.s32.totalorder %s31, 0
      %p122 = por %p120, %p121
      %p123 = scmp.ne.s32.totalorder %s111, %s112
      %p124 = scmp.eq.s32.totalorder %s32, 1
      %p125 = por %p123, %p124
      %p127 = scmp.ne.s32.totalorder %s112, %s126
      %p128 = scmp.eq.s32.totalorder %s32, 0
      %p129 = por %p127, %p128
      %s131 = sadd.s32 %s130, 1
      %p134 = scmp.eq.s32.totalorder %s26, 1
      %p135 = scmp.ne.s32.totalorder %s130, %s132
      %p136 = scmp.eq.s32.totalorder %s26, 0
      %p137 = por %p135, %p136
      %p138 = scmp.ne.s32.totalorder %s130, %s132
      %p139 = scmp.eq.s32.totalorder %s31, 1
      %p140 = por %p138, %p139
      %p141 = scmp.ne.s32.totalorder %s132, %s133
      %p142 = scmp.eq.s32.totalorder %s31, 0
      %p143 = por %p141, %p142
      %p144 = scmp.ne.s32.totalorder %s132, %s133
      %p145 = scmp.eq.s32.totalorder %s32, 1
      %p146 = por %p144, %p145
      %p148 = scmp.ne.s32.totalorder %s133, %s147
      %p149 = scmp.eq.s32.totalorder %s32, 0
      %p150 = por %p148, %p149
      %s152 = sadd.s32 %s151, 1
      %p155 = scmp.eq.s32.totalorder %s26, 1
      %p156 = scmp.ne.s32.totalorder %s151, %s153
      %p157 = scmp.eq.s32.totalorder %s26, 0
      %p158 = por %p156, %p157
      %p159 = scmp.ne.s32.totalorder %s151, %s153
      %p160 = scmp.eq.s32.totalorder %s31, 1
      %p161 = por %p159, %p160
      %p162 = scmp.ne.s32.totalorder %s153, %s154
      %p163 = scmp.eq.s32.totalorder %s31, 0
      %p164 = por %p162, %p163
      %p165 = scmp.ne.s32.totalorder %s153, %s154
      %p166 = scmp.eq.s32.totalorder %s32, 1
      %p167 = por %p165, %p166
      %p169 = scmp.ne.s32.totalorder %s154, %s168
      %p170 = scmp.eq.s32.totalorder %s32, 0
      %p171 = por %p169, %p170
      %s173 = sadd.s32 %s172, 1
      %p176 = scmp.eq.s32.totalorder %s26, 1
      %p177 = scmp.ne.s32.totalorder %s172, %s174
      %p178 = scmp.eq.s32.totalorder %s26, 0
      %p179 = por %p177, %p178
      %p180 = scmp.ne.s32.totalorder %s172, %s174
      %p181 = scmp.eq.s32.totalorder %s31, 1
      %p182 = por %p180, %p181
      %p183 = scmp.ne.s32.totalorder %s174, %s175
      %p184 = scmp.eq.s32.totalorder %s31, 0
      %p185 = por %p183, %p184
      %p186 = scmp.ne.s32.totalorder %s174, %s175
      %p187 = scmp.eq.s32.totalorder %s32, 1
      %p188 = por %p186, %p187
      %p190 = scmp.ne.s32.totalorder %s175, %s189
      %p191 = scmp.eq.s32.totalorder %s32, 0
      %p192 = por %p190, %p191
      %s194 = sadd.s32 %s193, 1
      %p197 = scmp.eq.s32.totalorder %s26, 1
      %p198 = scmp.ne.s32.totalorder %s193, %s195
      %p199 = scmp.eq.s32.totalorder %s26, 0
      %p200 = por %p198, %p199
      %p201 = scmp.ne.s32.totalorder %s193, %s195
      %p202 = scmp.eq.s32.totalorder %s31, 1
      %p203 = por %p201, %p202
      %p204 = scmp.ne.s32.totalorder %s195, %s196
      %p205 = scmp.eq.s32.totalorder %s31, 0
      %p206 = por %p204, %p205
      %p207 = scmp.ne.s32.totalorder %s195, %s196
      %p208 = scmp.eq.s32.totalorder %s32, 1
      %p209 = por %p207, %p208
      %p211 = scmp.ne.s32.totalorder %s196, %s210
      %p212 = scmp.eq.s32.totalorder %s32, 0
      %p213 = por %p211, %p212
      %s215 = sadd.s32 %s214, 1
      %p218 = scmp.eq.s32.totalorder %s26, 1
      %p219 = scmp.ne.s32.totalorder %s214, %s216
      %p220 = scmp.eq.s32.totalorder %s26, 0
      %p221 = por %p219, %p220
      %p222 = scmp.ne.s32.totalorder %s214, %s216
      %p223 = scmp.eq.s32.totalorder %s31, 1
      %p224 = por %p222, %p223
      %p225 = scmp.ne.s32.totalorder %s216, %s217
      %p226 = scmp.eq.s32.totalorder %s31, 0
      %p227 = por %p225, %p226
      %p228 = scmp.ne.s32.totalorder %s216, %s217
      %p229 = scmp.eq.s32.totalorder %s32, 1
      %p230 = por %p228, %p229
      %p232 = scmp.ne.s32.totalorder %s217, %s231
      %p233 = scmp.eq.s32.totalorder %s32, 0
      %p234 = por %p232, %p233
      %s235 = ssub.s32 %s33, %s52
      %s236 = ssub.s32 %s35, %s44
      %s237 = sor.u32 %s235, %s236
      %s238 = ssub.s32 %s34, %s48
      %s239 = sor.u32 %s237, %s238
      %p240 = scmp.eq.s32.totalorder %s239, 0
      %s242 = sadd.s32 %s241, 1
      %s243 = scalar_select %p240, %s241, %s242
      %p246 = pneg %p240
      %p247 = scmp.eq.s32.totalorder %s26, 1
      %p248 = por %p246, %p247
      %p249 = scmp.ne.s32.totalorder %s241, %s244
      %p250 = scmp.eq.s32.totalorder %s26, 0
      %p251 = por %p249, %p250
      %p252 = scmp.ne.s32.totalorder %s241, %s244
      %p253 = scmp.eq.s32.totalorder %s31, 1
      %p254 = por %p252, %p253
      %p255 = scmp.ne.s32.totalorder %s244, %s245
      %p256 = scmp.eq.s32.totalorder %s31, 0
      %p257 = por %p255, %p256
      %p258 = scmp.ne.s32.totalorder %s244, %s245
      %p259 = scmp.eq.s32.totalorder %s32, 1
      %p260 = por %p258, %p259
      %p262 = scmp.ne.s32.totalorder %s245, %s261
      %p263 = scmp.eq.s32.totalorder %s32, 0
      %p264 = por %p262, %p263
      %p265 = scmp.le.s32.totalorder 1, %s26
      %p266 = scmp.lt.s32.totalorder %s26, 3
      %p267 = pnand %p265, %p266
      %p268 = pneg %p267
      // Predicated region
      $region9: #{scorenet_forward.1} parent=5 // pred_check
        _
      $region10: #{scorenet_forward.1} parent=5 // pred_check_branch
        %270 = sbr.rel (%p267) target = $region12
      $region11: #{scorenet_forward.1} parent=5 // pred_region
        %s271 = ssub.s32 %s26, 1
        // Predicated region
        $region13: #{scorenet_forward.1} parent=11 // pred_check
          %p272 = pneg %p122
        $region14: #{scorenet_forward.1} parent=11 // pred_check_branch
          %274 = sbr.rel (%p272) target = $region16
        $region15: #{scorenet_forward.1} parent=11 // pred_region
          %s276 = ssub.s32 4096, 4096
          %277 = vsyncadd [#allocation7], %s276
          %s278 = sshll.u32 [#allocation8], 4
          %s279 = int_to_ptr.vmem [resolvable:$true] %s278
          %284 = dma.hbm_to_vmem [thread:$0]  %s2, 4096, %s279, [#allocation7], 128, 128, 8
        $region16: #{scorenet_forward.1} parent=11 // pred_fallthru
          _
        // Predicated region
        $region17: #{scorenet_forward.1} parent=11 // pred_check
          %p285 = pneg %p143
        $region18: #{scorenet_forward.1} parent=11 // pred_check_branch
          %287 = sbr.rel (%p285) target = $region20
        $region19: #{scorenet_forward.1} parent=11 // pred_region
          %s289 = ssub.s32 16, 16
          %290 = vsyncadd [#allocation10], %s289
          %s292 = sshll.u32 [#allocation9], 4
          %s293 = int_to_ptr.vmem [resolvable:$true] %s292
          %295 = dma.hbm_to_vmem [thread:$0]  %s3, 16, %s293, [#allocation10]
        $region20: #{scorenet_forward.1} parent=11 // pred_fallthru
          _
        // Predicated region
        $region21: #{scorenet_forward.1} parent=11 // pred_check
          %p296 = pneg %p164
        $region22: #{scorenet_forward.1} parent=11 // pred_check_branch
          %298 = sbr.rel (%p296) target = $region24
        $region23: #{scorenet_forward.1} parent=11 // pred_region
          %s300 = ssub.s32 2048, 2048
          %301 = vsyncadd [#allocation10], %s300
          %s302 = sshll.u32 [#allocation11], 4
          %s303 = int_to_ptr.vmem [resolvable:$true] %s302
          %308 = dma.hbm_to_vmem [thread:$0]  %s4, 2048, %s303, [#allocation10], 128, 128, 8
        $region24: #{scorenet_forward.1} parent=11 // pred_fallthru
          _
        // Predicated region
        $region25: #{scorenet_forward.1} parent=11 // pred_check
          %p309 = pneg %p185
        $region26: #{scorenet_forward.1} parent=11 // pred_check_branch
          %311 = sbr.rel (%p309) target = $region28
        $region27: #{scorenet_forward.1} parent=11 // pred_region
          %s313 = ssub.s32 16, 16
          %314 = vsyncadd [#allocation13], %s313
          %s316 = sshll.u32 [#allocation12], 4
          %s317 = int_to_ptr.vmem [resolvable:$true] %s316
          %319 = dma.hbm_to_vmem [thread:$0]  %s5, 16, %s317, [#allocation13]
        $region28: #{scorenet_forward.1} parent=11 // pred_fallthru
          _
        // Predicated region
        $region29: #{scorenet_forward.1} parent=11 // pred_check
          %p320 = pneg %p206
        $region30: #{scorenet_forward.1} parent=11 // pred_check_branch
          %322 = sbr.rel (%p320) target = $region32
        $region31: #{scorenet_forward.1} parent=11 // pred_region
          %s324 = ssub.s32 16, 16
          %325 = vsyncadd [#allocation13], %s324
          %s327 = sshll.u32 [#allocation14], 4
          %s328 = int_to_ptr.vmem [resolvable:$true] %s327
          %330 = dma.hbm_to_vmem [thread:$0]  %s6, 16, %s328, [#allocation13]
        $region32: #{scorenet_forward.1} parent=11 // pred_fallthru
          _
        // Predicated region
        $region33: #{scorenet_forward.1} parent=11 // pred_check
          %p331 = pneg %p227
        $region34: #{scorenet_forward.1} parent=11 // pred_check_branch
          %333 = sbr.rel (%p331) target = $region36
        $region35: #{scorenet_forward.1} parent=11 // pred_region
          _
        $region36: #{scorenet_forward.1} parent=11 // pred_fallthru
          _
      $region12: #{scorenet_forward.1} parent=5 // pred_fallthru
        _
      %p334 = scmp.lt.s32.totalorder %s26, 2
      // Predicated region
      $region37: #{scorenet_forward.1} parent=5 // pred_check
        %p335 = pneg %p334
      $region38: #{scorenet_forward.1} parent=5 // pred_check_branch
        %337 = sbr.rel (%p335) target = $region40
      $region39: #{scorenet_forward.1} parent=5 // pred_region
        // Predicated region
        $region41: #{scorenet_forward.1} parent=39 // pred_check
          %p338 = pneg %p67
        $region42: #{scorenet_forward.1} parent=39 // pred_check_branch
          %340 = sbr.rel (%p338) target = $region44
        $region43: #{scorenet_forward.1} parent=39 // pred_region
          %s341 = sand.u32 %s57, 1
          %s342 = scalar_lea.sflag [#allocation4], %s341
          %s343 = sand.u32 %s57, 1
          %s344 = smul.addr %s343, 32
          %s345 = scalar_lea.vmem [#allocation3], %s344
          %s346 = smul.u32 2, %s35
          %s348 = ssub.s32 512, 512
          %349 = vsyncadd %s342, %s348
          %s350 = smul.addr %s346, 2
          %s351 = smul.addr %s33, 4
          %s352 = sadd.s32 %s350, %s351
          %s353 = smul.addr %s352, 128
          %s354 = scalar_lea.hbm %s0, %s353
          %s355 = sshll.u32 %s345, 4
          %s356 = int_to_ptr.vmem [resolvable:$true] %s355
          %361 = dma.hbm_to_vmem [thread:$0]  %s354, 512, %s356, %s342, 256, 256, 16
        $region44: #{scorenet_forward.1} parent=39 // pred_fallthru
          _
        // Predicated region
        $region45: #{scorenet_forward.1} parent=39 // pred_check
          %p362 = pneg %p95
        $region46: #{scorenet_forward.1} parent=39 // pred_check_branch
          %364 = sbr.rel (%p362) target = $region48
        $region47: #{scorenet_forward.1} parent=39 // pred_region
          %s365 = sand.u32 %s26, 1
          %s366 = scalar_lea.sflag [#allocation7], %s365
          %s367 = sand.u32 %s85, 1
          %s368 = smul.addr %s367, 256
          %s369 = scalar_lea.vmem [#allocation6], %s368
          %s370 = smul.u32 16, %s34
          %s372 = ssub.s32 4096, 4096
          %373 = vsyncadd %s366, %s372
          %s374 = smul.addr %s370, 2
          %s375 = smul.addr %s33, 32
          %s376 = sadd.s32 %s374, %s375
          %s377 = smul.addr %s376, 128
          %s378 = scalar_lea.hbm %s1, %s377
          %s379 = sshll.u32 %s369, 4
          %s380 = int_to_ptr.vmem [resolvable:$true] %s379
          %385 = dma.hbm_to_vmem [thread:$0]  %s378, 4096, %s380, %s366, 256, 256, 16
        $region48: #{scorenet_forward.1} parent=39 // pred_fallthru
          _
      $region40: #{scorenet_forward.1} parent=5 // pred_fallthru
        _
      %p386 = scmp.le.s32.totalorder 1, %s26
      %p387 = scmp.lt.s32.totalorder %s26, 3
      %p388 = pnand %p386, %p387
      %p389 = pneg %p388
      // Predicated region
      $region49: #{scorenet_forward.1} parent=5 // pred_check
        _
      $region50: #{scorenet_forward.1} parent=5 // pred_check_branch
        %391 = sbr.rel (%p388) target = $region52
      $region51: #{scorenet_forward.1} parent=5 // pred_region
        %s392 = ssub.s32 %s26, 1
        %s393 = sand.u32 %s60, 1
        %s394 = scalar_lea.sflag [#allocation4], %s393
        %s395 = sand.u32 %s60, 1
        %s396 = smul.addr %s395, 32
        %s397 = scalar_lea.vmem [#allocation3], %s396
        // Predicated region
        $region53: #{scorenet_forward.1} parent=51 // pred_check
          %p398 = pneg %p73
        $region54: #{scorenet_forward.1} parent=51 // pred_check_branch
          %400 = sbr.rel (%p398) target = $region56
        $region55: #{scorenet_forward.1} parent=51 // pred_region
          %401 = dma.done %s394, 512
        $region56: #{scorenet_forward.1} parent=51 // pred_fallthru
          _
        %s402 = sand.u32 %s31, 1
        %s403 = scalar_lea.sflag [#allocation7], %s402
        %s404 = sand.u32 %s88, 1
        %s405 = smul.addr %s404, 256
        %s406 = scalar_lea.vmem [#allocation6], %s405
        // Predicated region
        $region57: #{scorenet_forward.1} parent=51 // pred_check
          %p407 = pneg %p101
        $region58: #{scorenet_forward.1} parent=51 // pred_check_branch
          %409 = sbr.rel (%p407) target = $region60
        $region59: #{scorenet_forward.1} parent=51 // pred_region
          %410 = dma.done %s403, 4096
        $region60: #{scorenet_forward.1} parent=51 // pred_fallthru
          _
        // Predicated region
        $region61: #{scorenet_forward.1} parent=51 // pred_check
          %p411 = pneg %p122
        $region62: #{scorenet_forward.1} parent=51 // pred_check_branch
          %413 = sbr.rel (%p411) target = $region64
        $region63: #{scorenet_forward.1} parent=51 // pred_region
          %414 = dma.done [#allocation7], 4096
        $region64: #{scorenet_forward.1} parent=51 // pred_fallthru
          _
        // Predicated region
        $region65: #{scorenet_forward.1} parent=51 // pred_check
          %p415 = pneg %p143
        $region66: #{scorenet_forward.1} parent=51 // pred_check_branch
          %417 = sbr.rel (%p415) target = $region68
        $region67: #{scorenet_forward.1} parent=51 // pred_region
          %418 = dma.done [#allocation10], 16
        $region68: #{scorenet_forward.1} parent=51 // pred_fallthru
          _
        // Predicated region
        $region69: #{scorenet_forward.1} parent=51 // pred_check
          %p419 = pneg %p164
        $region70: #{scorenet_forward.1} parent=51 // pred_check_branch
          %421 = sbr.rel (%p419) target = $region72
        $region71: #{scorenet_forward.1} parent=51 // pred_region
          %422 = dma.done [#allocation10], 2048
        $region72: #{scorenet_forward.1} parent=51 // pred_fallthru
          _
        // Predicated region
        $region73: #{scorenet_forward.1} parent=51 // pred_check
          %p423 = pneg %p185
        $region74: #{scorenet_forward.1} parent=51 // pred_check_branch
          %425 = sbr.rel (%p423) target = $region76
        $region75: #{scorenet_forward.1} parent=51 // pred_region
          %426 = dma.done [#allocation13], 16
        $region76: #{scorenet_forward.1} parent=51 // pred_fallthru
          _
        // Predicated region
        $region77: #{scorenet_forward.1} parent=51 // pred_check
          %p427 = pneg %p206
        $region78: #{scorenet_forward.1} parent=51 // pred_check_branch
          %429 = sbr.rel (%p427) target = $region80
        $region79: #{scorenet_forward.1} parent=51 // pred_region
          %430 = dma.done [#allocation13], 16
        $region80: #{scorenet_forward.1} parent=51 // pred_fallthru
          _
        %s431 = sand.u32 %s60, 1
        %s432 = scalar_lea.sflag [#allocation4], %s431
        %s433 = sand.u32 %s60, 1
        %s434 = smul.addr %s433, 32
        %s435 = scalar_lea.vmem [#allocation3], %s434
        %p436 = pneg %p73
        %p437 = pneg %p70
        %s438 = sand.u32 %s31, 1
        %s439 = scalar_lea.sflag [#allocation7], %s438
        %s440 = sand.u32 %s88, 1
        %s441 = smul.addr %s440, 256
        %s442 = scalar_lea.vmem [#allocation6], %s441
        %p443 = pneg %p101
        %p444 = pneg %p98
        %p445 = pneg %p122
        %p446 = pneg %p119
        %p447 = pneg %p143
        %p448 = pneg %p140
        %p449 = pneg %p164
        %p450 = pneg %p161
        %p451 = pneg %p185
        %p452 = pneg %p182
        %p453 = pneg %p206
        %p454 = pneg %p203
        %p455 = pneg %p227
        %p456 = pneg %p224
        %p457 = pneg %p257
        %p458 = pneg %p254
        %s459 = sand.u32 %s244, 1
        %s460 = scalar_lea.sflag [#allocation5], %s459
        %s461 = sand.u32 %s244, 1
        %s462 = smul.addr %s461, 16
        %s463 = scalar_lea.vmem [#allocation15], %s462
        %s464 = smul.u32 2, %s38
        %s465 = smul.u32 16, %s37
        %s466 = smul.u32 2, %s38
        %v467 = vld [vmem:[%s397] sm:$0xff]
        %v468 = vld [vmem:[%s397 + $0x8] sm:$0xff]
        %v469 = vld [vmem:[%s397 + $0x10] sm:$0xff]
        %v470 = vld [vmem:[%s397 + $0x18] sm:$0xff]
        %v471 = vld [vmem:[%s406] sm:$0xff]
        %v472 = vld [vmem:[%s406 + $0x8] sm:$0xff]
        %v473 = vld [vmem:[%s406 + $0x10] sm:$0xff]
        %v474 = vld [vmem:[%s406 + $0x18] sm:$0xff]
        %v475 = vld [vmem:[%s406 + $0x20] sm:$0xff]
        %v476 = vld [vmem:[%s406 + $0x28] sm:$0xff]
        %v477 = vld [vmem:[%s406 + $0x30] sm:$0xff]
        %v478 = vld [vmem:[%s406 + $0x38] sm:$0xff]
        %v479 = vld [vmem:[%s406 + $0x40] sm:$0xff]
        %v480 = vld [vmem:[%s406 + $0x48] sm:$0xff]
        %v481 = vld [vmem:[%s406 + $0x50] sm:$0xff]
        %v482 = vld [vmem:[%s406 + $0x58] sm:$0xff]
        %v483 = vld [vmem:[%s406 + $0x60] sm:$0xff]
        %v484 = vld [vmem:[%s406 + $0x68] sm:$0xff]
        %v485 = vld [vmem:[%s406 + $0x70] sm:$0xff]
        %v486 = vld [vmem:[%s406 + $0x78] sm:$0xff]
        %v487 = vld [vmem:[%s406 + $0x80] sm:$0xff]
        %v488 = vld [vmem:[%s406 + $0x88] sm:$0xff]
        %v489 = vld [vmem:[%s406 + $0x90] sm:$0xff]
        %v490 = vld [vmem:[%s406 + $0x98] sm:$0xff]
        %v491 = vld [vmem:[%s406 + $0xa0] sm:$0xff]
        %v492 = vld [vmem:[%s406 + $0xa8] sm:$0xff]
        %v493 = vld [vmem:[%s406 + $0xb0] sm:$0xff]
        %v494 = vld [vmem:[%s406 + $0xb8] sm:$0xff]
        %v495 = vld [vmem:[%s406 + $0xc0] sm:$0xff]
        %v496 = vld [vmem:[%s406 + $0xc8] sm:$0xff]
        %v497 = vld [vmem:[%s406 + $0xd0] sm:$0xff]
        %v498 = vld [vmem:[%s406 + $0xd8] sm:$0xff]
        %v499 = vld [vmem:[%s406 + $0xe0] sm:$0xff]
        %v500 = vld [vmem:[%s406 + $0xe8] sm:$0xff]
        %v501 = vld [vmem:[%s406 + $0xf0] sm:$0xff]
        %v502 = vld [vmem:[%s406 + $0xf8] sm:$0xff]
        %v507 = vcombine.low %v467, %v468
        %v508 = vcombine.high %v467, %v468
        %v510 = vunpack.c.l.s4 1966171168
        %v511 = vunpack.c.0.s8 %v510
        %v512 = vlaneseq
        %v513 = vshrl.u32 %v512, 7
        %v514 = vsub.s32 %v511, %v513
        %v515 = vrot.slane %v507, %v514
        %v517 = vunpack.c.l.s4 1966171168
        %v518 = vunpack.c.0.s8 %v517
        %v519 = vlaneseq
        %v520 = vshrl.u32 %v519, 7
        %v521 = vsub.s32 %v518, %v520
        %v522 = vrot.slane %v508, %v521
        %v523 = vcombine.high %v515, %v515
        %v524 = vcombine.high %v522, %v522
        %v526 = vunpack.c.l.s4 1966171168
        %v527 = vunpack.c.0.s8 %v526
        %v528 = vlaneseq
        %v529 = vshrl.u32 %v528, 7
        %v530 = vsub.s32 %v527, %v529
        %v531 = vrot.slane %v515, %v530
        %v533 = vunpack.c.l.s4 1966171168
        %v534 = vunpack.c.0.s8 %v533
        %v535 = vlaneseq
        %v536 = vshrl.u32 %v535, 7
        %v537 = vsub.s32 %v534, %v536
        %v538 = vrot.slane %v522, %v537
        %v540 = vunpack.c.l.s4 1966171168
        %v541 = vunpack.c.0.s8 %v540
        %v542 = vlaneseq
        %v543 = vshrl.u32 %v542, 7
        %v544 = vsub.s32 %v541, %v543
        %v545 = vrot.slane %v523, %v544
        %v547 = vunpack.c.l.s4 1966171168
        %v548 = vunpack.c.0.s8 %v547
        %v549 = vlaneseq
        %v550 = vshrl.u32 %v549, 7
        %v551 = vsub.s32 %v548, %v550
        %v552 = vrot.slane %v524, %v551
        %v553 = vcombine.high %v531, %v531
        %v554 = vcombine.high %v538, %v538
        %v555 = vcombine.high %v545, %v545
        %v556 = vcombine.high %v552, %v552
        %v557 = vcombine.low %v469, %v470
        %v558 = vcombine.high %v469, %v470
        %v560 = vunpack.c.l.s4 1966171168
        %v561 = vunpack.c.0.s8 %v560
        %v562 = vlaneseq
        %v563 = vshrl.u32 %v562, 7
        %v564 = vsub.s32 %v561, %v563
        %v565 = vrot.slane %v557, %v564
        %v567 = vunpack.c.l.s4 1966171168
        %v568 = vunpack.c.0.s8 %v567
        %v569 = vlaneseq
        %v570 = vshrl.u32 %v569, 7
        %v571 = vsub.s32 %v568, %v570
        %v572 = vrot.slane %v558, %v571
        %v573 = vcombine.high %v565, %v565
        %v574 = vcombine.high %v572, %v572
        %v576 = vunpack.c.l.s4 1966171168
        %v577 = vunpack.c.0.s8 %v576
        %v578 = vlaneseq
        %v579 = vshrl.u32 %v578, 7
        %v580 = vsub.s32 %v577, %v579
        %v581 = vrot.slane %v565, %v580
        %v583 = vunpack.c.l.s4 1966171168
        %v584 = vunpack.c.0.s8 %v583
        %v585 = vlaneseq
        %v586 = vshrl.u32 %v585, 7
        %v587 = vsub.s32 %v584, %v586
        %v588 = vrot.slane %v572, %v587
        %v590 = vunpack.c.l.s4 1966171168
        %v591 = vunpack.c.0.s8 %v590
        %v592 = vlaneseq
        %v593 = vshrl.u32 %v592, 7
        %v594 = vsub.s32 %v591, %v593
        %v595 = vrot.slane %v573, %v594
        %v597 = vunpack.c.l.s4 1966171168
        %v598 = vunpack.c.0.s8 %v597
        %v599 = vlaneseq
        %v600 = vshrl.u32 %v599, 7
        %v601 = vsub.s32 %v598, %v600
        %v602 = vrot.slane %v574, %v601
        %v603 = vcombine.high %v581, %v581
        %v604 = vcombine.high %v588, %v588
        %v605 = vcombine.high %v595, %v595
        %v606 = vcombine.high %v602, %v602
        %v607 = vlaneseq
        %v608 = vshrl.u32 %v607, 7
        %v609 = vsub.s32 0, %v608
        %v610 = vrot.slane %v531, %v609
        %v611 = vlaneseq
        %v612 = vshrl.u32 %v611, 7
        %v613 = vsub.s32 1, %v612
        %v614 = vrot.slane %v531, %v613
        %v615 = vlaneseq
        %v616 = vshrl.u32 %v615, 7
        %v617 = vsub.s32 0, %v616
        %v618 = vrot.slane %v545, %v617
        %v619 = vlaneseq
        %v620 = vshrl.u32 %v619, 7
        %v621 = vsub.s32 1, %v620
        %v622 = vrot.slane %v545, %v621
        %v623 = vlaneseq
        %v624 = vshrl.u32 %v623, 7
        %v625 = vsub.s32 0, %v624
        %v626 = vrot.slane %v553, %v625
        %v627 = vlaneseq
        %v628 = vshrl.u32 %v627, 7
        %v629 = vsub.s32 1, %v628
        %v630 = vrot.slane %v553, %v629
        %v631 = vlaneseq
        %v632 = vshrl.u32 %v631, 7
        %v633 = vsub.s32 0, %v632
        %v634 = vrot.slane %v555, %v633
        %v635 = vlaneseq
        %v636 = vshrl.u32 %v635, 7
        %v637 = vsub.s32 1, %v636
        %v638 = vrot.slane %v555, %v637
        %v639 = vlaneseq
        %v640 = vshrl.u32 %v639, 7
        %v641 = vsub.s32 0, %v640
        %v642 = vrot.slane %v538, %v641
        %v643 = vlaneseq
        %v644 = vshrl.u32 %v643, 7
        %v645 = vsub.s32 1, %v644
        %v646 = vrot.slane %v538, %v645
        %v647 = vlaneseq
        %v648 = vshrl.u32 %v647, 7
        %v649 = vsub.s32 0, %v648
        %v650 = vrot.slane %v552, %v649
        %v651 = vlaneseq
        %v652 = vshrl.u32 %v651, 7
        %v653 = vsub.s32 1, %v652
        %v654 = vrot.slane %v552, %v653
        %v655 = vlaneseq
        %v656 = vshrl.u32 %v655, 7
        %v657 = vsub.s32 0, %v656
        %v658 = vrot.slane %v554, %v657
        %v659 = vlaneseq
        %v660 = vshrl.u32 %v659, 7
        %v661 = vsub.s32 1, %v660
        %v662 = vrot.slane %v554, %v661
        %v663 = vlaneseq
        %v664 = vshrl.u32 %v663, 7
        %v665 = vsub.s32 0, %v664
        %v666 = vrot.slane %v556, %v665
        %v667 = vlaneseq
        %v668 = vshrl.u32 %v667, 7
        %v669 = vsub.s32 1, %v668
        %v670 = vrot.slane %v556, %v669
        %v671 = vlaneseq
        %v672 = vshrl.u32 %v671, 7
        %v673 = vsub.s32 0, %v672
        %v674 = vrot.slane %v581, %v673
        %v675 = vlaneseq
        %v676 = vshrl.u32 %v675, 7
        %v677 = vsub.s32 1, %v676
        %v678 = vrot.slane %v581, %v677
        %v679 = vlaneseq
        %v680 = vshrl.u32 %v679, 7
        %v681 = vsub.s32 0, %v680
        %v682 = vrot.slane %v595, %v681
        %v683 = vlaneseq
        %v684 = vshrl.u32 %v683, 7
        %v685 = vsub.s32 1, %v684
        %v686 = vrot.slane %v595, %v685
        %v687 = vlaneseq
        %v688 = vshrl.u32 %v687, 7
        %v689 = vsub.s32 0, %v688
        %v690 = vrot.slane %v603, %v689
        %v691 = vlaneseq
        %v692 = vshrl.u32 %v691, 7
        %v693 = vsub.s32 1, %v692
        %v694 = vrot.slane %v603, %v693
        %v695 = vlaneseq
        %v696 = vshrl.u32 %v695, 7
        %v697 = vsub.s32 0, %v696
        %v698 = vrot.slane %v605, %v697
        %v699 = vlaneseq
        %v700 = vshrl.u32 %v699, 7
        %v701 = vsub.s32 1, %v700
        %v702 = vrot.slane %v605, %v701
        %v703 = vlaneseq
        %v704 = vshrl.u32 %v703, 7
        %v705 = vsub.s32 0, %v704
        %v706 = vrot.slane %v588, %v705
        %v707 = vlaneseq
        %v708 = vshrl.u32 %v707, 7
        %v709 = vsub.s32 1, %v708
        %v710 = vrot.slane %v588, %v709
        %v711 = vlaneseq
        %v712 = vshrl.u32 %v711, 7
        %v713 = vsub.s32 0, %v712
        %v714 = vrot.slane %v602, %v713
        %v715 = vlaneseq
        %v716 = vshrl.u32 %v715, 7
        %v717 = vsub.s32 1, %v716
        %v718 = vrot.slane %v602, %v717
        %v719 = vlaneseq
        %v720 = vshrl.u32 %v719, 7
        %v721 = vsub.s32 0, %v720
        %v722 = vrot.slane %v604, %v721
        %v723 = vlaneseq
        %v724 = vshrl.u32 %v723, 7
        %v725 = vsub.s32 1, %v724
        %v726 = vrot.slane %v604, %v725
        %v727 = vlaneseq
        %v728 = vshrl.u32 %v727, 7
        %v729 = vsub.s32 0, %v728
        %v730 = vrot.slane %v606, %v729
        %v731 = vlaneseq
        %v732 = vshrl.u32 %v731, 7
        %v733 = vsub.s32 1, %v732
        %v734 = vrot.slane %v606, %v733
        %v767 = vadd.f32 %v610, %v471
        %v768 = vadd.f32 %v614, %v472
        %v769 = vadd.f32 %v610, %v473
        %v770 = vadd.f32 %v614, %v474
        %v771 = vadd.f32 %v610, %v475
        %v772 = vadd.f32 %v614, %v476
        %v773 = vadd.f32 %v610, %v477
        %v774 = vadd.f32 %v614, %v478
        %v775 = vadd.f32 %v610, %v479
        %v776 = vadd.f32 %v614, %v480
        %v777 = vadd.f32 %v610, %v481
        %v778 = vadd.f32 %v614, %v482
        %v779 = vadd.f32 %v610, %v483
        %v780 = vadd.f32 %v614, %v484
        %v781 = vadd.f32 %v610, %v485
        %v782 = vadd.f32 %v614, %v486
        %v783 = vadd.f32 %v610, %v487
        %v784 = vadd.f32 %v614, %v488
        %v785 = vadd.f32 %v610, %v489
        %v786 = vadd.f32 %v614, %v490
        %v787 = vadd.f32 %v610, %v491
        %v788 = vadd.f32 %v614, %v492
        %v789 = vadd.f32 %v610, %v493
        %v790 = vadd.f32 %v614, %v494
        %v791 = vadd.f32 %v610, %v495
        %v792 = vadd.f32 %v614, %v496
        %v793 = vadd.f32 %v610, %v497
        %v794 = vadd.f32 %v614, %v498
        %v795 = vadd.f32 %v610, %v499
        %v796 = vadd.f32 %v614, %v500
        %v797 = vadd.f32 %v610, %v501
        %v798 = vadd.f32 %v614, %v502
        %v799 = vadd.f32 %v618, %v471
        %v800 = vadd.f32 %v622, %v472
        %v801 = vadd.f32 %v618, %v473
        %v802 = vadd.f32 %v622, %v474
        %v803 = vadd.f32 %v618, %v475
        %v804 = vadd.f32 %v622, %v476
        %v805 = vadd.f32 %v618, %v477
        %v806 = vadd.f32 %v622, %v478
        %v807 = vadd.f32 %v618, %v479
        %v808 = vadd.f32 %v622, %v480
        %v809 = vadd.f32 %v618, %v481
        %v810 = vadd.f32 %v622, %v482
        %v811 = vadd.f32 %v618, %v483
        %v812 = vadd.f32 %v622, %v484
        %v813 = vadd.f32 %v618, %v485
        %v814 = vadd.f32 %v622, %v486
        %v815 = vadd.f32 %v618, %v487
        %v816 = vadd.f32 %v622, %v488
        %v817 = vadd.f32 %v618, %v489
        %v818 = vadd.f32 %v622, %v490
        %v819 = vadd.f32 %v618, %v491
        %v820 = vadd.f32 %v622, %v492
        %v821 = vadd.f32 %v618, %v493
        %v822 = vadd.f32 %v622, %v494
        %v823 = vadd.f32 %v618, %v495
        %v824 = vadd.f32 %v622, %v496
        %v825 = vadd.f32 %v618, %v497
        %v826 = vadd.f32 %v622, %v498
        %v827 = vadd.f32 %v618, %v499
        %v828 = vadd.f32 %v622, %v500
        %v829 = vadd.f32 %v618, %v501
        %v830 = vadd.f32 %v622, %v502
        %v831 = vadd.f32 %v626, %v471
        %v832 = vadd.f32 %v630, %v472
        %v833 = vadd.f32 %v626, %v473
        %v834 = vadd.f32 %v630, %v474
        %v835 = vadd.f32 %v626, %v475
        %v836 = vadd.f32 %v630, %v476
        %v837 = vadd.f32 %v626, %v477
        %v838 = vadd.f32 %v630, %v478
        %v839 = vadd.f32 %v626, %v479
        %v840 = vadd.f32 %v630, %v480
        %v841 = vadd.f32 %v626, %v481
        %v842 = vadd.f32 %v630, %v482
        %v843 = vadd.f32 %v626, %v483
        %v844 = vadd.f32 %v630, %v484
        %v845 = vadd.f32 %v626, %v485
        %v846 = vadd.f32 %v630, %v486
        %v847 = vadd.f32 %v626, %v487
        %v848 = vadd.f32 %v630, %v488
        %v849 = vadd.f32 %v626, %v489
        %v850 = vadd.f32 %v630, %v490
        %v851 = vadd.f32 %v626, %v491
        %v852 = vadd.f32 %v630, %v492
        %v853 = vadd.f32 %v626, %v493
        %v854 = vadd.f32 %v630, %v494
        %v855 = vadd.f32 %v626, %v495
        %v856 = vadd.f32 %v630, %v496
        %v857 = vadd.f32 %v626, %v497
        %v858 = vadd.f32 %v630, %v498
        %v859 = vadd.f32 %v626, %v499
        %v860 = vadd.f32 %v630, %v500
        %v861 = vadd.f32 %v626, %v501
        %v862 = vadd.f32 %v630, %v502
        %v863 = vadd.f32 %v634, %v471
        %v864 = vadd.f32 %v638, %v472
        %v865 = vadd.f32 %v634, %v473
        %v866 = vadd.f32 %v638, %v474
        %v867 = vadd.f32 %v634, %v475
        %v868 = vadd.f32 %v638, %v476
        %v869 = vadd.f32 %v634, %v477
        %v870 = vadd.f32 %v638, %v478
        %v871 = vadd.f32 %v634, %v479
        %v872 = vadd.f32 %v638, %v480
        %v873 = vadd.f32 %v634, %v481
        %v874 = vadd.f32 %v638, %v482
        %v875 = vadd.f32 %v634, %v483
        %v876 = vadd.f32 %v638, %v484
        %v877 = vadd.f32 %v634, %v485
        %v878 = vadd.f32 %v638, %v486
        %v879 = vadd.f32 %v634, %v487
        %v880 = vadd.f32 %v638, %v488
        %v881 = vadd.f32 %v634, %v489
        %v882 = vadd.f32 %v638, %v490
        %v883 = vadd.f32 %v634, %v491
        %v884 = vadd.f32 %v638, %v492
        %v885 = vadd.f32 %v634, %v493
        %v886 = vadd.f32 %v638, %v494
        %v887 = vadd.f32 %v634, %v495
        %v888 = vadd.f32 %v638, %v496
        %v889 = vadd.f32 %v634, %v497
        %v890 = vadd.f32 %v638, %v498
        %v891 = vadd.f32 %v634, %v499
        %v892 = vadd.f32 %v638, %v500
        %v893 = vadd.f32 %v634, %v501
        %v894 = vadd.f32 %v638, %v502
        %v895 = vadd.f32 %v642, %v471
        %v896 = vadd.f32 %v646, %v472
        %v897 = vadd.f32 %v642, %v473
        %v898 = vadd.f32 %v646, %v474
        %v899 = vadd.f32 %v642, %v475
        %v900 = vadd.f32 %v646, %v476
        %v901 = vadd.f32 %v642, %v477
        %v902 = vadd.f32 %v646, %v478
        %v903 = vadd.f32 %v642, %v479
        %v904 = vadd.f32 %v646, %v480
        %v905 = vadd.f32 %v642, %v481
        %v906 = vadd.f32 %v646, %v482
        %v907 = vadd.f32 %v642, %v483
        %v908 = vadd.f32 %v646, %v484
        %v909 = vadd.f32 %v642, %v485
        %v910 = vadd.f32 %v646, %v486
        %v911 = vadd.f32 %v642, %v487
        %v912 = vadd.f32 %v646, %v488
        %v913 = vadd.f32 %v642, %v489
        %v914 = vadd.f32 %v646, %v490
        %v915 = vadd.f32 %v642, %v491
        %v916 = vadd.f32 %v646, %v492
        %v917 = vadd.f32 %v642, %v493
        %v918 = vadd.f32 %v646, %v494
        %v919 = vadd.f32 %v642, %v495
        %v920 = vadd.f32 %v646, %v496
        %v921 = vadd.f32 %v642, %v497
        %v922 = vadd.f32 %v646, %v498
        %v923 = vadd.f32 %v642, %v499
        %v924 = vadd.f32 %v646, %v500
        %v925 = vadd.f32 %v642, %v501
        %v926 = vadd.f32 %v646, %v502
        %v927 = vadd.f32 %v650, %v471
        %v928 = vadd.f32 %v654, %v472
        %v929 = vadd.f32 %v650, %v473
        %v930 = vadd.f32 %v654, %v474
        %v931 = vadd.f32 %v650, %v475
        %v932 = vadd.f32 %v654, %v476
        %v933 = vadd.f32 %v650, %v477
        %v934 = vadd.f32 %v654, %v478
        %v935 = vadd.f32 %v650, %v479
        %v936 = vadd.f32 %v654, %v480
        %v937 = vadd.f32 %v650, %v481
        %v938 = vadd.f32 %v654, %v482
        %v939 = vadd.f32 %v650, %v483
        %v940 = vadd.f32 %v654, %v484
        %v941 = vadd.f32 %v650, %v485
        %v942 = vadd.f32 %v654, %v486
        %v943 = vadd.f32 %v650, %v487
        %v944 = vadd.f32 %v654, %v488
        %v945 = vadd.f32 %v650, %v489
        %v946 = vadd.f32 %v654, %v490
        %v947 = vadd.f32 %v650, %v491
        %v948 = vadd.f32 %v654, %v492
        %v949 = vadd.f32 %v650, %v493
        %v950 = vadd.f32 %v654, %v494
        %v951 = vadd.f32 %v650, %v495
        %v952 = vadd.f32 %v654, %v496
        %v953 = vadd.f32 %v650, %v497
        %v954 = vadd.f32 %v654, %v498
        %v955 = vadd.f32 %v650, %v499
        %v956 = vadd.f32 %v654, %v500
        %v957 = vadd.f32 %v650, %v501
        %v958 = vadd.f32 %v654, %v502
        %v959 = vadd.f32 %v658, %v471
        %v960 = vadd.f32 %v662, %v472
        %v961 = vadd.f32 %v658, %v473
        %v962 = vadd.f32 %v662, %v474
        %v963 = vadd.f32 %v658, %v475
        %v964 = vadd.f32 %v662, %v476
        %v965 = vadd.f32 %v658, %v477
        %v966 = vadd.f32 %v662, %v478
        %v967 = vadd.f32 %v658, %v479
        %v968 = vadd.f32 %v662, %v480
        %v969 = vadd.f32 %v658, %v481
        %v970 = vadd.f32 %v662, %v482
        %v971 = vadd.f32 %v658, %v483
        %v972 = vadd.f32 %v662, %v484
        %v973 = vadd.f32 %v658, %v485
        %v974 = vadd.f32 %v662, %v486
        %v975 = vadd.f32 %v658, %v487
        %v976 = vadd.f32 %v662, %v488
        %v977 = vadd.f32 %v658, %v489
        %v978 = vadd.f32 %v662, %v490
        %v979 = vadd.f32 %v658, %v491
        %v980 = vadd.f32 %v662, %v492
        %v981 = vadd.f32 %v658, %v493
        %v982 = vadd.f32 %v662, %v494
        %v983 = vadd.f32 %v658, %v495
        %v984 = vadd.f32 %v662, %v496
        %v985 = vadd.f32 %v658, %v497
        %v986 = vadd.f32 %v662, %v498
        %v987 = vadd.f32 %v658, %v499
        %v988 = vadd.f32 %v662, %v500
        %v989 = vadd.f32 %v658, %v501
        %v990 = vadd.f32 %v662, %v502
        %v991 = vadd.f32 %v666, %v471
        %v992 = vadd.f32 %v670, %v472
        %v993 = vadd.f32 %v666, %v473
        %v994 = vadd.f32 %v670, %v474
        %v995 = vadd.f32 %v666, %v475
        %v996 = vadd.f32 %v670, %v476
        %v997 = vadd.f32 %v666, %v477
        %v998 = vadd.f32 %v670, %v478
        %v999 = vadd.f32 %v666, %v479
        %v1000 = vadd.f32 %v670, %v480
        %v1001 = vadd.f32 %v666, %v481
        %v1002 = vadd.f32 %v670, %v482
        %v1003 = vadd.f32 %v666, %v483
        %v1004 = vadd.f32 %v670, %v484
        %v1005 = vadd.f32 %v666, %v485
        %v1006 = vadd.f32 %v670, %v486
        %v1007 = vadd.f32 %v666, %v487
        %v1008 = vadd.f32 %v670, %v488
        %v1009 = vadd.f32 %v666, %v489
        %v1010 = vadd.f32 %v670, %v490
        %v1011 = vadd.f32 %v666, %v491
        %v1012 = vadd.f32 %v670, %v492
        %v1013 = vadd.f32 %v666, %v493
        %v1014 = vadd.f32 %v670, %v494
        %v1015 = vadd.f32 %v666, %v495
        %v1016 = vadd.f32 %v670, %v496
        %v1017 = vadd.f32 %v666, %v497
        %v1018 = vadd.f32 %v670, %v498
        %v1019 = vadd.f32 %v666, %v499
        %v1020 = vadd.f32 %v670, %v500
        %v1021 = vadd.f32 %v666, %v501
        %v1022 = vadd.f32 %v670, %v502
        %v1023 = vadd.f32 %v674, %v471
        %v1024 = vadd.f32 %v678, %v472
        %v1025 = vadd.f32 %v674, %v473
        %v1026 = vadd.f32 %v678, %v474
        %v1027 = vadd.f32 %v674, %v475
        %v1028 = vadd.f32 %v678, %v476
        %v1029 = vadd.f32 %v674, %v477
        %v1030 = vadd.f32 %v678, %v478
        %v1031 = vadd.f32 %v674, %v479
        %v1032 = vadd.f32 %v678, %v480
        %v1033 = vadd.f32 %v674, %v481
        %v1034 = vadd.f32 %v678, %v482
        %v1035 = vadd.f32 %v674, %v483
        %v1036 = vadd.f32 %v678, %v484
        %v1037 = vadd.f32 %v674, %v485
        %v1038 = vadd.f32 %v678, %v486
        %v1039 = vadd.f32 %v674, %v487
        %v1040 = vadd.f32 %v678, %v488
        %v1041 = vadd.f32 %v674, %v489
        %v1042 = vadd.f32 %v678, %v490
        %v1043 = vadd.f32 %v674, %v491
        %v1044 = vadd.f32 %v678, %v492
        %v1045 = vadd.f32 %v674, %v493
        %v1046 = vadd.f32 %v678, %v494
        %v1047 = vadd.f32 %v674, %v495
        %v1048 = vadd.f32 %v678, %v496
        %v1049 = vadd.f32 %v674, %v497
        %v1050 = vadd.f32 %v678, %v498
        %v1051 = vadd.f32 %v674, %v499
        %v1052 = vadd.f32 %v678, %v500
        %v1053 = vadd.f32 %v674, %v501
        %v1054 = vadd.f32 %v678, %v502
        %v1055 = vadd.f32 %v682, %v471
        %v1056 = vadd.f32 %v686, %v472
        %v1057 = vadd.f32 %v682, %v473
        %v1058 = vadd.f32 %v686, %v474
        %v1059 = vadd.f32 %v682, %v475
        %v1060 = vadd.f32 %v686, %v476
        %v1061 = vadd.f32 %v682, %v477
        %v1062 = vadd.f32 %v686, %v478
        %v1063 = vadd.f32 %v682, %v479
        %v1064 = vadd.f32 %v686, %v480
        %v1065 = vadd.f32 %v682, %v481
        %v1066 = vadd.f32 %v686, %v482
        %v1067 = vadd.f32 %v682, %v483
        %v1068 = vadd.f32 %v686, %v484
        %v1069 = vadd.f32 %v682, %v485
        %v1070 = vadd.f32 %v686, %v486
        %v1071 = vadd.f32 %v682, %v487
        %v1072 = vadd.f32 %v686, %v488
        %v1073 = vadd.f32 %v682, %v489
        %v1074 = vadd.f32 %v686, %v490
        %v1075 = vadd.f32 %v682, %v491
        %v1076 = vadd.f32 %v686, %v492
        %v1077 = vadd.f32 %v682, %v493
        %v1078 = vadd.f32 %v686, %v494
        %v1079 = vadd.f32 %v682, %v495
        %v1080 = vadd.f32 %v686, %v496
        %v1081 = vadd.f32 %v682, %v497
        %v1082 = vadd.f32 %v686, %v498
        %v1083 = vadd.f32 %v682, %v499
        %v1084 = vadd.f32 %v686, %v500
        %v1085 = vadd.f32 %v682, %v501
        %v1086 = vadd.f32 %v686, %v502
        %v1087 = vadd.f32 %v690, %v471
        %v1088 = vadd.f32 %v694, %v472
        %v1089 = vadd.f32 %v690, %v473
        %v1090 = vadd.f32 %v694, %v474
        %v1091 = vadd.f32 %v690, %v475
        %v1092 = vadd.f32 %v694, %v476
        %v1093 = vadd.f32 %v690, %v477
        %v1094 = vadd.f32 %v694, %v478
        %v1095 = vadd.f32 %v690, %v479
        %v1096 = vadd.f32 %v694, %v480
        %v1097 = vadd.f32 %v690, %v481
        %v1098 = vadd.f32 %v694, %v482
        %v1099 = vadd.f32 %v690, %v483
        %v1100 = vadd.f32 %v694, %v484
        %v1101 = vadd.f32 %v690, %v485
        %v1102 = vadd.f32 %v694, %v486
        %v1103 = vadd.f32 %v690, %v487
        %v1104 = vadd.f32 %v694, %v488
        %v1105 = vadd.f32 %v690, %v489
        %v1106 = vadd.f32 %v694, %v490
        %v1107 = vadd.f32 %v690, %v491
        %v1108 = vadd.f32 %v694, %v492
        %v1109 = vadd.f32 %v690, %v493
        %v1110 = vadd.f32 %v694, %v494
        %v1111 = vadd.f32 %v690, %v495
        %v1112 = vadd.f32 %v694, %v496
        %v1113 = vadd.f32 %v690, %v497
        %v1114 = vadd.f32 %v694, %v498
        %v1115 = vadd.f32 %v690, %v499
        %v1116 = vadd.f32 %v694, %v500
        %v1117 = vadd.f32 %v690, %v501
        %v1118 = vadd.f32 %v694, %v502
        %v1119 = vadd.f32 %v698, %v471
        %v1120 = vadd.f32 %v702, %v472
        %v1121 = vadd.f32 %v698, %v473
        %v1122 = vadd.f32 %v702, %v474
        %v1123 = vadd.f32 %v698, %v475
        %v1124 = vadd.f32 %v702, %v476
        %v1125 = vadd.f32 %v698, %v477
        %v1126 = vadd.f32 %v702, %v478
        %v1127 = vadd.f32 %v698, %v479
        %v1128 = vadd.f32 %v702, %v480
        %v1129 = vadd.f32 %v698, %v481
        %v1130 = vadd.f32 %v702, %v482
        %v1131 = vadd.f32 %v698, %v483
        %v1132 = vadd.f32 %v702, %v484
        %v1133 = vadd.f32 %v698, %v485
        %v1134 = vadd.f32 %v702, %v486
        %v1135 = vadd.f32 %v698, %v487
        %v1136 = vadd.f32 %v702, %v488
        %v1137 = vadd.f32 %v698, %v489
        %v1138 = vadd.f32 %v702, %v490
        %v1139 = vadd.f32 %v698, %v491
        %v1140 = vadd.f32 %v702, %v492
        %v1141 = vadd.f32 %v698, %v493
        %v1142 = vadd.f32 %v702, %v494
        %v1143 = vadd.f32 %v698, %v495
        %v1144 = vadd.f32 %v702, %v496
        %v1145 = vadd.f32 %v698, %v497
        %v1146 = vadd.f32 %v702, %v498
        %v1147 = vadd.f32 %v698, %v499
        %v1148 = vadd.f32 %v702, %v500
        %v1149 = vadd.f32 %v698, %v501
        %v1150 = vadd.f32 %v702, %v502
        %v1151 = vadd.f32 %v706, %v471
        %v1152 = vadd.f32 %v710, %v472
        %v1153 = vadd.f32 %v706, %v473
        %v1154 = vadd.f32 %v710, %v474
        %v1155 = vadd.f32 %v706, %v475
        %v1156 = vadd.f32 %v710, %v476
        %v1157 = vadd.f32 %v706, %v477
        %v1158 = vadd.f32 %v710, %v478
        %v1159 = vadd.f32 %v706, %v479
        %v1160 = vadd.f32 %v710, %v480
        %v1161 = vadd.f32 %v706, %v481
        %v1162 = vadd.f32 %v710, %v482
        %v1163 = vadd.f32 %v706, %v483
        %v1164 = vadd.f32 %v710, %v484
        %v1165 = vadd.f32 %v706, %v485
        %v1166 = vadd.f32 %v710, %v486
        %v1167 = vadd.f32 %v706, %v487
        %v1168 = vadd.f32 %v710, %v488
        %v1169 = vadd.f32 %v706, %v489
        %v1170 = vadd.f32 %v710, %v490
        %v1171 = vadd.f32 %v706, %v491
        %v1172 = vadd.f32 %v710, %v492
        %v1173 = vadd.f32 %v706, %v493
        %v1174 = vadd.f32 %v710, %v494
        %v1175 = vadd.f32 %v706, %v495
        %v1176 = vadd.f32 %v710, %v496
        %v1177 = vadd.f32 %v706, %v497
        %v1178 = vadd.f32 %v710, %v498
        %v1179 = vadd.f32 %v706, %v499
        %v1180 = vadd.f32 %v710, %v500
        %v1181 = vadd.f32 %v706, %v501
        %v1182 = vadd.f32 %v710, %v502
        %v1183 = vadd.f32 %v714, %v471
        %v1184 = vadd.f32 %v718, %v472
        %v1185 = vadd.f32 %v714, %v473
        %v1186 = vadd.f32 %v718, %v474
        %v1187 = vadd.f32 %v714, %v475
        %v1188 = vadd.f32 %v718, %v476
        %v1189 = vadd.f32 %v714, %v477
        %v1190 = vadd.f32 %v718, %v478
        %v1191 = vadd.f32 %v714, %v479
        %v1192 = vadd.f32 %v718, %v480
        %v1193 = vadd.f32 %v714, %v481
        %v1194 = vadd.f32 %v718, %v482
        %v1195 = vadd.f32 %v714, %v483
        %v1196 = vadd.f32 %v718, %v484
        %v1197 = vadd.f32 %v714, %v485
        %v1198 = vadd.f32 %v718, %v486
        %v1199 = vadd.f32 %v714, %v487
        %v1200 = vadd.f32 %v718, %v488
        %v1201 = vadd.f32 %v714, %v489
        %v1202 = vadd.f32 %v718, %v490
        %v1203 = vadd.f32 %v714, %v491
        %v1204 = vadd.f32 %v718, %v492
        %v1205 = vadd.f32 %v714, %v493
        %v1206 = vadd.f32 %v718, %v494
        %v1207 = vadd.f32 %v714, %v495
        %v1208 = vadd.f32 %v718, %v496
        %v1209 = vadd.f32 %v714, %v497
        %v1210 = vadd.f32 %v718, %v498
        %v1211 = vadd.f32 %v714, %v499
        %v1212 = vadd.f32 %v718, %v500
        %v1213 = vadd.f32 %v714, %v501
        %v1214 = vadd.f32 %v718, %v502
        %v1215 = vadd.f32 %v722, %v471
        %v1216 = vadd.f32 %v726, %v472
        %v1217 = vadd.f32 %v722, %v473
        %v1218 = vadd.f32 %v726, %v474
        %v1219 = vadd.f32 %v722, %v475
        %v1220 = vadd.f32 %v726, %v476
        %v1221 = vadd.f32 %v722, %v477
        %v1222 = vadd.f32 %v726, %v478
        %v1223 = vadd.f32 %v722, %v479
        %v1224 = vadd.f32 %v726, %v480
        %v1225 = vadd.f32 %v722, %v481
        %v1226 = vadd.f32 %v726, %v482
        %v1227 = vadd.f32 %v722, %v483
        %v1228 = vadd.f32 %v726, %v484
        %v1229 = vadd.f32 %v722, %v485
        %v1230 = vadd.f32 %v726, %v486
        %v1231 = vadd.f32 %v722, %v487
        %v1232 = vadd.f32 %v726, %v488
        %v1233 = vadd.f32 %v722, %v489
        %v1234 = vadd.f32 %v726, %v490
        %v1235 = vadd.f32 %v722, %v491
        %v1236 = vadd.f32 %v726, %v492
        %v1237 = vadd.f32 %v722, %v493
        %v1238 = vadd.f32 %v726, %v494
        %v1239 = vadd.f32 %v722, %v495
        %v1240 = vadd.f32 %v726, %v496
        %v1241 = vadd.f32 %v722, %v497
        %v1242 = vadd.f32 %v726, %v498
        %v1243 = vadd.f32 %v722, %v499
        %v1244 = vadd.f32 %v726, %v500
        %v1245 = vadd.f32 %v722, %v501
        %v1246 = vadd.f32 %v726, %v502
        %v1247 = vadd.f32 %v730, %v471
        %v1248 = vadd.f32 %v734, %v472
        %v1249 = vadd.f32 %v730, %v473
        %v1250 = vadd.f32 %v734, %v474
        %v1251 = vadd.f32 %v730, %v475
        %v1252 = vadd.f32 %v734, %v476
        %v1253 = vadd.f32 %v730, %v477
        %v1254 = vadd.f32 %v734, %v478
        %v1255 = vadd.f32 %v730, %v479
        %v1256 = vadd.f32 %v734, %v480
        %v1257 = vadd.f32 %v730, %v481
        %v1258 = vadd.f32 %v734, %v482
        %v1259 = vadd.f32 %v730, %v483
        %v1260 = vadd.f32 %v734, %v484
        %v1261 = vadd.f32 %v730, %v485
        %v1262 = vadd.f32 %v734, %v486
        %v1263 = vadd.f32 %v730, %v487
        %v1264 = vadd.f32 %v734, %v488
        %v1265 = vadd.f32 %v730, %v489
        %v1266 = vadd.f32 %v734, %v490
        %v1267 = vadd.f32 %v730, %v491
        %v1268 = vadd.f32 %v734, %v492
        %v1269 = vadd.f32 %v730, %v493
        %v1270 = vadd.f32 %v734, %v494
        %v1271 = vadd.f32 %v730, %v495
        %v1272 = vadd.f32 %v734, %v496
        %v1273 = vadd.f32 %v730, %v497
        %v1274 = vadd.f32 %v734, %v498
        %v1275 = vadd.f32 %v730, %v499
        %v1276 = vadd.f32 %v734, %v500
        %v1277 = vadd.f32 %v730, %v501
        %v1278 = vadd.f32 %v734, %v502
        %v1279 = vmax.f32 %v767, 0.0
        %v1280 = vmax.f32 %v768, 0.0
        %v1281 = vmax.f32 %v769, 0.0
        %v1282 = vmax.f32 %v770, 0.0
        %v1283 = vmax.f32 %v771, 0.0
        %v1284 = vmax.f32 %v772, 0.0
        %v1285 = vmax.f32 %v773, 0.0
        %v1286 = vmax.f32 %v774, 0.0
        %v1287 = vmax.f32 %v775, 0.0
        %v1288 = vmax.f32 %v776, 0.0
        %v1289 = vmax.f32 %v777, 0.0
        %v1290 = vmax.f32 %v778, 0.0
        %v1291 = vmax.f32 %v779, 0.0
        %v1292 = vmax.f32 %v780, 0.0
        %v1293 = vmax.f32 %v781, 0.0
        %v1294 = vmax.f32 %v782, 0.0
        %v1295 = vmax.f32 %v783, 0.0
        %v1296 = vmax.f32 %v784, 0.0
        %v1297 = vmax.f32 %v785, 0.0
        %v1298 = vmax.f32 %v786, 0.0
        %v1299 = vmax.f32 %v787, 0.0
        %v1300 = vmax.f32 %v788, 0.0
        %v1301 = vmax.f32 %v789, 0.0
        %v1302 = vmax.f32 %v790, 0.0
        %v1303 = vmax.f32 %v791, 0.0
        %v1304 = vmax.f32 %v792, 0.0
        %v1305 = vmax.f32 %v793, 0.0
        %v1306 = vmax.f32 %v794, 0.0
        %v1307 = vmax.f32 %v795, 0.0
        %v1308 = vmax.f32 %v796, 0.0
        %v1309 = vmax.f32 %v797, 0.0
        %v1310 = vmax.f32 %v798, 0.0
        %v1311 = vmax.f32 %v799, 0.0
        %v1312 = vmax.f32 %v800, 0.0
        %v1313 = vmax.f32 %v801, 0.0
        %v1314 = vmax.f32 %v802, 0.0
        %v1315 = vmax.f32 %v803, 0.0
        %v1316 = vmax.f32 %v804, 0.0
        %v1317 = vmax.f32 %v805, 0.0
        %v1318 = vmax.f32 %v806, 0.0
        %v1319 = vmax.f32 %v807, 0.0
        %v1320 = vmax.f32 %v808, 0.0
        %v1321 = vmax.f32 %v809, 0.0
        %v1322 = vmax.f32 %v810, 0.0
        %v1323 = vmax.f32 %v811, 0.0
        %v1324 = vmax.f32 %v812, 0.0
        %v1325 = vmax.f32 %v813, 0.0
        %v1326 = vmax.f32 %v814, 0.0
        %v1327 = vmax.f32 %v815, 0.0
        %v1328 = vmax.f32 %v816, 0.0
        %v1329 = vmax.f32 %v817, 0.0
        %v1330 = vmax.f32 %v818, 0.0
        %v1331 = vmax.f32 %v819, 0.0
        %v1332 = vmax.f32 %v820, 0.0
        %v1333 = vmax.f32 %v821, 0.0
        %v1334 = vmax.f32 %v822, 0.0
        %v1335 = vmax.f32 %v823, 0.0
        %v1336 = vmax.f32 %v824, 0.0
        %v1337 = vmax.f32 %v825, 0.0
        %v1338 = vmax.f32 %v826, 0.0
        %v1339 = vmax.f32 %v827, 0.0
        %v1340 = vmax.f32 %v828, 0.0
        %v1341 = vmax.f32 %v829, 0.0
        %v1342 = vmax.f32 %v830, 0.0
        %v1343 = vmax.f32 %v831, 0.0
        %v1344 = vmax.f32 %v832, 0.0
        %v1345 = vmax.f32 %v833, 0.0
        %v1346 = vmax.f32 %v834, 0.0
        %v1347 = vmax.f32 %v835, 0.0
        %v1348 = vmax.f32 %v836, 0.0
        %v1349 = vmax.f32 %v837, 0.0
        %v1350 = vmax.f32 %v838, 0.0
        %v1351 = vmax.f32 %v839, 0.0
        %v1352 = vmax.f32 %v840, 0.0
        %v1353 = vmax.f32 %v841, 0.0
        %v1354 = vmax.f32 %v842, 0.0
        %v1355 = vmax.f32 %v843, 0.0
        %v1356 = vmax.f32 %v844, 0.0
        %v1357 = vmax.f32 %v845, 0.0
        %v1358 = vmax.f32 %v846, 0.0
        %v1359 = vmax.f32 %v847, 0.0
        %v1360 = vmax.f32 %v848, 0.0
        %v1361 = vmax.f32 %v849, 0.0
        %v1362 = vmax.f32 %v850, 0.0
        %v1363 = vmax.f32 %v851, 0.0
        %v1364 = vmax.f32 %v852, 0.0
        %v1365 = vmax.f32 %v853, 0.0
        %v1366 = vmax.f32 %v854, 0.0
        %v1367 = vmax.f32 %v855, 0.0
        %v1368 = vmax.f32 %v856, 0.0
        %v1369 = vmax.f32 %v857, 0.0
        %v1370 = vmax.f32 %v858, 0.0
        %v1371 = vmax.f32 %v859, 0.0
        %v1372 = vmax.f32 %v860, 0.0
        %v1373 = vmax.f32 %v861, 0.0
        %v1374 = vmax.f32 %v862, 0.0
        %v1375 = vmax.f32 %v863, 0.0
        %v1376 = vmax.f32 %v864, 0.0
        %v1377 = vmax.f32 %v865, 0.0
        %v1378 = vmax.f32 %v866, 0.0
        %v1379 = vmax.f32 %v867, 0.0
        %v1380 = vmax.f32 %v868, 0.0
        %v1381 = vmax.f32 %v869, 0.0
        %v1382 = vmax.f32 %v870, 0.0
        %v1383 = vmax.f32 %v871, 0.0
        %v1384 = vmax.f32 %v872, 0.0
        %v1385 = vmax.f32 %v873, 0.0
        %v1386 = vmax.f32 %v874, 0.0
        %v1387 = vmax.f32 %v875, 0.0
        %v1388 = vmax.f32 %v876, 0.0
        %v1389 = vmax.f32 %v877, 0.0
        %v1390 = vmax.f32 %v878, 0.0
        %v1391 = vmax.f32 %v879, 0.0
        %v1392 = vmax.f32 %v880, 0.0
        %v1393 = vmax.f32 %v881, 0.0
        %v1394 = vmax.f32 %v882, 0.0
        %v1395 = vmax.f32 %v883, 0.0
        %v1396 = vmax.f32 %v884, 0.0
        %v1397 = vmax.f32 %v885, 0.0
        %v1398 = vmax.f32 %v886, 0.0
        %v1399 = vmax.f32 %v887, 0.0
        %v1400 = vmax.f32 %v888, 0.0
        %v1401 = vmax.f32 %v889, 0.0
        %v1402 = vmax.f32 %v890, 0.0
        %v1403 = vmax.f32 %v891, 0.0
        %v1404 = vmax.f32 %v892, 0.0
        %v1405 = vmax.f32 %v893, 0.0
        %v1406 = vmax.f32 %v894, 0.0
        %v1407 = vmax.f32 %v895, 0.0
        %v1408 = vmax.f32 %v896, 0.0
        %v1409 = vmax.f32 %v897, 0.0
        %v1410 = vmax.f32 %v898, 0.0
        %v1411 = vmax.f32 %v899, 0.0
        %v1412 = vmax.f32 %v900, 0.0
        %v1413 = vmax.f32 %v901, 0.0
        %v1414 = vmax.f32 %v902, 0.0
        %v1415 = vmax.f32 %v903, 0.0
        %v1416 = vmax.f32 %v904, 0.0
        %v1417 = vmax.f32 %v905, 0.0
        %v1418 = vmax.f32 %v906, 0.0
        %v1419 = vmax.f32 %v907, 0.0
        %v1420 = vmax.f32 %v908, 0.0
        %v1421 = vmax.f32 %v909, 0.0
        %v1422 = vmax.f32 %v910, 0.0
        %v1423 = vmax.f32 %v911, 0.0
        %v1424 = vmax.f32 %v912, 0.0
        %v1425 = vmax.f32 %v913, 0.0
        %v1426 = vmax.f32 %v914, 0.0
        %v1427 = vmax.f32 %v915, 0.0
        %v1428 = vmax.f32 %v916, 0.0
        %v1429 = vmax.f32 %v917, 0.0
        %v1430 = vmax.f32 %v918, 0.0
        %v1431 = vmax.f32 %v919, 0.0
        %v1432 = vmax.f32 %v920, 0.0
        %v1433 = vmax.f32 %v921, 0.0
        %v1434 = vmax.f32 %v922, 0.0
        %v1435 = vmax.f32 %v923, 0.0
        %v1436 = vmax.f32 %v924, 0.0
        %v1437 = vmax.f32 %v925, 0.0
        %v1438 = vmax.f32 %v926, 0.0
        %v1439 = vmax.f32 %v927, 0.0
        %v1440 = vmax.f32 %v928, 0.0
        %v1441 = vmax.f32 %v929, 0.0
        %v1442 = vmax.f32 %v930, 0.0
        %v1443 = vmax.f32 %v931, 0.0
        %v1444 = vmax.f32 %v932, 0.0
        %v1445 = vmax.f32 %v933, 0.0
        %v1446 = vmax.f32 %v934, 0.0
        %v1447 = vmax.f32 %v935, 0.0
        %v1448 = vmax.f32 %v936, 0.0
        %v1449 = vmax.f32 %v937, 0.0
        %v1450 = vmax.f32 %v938, 0.0
        %v1451 = vmax.f32 %v939, 0.0
        %v1452 = vmax.f32 %v940, 0.0
        %v1453 = vmax.f32 %v941, 0.0
        %v1454 = vmax.f32 %v942, 0.0
        %v1455 = vmax.f32 %v943, 0.0
        %v1456 = vmax.f32 %v944, 0.0
        %v1457 = vmax.f32 %v945, 0.0
        %v1458 = vmax.f32 %v946, 0.0
        %v1459 = vmax.f32 %v947, 0.0
        %v1460 = vmax.f32 %v948, 0.0
        %v1461 = vmax.f32 %v949, 0.0
        %v1462 = vmax.f32 %v950, 0.0
        %v1463 = vmax.f32 %v951, 0.0
        %v1464 = vmax.f32 %v952, 0.0
        %v1465 = vmax.f32 %v953, 0.0
        %v1466 = vmax.f32 %v954, 0.0
        %v1467 = vmax.f32 %v955, 0.0
        %v1468 = vmax.f32 %v956, 0.0
        %v1469 = vmax.f32 %v957, 0.0
        %v1470 = vmax.f32 %v958, 0.0
        %v1471 = vmax.f32 %v959, 0.0
        %v1472 = vmax.f32 %v960, 0.0
        %v1473 = vmax.f32 %v961, 0.0
        %v1474 = vmax.f32 %v962, 0.0
        %v1475 = vmax.f32 %v963, 0.0
        %v1476 = vmax.f32 %v964, 0.0
        %v1477 = vmax.f32 %v965, 0.0
        %v1478 = vmax.f32 %v966, 0.0
        %v1479 = vmax.f32 %v967, 0.0
        %v1480 = vmax.f32 %v968, 0.0
        %v1481 = vmax.f32 %v969, 0.0
        %v1482 = vmax.f32 %v970, 0.0
        %v1483 = vmax.f32 %v971, 0.0
        %v1484 = vmax.f32 %v972, 0.0
        %v1485 = vmax.f32 %v973, 0.0
        %v1486 = vmax.f32 %v974, 0.0
        %v1487 = vmax.f32 %v975, 0.0
        %v1488 = vmax.f32 %v976, 0.0
        %v1489 = vmax.f32 %v977, 0.0
        %v1490 = vmax.f32 %v978, 0.0
        %v1491 = vmax.f32 %v979, 0.0
        %v1492 = vmax.f32 %v980, 0.0
        %v1493 = vmax.f32 %v981, 0.0
        %v1494 = vmax.f32 %v982, 0.0
        %v1495 = vmax.f32 %v983, 0.0
        %v1496 = vmax.f32 %v984, 0.0
        %v1497 = vmax.f32 %v985, 0.0
        %v1498 = vmax.f32 %v986, 0.0
        %v1499 = vmax.f32 %v987, 0.0
        %v1500 = vmax.f32 %v988, 0.0
        %v1501 = vmax.f32 %v989, 0.0
        %v1502 = vmax.f32 %v990, 0.0
        %v1503 = vmax.f32 %v991, 0.0
        %v1504 = vmax.f32 %v992, 0.0
        %v1505 = vmax.f32 %v993, 0.0
        %v1506 = vmax.f32 %v994, 0.0
        %v1507 = vmax.f32 %v995, 0.0
        %v1508 = vmax.f32 %v996, 0.0
        %v1509 = vmax.f32 %v997, 0.0
        %v1510 = vmax.f32 %v998, 0.0
        %v1511 = vmax.f32 %v999, 0.0
        %v1512 = vmax.f32 %v1000, 0.0
        %v1513 = vmax.f32 %v1001, 0.0
        %v1514 = vmax.f32 %v1002, 0.0
        %v1515 = vmax.f32 %v1003, 0.0
        %v1516 = vmax.f32 %v1004, 0.0
        %v1517 = vmax.f32 %v1005, 0.0
        %v1518 = vmax.f32 %v1006, 0.0
        %v1519 = vmax.f32 %v1007, 0.0
        %v1520 = vmax.f32 %v1008, 0.0
        %v1521 = vmax.f32 %v1009, 0.0
        %v1522 = vmax.f32 %v1010, 0.0
        %v1523 = vmax.f32 %v1011, 0.0
        %v1524 = vmax.f32 %v1012, 0.0
        %v1525 = vmax.f32 %v1013, 0.0
        %v1526 = vmax.f32 %v1014, 0.0
        %v1527 = vmax.f32 %v1015, 0.0
        %v1528 = vmax.f32 %v1016, 0.0
        %v1529 = vmax.f32 %v1017, 0.0
        %v1530 = vmax.f32 %v1018, 0.0
        %v1531 = vmax.f32 %v1019, 0.0
        %v1532 = vmax.f32 %v1020, 0.0
        %v1533 = vmax.f32 %v1021, 0.0
        %v1534 = vmax.f32 %v1022, 0.0
        %v1535 = vmax.f32 %v1023, 0.0
        %v1536 = vmax.f32 %v1024, 0.0
        %v1537 = vmax.f32 %v1025, 0.0
        %v1538 = vmax.f32 %v1026, 0.0
        %v1539 = vmax.f32 %v1027, 0.0
        %v1540 = vmax.f32 %v1028, 0.0
        %v1541 = vmax.f32 %v1029, 0.0
        %v1542 = vmax.f32 %v1030, 0.0
        %v1543 = vmax.f32 %v1031, 0.0
        %v1544 = vmax.f32 %v1032, 0.0
        %v1545 = vmax.f32 %v1033, 0.0
        %v1546 = vmax.f32 %v1034, 0.0
        %v1547 = vmax.f32 %v1035, 0.0
        %v1548 = vmax.f32 %v1036, 0.0
        %v1549 = vmax.f32 %v1037, 0.0
        %v1550 = vmax.f32 %v1038, 0.0
        %v1551 = vmax.f32 %v1039, 0.0
        %v1552 = vmax.f32 %v1040, 0.0
        %v1553 = vmax.f32 %v1041, 0.0
        %v1554 = vmax.f32 %v1042, 0.0
        %v1555 = vmax.f32 %v1043, 0.0
        %v1556 = vmax.f32 %v1044, 0.0
        %v1557 = vmax.f32 %v1045, 0.0
        %v1558 = vmax.f32 %v1046, 0.0
        %v1559 = vmax.f32 %v1047, 0.0
        %v1560 = vmax.f32 %v1048, 0.0
        %v1561 = vmax.f32 %v1049, 0.0
        %v1562 = vmax.f32 %v1050, 0.0
        %v1563 = vmax.f32 %v1051, 0.0
        %v1564 = vmax.f32 %v1052, 0.0
        %v1565 = vmax.f32 %v1053, 0.0
        %v1566 = vmax.f32 %v1054, 0.0
        %v1567 = vmax.f32 %v1055, 0.0
        %v1568 = vmax.f32 %v1056, 0.0
        %v1569 = vmax.f32 %v1057, 0.0
        %v1570 = vmax.f32 %v1058, 0.0
        %v1571 = vmax.f32 %v1059, 0.0
        %v1572 = vmax.f32 %v1060, 0.0
        %v1573 = vmax.f32 %v1061, 0.0
        %v1574 = vmax.f32 %v1062, 0.0
        %v1575 = vmax.f32 %v1063, 0.0
        %v1576 = vmax.f32 %v1064, 0.0
        %v1577 = vmax.f32 %v1065, 0.0
        %v1578 = vmax.f32 %v1066, 0.0
        %v1579 = vmax.f32 %v1067, 0.0
        %v1580 = vmax.f32 %v1068, 0.0
        %v1581 = vmax.f32 %v1069, 0.0
        %v1582 = vmax.f32 %v1070, 0.0
        %v1583 = vmax.f32 %v1071, 0.0
        %v1584 = vmax.f32 %v1072, 0.0
        %v1585 = vmax.f32 %v1073, 0.0
        %v1586 = vmax.f32 %v1074, 0.0
        %v1587 = vmax.f32 %v1075, 0.0
        %v1588 = vmax.f32 %v1076, 0.0
        %v1589 = vmax.f32 %v1077, 0.0
        %v1590 = vmax.f32 %v1078, 0.0
        %v1591 = vmax.f32 %v1079, 0.0
        %v1592 = vmax.f32 %v1080, 0.0
        %v1593 = vmax.f32 %v1081, 0.0
        %v1594 = vmax.f32 %v1082, 0.0
        %v1595 = vmax.f32 %v1083, 0.0
        %v1596 = vmax.f32 %v1084, 0.0
        %v1597 = vmax.f32 %v1085, 0.0
        %v1598 = vmax.f32 %v1086, 0.0
        %v1599 = vmax.f32 %v1087, 0.0
        %v1600 = vmax.f32 %v1088, 0.0
        %v1601 = vmax.f32 %v1089, 0.0
        %v1602 = vmax.f32 %v1090, 0.0
        %v1603 = vmax.f32 %v1091, 0.0
        %v1604 = vmax.f32 %v1092, 0.0
        %v1605 = vmax.f32 %v1093, 0.0
        %v1606 = vmax.f32 %v1094, 0.0
        %v1607 = vmax.f32 %v1095, 0.0
        %v1608 = vmax.f32 %v1096, 0.0
        %v1609 = vmax.f32 %v1097, 0.0
        %v1610 = vmax.f32 %v1098, 0.0
        %v1611 = vmax.f32 %v1099, 0.0
        %v1612 = vmax.f32 %v1100, 0.0
        %v1613 = vmax.f32 %v1101, 0.0
        %v1614 = vmax.f32 %v1102, 0.0
        %v1615 = vmax.f32 %v1103, 0.0
        %v1616 = vmax.f32 %v1104, 0.0
        %v1617 = vmax.f32 %v1105, 0.0
        %v1618 = vmax.f32 %v1106, 0.0
        %v1619 = vmax.f32 %v1107, 0.0
        %v1620 = vmax.f32 %v1108, 0.0
        %v1621 = vmax.f32 %v1109, 0.0
        %v1622 = vmax.f32 %v1110, 0.0
        %v1623 = vmax.f32 %v1111, 0.0
        %v1624 = vmax.f32 %v1112, 0.0
        %v1625 = vmax.f32 %v1113, 0.0
        %v1626 = vmax.f32 %v1114, 0.0
        %v1627 = vmax.f32 %v1115, 0.0
        %v1628 = vmax.f32 %v1116, 0.0
        %v1629 = vmax.f32 %v1117, 0.0
        %v1630 = vmax.f32 %v1118, 0.0
        %v1631 = vmax.f32 %v1119, 0.0
        %v1632 = vmax.f32 %v1120, 0.0
        %v1633 = vmax.f32 %v1121, 0.0
        %v1634 = vmax.f32 %v1122, 0.0
        %v1635 = vmax.f32 %v1123, 0.0
        %v1636 = vmax.f32 %v1124, 0.0
        %v1637 = vmax.f32 %v1125, 0.0
        %v1638 = vmax.f32 %v1126, 0.0
        %v1639 = vmax.f32 %v1127, 0.0
        %v1640 = vmax.f32 %v1128, 0.0
        %v1641 = vmax.f32 %v1129, 0.0
        %v1642 = vmax.f32 %v1130, 0.0
        %v1643 = vmax.f32 %v1131, 0.0
        %v1644 = vmax.f32 %v1132, 0.0
        %v1645 = vmax.f32 %v1133, 0.0
        %v1646 = vmax.f32 %v1134, 0.0
        %v1647 = vmax.f32 %v1135, 0.0
        %v1648 = vmax.f32 %v1136, 0.0
        %v1649 = vmax.f32 %v1137, 0.0
        %v1650 = vmax.f32 %v1138, 0.0
        %v1651 = vmax.f32 %v1139, 0.0
        %v1652 = vmax.f32 %v1140, 0.0
        %v1653 = vmax.f32 %v1141, 0.0
        %v1654 = vmax.f32 %v1142, 0.0
        %v1655 = vmax.f32 %v1143, 0.0
        %v1656 = vmax.f32 %v1144, 0.0
        %v1657 = vmax.f32 %v1145, 0.0
        %v1658 = vmax.f32 %v1146, 0.0
        %v1659 = vmax.f32 %v1147, 0.0
        %v1660 = vmax.f32 %v1148, 0.0
        %v1661 = vmax.f32 %v1149, 0.0
        %v1662 = vmax.f32 %v1150, 0.0
        %v1663 = vmax.f32 %v1151, 0.0
        %v1664 = vmax.f32 %v1152, 0.0
        %v1665 = vmax.f32 %v1153, 0.0
        %v1666 = vmax.f32 %v1154, 0.0
        %v1667 = vmax.f32 %v1155, 0.0
        %v1668 = vmax.f32 %v1156, 0.0
        %v1669 = vmax.f32 %v1157, 0.0
        %v1670 = vmax.f32 %v1158, 0.0
        %v1671 = vmax.f32 %v1159, 0.0
        %v1672 = vmax.f32 %v1160, 0.0
        %v1673 = vmax.f32 %v1161, 0.0
        %v1674 = vmax.f32 %v1162, 0.0
        %v1675 = vmax.f32 %v1163, 0.0
        %v1676 = vmax.f32 %v1164, 0.0
        %v1677 = vmax.f32 %v1165, 0.0
        %v1678 = vmax.f32 %v1166, 0.0
        %v1679 = vmax.f32 %v1167, 0.0
        %v1680 = vmax.f32 %v1168, 0.0
        %v1681 = vmax.f32 %v1169, 0.0
        %v1682 = vmax.f32 %v1170, 0.0
        %v1683 = vmax.f32 %v1171, 0.0
        %v1684 = vmax.f32 %v1172, 0.0
        %v1685 = vmax.f32 %v1173, 0.0
        %v1686 = vmax.f32 %v1174, 0.0
        %v1687 = vmax.f32 %v1175, 0.0
        %v1688 = vmax.f32 %v1176, 0.0
        %v1689 = vmax.f32 %v1177, 0.0
        %v1690 = vmax.f32 %v1178, 0.0
        %v1691 = vmax.f32 %v1179, 0.0
        %v1692 = vmax.f32 %v1180, 0.0
        %v1693 = vmax.f32 %v1181, 0.0
        %v1694 = vmax.f32 %v1182, 0.0
        %v1695 = vmax.f32 %v1183, 0.0
        %v1696 = vmax.f32 %v1184, 0.0
        %v1697 = vmax.f32 %v1185, 0.0
        %v1698 = vmax.f32 %v1186, 0.0
        %v1699 = vmax.f32 %v1187, 0.0
        %v1700 = vmax.f32 %v1188, 0.0
        %v1701 = vmax.f32 %v1189, 0.0
        %v1702 = vmax.f32 %v1190, 0.0
        %v1703 = vmax.f32 %v1191, 0.0
        %v1704 = vmax.f32 %v1192, 0.0
        %v1705 = vmax.f32 %v1193, 0.0
        %v1706 = vmax.f32 %v1194, 0.0
        %v1707 = vmax.f32 %v1195, 0.0
        %v1708 = vmax.f32 %v1196, 0.0
        %v1709 = vmax.f32 %v1197, 0.0
        %v1710 = vmax.f32 %v1198, 0.0
        %v1711 = vmax.f32 %v1199, 0.0
        %v1712 = vmax.f32 %v1200, 0.0
        %v1713 = vmax.f32 %v1201, 0.0
        %v1714 = vmax.f32 %v1202, 0.0
        %v1715 = vmax.f32 %v1203, 0.0
        %v1716 = vmax.f32 %v1204, 0.0
        %v1717 = vmax.f32 %v1205, 0.0
        %v1718 = vmax.f32 %v1206, 0.0
        %v1719 = vmax.f32 %v1207, 0.0
        %v1720 = vmax.f32 %v1208, 0.0
        %v1721 = vmax.f32 %v1209, 0.0
        %v1722 = vmax.f32 %v1210, 0.0
        %v1723 = vmax.f32 %v1211, 0.0
        %v1724 = vmax.f32 %v1212, 0.0
        %v1725 = vmax.f32 %v1213, 0.0
        %v1726 = vmax.f32 %v1214, 0.0
        %v1727 = vmax.f32 %v1215, 0.0
        %v1728 = vmax.f32 %v1216, 0.0
        %v1729 = vmax.f32 %v1217, 0.0
        %v1730 = vmax.f32 %v1218, 0.0
        %v1731 = vmax.f32 %v1219, 0.0
        %v1732 = vmax.f32 %v1220, 0.0
        %v1733 = vmax.f32 %v1221, 0.0
        %v1734 = vmax.f32 %v1222, 0.0
        %v1735 = vmax.f32 %v1223, 0.0
        %v1736 = vmax.f32 %v1224, 0.0
        %v1737 = vmax.f32 %v1225, 0.0
        %v1738 = vmax.f32 %v1226, 0.0
        %v1739 = vmax.f32 %v1227, 0.0
        %v1740 = vmax.f32 %v1228, 0.0
        %v1741 = vmax.f32 %v1229, 0.0
        %v1742 = vmax.f32 %v1230, 0.0
        %v1743 = vmax.f32 %v1231, 0.0
        %v1744 = vmax.f32 %v1232, 0.0
        %v1745 = vmax.f32 %v1233, 0.0
        %v1746 = vmax.f32 %v1234, 0.0
        %v1747 = vmax.f32 %v1235, 0.0
        %v1748 = vmax.f32 %v1236, 0.0
        %v1749 = vmax.f32 %v1237, 0.0
        %v1750 = vmax.f32 %v1238, 0.0
        %v1751 = vmax.f32 %v1239, 0.0
        %v1752 = vmax.f32 %v1240, 0.0
        %v1753 = vmax.f32 %v1241, 0.0
        %v1754 = vmax.f32 %v1242, 0.0
        %v1755 = vmax.f32 %v1243, 0.0
        %v1756 = vmax.f32 %v1244, 0.0
        %v1757 = vmax.f32 %v1245, 0.0
        %v1758 = vmax.f32 %v1246, 0.0
        %v1759 = vmax.f32 %v1247, 0.0
        %v1760 = vmax.f32 %v1248, 0.0
        %v1761 = vmax.f32 %v1249, 0.0
        %v1762 = vmax.f32 %v1250, 0.0
        %v1763 = vmax.f32 %v1251, 0.0
        %v1764 = vmax.f32 %v1252, 0.0
        %v1765 = vmax.f32 %v1253, 0.0
        %v1766 = vmax.f32 %v1254, 0.0
        %v1767 = vmax.f32 %v1255, 0.0
        %v1768 = vmax.f32 %v1256, 0.0
        %v1769 = vmax.f32 %v1257, 0.0
        %v1770 = vmax.f32 %v1258, 0.0
        %v1771 = vmax.f32 %v1259, 0.0
        %v1772 = vmax.f32 %v1260, 0.0
        %v1773 = vmax.f32 %v1261, 0.0
        %v1774 = vmax.f32 %v1262, 0.0
        %v1775 = vmax.f32 %v1263, 0.0
        %v1776 = vmax.f32 %v1264, 0.0
        %v1777 = vmax.f32 %v1265, 0.0
        %v1778 = vmax.f32 %v1266, 0.0
        %v1779 = vmax.f32 %v1267, 0.0
        %v1780 = vmax.f32 %v1268, 0.0
        %v1781 = vmax.f32 %v1269, 0.0
        %v1782 = vmax.f32 %v1270, 0.0
        %v1783 = vmax.f32 %v1271, 0.0
        %v1784 = vmax.f32 %v1272, 0.0
        %v1785 = vmax.f32 %v1273, 0.0
        %v1786 = vmax.f32 %v1274, 0.0
        %v1787 = vmax.f32 %v1275, 0.0
        %v1788 = vmax.f32 %v1276, 0.0
        %v1789 = vmax.f32 %v1277, 0.0
        %v1790 = vmax.f32 %v1278, 0.0
        %v1791 = vld [vmem:[#allocation8] sm:$0xff]
        %v1792 = vld [vmem:[#allocation8 + $0x8] sm:$0xff]
        %v1793 = vld [vmem:[#allocation8 + $0x10] sm:$0xff]
        %v1794 = vld [vmem:[#allocation8 + $0x18] sm:$0xff]
        %v1795 = vld [vmem:[#allocation8 + $0x20] sm:$0xff]
        %v1796 = vld [vmem:[#allocation8 + $0x28] sm:$0xff]
        %v1797 = vld [vmem:[#allocation8 + $0x30] sm:$0xff]
        %v1798 = vld [vmem:[#allocation8 + $0x38] sm:$0xff]
        %v1799 = vld [vmem:[#allocation8 + $0x40] sm:$0xff]
        %v1800 = vld [vmem:[#allocation8 + $0x48] sm:$0xff]
        %v1801 = vld [vmem:[#allocation8 + $0x50] sm:$0xff]
        %v1802 = vld [vmem:[#allocation8 + $0x58] sm:$0xff]
        %v1803 = vld [vmem:[#allocation8 + $0x60] sm:$0xff]
        %v1804 = vld [vmem:[#allocation8 + $0x68] sm:$0xff]
        %v1805 = vld [vmem:[#allocation8 + $0x70] sm:$0xff]
        %v1806 = vld [vmem:[#allocation8 + $0x78] sm:$0xff]
        %v1807 = vld [vmem:[#allocation8 + $0x80] sm:$0xff]
        %v1808 = vld [vmem:[#allocation8 + $0x88] sm:$0xff]
        %v1809 = vld [vmem:[#allocation8 + $0x90] sm:$0xff]
        %v1810 = vld [vmem:[#allocation8 + $0x98] sm:$0xff]
        %v1811 = vld [vmem:[#allocation8 + $0xa0] sm:$0xff]
        %v1812 = vld [vmem:[#allocation8 + $0xa8] sm:$0xff]
        %v1813 = vld [vmem:[#allocation8 + $0xb0] sm:$0xff]
        %v1814 = vld [vmem:[#allocation8 + $0xb8] sm:$0xff]
        %v1815 = vld [vmem:[#allocation8 + $0xc0] sm:$0xff]
        %v1816 = vld [vmem:[#allocation8 + $0xc8] sm:$0xff]
        %v1817 = vld [vmem:[#allocation8 + $0xd0] sm:$0xff]
        %v1818 = vld [vmem:[#allocation8 + $0xd8] sm:$0xff]
        %v1819 = vld [vmem:[#allocation8 + $0xe0] sm:$0xff]
        %v1820 = vld [vmem:[#allocation8 + $0xe8] sm:$0xff]
        %v1821 = vld [vmem:[#allocation8 + $0xf0] sm:$0xff]
        %v1822 = vld [vmem:[#allocation8 + $0xf8] sm:$0xff]
        %v1823 = vld [vmem:[#allocation9] sm:$0x1]
        %v1825 = vlaneseq
        %v1826 = vshrl.u32 %v1825, 7
        %v1827 = vsub.s32 0, %v1826
        %v1828 = vrot.slane %v1823, %v1827
        %1830 = vmatprep.subr.mxu0 0.0
        %1831 = vmatpush1.msra.mxu0 %v1791
        %1832 = vmatprep.subr.mxu0 0.0
        %1833 = vmatpush1.msra.mxu0 %v1792
        %1834 = vmatprep.subr.mxu0 0.0
        %1835 = vmatpush1.msra.mxu0 %v1793
        %1836 = vmatprep.subr.mxu0 0.0
        %1837 = vmatpush1.msra.mxu0 %v1794
        %1838 = vmatprep.subr.mxu0 0.0
        %1839 = vmatpush1.msra.mxu0 %v1795
        %1840 = vmatprep.subr.mxu0 0.0
        %1841 = vmatpush1.msra.mxu0 %v1796
        %1842 = vmatprep.subr.mxu0 0.0
        %1843 = vmatpush1.msra.mxu0 %v1797
        %1844 = vmatprep.subr.mxu0 0.0
        %1845 = vmatpush1.msra.mxu0 %v1798
        %1846 = vmatprep.subr.mxu0 0.0
        %1847 = vmatpush1.msra.mxu0 %v1799
        %1848 = vmatprep.subr.mxu0 0.0
        %1849 = vmatpush1.msra.mxu0 %v1800
        %1850 = vmatprep.subr.mxu0 0.0
        %1851 = vmatpush1.msra.mxu0 %v1801
        %1852 = vmatprep.subr.mxu0 0.0
        %1853 = vmatpush1.msra.mxu0 %v1802
        %1854 = vmatprep.subr.mxu0 0.0
        %1855 = vmatpush1.msra.mxu0 %v1803
        %1856 = vmatprep.subr.mxu0 0.0
        %1857 = vmatpush1.msra.mxu0 %v1804
        %1858 = vmatprep.subr.mxu0 0.0
        %1859 = vmatpush1.msra.mxu0 %v1805
        %1860 = vmatprep.subr.mxu0 0.0
        %1861 = vmatpush1.msra.mxu0 %v1806
        %1862 = vmatprep.subr.mxu0 0.0
        %1863 = vmatpush1.msra.mxu0 %v1807
        %1864 = vmatprep.subr.mxu0 0.0
        %1865 = vmatpush1.msra.mxu0 %v1808
        %1866 = vmatprep.subr.mxu0 0.0
        %1867 = vmatpush1.msra.mxu0 %v1809
        %1868 = vmatprep.subr.mxu0 0.0
        %1869 = vmatpush1.msra.mxu0 %v1810
        %1870 = vmatprep.subr.mxu0 0.0
        %1871 = vmatpush1.msra.mxu0 %v1811
        %1872 = vmatprep.subr.mxu0 0.0
        %1873 = vmatpush1.msra.mxu0 %v1812
        %1874 = vmatprep.subr.mxu0 0.0
        %1875 = vmatpush1.msra.mxu0 %v1813
        %1876 = vmatprep.subr.mxu0 0.0
        %1877 = vmatpush1.msra.mxu0 %v1814
        %1878 = vmatprep.subr.mxu0 0.0
        %1879 = vmatpush1.msra.mxu0 %v1815
        %1880 = vmatprep.subr.mxu0 0.0
        %1881 = vmatpush1.msra.mxu0 %v1816
        %1882 = vmatprep.subr.mxu0 0.0
        %1883 = vmatpush1.msra.mxu0 %v1817
        %1884 = vmatprep.subr.mxu0 0.0
        %1885 = vmatpush1.msra.mxu0 %v1818
        %1886 = vmatprep.subr.mxu0 0.0
        %1887 = vmatpush1.msra.mxu0 %v1819
        %1888 = vmatprep.subr.mxu0 0.0
        %1889 = vmatpush1.msra.mxu0 %v1820
        %1890 = vmatprep.subr.mxu0 0.0
        %1891 = vmatpush1.msra.mxu0 %v1821
        %1892 = vmatprep.subr.mxu0 0.0
        %1893 = vmatpush1.msra.mxu0 %v1822
        %1894 = vmatprep.mubr.f32.mxu0 %v1280
        %1895 = vmatmul.mubr.f32.gmra.mrb[0].mxu0 %v1279
        %v1896 = vpop.f32.mrb[0].mxu0
        %v1897 = vadd.f32 %v1828, %v1896
        %v1898 = vpop.f32.mrb[0].mxu0
        %1899 = vmatprep.mubr.f32.mxu0 %v1282
        %1900 = vmatmul.mubr.f32.gmra.mrb[0].mxu0 %v1281
        %v1901 = vpop.f32.mrb[0].mxu0
        %v1902 = vadd.f32 %v1828, %v1901
        %v1903 = vpop.f32.mrb[0].mxu0
        %1904 = vmatprep.mubr.f32.mxu0 %v1284
        %1905 = vmatmul.mubr.f32.gmra.mrb[0].mxu0 %v1283
        %v1906 = vpop.f32.mrb[0].mxu0
        %v1907 = vadd.f32 %v1828, %v1906
        %v1908 = vpop.f32.mrb[0].mxu0
        %1909 = vmatprep.mubr.f32.mxu0 %v1286
        %1910 = vmatmul.mubr.f32.gmra.mrb[0].mxu0 %v1285
        %v1911 = vpop.f32.mrb[0].mxu0
        %v1912 = vadd.f32 %v1828, %v1911
        %v1913 = vpop.f32.mrb[0].mxu0
        %1914 = vmatprep.mubr.f32.mxu0 %v1288
        %1915 = vmatmul.mubr.f32.gmra.mrb[0].mxu0 %v1287
        %v1916 = vpop.f32.mrb[0].mxu0
        %v1917 = vadd.f32 %v1828, %v1916
        %v1918 = vpop.f32.mrb[0].mxu0
        %1919 = vmatprep.mubr.f32.mxu0 %v1290
        %1920 = vmatmul.mubr.f32.gmra.mrb[0].mxu0 %v1289
        %v1921 = vpop.f32.mrb[0].mxu0
        %v1922 = vadd.f32 %v1828, %v1921
        %v1923 = vpop.f32.mrb[0].mxu0
        %1924 = vmatprep.mubr.f32.mxu0 %v1292
        %1925 = vmatmul.mubr.f32.gmra.mrb[0].mxu0 %v1291
        %v1926 = vpop.f32.mrb[0].mxu0
        %v1927 = vadd.f32 %v1828, %v1926
        %v1928 = vpop.f32.mrb[0].mxu0
        %1929 = vmatprep.mubr.f32.mxu0 %v1294
        %1930 = vmatmul.mubr.f32.gmra.mrb[0].mxu0 %v1293
        %v1931 = vpop.f32.mrb[0].mxu0
        %v1932 = vadd.f32 %v1828, %v1931
        %v1933 = vpop.f32.mrb[0].mxu0
        %1934 = vmatprep.mubr.f32.mxu0 %v1296
        %1935 = vmatmul.mubr.f32.gmra.mrb[0].mxu0 %v1295
        %v1936 = vpop.f32.mrb[0].mxu0
        %v1937 = vadd.f32 %v1828, %v1936
        %v1938 = vpop.f32.mrb[0].mxu0
        %1939 = vmatprep.mubr.f32.mxu0 %v1298
        %1940 = vmatmul.mubr.f32.gmra.mrb[0].mxu0 %v1297
        %v1941 = vpop.f32.mrb[0].mxu0
        %v1942 = vadd.f32 %v1828, %v1941
        %v1943 = vpop.f32.mrb[0].mxu0
        %1944 = vmatprep.mubr.f32.mxu0 %v1300
        %1945 = vmatmul.mubr.f32.gmra.mrb[0].mxu0 %v1299
        %v1946 = vpop.f32.mrb[0].mxu0
        %v1947 = vadd.f32 %v1828, %v1946
        %v1948 = vpop.f32.mrb[0].mxu0
        %1949 = vmatprep.mubr.f32.mxu0 %v1302
        %1950 = vmatmul.mubr.f32.gmra.mrb[0].mxu0 %v1301
        %v1951 = vpop.f32.mrb[0].mxu0
        %v1952 = vadd.f32 %v1828, %v1951
        %v1953 = vpop.f32.mrb[0].mxu0
        %1954 = vmatprep.mubr.f32.mxu0 %v1304
        %1955 = vmatmul.mubr.f32.gmra.mrb[0].mxu0 %v1303
        %v1956 = vpop.f32.mrb[0].mxu0
        %v1957 = vadd.f32 %v1828, %v1956
        %v1958 = vpop.f32.mrb[0].mxu0
        %1959 = vmatprep.mubr.f32.mxu0 %v1306
        %1960 = vmatmul.mubr.f32.gmra.mrb[0].mxu0 %v1305
        %v1961 = vpop.f32.mrb[0].mxu0
        %v1962 = vadd.f32 %v1828, %v1961
        %v1963 = vpop.f32.mrb[0].mxu0
        %1964 = vmatprep.mubr.f32.mxu0 %v1308
        %1965 = vmatmul.mubr.f32.gmra.mrb[0].mxu0 %v1307
        %v1966 = vpop.f32.mrb[0].mxu0
        %v1967 = vadd.f32 %v1828, %v1966
        %v1968 = vpop.f32.mrb[0].mxu0
        %1969 = vmatprep.mubr.f32.mxu0 %v1310
        %1970 = vmatmul.mubr.f32.gmra.mrb[0].mxu0 %v1309
        %v1971 = vpop.f32.mrb[0].mxu0
        %v1972 = vadd.f32 %v1828, %v1971
        %v1973 = vpop.f32.mrb[0].mxu0
        %1974 = vmatprep.mubr.f32.mxu0 %v1312
        %1975 = vmatmul.mubr.f32.gmra.mrb[0].mxu0 %v1311
        %v1976 = vpop.f32.mrb[0].mxu0
        %v1977 = vadd.f32 %v1828, %v1976
        %v1978 = vpop.f32.mrb[0].mxu0
        %1979 = vmatprep.mubr.f32.mxu0 %v1314
        %1980 = vmatmul.mubr.f32.gmra.mrb[0].mxu0 %v1313
        %v1981 = vpop.f32.mrb[0].mxu0
        %v1982 = vadd.f32 %v1828, %v1981
        %v1983 = vpop.f32.mrb[0].mxu0
        %1984 = vmatprep.mubr.f32.mxu0 %v1316
        %1985 = vmatmul.mubr.f32.gmra.mrb[0].mxu0 %v1315
        %v1986 = vpop.f32.mrb[0].mxu0
        %v1987 = vadd.f32 %v1828, %v1986
        %v1988 = vpop.f32.mrb[0].mxu0
        %1989 = vmatprep.mubr.f32.mxu0 %v1318
        %1990 = vmatmul.mubr.f32.gmra.mrb[0].mxu0 %v1317
        %v1991 = vpop.f32.mrb[0].mxu0
        %v1992 = vadd.f32 %v1828, %v1991
        %v1993 = vpop.f32.mrb[0].mxu0
        %1994 = vmatprep.mubr.f32.mxu0 %v1320
        %1995 = vmatmul.mubr.f32.gmra.mrb[0].mxu0 %v1319
        %v1996 = vpop.f32.mrb[0].mxu0
        %v1997 = vadd.f32 %v1828, %v1996
        %v1998 = vpop.f32.mrb[0].mxu0
        %1999 = vmatprep.mubr.f32.mxu0 %v1322
        %2000 = vmatmul.mubr.f32.gmra.mrb[0].mxu0 %v1321
        %v2001 = vpop.f32.mrb[0].mxu0
        %v2002 = vadd.f32 %v1828, %v2001
        %v2003 = vpop.f32.mrb[0].mxu0
        %2004 = vmatprep.mubr.f32.mxu0 %v1324
        %2005 = vmatmul.mubr.f32.gmra.mrb[0].mxu0 %v1323
        %v2006 = vpop.f32.mrb[0].mxu0
        %v2007 = vadd.f32 %v1828, %v2006
        %v2008 = vpop.f32.mrb[0].mxu0
        %2009 = vmatprep.mubr.f32.mxu0 %v1326
        %2010 = vmatmul.mubr.f32.gmra.mrb[0].mxu0 %v1325
        %v2011 = vpop.f32.mrb[0].mxu0
        %v2012 = vadd.f32 %v1828, %v2011
        %v2013 = vpop.f32.mrb[0].mxu0
        %2014 = vmatprep.mubr.f32.mxu0 %v1328
        %2015 = vmatmul.mubr.f32.gmra.mrb[0].mxu0 %v1327
        %v2016 = vpop.f32.mrb[0].mxu0
        %v2017 = vadd.f32 %v1828, %v2016
        %v2018 = vpop.f32.mrb[0].mxu0
        %2019 = vmatprep.mubr.f32.mxu0 %v1330
        %2020 = vmatmul.mubr.f32.gmra.mrb[0].mxu0 %v1329
        %v2021 = vpop.f32.mrb[0].mxu0
        %v2022 = vadd.f32 %v1828, %v2021
        %v2023 = vpop.f32.mrb[0].mxu0
        %2024 = vmatprep.mubr.f32.mxu0 %v1332
        %2025 = vmatmul.mubr.f32.gmra.mrb[0].mxu0 %v1331
        %v2026 = vpop.f32.mrb[0].mxu0
        %v2027 = vadd.f32 %v1828, %v2026
        %v2028 = vpop.f32.mrb[0].mxu0
        %2029 = vmatprep.mubr.f32.mxu0 %v1334
        %2030 = vmatmul.mubr.f32.gmra.mrb[0].mxu0 %v1333
        %v2031 = vpop.f32.mrb[0].mxu0
        %v2032 = vadd.f32 %v1828, %v2031
        %v2033 = vpop.f32.mrb[0].mxu0
        %2034 = vmatprep.mubr.f32.mxu0 %v1336
        %2035 = vmatmul.mubr.f32.gmra.mrb[0].mxu0 %v1335
        %v2036 = vpop.f32.mrb[0].mxu0
        %v2037 = vadd.f32 %v1828, %v2036
        %v2038 = vpop.f32.mrb[0].mxu0
        %2039 = vmatprep.mubr.f32.mxu0 %v1338
        %2040 = vmatmul.mubr.f32.gmra.mrb[0].mxu0 %v1337
        %v2041 = vpop.f32.mrb[0].mxu0
        %v2042 = vadd.f32 %v1828, %v2041
        %v2043 = vpop.f32.mrb[0].mxu0
        %2044 = vmatprep.mubr.f32.mxu0 %v1340
        %2045 = vmatmul.mubr.f32.gmra.mrb[0].mxu0 %v1339
        %v2046 = vpop.f32.mrb[0].mxu0
        %v2047 = vadd.f32 %v1828, %v2046
        %v2048 = vpop.f32.mrb[0].mxu0
        %2049 = vmatprep.mubr.f32.mxu0 %v1342
        %2050 = vmatmul.mubr.f32.gmra.mrb[0].mxu0 %v1341
        %v2051 = vpop.f32.mrb[0].mxu0
        %v2052 = vadd.f32 %v1828, %v2051
        %v2053 = vpop.f32.mrb[0].mxu0
        %2054 = vmatprep.mubr.f32.mxu0 %v1344
        %2055 = vmatmul.mubr.f32.gmra.mrb[0].mxu0 %v1343
        %v2056 = vpop.f32.mrb[0].mxu0
        %v2057 = vadd.f32 %v1828, %v2056
        %v2058 = vpop.f32.mrb[0].mxu0
        %2059 = vmatprep.mubr.f32.mxu0 %v1346
        %2060 = vmatmul.mubr.f32.gmra.mrb[0].mxu0 %v1345
        %v2061 = vpop.f32.mrb[0].mxu0
        %v2062 = vadd.f32 %v1828, %v2061
        %v2063 = vpop.f32.mrb[0].mxu0
        %2064 = vmatprep.mubr.f32.mxu0 %v1348
        %2065 = vmatmul.mubr.f32.gmra.mrb[0].mxu0 %v1347
        %v2066 = vpop.f32.mrb[0].mxu0
        %v2067 = vadd.f32 %v1828, %v2066
        %v2068 = vpop.f32.mrb[0].mxu0
        %2069 = vmatprep.mubr.f32.mxu0 %v1350
        %2070 = vmatmul.mubr.f32.gmra.mrb[0].mxu0 %v1349
        %v2071 = vpop.f32.mrb[0].mxu0
        %v2072 = vadd.f32 %v1828, %v2071
        %v2073 = vpop.f32.mrb[0].mxu0
        %2074 = vmatprep.mubr.f32.mxu0 %v1352
        %2075 = vmatmul.mubr.f32.gmra.mrb[0].mxu0 %v1351
        %v2076 = vpop.f32.mrb[0].mxu0
        %v2077 = vadd.f32 %v1828, %v2076
        %v2078 = vpop.f32.mrb[0].mxu0
        %2079 = vmatprep.mubr.f32.mxu0 %v1354
        %2080 = vmatmul.mubr.f32.gmra.mrb[0].mxu0 %v1353
        %v2081 = vpop.f32.mrb[0].mxu0
        %v2082 = vadd.f32 %v1828, %v2081
        %v2083 = vpop.f32.mrb[0].mxu0
        %2084 = vmatprep.mubr.f32.mxu0 %v1356
        %2085 = vmatmul.mubr.f32.gmra.mrb[0].mxu0 %v1355
        %v2086 = vpop.f32.mrb[0].mxu0
        %v2087 = vadd.f32 %v1828, %v2086
        %v2088 = vpop.f32.mrb[0].mxu0
        %2089 = vmatprep.mubr.f32.mxu0 %v1358
        %2090 = vmatmul.mubr.f32.gmra.mrb[0].mxu0 %v1357
        %v2091 = vpop.f32.mrb[0].mxu0
        %v2092 = vadd.f32 %v1828, %v2091
        %v2093 = vpop.f32.mrb[0].mxu0
        %2094 = vmatprep.mubr.f32.mxu0 %v1360
        %2095 = vmatmul.mubr.f32.gmra.mrb[0].mxu0 %v1359
        %v2096 = vpop.f32.mrb[0].mxu0
        %v2097 = vadd.f32 %v1828, %v2096
        %v2098 = vpop.f32.mrb[0].mxu0
        %2099 = vmatprep.mubr.f32.mxu0 %v1362
        %2100 = vmatmul.mubr.f32.gmra.mrb[0].mxu0 %v1361
        %v2101 = vpop.f32.mrb[0].mxu0
        %v2102 = vadd.f32 %v1828, %v2101
        %v2103 = vpop.f32.mrb[0].mxu0
        %2104 = vmatprep.mubr.f32.mxu0 %v1364
        %2105 = vmatmul.mubr.f32.gmra.mrb[0].mxu0 %v1363
        %v2106 = vpop.f32.mrb[0].mxu0
        %v2107 = vadd.f32 %v1828, %v2106
        %v2108 = vpop.f32.mrb[0].mxu0
        %2109 = vmatprep.mubr.f32.mxu0 %v1366
        %2110 = vmatmul.mubr.f32.gmra.mrb[0].mxu0 %v1365
        %v2111 = vpop.f32.mrb[0].mxu0
        %v2112 = vadd.f32 %v1828, %v2111
        %v2113 = vpop.f32.mrb[0].mxu0
        %2114 = vmatprep.mubr.f32.mxu0 %v1368
        %2115 = vmatmul.mubr.f32.gmra.mrb[0].mxu0 %v1367
        %v2116 = vpop.f32.mrb[0].mxu0
        %v2117 = vadd.f32 %v1828, %v2116
        %v2118 = vpop.f32.mrb[0].mxu0
        %2119 = vmatprep.mubr.f32.mxu0 %v1370
        %2120 = vmatmul.mubr.f32.gmra.mrb[0].mxu0 %v1369
        %v2121 = vpop.f32.mrb[0].mxu0
        %v2122 = vadd.f32 %v1828, %v2121
        %v2123 = vpop.f32.mrb[0].mxu0
        %2124 = vmatprep.mubr.f32.mxu0 %v1372
        %2125 = vmatmul.mubr.f32.gmra.mrb[0].mxu0 %v1371
        %v2126 = vpop.f32.mrb[0].mxu0
        %v2127 = vadd.f32 %v1828, %v2126
        %v2128 = vpop.f32.mrb[0].mxu0
        %2129 = vmatprep.mubr.f32.mxu0 %v1374
        %2130 = vmatmul.mubr.f32.gmra.mrb[0].mxu0 %v1373
        %v2131 = vpop.f32.mrb[0].mxu0
        %v2132 = vadd.f32 %v1828, %v2131
        %v2133 = vpop.f32.mrb[0].mxu0
        %2134 = vmatprep.mubr.f32.mxu0 %v1376
        %2135 = vmatmul.mubr.f32.gmra.mrb[0].mxu0 %v1375
        %v2136 = vpop.f32.mrb[0].mxu0
        %v2137 = vadd.f32 %v1828, %v2136
        %v2138 = vpop.f32.mrb[0].mxu0
        %2139 = vmatprep.mubr.f32.mxu0 %v1378
        %2140 = vmatmul.mubr.f32.gmra.mrb[0].mxu0 %v1377
        %v2141 = vpop.f32.mrb[0].mxu0
        %v2142 = vadd.f32 %v1828, %v2141
        %v2143 = vpop.f32.mrb[0].mxu0
        %2144 = vmatprep.mubr.f32.mxu0 %v1380
        %2145 = vmatmul.mubr.f32.gmra.mrb[0].mxu0 %v1379
        %v2146 = vpop.f32.mrb[0].mxu0
        %v2147 = vadd.f32 %v1828, %v2146
        %v2148 = vpop.f32.mrb[0].mxu0
        %2149 = vmatprep.mubr.f32.mxu0 %v1382
        %2150 = vmatmul.mubr.f32.gmra.mrb[0].mxu0 %v1381
        %v2151 = vpop.f32.mrb[0].mxu0
        %v2152 = vadd.f32 %v1828, %v2151
        %v2153 = vpop.f32.mrb[0].mxu0
        %2154 = vmatprep.mubr.f32.mxu0 %v1384
        %2155 = vmatmul.mubr.f32.gmra.mrb[0].mxu0 %v1383
        %v2156 = vpop.f32.mrb[0].mxu0
        %v2157 = vadd.f32 %v1828, %v2156
        %v2158 = vpop.f32.mrb[0].mxu0
        %2159 = vmatprep.mubr.f32.mxu0 %v1386
        %2160 = vmatmul.mubr.f32.gmra.mrb[0].mxu0 %v1385
        %v2161 = vpop.f32.mrb[0].mxu0
        %v2162 = vadd.f32 %v1828, %v2161
        %v2163 = vpop.f32.mrb[0].mxu0
        %2164 = vmatprep.mubr.f32.mxu0 %v1388
        %2165 = vmatmul.mubr.f32.gmra.mrb[0].mxu0 %v1387
        %v2166 = vpop.f32.mrb[0].mxu0
        %v2167 = vadd.f32 %v1828, %v2166
        %v2168 = vpop.f32.mrb[0].mxu0
        %2169 = vmatprep.mubr.f32.mxu0 %v1390
        %2170 = vmatmul.mubr.f32.gmra.mrb[0].mxu0 %v1389
        %v2171 = vpop.f32.mrb[0].mxu0
        %v2172 = vadd.f32 %v1828, %v2171
        %v2173 = vpop.f32.mrb[0].mxu0
        %2174 = vmatprep.mubr.f32.mxu0 %v1392
        %2175 = vmatmul.mubr.f32.gmra.mrb[0].mxu0 %v1391
        %v2176 = vpop.f32.mrb[0].mxu0
        %v2177 = vadd.f32 %v1828, %v2176
        %v2178 = vpop.f32.mrb[0].mxu0
        %2179 = vmatprep.mubr.f32.mxu0 %v1394
        %2180 = vmatmul.mubr.f32.gmra.mrb[0].mxu0 %v1393
        %v2181 = vpop.f32.mrb[0].mxu0
        %v2182 = vadd.f32 %v1828, %v2181
        %v2183 = vpop.f32.mrb[0].mxu0
        %2184 = vmatprep.mubr.f32.mxu0 %v1396
        %2185 = vmatmul.mubr.f32.gmra.mrb[0].mxu0 %v1395
        %v2186 = vpop.f32.mrb[0].mxu0
        %v2187 = vadd.f32 %v1828, %v2186
        %v2188 = vpop.f32.mrb[0].mxu0
        %2189 = vmatprep.mubr.f32.mxu0 %v1398
        %2190 = vmatmul.mubr.f32.gmra.mrb[0].mxu0 %v1397
        %v2191 = vpop.f32.mrb[0].mxu0
        %v2192 = vadd.f32 %v1828, %v2191
        %v2193 = vpop.f32.mrb[0].mxu0
        %2194 = vmatprep.mubr.f32.mxu0 %v1400
        %2195 = vmatmul.mubr.f32.gmra.mrb[0].mxu0 %v1399
        %v2196 = vpop.f32.mrb[0].mxu0
        %v2197 = vadd.f32 %v1828, %v2196
        %v2198 = vpop.f32.mrb[0].mxu0
        %2199 = vmatprep.mubr.f32.mxu0 %v1402
        %2200 = vmatmul.mubr.f32.gmra.mrb[0].mxu0 %v1401
        %v2201 = vpop.f32.mrb[0].mxu0
        %v2202 = vadd.f32 %v1828, %v2201
        %v2203 = vpop.f32.mrb[0].mxu0
        %2204 = vmatprep.mubr.f32.mxu0 %v1404
        %2205 = vmatmul.mubr.f32.gmra.mrb[0].mxu0 %v1403
        %v2206 = vpop.f32.mrb[0].mxu0
        %v2207 = vadd.f32 %v1828, %v2206
        %v2208 = vpop.f32.mrb[0].mxu0
        %2209 = vmatprep.mubr.f32.mxu0 %v1406
        %2210 = vmatmul.mubr.f32.gmra.mrb[0].mxu0 %v1405
        %v2211 = vpop.f32.mrb[0].mxu0
        %v2212 = vadd.f32 %v1828, %v2211
        %v2213 = vpop.f32.mrb[0].mxu0
        %2214 = vmatprep.mubr.f32.mxu0 %v1408
        %2215 = vmatmul.mubr.f32.gmra.mrb[0].mxu0 %v1407
        %v2216 = vpop.f32.mrb[0].mxu0
        %v2217 = vadd.f32 %v1828, %v2216
        %v2218 = vpop.f32.mrb[0].mxu0
        %2219 = vmatprep.mubr.f32.mxu0 %v1410
        %2220 = vmatmul.mubr.f32.gmra.mrb[0].mxu0 %v1409
        %v2221 = vpop.f32.mrb[0].mxu0
        %v2222 = vadd.f32 %v1828, %v2221
        %v2223 = vpop.f32.mrb[0].mxu0
        %2224 = vmatprep.mubr.f32.mxu0 %v1412
        %2225 = vmatmul.mubr.f32.gmra.mrb[0].mxu0 %v1411
        %v2226 = vpop.f32.mrb[0].mxu0
        %v2227 = vadd.f32 %v1828, %v2226
        %v2228 = vpop.f32.mrb[0].mxu0
        %2229 = vmatprep.mubr.f32.mxu0 %v1414
        %2230 = vmatmul.mubr.f32.gmra.mrb[0].mxu0 %v1413
        %v2231 = vpop.f32.mrb[0].mxu0
        %v2232 = vadd.f32 %v1828, %v2231
        %v2233 = vpop.f32.mrb[0].mxu0
        %2234 = vmatprep.mubr.f32.mxu0 %v1416
        %2235 = vmatmul.mubr.f32.gmra.mrb[0].mxu0 %v1415
        %v2236 = vpop.f32.mrb[0].mxu0
        %v2237 = vadd.f32 %v1828, %v2236
        %v2238 = vpop.f32.mrb[0].mxu0
        %2239 = vmatprep.mubr.f32.mxu0 %v1418
        %2240 = vmatmul.mubr.f32.gmra.mrb[0].mxu0 %v1417
        %v2241 = vpop.f32.mrb[0].mxu0
        %v2242 = vadd.f32 %v1828, %v2241
        %v2243 = vpop.f32.mrb[0].mxu0
        %2244 = vmatprep.mubr.f32.mxu0 %v1420
        %2245 = vmatmul.mubr.f32.gmra.mrb[0].mxu0 %v1419
        %v2246 = vpop.f32.mrb[0].mxu0
        %v2247 = vadd.f32 %v1828, %v2246
        %v2248 = vpop.f32.mrb[0].mxu0
        %2249 = vmatprep.mubr.f32.mxu0 %v1422
        %2250 = vmatmul.mubr.f32.gmra.mrb[0].mxu0 %v1421
        %v2251 = vpop.f32.mrb[0].mxu0
        %v2252 = vadd.f32 %v1828, %v2251
        %v2253 = vpop.f32.mrb[0].mxu0
        %2254 = vmatprep.mubr.f32.mxu0 %v1424
        %2255 = vmatmul.mubr.f32.gmra.mrb[0].mxu0 %v1423
        %v2256 = vpop.f32.mrb[0].mxu0
        %v2257 = vadd.f32 %v1828, %v2256
        %v2258 = vpop.f32.mrb[0].mxu0
        %2259 = vmatprep.mubr.f32.mxu0 %v1426
        %2260 = vmatmul.mubr.f32.gmra.mrb[0].mxu0 %v1425
        %v2261 = vpop.f32.mrb[0].mxu0
        %v2262 = vadd.f32 %v1828, %v2261
        %v2263 = vpop.f32.mrb[0].mxu0
        %2264 = vmatprep.mubr.f32.mxu0 %v1428
        %2265 = vmatmul.mubr.f32.gmra.mrb[0].mxu0 %v1427
        %v2266 = vpop.f32.mrb[0].mxu0
        %v2267 = vadd.f32 %v1828, %v2266
        %v2268 = vpop.f32.mrb[0].mxu0
        %2269 = vmatprep.mubr.f32.mxu0 %v1430
        %2270 = vmatmul.mubr.f32.gmra.mrb[0].mxu0 %v1429
        %v2271 = vpop.f32.mrb[0].mxu0
        %v2272 = vadd.f32 %v1828, %v2271
        %v2273 = vpop.f32.mrb[0].mxu0
        %2274 = vmatprep.mubr.f32.mxu0 %v1432
        %2275 = vmatmul.mubr.f32.gmra.mrb[0].mxu0 %v1431
        %v2276 = vpop.f32.mrb[0].mxu0
        %v2277 = vadd.f32 %v1828, %v2276
        %v2278 = vpop.f32.mrb[0].mxu0
        %2279 = vmatprep.mubr.f32.mxu0 %v1434
        %2280 = vmatmul.mubr.f32.gmra.mrb[0].mxu0 %v1433
        %v2281 = vpop.f32.mrb[0].mxu0
        %v2282 = vadd.f32 %v1828, %v2281
        %v2283 = vpop.f32.mrb[0].mxu0
        %2284 = vmatprep.mubr.f32.mxu0 %v1436
        %2285 = vmatmul.mubr.f32.gmra.mrb[0].mxu0 %v1435
        %v2286 = vpop.f32.mrb[0].mxu0
        %v2287 = vadd.f32 %v1828, %v2286
        %v2288 = vpop.f32.mrb[0].mxu0
        %2289 = vmatprep.mubr.f32.mxu0 %v1438
        %2290 = vmatmul.mubr.f32.gmra.mrb[0].mxu0 %v1437
        %v2291 = vpop.f32.mrb[0].mxu0
        %v2292 = vadd.f32 %v1828, %v2291
        %v2293 = vpop.f32.mrb[0].mxu0
        %2294 = vmatprep.mubr.f32.mxu0 %v1440
        %2295 = vmatmul.mubr.f32.gmra.mrb[0].mxu0 %v1439
        %v2296 = vpop.f32.mrb[0].mxu0
        %v2297 = vadd.f32 %v1828, %v2296
        %v2298 = vpop.f32.mrb[0].mxu0
        %2299 = vmatprep.mubr.f32.mxu0 %v1442
        %2300 = vmatmul.mubr.f32.gmra.mrb[0].mxu0 %v1441
        %v2301 = vpop.f32.mrb[0].mxu0
        %v2302 = vadd.f32 %v1828, %v2301
        %v2303 = vpop.f32.mrb[0].mxu0
        %2304 = vmatprep.mubr.f32.mxu0 %v1444
        %2305 = vmatmul.mubr.f32.gmra.mrb[0].mxu0 %v1443
        %v2306 = vpop.f32.mrb[0].mxu0
        %v2307 = vadd.f32 %v1828, %v2306
        %v2308 = vpop.f32.mrb[0].mxu0
        %2309 = vmatprep.mubr.f32.mxu0 %v1446
        %2310 = vmatmul.mubr.f32.gmra.mrb[0].mxu0 %v1445
        %v2311 = vpop.f32.mrb[0].mxu0
        %v2312 = vadd.f32 %v1828, %v2311
        %v2313 = vpop.f32.mrb[0].mxu0
        %2314 = vmatprep.mubr.f32.mxu0 %v1448
        %2315 = vmatmul.mubr.f32.gmra.mrb[0].mxu0 %v1447
        %v2316 = vpop.f32.mrb[0].mxu0
        %v2317 = vadd.f32 %v1828, %v2316
        %v2318 = vpop.f32.mrb[0].mxu0
        %2319 = vmatprep.mubr.f32.mxu0 %v1450
        %2320 = vmatmul.mubr.f32.gmra.mrb[0].mxu0 %v1449
        %v2321 = vpop.f32.mrb[0].mxu0
        %v2322 = vadd.f32 %v1828, %v2321
        %v2323 = vpop.f32.mrb[0].mxu0
        %2324 = vmatprep.mubr.f32.mxu0 %v1452
        %2325 = vmatmul.mubr.f32.gmra.mrb[0].mxu0 %v1451
        %v2326 = vpop.f32.mrb[0].mxu0
        %v2327 = vadd.f32 %v1828, %v2326
        %v2328 = vpop.f32.mrb[0].mxu0
        %2329 = vmatprep.mubr.f32.mxu0 %v1454
        %2330 = vmatmul.mubr.f32.gmra.mrb[0].mxu0 %v1453
        %v2331 = vpop.f32.mrb[0].mxu0
        %v2332 = vadd.f32 %v1828, %v2331
        %v2333 = vpop.f32.mrb[0].mxu0
        %2334 = vmatprep.mubr.f32.mxu0 %v1456
        %2335 = vmatmul.mubr.f32.gmra.mrb[0].mxu0 %v1455
        %v2336 = vpop.f32.mrb[0].mxu0
        %v2337 = vadd.f32 %v1828, %v2336
        %v2338 = vpop.f32.mrb[0].mxu0
        %2339 = vmatprep.mubr.f32.mxu0 %v1458
        %2340 = vmatmul.mubr.f32.gmra.mrb[0].mxu0 %v1457
        %v2341 = vpop.f32.mrb[0].mxu0
        %v2342 = vadd.f32 %v1828, %v2341
        %v2343 = vpop.f32.mrb[0].mxu0
        %2344 = vmatprep.mubr.f32.mxu0 %v1460
        %2345 = vmatmul.mubr.f32.gmra.mrb[0].mxu0 %v1459
        %v2346 = vpop.f32.mrb[0].mxu0
        %v2347 = vadd.f32 %v1828, %v2346
        %v2348 = vpop.f32.mrb[0].mxu0
        %2349 = vmatprep.mubr.f32.mxu0 %v1462
        %2350 = vmatmul.mubr.f32.gmra.mrb[0].mxu0 %v1461
        %v2351 = vpop.f32.mrb[0].mxu0
        %v2352 = vadd.f32 %v1828, %v2351
        %v2353 = vpop.f32.mrb[0].mxu0
        %2354 = vmatprep.mubr.f32.mxu0 %v1464
        %2355 = vmatmul.mubr.f32.gmra.mrb[0].mxu0 %v1463
        %v2356 = vpop.f32.mrb[0].mxu0
        %v2357 = vadd.f32 %v1828, %v2356
        %v2358 = vpop.f32.mrb[0].mxu0
        %2359 = vmatprep.mubr.f32.mxu0 %v1466
        %2360 = vmatmul.mubr.f32.gmra.mrb[0].mxu0 %v1465
        %v2361 = vpop.f32.mrb[0].mxu0
        %v2362 = vadd.f32 %v1828, %v2361
        %v2363 = vpop.f32.mrb[0].mxu0
        %2364 = vmatprep.mubr.f32.mxu0 %v1468
        %2365 = vmatmul.mubr.f32.gmra.mrb[0].mxu0 %v1467
        %v2366 = vpop.f32.mrb[0].mxu0
        %v2367 = vadd.f32 %v1828, %v2366
        %v2368 = vpop.f32.mrb[0].mxu0
        %2369 = vmatprep.mubr.f32.mxu0 %v1470
        %2370 = vmatmul.mubr.f32.gmra.mrb[0].mxu0 %v1469
        %v2371 = vpop.f32.mrb[0].mxu0
        %v2372 = vadd.f32 %v1828, %v2371
        %v2373 = vpop.f32.mrb[0].mxu0
        %2374 = vmatprep.mubr.f32.mxu0 %v1472
        %2375 = vmatmul.mubr.f32.gmra.mrb[0].mxu0 %v1471
        %v2376 = vpop.f32.mrb[0].mxu0
        %v2377 = vadd.f32 %v1828, %v2376
        %v2378 = vpop.f32.mrb[0].mxu0
        %2379 = vmatprep.mubr.f32.mxu0 %v1474
        %2380 = vmatmul.mubr.f32.gmra.mrb[0].mxu0 %v1473
        %v2381 = vpop.f32.mrb[0].mxu0
        %v2382 = vadd.f32 %v1828, %v2381
        %v2383 = vpop.f32.mrb[0].mxu0
        %2384 = vmatprep.mubr.f32.mxu0 %v1476
        %2385 = vmatmul.mubr.f32.gmra.mrb[0].mxu0 %v1475
        %v2386 = vpop.f32.mrb[0].mxu0
        %v2387 = vadd.f32 %v1828, %v2386
        %v2388 = vpop.f32.mrb[0].mxu0
        %2389 = vmatprep.mubr.f32.mxu0 %v1478
        %2390 = vmatmul.mubr.f32.gmra.mrb[0].mxu0 %v1477
        %v2391 = vpop.f32.mrb[0].mxu0
        %v2392 = vadd.f32 %v1828, %v2391
        %v2393 = vpop.f32.mrb[0].mxu0
        %2394 = vmatprep.mubr.f32.mxu0 %v1480
        %2395 = vmatmul.mubr.f32.gmra.mrb[0].mxu0 %v1479
        %v2396 = vpop.f32.mrb[0].mxu0
        %v2397 = vadd.f32 %v1828, %v2396
        %v2398 = vpop.f32.mrb[0].mxu0
        %2399 = vmatprep.mubr.f32.mxu0 %v1482
        %2400 = vmatmul.mubr.f32.gmra.mrb[0].mxu0 %v1481
        %v2401 = vpop.f32.mrb[0].mxu0
        %v2402 = vadd.f32 %v1828, %v2401
        %v2403 = vpop.f32.mrb[0].mxu0
        %2404 = vmatprep.mubr.f32.mxu0 %v1484
        %2405 = vmatmul.mubr.f32.gmra.mrb[0].mxu0 %v1483
        %v2406 = vpop.f32.mrb[0].mxu0
        %v2407 = vadd.f32 %v1828, %v2406
        %v2408 = vpop.f32.mrb[0].mxu0
        %2409 = vmatprep.mubr.f32.mxu0 %v1486
        %2410 = vmatmul.mubr.f32.gmra.mrb[0].mxu0 %v1485
        %v2411 = vpop.f32.mrb[0].mxu0
        %v2412 = vadd.f32 %v1828, %v2411
        %v2413 = vpop.f32.mrb[0].mxu0
        %2414 = vmatprep.mubr.f32.mxu0 %v1488
        %2415 = vmatmul.mubr.f32.gmra.mrb[0].mxu0 %v1487
        %v2416 = vpop.f32.mrb[0].mxu0
        %v2417 = vadd.f32 %v1828, %v2416
        %v2418 = vpop.f32.mrb[0].mxu0
        %2419 = vmatprep.mubr.f32.mxu0 %v1490
        %2420 = vmatmul.mubr.f32.gmra.mrb[0].mxu0 %v1489
        %v2421 = vpop.f32.mrb[0].mxu0
        %v2422 = vadd.f32 %v1828, %v2421
        %v2423 = vpop.f32.mrb[0].mxu0
        %2424 = vmatprep.mubr.f32.mxu0 %v1492
        %2425 = vmatmul.mubr.f32.gmra.mrb[0].mxu0 %v1491
        %v2426 = vpop.f32.mrb[0].mxu0
        %v2427 = vadd.f32 %v1828, %v2426
        %v2428 = vpop.f32.mrb[0].mxu0
        %2429 = vmatprep.mubr.f32.mxu0 %v1494
        %2430 = vmatmul.mubr.f32.gmra.mrb[0].mxu0 %v1493
        %v2431 = vpop.f32.mrb[0].mxu0
        %v2432 = vadd.f32 %v1828, %v2431
        %v2433 = vpop.f32.mrb[0].mxu0
        %2434 = vmatprep.mubr.f32.mxu0 %v1496
        %2435 = vmatmul.mubr.f32.gmra.mrb[0].mxu0 %v1495
        %v2436 = vpop.f32.mrb[0].mxu0
        %v2437 = vadd.f32 %v1828, %v2436
        %v2438 = vpop.f32.mrb[0].mxu0
        %2439 = vmatprep.mubr.f32.mxu0 %v1498
        %2440 = vmatmul.mubr.f32.gmra.mrb[0].mxu0 %v1497
        %v2441 = vpop.f32.mrb[0].mxu0
        %v2442 = vadd.f32 %v1828, %v2441
        %v2443 = vpop.f32.mrb[0].mxu0
        %2444 = vmatprep.mubr.f32.mxu0 %v1500
        %2445 = vmatmul.mubr.f32.gmra.mrb[0].mxu0 %v1499
        %v2446 = vpop.f32.mrb[0].mxu0
        %v2447 = vadd.f32 %v1828, %v2446
        %v2448 = vpop.f32.mrb[0].mxu0
        %2449 = vmatprep.mubr.f32.mxu0 %v1502
        %2450 = vmatmul.mubr.f32.gmra.mrb[0].mxu0 %v1501
        %v2451 = vpop.f32.mrb[0].mxu0
        %v2452 = vadd.f32 %v1828, %v2451
        %v2453 = vpop.f32.mrb[0].mxu0
        %2454 = vmatprep.mubr.f32.mxu0 %v1504
        %2455 = vmatmul.mubr.f32.gmra.mrb[0].mxu0 %v1503
        %v2456 = vpop.f32.mrb[0].mxu0
        %v2457 = vadd.f32 %v1828, %v2456
        %v2458 = vpop.f32.mrb[0].mxu0
        %2459 = vmatprep.mubr.f32.mxu0 %v1506
        %2460 = vmatmul.mubr.f32.gmra.mrb[0].mxu0 %v1505
        %v2461 = vpop.f32.mrb[0].mxu0
        %v2462 = vadd.f32 %v1828, %v2461
        %v2463 = vpop.f32.mrb[0].mxu0
        %2464 = vmatprep.mubr.f32.mxu0 %v1508
        %2465 = vmatmul.mubr.f32.gmra.mrb[0].mxu0 %v1507
        %v2466 = vpop.f32.mrb[0].mxu0
        %v2467 = vadd.f32 %v1828, %v2466
        %v2468 = vpop.f32.mrb[0].mxu0
        %2469 = vmatprep.mubr.f32.mxu0 %v1510
        %2470 = vmatmul.mubr.f32.gmra.mrb[0].mxu0 %v1509
        %v2471 = vpop.f32.mrb[0].mxu0
        %v2472 = vadd.f32 %v1828, %v2471
        %v2473 = vpop.f32.mrb[0].mxu0
        %2474 = vmatprep.mubr.f32.mxu0 %v1512
        %2475 = vmatmul.mubr.f32.gmra.mrb[0].mxu0 %v1511
        %v2476 = vpop.f32.mrb[0].mxu0
        %v2477 = vadd.f32 %v1828, %v2476
        %v2478 = vpop.f32.mrb[0].mxu0
        %2479 = vmatprep.mubr.f32.mxu0 %v1514
        %2480 = vmatmul.mubr.f32.gmra.mrb[0].mxu0 %v1513
        %v2481 = vpop.f32.mrb[0].mxu0
        %v2482 = vadd.f32 %v1828, %v2481
        %v2483 = vpop.f32.mrb[0].mxu0
        %2484 = vmatprep.mubr.f32.mxu0 %v1516
        %2485 = vmatmul.mubr.f32.gmra.mrb[0].mxu0 %v1515
        %v2486 = vpop.f32.mrb[0].mxu0
        %v2487 = vadd.f32 %v1828, %v2486
        %v2488 = vpop.f32.mrb[0].mxu0
        %2489 = vmatprep.mubr.f32.mxu0 %v1518
        %2490 = vmatmul.mubr.f32.gmra.mrb[0].mxu0 %v1517
        %v2491 = vpop.f32.mrb[0].mxu0
        %v2492 = vadd.f32 %v1828, %v2491
        %v2493 = vpop.f32.mrb[0].mxu0
        %2494 = vmatprep.mubr.f32.mxu0 %v1520
        %2495 = vmatmul.mubr.f32.gmra.mrb[0].mxu0 %v1519
        %v2496 = vpop.f32.mrb[0].mxu0
        %v2497 = vadd.f32 %v1828, %v2496
        %v2498 = vpop.f32.mrb[0].mxu0
        %2499 = vmatprep.mubr.f32.mxu0 %v1522
        %2500 = vmatmul.mubr.f32.gmra.mrb[0].mxu0 %v1521
        %v2501 = vpop.f32.mrb[0].mxu0
        %v2502 = vadd.f32 %v1828, %v2501
        %v2503 = vpop.f32.mrb[0].mxu0
        %2504 = vmatprep.mubr.f32.mxu0 %v1524
        %2505 = vmatmul.mubr.f32.gmra.mrb[0].mxu0 %v1523
        %v2506 = vpop.f32.mrb[0].mxu0
        %v2507 = vadd.f32 %v1828, %v2506
        %v2508 = vpop.f32.mrb[0].mxu0
        %2509 = vmatprep.mubr.f32.mxu0 %v1526
        %2510 = vmatmul.mubr.f32.gmra.mrb[0].mxu0 %v1525
        %v2511 = vpop.f32.mrb[0].mxu0
        %v2512 = vadd.f32 %v1828, %v2511
        %v2513 = vpop.f32.mrb[0].mxu0
        %2514 = vmatprep.mubr.f32.mxu0 %v1528
        %2515 = vmatmul.mubr.f32.gmra.mrb[0].mxu0 %v1527
        %v2516 = vpop.f32.mrb[0].mxu0
        %v2517 = vadd.f32 %v1828, %v2516
        %v2518 = vpop.f32.mrb[0].mxu0
        %2519 = vmatprep.mubr.f32.mxu0 %v1530
        %2520 = vmatmul.mubr.f32.gmra.mrb[0].mxu0 %v1529
        %v2521 = vpop.f32.mrb[0].mxu0
        %v2522 = vadd.f32 %v1828, %v2521
        %v2523 = vpop.f32.mrb[0].mxu0
        %2524 = vmatprep.mubr.f32.mxu0 %v1532
        %2525 = vmatmul.mubr.f32.gmra.mrb[0].mxu0 %v1531
        %v2526 = vpop.f32.mrb[0].mxu0
        %v2527 = vadd.f32 %v1828, %v2526
        %v2528 = vpop.f32.mrb[0].mxu0
        %2529 = vmatprep.mubr.f32.mxu0 %v1534
        %2530 = vmatmul.mubr.f32.gmra.mrb[0].mxu0 %v1533
        %v2531 = vpop.f32.mrb[0].mxu0
        %v2532 = vadd.f32 %v1828, %v2531
        %v2533 = vpop.f32.mrb[0].mxu0
        %2534 = vmatprep.mubr.f32.mxu0 %v1536
        %2535 = vmatmul.mubr.f32.gmra.mrb[0].mxu0 %v1535
        %v2536 = vpop.f32.mrb[0].mxu0
        %v2537 = vadd.f32 %v1828, %v2536
        %v2538 = vpop.f32.mrb[0].mxu0
        %2539 = vmatprep.mubr.f32.mxu0 %v1538
        %2540 = vmatmul.mubr.f32.gmra.mrb[0].mxu0 %v1537
        %v2541 = vpop.f32.mrb[0].mxu0
        %v2542 = vadd.f32 %v1828, %v2541
        %v2543 = vpop.f32.mrb[0].mxu0
        %2544 = vmatprep.mubr.f32.mxu0 %v1540
        %2545 = vmatmul.mubr.f32.gmra.mrb[0].mxu0 %v1539
        %v2546 = vpop.f32.mrb[0].mxu0
        %v2547 = vadd.f32 %v1828, %v2546
        %v2548 = vpop.f32.mrb[0].mxu0
        %2549 = vmatprep.mubr.f32.mxu0 %v1542
        %2550 = vmatmul.mubr.f32.gmra.mrb[0].mxu0 %v1541
        %v2551 = vpop.f32.mrb[0].mxu0
        %v2552 = vadd.f32 %v1828, %v2551
        %v2553 = vpop.f32.mrb[0].mxu0
        %2554 = vmatprep.mubr.f32.mxu0 %v1544
        %2555 = vmatmul.mubr.f32.gmra.mrb[0].mxu0 %v1543
        %v2556 = vpop.f32.mrb[0].mxu0
        %v2557 = vadd.f32 %v1828, %v2556
        %v2558 = vpop.f32.mrb[0].mxu0
        %2559 = vmatprep.mubr.f32.mxu0 %v1546
        %2560 = vmatmul.mubr.f32.gmra.mrb[0].mxu0 %v1545
        %v2561 = vpop.f32.mrb[0].mxu0
        %v2562 = vadd.f32 %v1828, %v2561
        %v2563 = vpop.f32.mrb[0].mxu0
        %2564 = vmatprep.mubr.f32.mxu0 %v1548
        %2565 = vmatmul.mubr.f32.gmra.mrb[0].mxu0 %v1547
        %v2566 = vpop.f32.mrb[0].mxu0
        %v2567 = vadd.f32 %v1828, %v2566
        %v2568 = vpop.f32.mrb[0].mxu0
        %2569 = vmatprep.mubr.f32.mxu0 %v1550
        %2570 = vmatmul.mubr.f32.gmra.mrb[0].mxu0 %v1549
        %v2571 = vpop.f32.mrb[0].mxu0
        %v2572 = vadd.f32 %v1828, %v2571
        %v2573 = vpop.f32.mrb[0].mxu0
        %2574 = vmatprep.mubr.f32.mxu0 %v1552
        %2575 = vmatmul.mubr.f32.gmra.mrb[0].mxu0 %v1551
        %v2576 = vpop.f32.mrb[0].mxu0
        %v2577 = vadd.f32 %v1828, %v2576
        %v2578 = vpop.f32.mrb[0].mxu0
        %2579 = vmatprep.mubr.f32.mxu0 %v1554
        %2580 = vmatmul.mubr.f32.gmra.mrb[0].mxu0 %v1553
        %v2581 = vpop.f32.mrb[0].mxu0
        %v2582 = vadd.f32 %v1828, %v2581
        %v2583 = vpop.f32.mrb[0].mxu0
        %2584 = vmatprep.mubr.f32.mxu0 %v1556
        %2585 = vmatmul.mubr.f32.gmra.mrb[0].mxu0 %v1555
        %v2586 = vpop.f32.mrb[0].mxu0
        %v2587 = vadd.f32 %v1828, %v2586
        %v2588 = vpop.f32.mrb[0].mxu0
        %2589 = vmatprep.mubr.f32.mxu0 %v1558
        %2590 = vmatmul.mubr.f32.gmra.mrb[0].mxu0 %v1557
        %v2591 = vpop.f32.mrb[0].mxu0
        %v2592 = vadd.f32 %v1828, %v2591
        %v2593 = vpop.f32.mrb[0].mxu0
        %2594 = vmatprep.mubr.f32.mxu0 %v1560
        %2595 = vmatmul.mubr.f32.gmra.mrb[0].mxu0 %v1559
        %v2596 = vpop.f32.mrb[0].mxu0
        %v2597 = vadd.f32 %v1828, %v2596
        %v2598 = vpop.f32.mrb[0].mxu0
        %2599 = vmatprep.mubr.f32.mxu0 %v1562
        %2600 = vmatmul.mubr.f32.gmra.mrb[0].mxu0 %v1561
        %v2601 = vpop.f32.mrb[0].mxu0
        %v2602 = vadd.f32 %v1828, %v2601
        %v2603 = vpop.f32.mrb[0].mxu0
        %2604 = vmatprep.mubr.f32.mxu0 %v1564
        %2605 = vmatmul.mubr.f32.gmra.mrb[0].mxu0 %v1563
        %v2606 = vpop.f32.mrb[0].mxu0
        %v2607 = vadd.f32 %v1828, %v2606
        %v2608 = vpop.f32.mrb[0].mxu0
        %2609 = vmatprep.mubr.f32.mxu0 %v1566
        %2610 = vmatmul.mubr.f32.gmra.mrb[0].mxu0 %v1565
        %v2611 = vpop.f32.mrb[0].mxu0
        %v2612 = vadd.f32 %v1828, %v2611
        %v2613 = vpop.f32.mrb[0].mxu0
        %2614 = vmatprep.mubr.f32.mxu0 %v1568
        %2615 = vmatmul.mubr.f32.gmra.mrb[0].mxu0 %v1567
        %v2616 = vpop.f32.mrb[0].mxu0
        %v2617 = vadd.f32 %v1828, %v2616
        %v2618 = vpop.f32.mrb[0].mxu0
        %2619 = vmatprep.mubr.f32.mxu0 %v1570
        %2620 = vmatmul.mubr.f32.gmra.mrb[0].mxu0 %v1569
        %v2621 = vpop.f32.mrb[0].mxu0
        %v2622 = vadd.f32 %v1828, %v2621
        %v2623 = vpop.f32.mrb[0].mxu0
        %2624 = vmatprep.mubr.f32.mxu0 %v1572
        %2625 = vmatmul.mubr.f32.gmra.mrb[0].mxu0 %v1571
        %v2626 = vpop.f32.mrb[0].mxu0
        %v2627 = vadd.f32 %v1828, %v2626
        %v2628 = vpop.f32.mrb[0].mxu0
        %2629 = vmatprep.mubr.f32.mxu0 %v1574
        %2630 = vmatmul.mubr.f32.gmra.mrb[0].mxu0 %v1573
        %v2631 = vpop.f32.mrb[0].mxu0
        %v2632 = vadd.f32 %v1828, %v2631
        %v2633 = vpop.f32.mrb[0].mxu0
        %2634 = vmatprep.mubr.f32.mxu0 %v1576
        %2635 = vmatmul.mubr.f32.gmra.mrb[0].mxu0 %v1575
        %v2636 = vpop.f32.mrb[0].mxu0
        %v2637 = vadd.f32 %v1828, %v2636
        %v2638 = vpop.f32.mrb[0].mxu0
        %2639 = vmatprep.mubr.f32.mxu0 %v1578
        %2640 = vmatmul.mubr.f32.gmra.mrb[0].mxu0 %v1577
        %v2641 = vpop.f32.mrb[0].mxu0
        %v2642 = vadd.f32 %v1828, %v2641
        %v2643 = vpop.f32.mrb[0].mxu0
        %2644 = vmatprep.mubr.f32.mxu0 %v1580
        %2645 = vmatmul.mubr.f32.gmra.mrb[0].mxu0 %v1579
        %v2646 = vpop.f32.mrb[0].mxu0
        %v2647 = vadd.f32 %v1828, %v2646
        %v2648 = vpop.f32.mrb[0].mxu0
        %2649 = vmatprep.mubr.f32.mxu0 %v1582
        %2650 = vmatmul.mubr.f32.gmra.mrb[0].mxu0 %v1581
        %v2651 = vpop.f32.mrb[0].mxu0
        %v2652 = vadd.f32 %v1828, %v2651
        %v2653 = vpop.f32.mrb[0].mxu0
        %2654 = vmatprep.mubr.f32.mxu0 %v1584
        %2655 = vmatmul.mubr.f32.gmra.mrb[0].mxu0 %v1583
        %v2656 = vpop.f32.mrb[0].mxu0
        %v2657 = vadd.f32 %v1828, %v2656
        %v2658 = vpop.f32.mrb[0].mxu0
        %2659 = vmatprep.mubr.f32.mxu0 %v1586
        %2660 = vmatmul.mubr.f32.gmra.mrb[0].mxu0 %v1585
        %v2661 = vpop.f32.mrb[0].mxu0
        %v2662 = vadd.f32 %v1828, %v2661
        %v2663 = vpop.f32.mrb[0].mxu0
        %2664 = vmatprep.mubr.f32.mxu0 %v1588
        %2665 = vmatmul.mubr.f32.gmra.mrb[0].mxu0 %v1587
        %v2666 = vpop.f32.mrb[0].mxu0
        %v2667 = vadd.f32 %v1828, %v2666
        %v2668 = vpop.f32.mrb[0].mxu0
        %2669 = vmatprep.mubr.f32.mxu0 %v1590
        %2670 = vmatmul.mubr.f32.gmra.mrb[0].mxu0 %v1589
        %v2671 = vpop.f32.mrb[0].mxu0
        %v2672 = vadd.f32 %v1828, %v2671
        %v2673 = vpop.f32.mrb[0].mxu0
        %2674 = vmatprep.mubr.f32.mxu0 %v1592
        %2675 = vmatmul.mubr.f32.gmra.mrb[0].mxu0 %v1591
        %v2676 = vpop.f32.mrb[0].mxu0
        %v2677 = vadd.f32 %v1828, %v2676
        %v2678 = vpop.f32.mrb[0].mxu0
        %2679 = vmatprep.mubr.f32.mxu0 %v1594
        %2680 = vmatmul.mubr.f32.gmra.mrb[0].mxu0 %v1593
        %v2681 = vpop.f32.mrb[0].mxu0
        %v2682 = vadd.f32 %v1828, %v2681
        %v2683 = vpop.f32.mrb[0].mxu0
        %2684 = vmatprep.mubr.f32.mxu0 %v1596
        %2685 = vmatmul.mubr.f32.gmra.mrb[0].mxu0 %v1595
        %v2686 = vpop.f32.mrb[0].mxu0
        %v2687 = vadd.f32 %v1828, %v2686
        %v2688 = vpop.f32.mrb[0].mxu0
        %2689 = vmatprep.mubr.f32.mxu0 %v1598
        %2690 = vmatmul.mubr.f32.gmra.mrb[0].mxu0 %v1597
        %v2691 = vpop.f32.mrb[0].mxu0
        %v2692 = vadd.f32 %v1828, %v2691
        %v2693 = vpop.f32.mrb[0].mxu0
        %2694 = vmatprep.mubr.f32.mxu0 %v1600
        %2695 = vmatmul.mubr.f32.gmra.mrb[0].mxu0 %v1599
        %v2696 = vpop.f32.mrb[0].mxu0
        %v2697 = vadd.f32 %v1828, %v2696
        %v2698 = vpop.f32.mrb[0].mxu0
        %2699 = vmatprep.mubr.f32.mxu0 %v1602
        %2700 = vmatmul.mubr.f32.gmra.mrb[0].mxu0 %v1601
        %v2701 = vpop.f32.mrb[0].mxu0
        %v2702 = vadd.f32 %v1828, %v2701
        %v2703 = vpop.f32.mrb[0].mxu0
        %2704 = vmatprep.mubr.f32.mxu0 %v1604
        %2705 = vmatmul.mubr.f32.gmra.mrb[0].mxu0 %v1603
        %v2706 = vpop.f32.mrb[0].mxu0
        %v2707 = vadd.f32 %v1828, %v2706
        %v2708 = vpop.f32.mrb[0].mxu0
        %2709 = vmatprep.mubr.f32.mxu0 %v1606
        %2710 = vmatmul.mubr.f32.gmra.mrb[0].mxu0 %v1605
        %v2711 = vpop.f32.mrb[0].mxu0
        %v2712 = vadd.f32 %v1828, %v2711
        %v2713 = vpop.f32.mrb[0].mxu0
        %2714 = vmatprep.mubr.f32.mxu0 %v1608
        %2715 = vmatmul.mubr.f32.gmra.mrb[0].mxu0 %v1607
        %v2716 = vpop.f32.mrb[0].mxu0
        %v2717 = vadd.f32 %v1828, %v2716
        %v2718 = vpop.f32.mrb[0].mxu0
        %2719 = vmatprep.mubr.f32.mxu0 %v1610
        %2720 = vmatmul.mubr.f32.gmra.mrb[0].mxu0 %v1609
        %v2721 = vpop.f32.mrb[0].mxu0
        %v2722 = vadd.f32 %v1828, %v2721
        %v2723 = vpop.f32.mrb[0].mxu0
        %2724 = vmatprep.mubr.f32.mxu0 %v1612
        %2725 = vmatmul.mubr.f32.gmra.mrb[0].mxu0 %v1611
        %v2726 = vpop.f32.mrb[0].mxu0
        %v2727 = vadd.f32 %v1828, %v2726
        %v2728 = vpop.f32.mrb[0].mxu0
        %2729 = vmatprep.mubr.f32.mxu0 %v1614
        %2730 = vmatmul.mubr.f32.gmra.mrb[0].mxu0 %v1613
        %v2731 = vpop.f32.mrb[0].mxu0
        %v2732 = vadd.f32 %v1828, %v2731
        %v2733 = vpop.f32.mrb[0].mxu0
        %2734 = vmatprep.mubr.f32.mxu0 %v1616
        %2735 = vmatmul.mubr.f32.gmra.mrb[0].mxu0 %v1615
        %v2736 = vpop.f32.mrb[0].mxu0
        %v2737 = vadd.f32 %v1828, %v2736
        %v2738 = vpop.f32.mrb[0].mxu0
        %2739 = vmatprep.mubr.f32.mxu0 %v1618
        %2740 = vmatmul.mubr.f32.gmra.mrb[0].mxu0 %v1617
        %v2741 = vpop.f32.mrb[0].mxu0
        %v2742 = vadd.f32 %v1828, %v2741
        %v2743 = vpop.f32.mrb[0].mxu0
        %2744 = vmatprep.mubr.f32.mxu0 %v1620
        %2745 = vmatmul.mubr.f32.gmra.mrb[0].mxu0 %v1619
        %v2746 = vpop.f32.mrb[0].mxu0
        %v2747 = vadd.f32 %v1828, %v2746
        %v2748 = vpop.f32.mrb[0].mxu0
        %2749 = vmatprep.mubr.f32.mxu0 %v1622
        %2750 = vmatmul.mubr.f32.gmra.mrb[0].mxu0 %v1621
        %v2751 = vpop.f32.mrb[0].mxu0
        %v2752 = vadd.f32 %v1828, %v2751
        %v2753 = vpop.f32.mrb[0].mxu0
        %2754 = vmatprep.mubr.f32.mxu0 %v1624
        %2755 = vmatmul.mubr.f32.gmra.mrb[0].mxu0 %v1623
        %v2756 = vpop.f32.mrb[0].mxu0
        %v2757 = vadd.f32 %v1828, %v2756
        %v2758 = vpop.f32.mrb[0].mxu0
        %2759 = vmatprep.mubr.f32.mxu0 %v1626
        %2760 = vmatmul.mubr.f32.gmra.mrb[0].mxu0 %v1625
        %v2761 = vpop.f32.mrb[0].mxu0
        %v2762 = vadd.f32 %v1828, %v2761
        %v2763 = vpop.f32.mrb[0].mxu0
        %2764 = vmatprep.mubr.f32.mxu0 %v1628
        %2765 = vmatmul.mubr.f32.gmra.mrb[0].mxu0 %v1627
        %v2766 = vpop.f32.mrb[0].mxu0
        %v2767 = vadd.f32 %v1828, %v2766
        %v2768 = vpop.f32.mrb[0].mxu0
        %2769 = vmatprep.mubr.f32.mxu0 %v1630
        %2770 = vmatmul.mubr.f32.gmra.mrb[0].mxu0 %v1629
        %v2771 = vpop.f32.mrb[0].mxu0
        %v2772 = vadd.f32 %v1828, %v2771
        %v2773 = vpop.f32.mrb[0].mxu0
        %2774 = vmatprep.mubr.f32.mxu0 %v1632
        %2775 = vmatmul.mubr.f32.gmra.mrb[0].mxu0 %v1631
        %v2776 = vpop.f32.mrb[0].mxu0
        %v2777 = vadd.f32 %v1828, %v2776
        %v2778 = vpop.f32.mrb[0].mxu0
        %2779 = vmatprep.mubr.f32.mxu0 %v1634
        %2780 = vmatmul.mubr.f32.gmra.mrb[0].mxu0 %v1633
        %v2781 = vpop.f32.mrb[0].mxu0
        %v2782 = vadd.f32 %v1828, %v2781
        %v2783 = vpop.f32.mrb[0].mxu0
        %2784 = vmatprep.mubr.f32.mxu0 %v1636
        %2785 = vmatmul.mubr.f32.gmra.mrb[0].mxu0 %v1635
        %v2786 = vpop.f32.mrb[0].mxu0
        %v2787 = vadd.f32 %v1828, %v2786
        %v2788 = vpop.f32.mrb[0].mxu0
        %2789 = vmatprep.mubr.f32.mxu0 %v1638
        %2790 = vmatmul.mubr.f32.gmra.mrb[0].mxu0 %v1637
        %v2791 = vpop.f32.mrb[0].mxu0
        %v2792 = vadd.f32 %v1828, %v2791
        %v2793 = vpop.f32.mrb[0].mxu0
        %2794 = vmatprep.mubr.f32.mxu0 %v1640
        %2795 = vmatmul.mubr.f32.gmra.mrb[0].mxu0 %v1639
        %v2796 = vpop.f32.mrb[0].mxu0
        %v2797 = vadd.f32 %v1828, %v2796
        %v2798 = vpop.f32.mrb[0].mxu0
        %2799 = vmatprep.mubr.f32.mxu0 %v1642
        %2800 = vmatmul.mubr.f32.gmra.mrb[0].mxu0 %v1641
        %v2801 = vpop.f32.mrb[0].mxu0
        %v2802 = vadd.f32 %v1828, %v2801
        %v2803 = vpop.f32.mrb[0].mxu0
        %2804 = vmatprep.mubr.f32.mxu0 %v1644
        %2805 = vmatmul.mubr.f32.gmra.mrb[0].mxu0 %v1643
        %v2806 = vpop.f32.mrb[0].mxu0
        %v2807 = vadd.f32 %v1828, %v2806
        %v2808 = vpop.f32.mrb[0].mxu0
        %2809 = vmatprep.mubr.f32.mxu0 %v1646
        %2810 = vmatmul.mubr.f32.gmra.mrb[0].mxu0 %v1645
        %v2811 = vpop.f32.mrb[0].mxu0
        %v2812 = vadd.f32 %v1828, %v2811
        %v2813 = vpop.f32.mrb[0].mxu0
        %2814 = vmatprep.mubr.f32.mxu0 %v1648
        %2815 = vmatmul.mubr.f32.gmra.mrb[0].mxu0 %v1647
        %v2816 = vpop.f32.mrb[0].mxu0
        %v2817 = vadd.f32 %v1828, %v2816
        %v2818 = vpop.f32.mrb[0].mxu0
        %2819 = vmatprep.mubr.f32.mxu0 %v1650
        %2820 = vmatmul.mubr.f32.gmra.mrb[0].mxu0 %v1649
        %v2821 = vpop.f32.mrb[0].mxu0
        %v2822 = vadd.f32 %v1828, %v2821
        %v2823 = vpop.f32.mrb[0].mxu0
        %2824 = vmatprep.mubr.f32.mxu0 %v1652
        %2825 = vmatmul.mubr.f32.gmra.mrb[0].mxu0 %v1651
        %v2826 = vpop.f32.mrb[0].mxu0
        %v2827 = vadd.f32 %v1828, %v2826
        %v2828 = vpop.f32.mrb[0].mxu0
        %2829 = vmatprep.mubr.f32.mxu0 %v1654
        %2830 = vmatmul.mubr.f32.gmra.mrb[0].mxu0 %v1653
        %v2831 = vpop.f32.mrb[0].mxu0
        %v2832 = vadd.f32 %v1828, %v2831
        %v2833 = vpop.f32.mrb[0].mxu0
        %2834 = vmatprep.mubr.f32.mxu0 %v1656
        %2835 = vmatmul.mubr.f32.gmra.mrb[0].mxu0 %v1655
        %v2836 = vpop.f32.mrb[0].mxu0
        %v2837 = vadd.f32 %v1828, %v2836
        %v2838 = vpop.f32.mrb[0].mxu0
        %2839 = vmatprep.mubr.f32.mxu0 %v1658
        %2840 = vmatmul.mubr.f32.gmra.mrb[0].mxu0 %v1657
        %v2841 = vpop.f32.mrb[0].mxu0
        %v2842 = vadd.f32 %v1828, %v2841
        %v2843 = vpop.f32.mrb[0].mxu0
        %2844 = vmatprep.mubr.f32.mxu0 %v1660
        %2845 = vmatmul.mubr.f32.gmra.mrb[0].mxu0 %v1659
        %v2846 = vpop.f32.mrb[0].mxu0
        %v2847 = vadd.f32 %v1828, %v2846
        %v2848 = vpop.f32.mrb[0].mxu0
        %2849 = vmatprep.mubr.f32.mxu0 %v1662
        %2850 = vmatmul.mubr.f32.gmra.mrb[0].mxu0 %v1661
        %v2851 = vpop.f32.mrb[0].mxu0
        %v2852 = vadd.f32 %v1828, %v2851
        %v2853 = vpop.f32.mrb[0].mxu0
        %2854 = vmatprep.mubr.f32.mxu0 %v1664
        %2855 = vmatmul.mubr.f32.gmra.mrb[0].mxu0 %v1663
        %v2856 = vpop.f32.mrb[0].mxu0
        %v2857 = vadd.f32 %v1828, %v2856
        %v2858 = vpop.f32.mrb[0].mxu0
        %2859 = vmatprep.mubr.f32.mxu0 %v1666
        %2860 = vmatmul.mubr.f32.gmra.mrb[0].mxu0 %v1665
        %v2861 = vpop.f32.mrb[0].mxu0
        %v2862 = vadd.f32 %v1828, %v2861
        %v2863 = vpop.f32.mrb[0].mxu0
        %2864 = vmatprep.mubr.f32.mxu0 %v1668
        %2865 = vmatmul.mubr.f32.gmra.mrb[0].mxu0 %v1667
        %v2866 = vpop.f32.mrb[0].mxu0
        %v2867 = vadd.f32 %v1828, %v2866
        %v2868 = vpop.f32.mrb[0].mxu0
        %2869 = vmatprep.mubr.f32.mxu0 %v1670
        %2870 = vmatmul.mubr.f32.gmra.mrb[0].mxu0 %v1669
        %v2871 = vpop.f32.mrb[0].mxu0
        %v2872 = vadd.f32 %v1828, %v2871
        %v2873 = vpop.f32.mrb[0].mxu0
        %2874 = vmatprep.mubr.f32.mxu0 %v1672
        %2875 = vmatmul.mubr.f32.gmra.mrb[0].mxu0 %v1671
        %v2876 = vpop.f32.mrb[0].mxu0
        %v2877 = vadd.f32 %v1828, %v2876
        %v2878 = vpop.f32.mrb[0].mxu0
        %2879 = vmatprep.mubr.f32.mxu0 %v1674
        %2880 = vmatmul.mubr.f32.gmra.mrb[0].mxu0 %v1673
        %v2881 = vpop.f32.mrb[0].mxu0
        %v2882 = vadd.f32 %v1828, %v2881
        %v2883 = vpop.f32.mrb[0].mxu0
        %2884 = vmatprep.mubr.f32.mxu0 %v1676
        %2885 = vmatmul.mubr.f32.gmra.mrb[0].mxu0 %v1675
        %v2886 = vpop.f32.mrb[0].mxu0
        %v2887 = vadd.f32 %v1828, %v2886
        %v2888 = vpop.f32.mrb[0].mxu0
        %2889 = vmatprep.mubr.f32.mxu0 %v1678
        %2890 = vmatmul.mubr.f32.gmra.mrb[0].mxu0 %v1677
        %v2891 = vpop.f32.mrb[0].mxu0
        %v2892 = vadd.f32 %v1828, %v2891
        %v2893 = vpop.f32.mrb[0].mxu0
        %2894 = vmatprep.mubr.f32.mxu0 %v1680
        %2895 = vmatmul.mubr.f32.gmra.mrb[0].mxu0 %v1679
        %v2896 = vpop.f32.mrb[0].mxu0
        %v2897 = vadd.f32 %v1828, %v2896
        %v2898 = vpop.f32.mrb[0].mxu0
        %2899 = vmatprep.mubr.f32.mxu0 %v1682
        %2900 = vmatmul.mubr.f32.gmra.mrb[0].mxu0 %v1681
        %v2901 = vpop.f32.mrb[0].mxu0
        %v2902 = vadd.f32 %v1828, %v2901
        %v2903 = vpop.f32.mrb[0].mxu0
        %2904 = vmatprep.mubr.f32.mxu0 %v1684
        %2905 = vmatmul.mubr.f32.gmra.mrb[0].mxu0 %v1683
        %v2906 = vpop.f32.mrb[0].mxu0
        %v2907 = vadd.f32 %v1828, %v2906
        %v2908 = vpop.f32.mrb[0].mxu0
        %2909 = vmatprep.mubr.f32.mxu0 %v1686
        %2910 = vmatmul.mubr.f32.gmra.mrb[0].mxu0 %v1685
        %v2911 = vpop.f32.mrb[0].mxu0
        %v2912 = vadd.f32 %v1828, %v2911
        %v2913 = vpop.f32.mrb[0].mxu0
        %2914 = vmatprep.mubr.f32.mxu0 %v1688
        %2915 = vmatmul.mubr.f32.gmra.mrb[0].mxu0 %v1687
        %v2916 = vpop.f32.mrb[0].mxu0
        %v2917 = vadd.f32 %v1828, %v2916
        %v2918 = vpop.f32.mrb[0].mxu0
        %2919 = vmatprep.mubr.f32.mxu0 %v1690
        %2920 = vmatmul.mubr.f32.gmra.mrb[0].mxu0 %v1689
        %v2921 = vpop.f32.mrb[0].mxu0
        %v2922 = vadd.f32 %v1828, %v2921
        %v2923 = vpop.f32.mrb[0].mxu0
        %2924 = vmatprep.mubr.f32.mxu0 %v1692
        %2925 = vmatmul.mubr.f32.gmra.mrb[0].mxu0 %v1691
        %v2926 = vpop.f32.mrb[0].mxu0
        %v2927 = vadd.f32 %v1828, %v2926
        %v2928 = vpop.f32.mrb[0].mxu0
        %2929 = vmatprep.mubr.f32.mxu0 %v1694
        %2930 = vmatmul.mubr.f32.gmra.mrb[0].mxu0 %v1693
        %v2931 = vpop.f32.mrb[0].mxu0
        %v2932 = vadd.f32 %v1828, %v2931
        %v2933 = vpop.f32.mrb[0].mxu0
        %2934 = vmatprep.mubr.f32.mxu0 %v1696
        %2935 = vmatmul.mubr.f32.gmra.mrb[0].mxu0 %v1695
        %v2936 = vpop.f32.mrb[0].mxu0
        %v2937 = vadd.f32 %v1828, %v2936
        %v2938 = vpop.f32.mrb[0].mxu0
        %2939 = vmatprep.mubr.f32.mxu0 %v1698
        %2940 = vmatmul.mubr.f32.gmra.mrb[0].mxu0 %v1697
        %v2941 = vpop.f32.mrb[0].mxu0
        %v2942 = vadd.f32 %v1828, %v2941
        %v2943 = vpop.f32.mrb[0].mxu0
        %2944 = vmatprep.mubr.f32.mxu0 %v1700
        %2945 = vmatmul.mubr.f32.gmra.mrb[0].mxu0 %v1699
        %v2946 = vpop.f32.mrb[0].mxu0
        %v2947 = vadd.f32 %v1828, %v2946
        %v2948 = vpop.f32.mrb[0].mxu0
        %2949 = vmatprep.mubr.f32.mxu0 %v1702
        %2950 = vmatmul.mubr.f32.gmra.mrb[0].mxu0 %v1701
        %v2951 = vpop.f32.mrb[0].mxu0
        %v2952 = vadd.f32 %v1828, %v2951
        %v2953 = vpop.f32.mrb[0].mxu0
        %2954 = vmatprep.mubr.f32.mxu0 %v1704
        %2955 = vmatmul.mubr.f32.gmra.mrb[0].mxu0 %v1703
        %v2956 = vpop.f32.mrb[0].mxu0
        %v2957 = vadd.f32 %v1828, %v2956
        %v2958 = vpop.f32.mrb[0].mxu0
        %2959 = vmatprep.mubr.f32.mxu0 %v1706
        %2960 = vmatmul.mubr.f32.gmra.mrb[0].mxu0 %v1705
        %v2961 = vpop.f32.mrb[0].mxu0
        %v2962 = vadd.f32 %v1828, %v2961
        %v2963 = vpop.f32.mrb[0].mxu0
        %2964 = vmatprep.mubr.f32.mxu0 %v1708
        %2965 = vmatmul.mubr.f32.gmra.mrb[0].mxu0 %v1707
        %v2966 = vpop.f32.mrb[0].mxu0
        %v2967 = vadd.f32 %v1828, %v2966
        %v2968 = vpop.f32.mrb[0].mxu0
        %2969 = vmatprep.mubr.f32.mxu0 %v1710
        %2970 = vmatmul.mubr.f32.gmra.mrb[0].mxu0 %v1709
        %v2971 = vpop.f32.mrb[0].mxu0
        %v2972 = vadd.f32 %v1828, %v2971
        %v2973 = vpop.f32.mrb[0].mxu0
        %2974 = vmatprep.mubr.f32.mxu0 %v1712
        %2975 = vmatmul.mubr.f32.gmra.mrb[0].mxu0 %v1711
        %v2976 = vpop.f32.mrb[0].mxu0
        %v2977 = vadd.f32 %v1828, %v2976
        %v2978 = vpop.f32.mrb[0].mxu0
        %2979 = vmatprep.mubr.f32.mxu0 %v1714
        %2980 = vmatmul.mubr.f32.gmra.mrb[0].mxu0 %v1713
        %v2981 = vpop.f32.mrb[0].mxu0
        %v2982 = vadd.f32 %v1828, %v2981
        %v2983 = vpop.f32.mrb[0].mxu0
        %2984 = vmatprep.mubr.f32.mxu0 %v1716
        %2985 = vmatmul.mubr.f32.gmra.mrb[0].mxu0 %v1715
        %v2986 = vpop.f32.mrb[0].mxu0
        %v2987 = vadd.f32 %v1828, %v2986
        %v2988 = vpop.f32.mrb[0].mxu0
        %2989 = vmatprep.mubr.f32.mxu0 %v1718
        %2990 = vmatmul.mubr.f32.gmra.mrb[0].mxu0 %v1717
        %v2991 = vpop.f32.mrb[0].mxu0
        %v2992 = vadd.f32 %v1828, %v2991
        %v2993 = vpop.f32.mrb[0].mxu0
        %2994 = vmatprep.mubr.f32.mxu0 %v1720
        %2995 = vmatmul.mubr.f32.gmra.mrb[0].mxu0 %v1719
        %v2996 = vpop.f32.mrb[0].mxu0
        %v2997 = vadd.f32 %v1828, %v2996
        %v2998 = vpop.f32.mrb[0].mxu0
        %2999 = vmatprep.mubr.f32.mxu0 %v1722
        %3000 = vmatmul.mubr.f32.gmra.mrb[0].mxu0 %v1721
        %v3001 = vpop.f32.mrb[0].mxu0
        %v3002 = vadd.f32 %v1828, %v3001
        %v3003 = vpop.f32.mrb[0].mxu0
        %3004 = vmatprep.mubr.f32.mxu0 %v1724
        %3005 = vmatmul.mubr.f32.gmra.mrb[0].mxu0 %v1723
        %v3006 = vpop.f32.mrb[0].mxu0
        %v3007 = vadd.f32 %v1828, %v3006
        %v3008 = vpop.f32.mrb[0].mxu0
        %3009 = vmatprep.mubr.f32.mxu0 %v1726
        %3010 = vmatmul.mubr.f32.gmra.mrb[0].mxu0 %v1725
        %v3011 = vpop.f32.mrb[0].mxu0
        %v3012 = vadd.f32 %v1828, %v3011
        %v3013 = vpop.f32.mrb[0].mxu0
        %3014 = vmatprep.mubr.f32.mxu0 %v1728
        %3015 = vmatmul.mubr.f32.gmra.mrb[0].mxu0 %v1727
        %v3016 = vpop.f32.mrb[0].mxu0
        %v3017 = vadd.f32 %v1828, %v3016
        %v3018 = vpop.f32.mrb[0].mxu0
        %3019 = vmatprep.mubr.f32.mxu0 %v1730
        %3020 = vmatmul.mubr.f32.gmra.mrb[0].mxu0 %v1729
        %v3021 = vpop.f32.mrb[0].mxu0
        %v3022 = vadd.f32 %v1828, %v3021
        %v3023 = vpop.f32.mrb[0].mxu0
        %3024 = vmatprep.mubr.f32.mxu0 %v1732
        %3025 = vmatmul.mubr.f32.gmra.mrb[0].mxu0 %v1731
        %v3026 = vpop.f32.mrb[0].mxu0
        %v3027 = vadd.f32 %v1828, %v3026
        %v3028 = vpop.f32.mrb[0].mxu0
        %3029 = vmatprep.mubr.f32.mxu0 %v1734
        %3030 = vmatmul.mubr.f32.gmra.mrb[0].mxu0 %v1733
        %v3031 = vpop.f32.mrb[0].mxu0
        %v3032 = vadd.f32 %v1828, %v3031
        %v3033 = vpop.f32.mrb[0].mxu0
        %3034 = vmatprep.mubr.f32.mxu0 %v1736
        %3035 = vmatmul.mubr.f32.gmra.mrb[0].mxu0 %v1735
        %v3036 = vpop.f32.mrb[0].mxu0
        %v3037 = vadd.f32 %v1828, %v3036
        %v3038 = vpop.f32.mrb[0].mxu0
        %3039 = vmatprep.mubr.f32.mxu0 %v1738
        %3040 = vmatmul.mubr.f32.gmra.mrb[0].mxu0 %v1737
        %v3041 = vpop.f32.mrb[0].mxu0
        %v3042 = vadd.f32 %v1828, %v3041
        %v3043 = vpop.f32.mrb[0].mxu0
        %3044 = vmatprep.mubr.f32.mxu0 %v1740
        %3045 = vmatmul.mubr.f32.gmra.mrb[0].mxu0 %v1739
        %v3046 = vpop.f32.mrb[0].mxu0
        %v3047 = vadd.f32 %v1828, %v3046
        %v3048 = vpop.f32.mrb[0].mxu0
        %3049 = vmatprep.mubr.f32.mxu0 %v1742
        %3050 = vmatmul.mubr.f32.gmra.mrb[0].mxu0 %v1741
        %v3051 = vpop.f32.mrb[0].mxu0
        %v3052 = vadd.f32 %v1828, %v3051
        %v3053 = vpop.f32.mrb[0].mxu0
        %3054 = vmatprep.mubr.f32.mxu0 %v1744
        %3055 = vmatmul.mubr.f32.gmra.mrb[0].mxu0 %v1743
        %v3056 = vpop.f32.mrb[0].mxu0
        %v3057 = vadd.f32 %v1828, %v3056
        %v3058 = vpop.f32.mrb[0].mxu0
        %3059 = vmatprep.mubr.f32.mxu0 %v1746
        %3060 = vmatmul.mubr.f32.gmra.mrb[0].mxu0 %v1745
        %v3061 = vpop.f32.mrb[0].mxu0
        %v3062 = vadd.f32 %v1828, %v3061
        %v3063 = vpop.f32.mrb[0].mxu0
        %3064 = vmatprep.mubr.f32.mxu0 %v1748
        %3065 = vmatmul.mubr.f32.gmra.mrb[0].mxu0 %v1747
        %v3066 = vpop.f32.mrb[0].mxu0
        %v3067 = vadd.f32 %v1828, %v3066
        %v3068 = vpop.f32.mrb[0].mxu0
        %3069 = vmatprep.mubr.f32.mxu0 %v1750
        %3070 = vmatmul.mubr.f32.gmra.mrb[0].mxu0 %v1749
        %v3071 = vpop.f32.mrb[0].mxu0
        %v3072 = vadd.f32 %v1828, %v3071
        %v3073 = vpop.f32.mrb[0].mxu0
        %3074 = vmatprep.mubr.f32.mxu0 %v1752
        %3075 = vmatmul.mubr.f32.gmra.mrb[0].mxu0 %v1751
        %v3076 = vpop.f32.mrb[0].mxu0
        %v3077 = vadd.f32 %v1828, %v3076
        %v3078 = vpop.f32.mrb[0].mxu0
        %3079 = vmatprep.mubr.f32.mxu0 %v1754
        %3080 = vmatmul.mubr.f32.gmra.mrb[0].mxu0 %v1753
        %v3081 = vpop.f32.mrb[0].mxu0
        %v3082 = vadd.f32 %v1828, %v3081
        %v3083 = vpop.f32.mrb[0].mxu0
        %3084 = vmatprep.mubr.f32.mxu0 %v1756
        %3085 = vmatmul.mubr.f32.gmra.mrb[0].mxu0 %v1755
        %v3086 = vpop.f32.mrb[0].mxu0
        %v3087 = vadd.f32 %v1828, %v3086
        %v3088 = vpop.f32.mrb[0].mxu0
        %3089 = vmatprep.mubr.f32.mxu0 %v1758
        %3090 = vmatmul.mubr.f32.gmra.mrb[0].mxu0 %v1757
        %v3091 = vpop.f32.mrb[0].mxu0
        %v3092 = vadd.f32 %v1828, %v3091
        %v3093 = vpop.f32.mrb[0].mxu0
        %3094 = vmatprep.mubr.f32.mxu0 %v1760
        %3095 = vmatmul.mubr.f32.gmra.mrb[0].mxu0 %v1759
        %v3096 = vpop.f32.mrb[0].mxu0
        %v3097 = vadd.f32 %v1828, %v3096
        %v3098 = vpop.f32.mrb[0].mxu0
        %3099 = vmatprep.mubr.f32.mxu0 %v1762
        %3100 = vmatmul.mubr.f32.gmra.mrb[0].mxu0 %v1761
        %v3101 = vpop.f32.mrb[0].mxu0
        %v3102 = vadd.f32 %v1828, %v3101
        %v3103 = vpop.f32.mrb[0].mxu0
        %3104 = vmatprep.mubr.f32.mxu0 %v1764
        %3105 = vmatmul.mubr.f32.gmra.mrb[0].mxu0 %v1763
        %v3106 = vpop.f32.mrb[0].mxu0
        %v3107 = vadd.f32 %v1828, %v3106
        %v3108 = vpop.f32.mrb[0].mxu0
        %3109 = vmatprep.mubr.f32.mxu0 %v1766
        %3110 = vmatmul.mubr.f32.gmra.mrb[0].mxu0 %v1765
        %v3111 = vpop.f32.mrb[0].mxu0
        %v3112 = vadd.f32 %v1828, %v3111
        %v3113 = vpop.f32.mrb[0].mxu0
        %3114 = vmatprep.mubr.f32.mxu0 %v1768
        %3115 = vmatmul.mubr.f32.gmra.mrb[0].mxu0 %v1767
        %v3116 = vpop.f32.mrb[0].mxu0
        %v3117 = vadd.f32 %v1828, %v3116
        %v3118 = vpop.f32.mrb[0].mxu0
        %3119 = vmatprep.mubr.f32.mxu0 %v1770
        %3120 = vmatmul.mubr.f32.gmra.mrb[0].mxu0 %v1769
        %v3121 = vpop.f32.mrb[0].mxu0
        %v3122 = vadd.f32 %v1828, %v3121
        %v3123 = vpop.f32.mrb[0].mxu0
        %3124 = vmatprep.mubr.f32.mxu0 %v1772
        %3125 = vmatmul.mubr.f32.gmra.mrb[0].mxu0 %v1771
        %v3126 = vpop.f32.mrb[0].mxu0
        %v3127 = vadd.f32 %v1828, %v3126
        %v3128 = vpop.f32.mrb[0].mxu0
        %3129 = vmatprep.mubr.f32.mxu0 %v1774
        %3130 = vmatmul.mubr.f32.gmra.mrb[0].mxu0 %v1773
        %v3131 = vpop.f32.mrb[0].mxu0
        %v3132 = vadd.f32 %v1828, %v3131
        %v3133 = vpop.f32.mrb[0].mxu0
        %3134 = vmatprep.mubr.f32.mxu0 %v1776
        %3135 = vmatmul.mubr.f32.gmra.mrb[0].mxu0 %v1775
        %v3136 = vpop.f32.mrb[0].mxu0
        %v3137 = vadd.f32 %v1828, %v3136
        %v3138 = vpop.f32.mrb[0].mxu0
        %3139 = vmatprep.mubr.f32.mxu0 %v1778
        %3140 = vmatmul.mubr.f32.gmra.mrb[0].mxu0 %v1777
        %v3141 = vpop.f32.mrb[0].mxu0
        %v3142 = vadd.f32 %v1828, %v3141
        %v3143 = vpop.f32.mrb[0].mxu0
        %3144 = vmatprep.mubr.f32.mxu0 %v1780
        %3145 = vmatmul.mubr.f32.gmra.mrb[0].mxu0 %v1779
        %v3146 = vpop.f32.mrb[0].mxu0
        %v3147 = vadd.f32 %v1828, %v3146
        %v3148 = vpop.f32.mrb[0].mxu0
        %3149 = vmatprep.mubr.f32.mxu0 %v1782
        %3150 = vmatmul.mubr.f32.gmra.mrb[0].mxu0 %v1781
        %v3151 = vpop.f32.mrb[0].mxu0
        %v3152 = vadd.f32 %v1828, %v3151
        %v3153 = vpop.f32.mrb[0].mxu0
        %3154 = vmatprep.mubr.f32.mxu0 %v1784
        %3155 = vmatmul.mubr.f32.gmra.mrb[0].mxu0 %v1783
        %v3156 = vpop.f32.mrb[0].mxu0
        %v3157 = vadd.f32 %v1828, %v3156
        %v3158 = vpop.f32.mrb[0].mxu0
        %3159 = vmatprep.mubr.f32.mxu0 %v1786
        %3160 = vmatmul.mubr.f32.gmra.mrb[0].mxu0 %v1785
        %v3161 = vpop.f32.mrb[0].mxu0
        %v3162 = vadd.f32 %v1828, %v3161
        %v3163 = vpop.f32.mrb[0].mxu0
        %3164 = vmatprep.mubr.f32.mxu0 %v1788
        %3165 = vmatmul.mubr.f32.gmra.mrb[0].mxu0 %v1787
        %v3166 = vpop.f32.mrb[0].mxu0
        %v3167 = vadd.f32 %v1828, %v3166
        %v3168 = vpop.f32.mrb[0].mxu0
        %3169 = vmatprep.mubr.f32.mxu0 %v1790
        %3170 = vmatmul.mubr.f32.gmra.mrb[0].mxu0 %v1789
        %v3171 = vpop.f32.mrb[0].mxu0
        %v3172 = vadd.f32 %v1828, %v3171
        %v3173 = vpop.f32.mrb[0].mxu0
        %3174 = vdwg.mxu0
        %v3175 = vmax.f32 %v1897, 0.0
        %v3176 = vmax.f32 %v1902, 0.0
        %v3177 = vmax.f32 %v1907, 0.0
        %v3178 = vmax.f32 %v1912, 0.0
        %v3179 = vmax.f32 %v1917, 0.0
        %v3180 = vmax.f32 %v1922, 0.0
        %v3181 = vmax.f32 %v1927, 0.0
        %v3182 = vmax.f32 %v1932, 0.0
        %v3183 = vmax.f32 %v1937, 0.0
        %v3184 = vmax.f32 %v1942, 0.0
        %v3185 = vmax.f32 %v1947, 0.0
        %v3186 = vmax.f32 %v1952, 0.0
        %v3187 = vmax.f32 %v1957, 0.0
        %v3188 = vmax.f32 %v1962, 0.0
        %v3189 = vmax.f32 %v1967, 0.0
        %v3190 = vmax.f32 %v1972, 0.0
        %v3191 = vmax.f32 %v1977, 0.0
        %v3192 = vmax.f32 %v1982, 0.0
        %v3193 = vmax.f32 %v1987, 0.0
        %v3194 = vmax.f32 %v1992, 0.0
        %v3195 = vmax.f32 %v1997, 0.0
        %v3196 = vmax.f32 %v2002, 0.0
        %v3197 = vmax.f32 %v2007, 0.0
        %v3198 = vmax.f32 %v2012, 0.0
        %v3199 = vmax.f32 %v2017, 0.0
        %v3200 = vmax.f32 %v2022, 0.0
        %v3201 = vmax.f32 %v2027, 0.0
        %v3202 = vmax.f32 %v2032, 0.0
        %v3203 = vmax.f32 %v2037, 0.0
        %v3204 = vmax.f32 %v2042, 0.0
        %v3205 = vmax.f32 %v2047, 0.0
        %v3206 = vmax.f32 %v2052, 0.0
        %v3207 = vmax.f32 %v2057, 0.0
        %v3208 = vmax.f32 %v2062, 0.0
        %v3209 = vmax.f32 %v2067, 0.0
        %v3210 = vmax.f32 %v2072, 0.0
        %v3211 = vmax.f32 %v2077, 0.0
        %v3212 = vmax.f32 %v2082, 0.0
        %v3213 = vmax.f32 %v2087, 0.0
        %v3214 = vmax.f32 %v2092, 0.0
        %v3215 = vmax.f32 %v2097, 0.0
        %v3216 = vmax.f32 %v2102, 0.0
        %v3217 = vmax.f32 %v2107, 0.0
        %v3218 = vmax.f32 %v2112, 0.0
        %v3219 = vmax.f32 %v2117, 0.0
        %v3220 = vmax.f32 %v2122, 0.0
        %v3221 = vmax.f32 %v2127, 0.0
        %v3222 = vmax.f32 %v2132, 0.0
        %v3223 = vmax.f32 %v2137, 0.0
        %v3224 = vmax.f32 %v2142, 0.0
        %v3225 = vmax.f32 %v2147, 0.0
        %v3226 = vmax.f32 %v2152, 0.0
        %v3227 = vmax.f32 %v2157, 0.0
        %v3228 = vmax.f32 %v2162, 0.0
        %v3229 = vmax.f32 %v2167, 0.0
        %v3230 = vmax.f32 %v2172, 0.0
        %v3231 = vmax.f32 %v2177, 0.0
        %v3232 = vmax.f32 %v2182, 0.0
        %v3233 = vmax.f32 %v2187, 0.0
        %v3234 = vmax.f32 %v2192, 0.0
        %v3235 = vmax.f32 %v2197, 0.0
        %v3236 = vmax.f32 %v2202, 0.0
        %v3237 = vmax.f32 %v2207, 0.0
        %v3238 = vmax.f32 %v2212, 0.0
        %v3239 = vmax.f32 %v2217, 0.0
        %v3240 = vmax.f32 %v2222, 0.0
        %v3241 = vmax.f32 %v2227, 0.0
        %v3242 = vmax.f32 %v2232, 0.0
        %v3243 = vmax.f32 %v2237, 0.0
        %v3244 = vmax.f32 %v2242, 0.0
        %v3245 = vmax.f32 %v2247, 0.0
        %v3246 = vmax.f32 %v2252, 0.0
        %v3247 = vmax.f32 %v2257, 0.0
        %v3248 = vmax.f32 %v2262, 0.0
        %v3249 = vmax.f32 %v2267, 0.0
        %v3250 = vmax.f32 %v2272, 0.0
        %v3251 = vmax.f32 %v2277, 0.0
        %v3252 = vmax.f32 %v2282, 0.0
        %v3253 = vmax.f32 %v2287, 0.0
        %v3254 = vmax.f32 %v2292, 0.0
        %v3255 = vmax.f32 %v2297, 0.0
        %v3256 = vmax.f32 %v2302, 0.0
        %v3257 = vmax.f32 %v2307, 0.0
        %v3258 = vmax.f32 %v2312, 0.0
        %v3259 = vmax.f32 %v2317, 0.0
        %v3260 = vmax.f32 %v2322, 0.0
        %v3261 = vmax.f32 %v2327, 0.0
        %v3262 = vmax.f32 %v2332, 0.0
        %v3263 = vmax.f32 %v2337, 0.0
        %v3264 = vmax.f32 %v2342, 0.0
        %v3265 = vmax.f32 %v2347, 0.0
        %v3266 = vmax.f32 %v2352, 0.0
        %v3267 = vmax.f32 %v2357, 0.0
        %v3268 = vmax.f32 %v2362, 0.0
        %v3269 = vmax.f32 %v2367, 0.0
        %v3270 = vmax.f32 %v2372, 0.0
        %v3271 = vmax.f32 %v2377, 0.0
        %v3272 = vmax.f32 %v2382, 0.0
        %v3273 = vmax.f32 %v2387, 0.0
        %v3274 = vmax.f32 %v2392, 0.0
        %v3275 = vmax.f32 %v2397, 0.0
        %v3276 = vmax.f32 %v2402, 0.0
        %v3277 = vmax.f32 %v2407, 0.0
        %v3278 = vmax.f32 %v2412, 0.0
        %v3279 = vmax.f32 %v2417, 0.0
        %v3280 = vmax.f32 %v2422, 0.0
        %v3281 = vmax.f32 %v2427, 0.0
        %v3282 = vmax.f32 %v2432, 0.0
        %v3283 = vmax.f32 %v2437, 0.0
        %v3284 = vmax.f32 %v2442, 0.0
        %v3285 = vmax.f32 %v2447, 0.0
        %v3286 = vmax.f32 %v2452, 0.0
        %v3287 = vmax.f32 %v2457, 0.0
        %v3288 = vmax.f32 %v2462, 0.0
        %v3289 = vmax.f32 %v2467, 0.0
        %v3290 = vmax.f32 %v2472, 0.0
        %v3291 = vmax.f32 %v2477, 0.0
        %v3292 = vmax.f32 %v2482, 0.0
        %v3293 = vmax.f32 %v2487, 0.0
        %v3294 = vmax.f32 %v2492, 0.0
        %v3295 = vmax.f32 %v2497, 0.0
        %v3296 = vmax.f32 %v2502, 0.0
        %v3297 = vmax.f32 %v2507, 0.0
        %v3298 = vmax.f32 %v2512, 0.0
        %v3299 = vmax.f32 %v2517, 0.0
        %v3300 = vmax.f32 %v2522, 0.0
        %v3301 = vmax.f32 %v2527, 0.0
        %v3302 = vmax.f32 %v2532, 0.0
        %v3303 = vmax.f32 %v2537, 0.0
        %v3304 = vmax.f32 %v2542, 0.0
        %v3305 = vmax.f32 %v2547, 0.0
        %v3306 = vmax.f32 %v2552, 0.0
        %v3307 = vmax.f32 %v2557, 0.0
        %v3308 = vmax.f32 %v2562, 0.0
        %v3309 = vmax.f32 %v2567, 0.0
        %v3310 = vmax.f32 %v2572, 0.0
        %v3311 = vmax.f32 %v2577, 0.0
        %v3312 = vmax.f32 %v2582, 0.0
        %v3313 = vmax.f32 %v2587, 0.0
        %v3314 = vmax.f32 %v2592, 0.0
        %v3315 = vmax.f32 %v2597, 0.0
        %v3316 = vmax.f32 %v2602, 0.0
        %v3317 = vmax.f32 %v2607, 0.0
        %v3318 = vmax.f32 %v2612, 0.0
        %v3319 = vmax.f32 %v2617, 0.0
        %v3320 = vmax.f32 %v2622, 0.0
        %v3321 = vmax.f32 %v2627, 0.0
        %v3322 = vmax.f32 %v2632, 0.0
        %v3323 = vmax.f32 %v2637, 0.0
        %v3324 = vmax.f32 %v2642, 0.0
        %v3325 = vmax.f32 %v2647, 0.0
        %v3326 = vmax.f32 %v2652, 0.0
        %v3327 = vmax.f32 %v2657, 0.0
        %v3328 = vmax.f32 %v2662, 0.0
        %v3329 = vmax.f32 %v2667, 0.0
        %v3330 = vmax.f32 %v2672, 0.0
        %v3331 = vmax.f32 %v2677, 0.0
        %v3332 = vmax.f32 %v2682, 0.0
        %v3333 = vmax.f32 %v2687, 0.0
        %v3334 = vmax.f32 %v2692, 0.0
        %v3335 = vmax.f32 %v2697, 0.0
        %v3336 = vmax.f32 %v2702, 0.0
        %v3337 = vmax.f32 %v2707, 0.0
        %v3338 = vmax.f32 %v2712, 0.0
        %v3339 = vmax.f32 %v2717, 0.0
        %v3340 = vmax.f32 %v2722, 0.0
        %v3341 = vmax.f32 %v2727, 0.0
        %v3342 = vmax.f32 %v2732, 0.0
        %v3343 = vmax.f32 %v2737, 0.0
        %v3344 = vmax.f32 %v2742, 0.0
        %v3345 = vmax.f32 %v2747, 0.0
        %v3346 = vmax.f32 %v2752, 0.0
        %v3347 = vmax.f32 %v2757, 0.0
        %v3348 = vmax.f32 %v2762, 0.0
        %v3349 = vmax.f32 %v2767, 0.0
        %v3350 = vmax.f32 %v2772, 0.0
        %v3351 = vmax.f32 %v2777, 0.0
        %v3352 = vmax.f32 %v2782, 0.0
        %v3353 = vmax.f32 %v2787, 0.0
        %v3354 = vmax.f32 %v2792, 0.0
        %v3355 = vmax.f32 %v2797, 0.0
        %v3356 = vmax.f32 %v2802, 0.0
        %v3357 = vmax.f32 %v2807, 0.0
        %v3358 = vmax.f32 %v2812, 0.0
        %v3359 = vmax.f32 %v2817, 0.0
        %v3360 = vmax.f32 %v2822, 0.0
        %v3361 = vmax.f32 %v2827, 0.0
        %v3362 = vmax.f32 %v2832, 0.0
        %v3363 = vmax.f32 %v2837, 0.0
        %v3364 = vmax.f32 %v2842, 0.0
        %v3365 = vmax.f32 %v2847, 0.0
        %v3366 = vmax.f32 %v2852, 0.0
        %v3367 = vmax.f32 %v2857, 0.0
        %v3368 = vmax.f32 %v2862, 0.0
        %v3369 = vmax.f32 %v2867, 0.0
        %v3370 = vmax.f32 %v2872, 0.0
        %v3371 = vmax.f32 %v2877, 0.0
        %v3372 = vmax.f32 %v2882, 0.0
        %v3373 = vmax.f32 %v2887, 0.0
        %v3374 = vmax.f32 %v2892, 0.0
        %v3375 = vmax.f32 %v2897, 0.0
        %v3376 = vmax.f32 %v2902, 0.0
        %v3377 = vmax.f32 %v2907, 0.0
        %v3378 = vmax.f32 %v2912, 0.0
        %v3379 = vmax.f32 %v2917, 0.0
        %v3380 = vmax.f32 %v2922, 0.0
        %v3381 = vmax.f32 %v2927, 0.0
        %v3382 = vmax.f32 %v2932, 0.0
        %v3383 = vmax.f32 %v2937, 0.0
        %v3384 = vmax.f32 %v2942, 0.0
        %v3385 = vmax.f32 %v2947, 0.0
        %v3386 = vmax.f32 %v2952, 0.0
        %v3387 = vmax.f32 %v2957, 0.0
        %v3388 = vmax.f32 %v2962, 0.0
        %v3389 = vmax.f32 %v2967, 0.0
        %v3390 = vmax.f32 %v2972, 0.0
        %v3391 = vmax.f32 %v2977, 0.0
        %v3392 = vmax.f32 %v2982, 0.0
        %v3393 = vmax.f32 %v2987, 0.0
        %v3394 = vmax.f32 %v2992, 0.0
        %v3395 = vmax.f32 %v2997, 0.0
        %v3396 = vmax.f32 %v3002, 0.0
        %v3397 = vmax.f32 %v3007, 0.0
        %v3398 = vmax.f32 %v3012, 0.0
        %v3399 = vmax.f32 %v3017, 0.0
        %v3400 = vmax.f32 %v3022, 0.0
        %v3401 = vmax.f32 %v3027, 0.0
        %v3402 = vmax.f32 %v3032, 0.0
        %v3403 = vmax.f32 %v3037, 0.0
        %v3404 = vmax.f32 %v3042, 0.0
        %v3405 = vmax.f32 %v3047, 0.0
        %v3406 = vmax.f32 %v3052, 0.0
        %v3407 = vmax.f32 %v3057, 0.0
        %v3408 = vmax.f32 %v3062, 0.0
        %v3409 = vmax.f32 %v3067, 0.0
        %v3410 = vmax.f32 %v3072, 0.0
        %v3411 = vmax.f32 %v3077, 0.0
        %v3412 = vmax.f32 %v3082, 0.0
        %v3413 = vmax.f32 %v3087, 0.0
        %v3414 = vmax.f32 %v3092, 0.0
        %v3415 = vmax.f32 %v3097, 0.0
        %v3416 = vmax.f32 %v3102, 0.0
        %v3417 = vmax.f32 %v3107, 0.0
        %v3418 = vmax.f32 %v3112, 0.0
        %v3419 = vmax.f32 %v3117, 0.0
        %v3420 = vmax.f32 %v3122, 0.0
        %v3421 = vmax.f32 %v3127, 0.0
        %v3422 = vmax.f32 %v3132, 0.0
        %v3423 = vmax.f32 %v3137, 0.0
        %v3424 = vmax.f32 %v3142, 0.0
        %v3425 = vmax.f32 %v3147, 0.0
        %v3426 = vmax.f32 %v3152, 0.0
        %v3427 = vmax.f32 %v3157, 0.0
        %v3428 = vmax.f32 %v3162, 0.0
        %v3429 = vmax.f32 %v3167, 0.0
        %v3430 = vmax.f32 %v3172, 0.0
        %v3431 = vld [vmem:[#allocation11] sm:$0xff]
        %v3432 = vld [vmem:[#allocation11 + $0x8] sm:$0xff]
        %v3433 = vld [vmem:[#allocation11 + $0x10] sm:$0xff]
        %v3434 = vld [vmem:[#allocation11 + $0x18] sm:$0xff]
        %v3435 = vld [vmem:[#allocation11 + $0x20] sm:$0xff]
        %v3436 = vld [vmem:[#allocation11 + $0x28] sm:$0xff]
        %v3437 = vld [vmem:[#allocation11 + $0x30] sm:$0xff]
        %v3438 = vld [vmem:[#allocation11 + $0x38] sm:$0xff]
        %v3439 = vld [vmem:[#allocation11 + $0x40] sm:$0xff]
        %v3440 = vld [vmem:[#allocation11 + $0x48] sm:$0xff]
        %v3441 = vld [vmem:[#allocation11 + $0x50] sm:$0xff]
        %v3442 = vld [vmem:[#allocation11 + $0x58] sm:$0xff]
        %v3443 = vld [vmem:[#allocation11 + $0x60] sm:$0xff]
        %v3444 = vld [vmem:[#allocation11 + $0x68] sm:$0xff]
        %v3445 = vld [vmem:[#allocation11 + $0x70] sm:$0xff]
        %v3446 = vld [vmem:[#allocation11 + $0x78] sm:$0xff]
        %v3447 = vld [vmem:[#allocation12] sm:$0x1]
        %v3449 = vlaneseq
        %v3450 = vshrl.u32 %v3449, 7
        %v3451 = vsub.s32 0, %v3450
        %v3452 = vrot.slane %v3447, %v3451
        %3454 = vmatprep.subr.mxu0 0.0
        %3455 = vmatpush1.msra.mxu0 %v3431
        %3456 = vmatprep.subr.mxu0 0.0
        %3457 = vmatpush1.msra.mxu0 %v3432
        %3458 = vmatprep.subr.mxu0 0.0
        %3459 = vmatpush1.msra.mxu0 %v3433
        %3460 = vmatprep.subr.mxu0 0.0
        %3461 = vmatpush1.msra.mxu0 %v3434
        %3462 = vmatprep.subr.mxu0 0.0
        %3463 = vmatpush1.msra.mxu0 %v3435
        %3464 = vmatprep.subr.mxu0 0.0
        %3465 = vmatpush1.msra.mxu0 %v3436
        %3466 = vmatprep.subr.mxu0 0.0
        %3467 = vmatpush1.msra.mxu0 %v3437
        %3468 = vmatprep.subr.mxu0 0.0
        %3469 = vmatpush1.msra.mxu0 %v3438
        %3470 = vmatprep.subr.mxu0 0.0
        %3471 = vmatpush1.msra.mxu0 %v3439
        %3472 = vmatprep.subr.mxu0 0.0
        %3473 = vmatpush1.msra.mxu0 %v3440
        %3474 = vmatprep.subr.mxu0 0.0
        %3475 = vmatpush1.msra.mxu0 %v3441
        %3476 = vmatprep.subr.mxu0 0.0
        %3477 = vmatpush1.msra.mxu0 %v3442
        %3478 = vmatprep.subr.mxu0 0.0
        %3479 = vmatpush1.msra.mxu0 %v3443
        %3480 = vmatprep.subr.mxu0 0.0
        %3481 = vmatpush1.msra.mxu0 %v3444
        %3482 = vmatprep.subr.mxu0 0.0
        %3483 = vmatpush1.msra.mxu0 %v3445
        %3484 = vmatprep.subr.mxu0 0.0
        %3485 = vmatpush1.msra.mxu0 %v3446
        %3486 = vmatprep.subr.mxu0 0.0
        %3487 = vmatpush1.msra.mxu0 0.0
        %3488 = vmatprep.subr.mxu0 0.0
        %3489 = vmatpush1.msra.mxu0 0.0
        %3490 = vmatprep.subr.mxu0 0.0
        %3491 = vmatpush1.msra.mxu0 0.0
        %3492 = vmatprep.subr.mxu0 0.0
        %3493 = vmatpush1.msra.mxu0 0.0
        %3494 = vmatprep.subr.mxu0 0.0
        %3495 = vmatpush1.msra.mxu0 0.0
        %3496 = vmatprep.subr.mxu0 0.0
        %3497 = vmatpush1.msra.mxu0 0.0
        %3498 = vmatprep.subr.mxu0 0.0
        %3499 = vmatpush1.msra.mxu0 0.0
        %3500 = vmatprep.subr.mxu0 0.0
        %3501 = vmatpush1.msra.mxu0 0.0
        %3502 = vmatprep.subr.mxu0 0.0
        %3503 = vmatpush1.msra.mxu0 0.0
        %3504 = vmatprep.subr.mxu0 0.0
        %3505 = vmatpush1.msra.mxu0 0.0
        %3506 = vmatprep.subr.mxu0 0.0
        %3507 = vmatpush1.msra.mxu0 0.0
        %3508 = vmatprep.subr.mxu0 0.0
        %3509 = vmatpush1.msra.mxu0 0.0
        %3510 = vmatprep.subr.mxu0 0.0
        %3511 = vmatpush1.msra.mxu0 0.0
        %3512 = vmatprep.subr.mxu0 0.0
        %3513 = vmatpush1.msra.mxu0 0.0
        %3514 = vmatprep.subr.mxu0 0.0
        %3515 = vmatpush1.msra.mxu0 0.0
        %3516 = vmatprep.subr.mxu0 0.0
        %3517 = vmatpush1.msra.mxu0 0.0
        %3518 = vmatprep.mubr.f32.mxu0 0.0
        %3519 = vmatmul.mubr.f32.gmra.mrb[0].mxu0 %v3175
        %v3520 = vpop.f32.mrb[0].mxu0
        %v3521 = vadd.f32 %v3452, %v3520
        %v3522 = vpop.f32.mrb[0].mxu0
        %3523 = vmatprep.mubr.f32.mxu0 0.0
        %3524 = vmatmul.mubr.f32.gmra.mrb[0].mxu0 %v3176
        %v3525 = vpop.f32.mrb[0].mxu0
        %v3526 = vadd.f32 %v3452, %v3525
        %v3527 = vpop.f32.mrb[0].mxu0
        %3528 = vmatprep.mubr.f32.mxu0 0.0
        %3529 = vmatmul.mubr.f32.gmra.mrb[0].mxu0 %v3177
        %v3530 = vpop.f32.mrb[0].mxu0
        %v3531 = vadd.f32 %v3452, %v3530
        %v3532 = vpop.f32.mrb[0].mxu0
        %3533 = vmatprep.mubr.f32.mxu0 0.0
        %3534 = vmatmul.mubr.f32.gmra.mrb[0].mxu0 %v3178
        %v3535 = vpop.f32.mrb[0].mxu0
        %v3536 = vadd.f32 %v3452, %v3535
        %v3537 = vpop.f32.mrb[0].mxu0
        %3538 = vmatprep.mubr.f32.mxu0 0.0
        %3539 = vmatmul.mubr.f32.gmra.mrb[0].mxu0 %v3179
        %v3540 = vpop.f32.mrb[0].mxu0
        %v3541 = vadd.f32 %v3452, %v3540
        %v3542 = vpop.f32.mrb[0].mxu0
        %3543 = vmatprep.mubr.f32.mxu0 0.0
        %3544 = vmatmul.mubr.f32.gmra.mrb[0].mxu0 %v3180
        %v3545 = vpop.f32.mrb[0].mxu0
        %v3546 = vadd.f32 %v3452, %v3545
        %v3547 = vpop.f32.mrb[0].mxu0
        %3548 = vmatprep.mubr.f32.mxu0 0.0
        %3549 = vmatmul.mubr.f32.gmra.mrb[0].mxu0 %v3181
        %v3550 = vpop.f32.mrb[0].mxu0
        %v3551 = vadd.f32 %v3452, %v3550
        %v3552 = vpop.f32.mrb[0].mxu0
        %3553 = vmatprep.mubr.f32.mxu0 0.0
        %3554 = vmatmul.mubr.f32.gmra.mrb[0].mxu0 %v3182
        %v3555 = vpop.f32.mrb[0].mxu0
        %v3556 = vadd.f32 %v3452, %v3555
        %v3557 = vpop.f32.mrb[0].mxu0
        %3558 = vmatprep.mubr.f32.mxu0 0.0
        %3559 = vmatmul.mubr.f32.gmra.mrb[0].mxu0 %v3183
        %v3560 = vpop.f32.mrb[0].mxu0
        %v3561 = vadd.f32 %v3452, %v3560
        %v3562 = vpop.f32.mrb[0].mxu0
        %3563 = vmatprep.mubr.f32.mxu0 0.0
        %3564 = vmatmul.mubr.f32.gmra.mrb[0].mxu0 %v3184
        %v3565 = vpop.f32.mrb[0].mxu0
        %v3566 = vadd.f32 %v3452, %v3565
        %v3567 = vpop.f32.mrb[0].mxu0
        %3568 = vmatprep.mubr.f32.mxu0 0.0
        %3569 = vmatmul.mubr.f32.gmra.mrb[0].mxu0 %v3185
        %v3570 = vpop.f32.mrb[0].mxu0
        %v3571 = vadd.f32 %v3452, %v3570
        %v3572 = vpop.f32.mrb[0].mxu0
        %3573 = vmatprep.mubr.f32.mxu0 0.0
        %3574 = vmatmul.mubr.f32.gmra.mrb[0].mxu0 %v3186
        %v3575 = vpop.f32.mrb[0].mxu0
        %v3576 = vadd.f32 %v3452, %v3575
        %v3577 = vpop.f32.mrb[0].mxu0
        %3578 = vmatprep.mubr.f32.mxu0 0.0
        %3579 = vmatmul.mubr.f32.gmra.mrb[0].mxu0 %v3187
        %v3580 = vpop.f32.mrb[0].mxu0
        %v3581 = vadd.f32 %v3452, %v3580
        %v3582 = vpop.f32.mrb[0].mxu0
        %3583 = vmatprep.mubr.f32.mxu0 0.0
        %3584 = vmatmul.mubr.f32.gmra.mrb[0].mxu0 %v3188
        %v3585 = vpop.f32.mrb[0].mxu0
        %v3586 = vadd.f32 %v3452, %v3585
        %v3587 = vpop.f32.mrb[0].mxu0
        %3588 = vmatprep.mubr.f32.mxu0 0.0
        %3589 = vmatmul.mubr.f32.gmra.mrb[0].mxu0 %v3189
        %v3590 = vpop.f32.mrb[0].mxu0
        %v3591 = vadd.f32 %v3452, %v3590
        %v3592 = vpop.f32.mrb[0].mxu0
        %3593 = vmatprep.mubr.f32.mxu0 0.0
        %3594 = vmatmul.mubr.f32.gmra.mrb[0].mxu0 %v3190
        %v3595 = vpop.f32.mrb[0].mxu0
        %v3596 = vadd.f32 %v3452, %v3595
        %v3597 = vpop.f32.mrb[0].mxu0
        %3598 = vmatprep.mubr.f32.mxu0 0.0
        %3599 = vmatmul.mubr.f32.gmra.mrb[0].mxu0 %v3191
        %v3600 = vpop.f32.mrb[0].mxu0
        %v3601 = vadd.f32 %v3452, %v3600
        %v3602 = vpop.f32.mrb[0].mxu0
        %3603 = vmatprep.mubr.f32.mxu0 0.0
        %3604 = vmatmul.mubr.f32.gmra.mrb[0].mxu0 %v3192
        %v3605 = vpop.f32.mrb[0].mxu0
        %v3606 = vadd.f32 %v3452, %v3605
        %v3607 = vpop.f32.mrb[0].mxu0
        %3608 = vmatprep.mubr.f32.mxu0 0.0
        %3609 = vmatmul.mubr.f32.gmra.mrb[0].mxu0 %v3193
        %v3610 = vpop.f32.mrb[0].mxu0
        %v3611 = vadd.f32 %v3452, %v3610
        %v3612 = vpop.f32.mrb[0].mxu0
        %3613 = vmatprep.mubr.f32.mxu0 0.0
        %3614 = vmatmul.mubr.f32.gmra.mrb[0].mxu0 %v3194
        %v3615 = vpop.f32.mrb[0].mxu0
        %v3616 = vadd.f32 %v3452, %v3615
        %v3617 = vpop.f32.mrb[0].mxu0
        %3618 = vmatprep.mubr.f32.mxu0 0.0
        %3619 = vmatmul.mubr.f32.gmra.mrb[0].mxu0 %v3195
        %v3620 = vpop.f32.mrb[0].mxu0
        %v3621 = vadd.f32 %v3452, %v3620
        %v3622 = vpop.f32.mrb[0].mxu0
        %3623 = vmatprep.mubr.f32.mxu0 0.0
        %3624 = vmatmul.mubr.f32.gmra.mrb[0].mxu0 %v3196
        %v3625 = vpop.f32.mrb[0].mxu0
        %v3626 = vadd.f32 %v3452, %v3625
        %v3627 = vpop.f32.mrb[0].mxu0
        %3628 = vmatprep.mubr.f32.mxu0 0.0
        %3629 = vmatmul.mubr.f32.gmra.mrb[0].mxu0 %v3197
        %v3630 = vpop.f32.mrb[0].mxu0
        %v3631 = vadd.f32 %v3452, %v3630
        %v3632 = vpop.f32.mrb[0].mxu0
        %3633 = vmatprep.mubr.f32.mxu0 0.0
        %3634 = vmatmul.mubr.f32.gmra.mrb[0].mxu0 %v3198
        %v3635 = vpop.f32.mrb[0].mxu0
        %v3636 = vadd.f32 %v3452, %v3635
        %v3637 = vpop.f32.mrb[0].mxu0
        %3638 = vmatprep.mubr.f32.mxu0 0.0
        %3639 = vmatmul.mubr.f32.gmra.mrb[0].mxu0 %v3199
        %v3640 = vpop.f32.mrb[0].mxu0
        %v3641 = vadd.f32 %v3452, %v3640
        %v3642 = vpop.f32.mrb[0].mxu0
        %3643 = vmatprep.mubr.f32.mxu0 0.0
        %3644 = vmatmul.mubr.f32.gmra.mrb[0].mxu0 %v3200
        %v3645 = vpop.f32.mrb[0].mxu0
        %v3646 = vadd.f32 %v3452, %v3645
        %v3647 = vpop.f32.mrb[0].mxu0
        %3648 = vmatprep.mubr.f32.mxu0 0.0
        %3649 = vmatmul.mubr.f32.gmra.mrb[0].mxu0 %v3201
        %v3650 = vpop.f32.mrb[0].mxu0
        %v3651 = vadd.f32 %v3452, %v3650
        %v3652 = vpop.f32.mrb[0].mxu0
        %3653 = vmatprep.mubr.f32.mxu0 0.0
        %3654 = vmatmul.mubr.f32.gmra.mrb[0].mxu0 %v3202
        %v3655 = vpop.f32.mrb[0].mxu0
        %v3656 = vadd.f32 %v3452, %v3655
        %v3657 = vpop.f32.mrb[0].mxu0
        %3658 = vmatprep.mubr.f32.mxu0 0.0
        %3659 = vmatmul.mubr.f32.gmra.mrb[0].mxu0 %v3203
        %v3660 = vpop.f32.mrb[0].mxu0
        %v3661 = vadd.f32 %v3452, %v3660
        %v3662 = vpop.f32.mrb[0].mxu0
        %3663 = vmatprep.mubr.f32.mxu0 0.0
        %3664 = vmatmul.mubr.f32.gmra.mrb[0].mxu0 %v3204
        %v3665 = vpop.f32.mrb[0].mxu0
        %v3666 = vadd.f32 %v3452, %v3665
        %v3667 = vpop.f32.mrb[0].mxu0
        %3668 = vmatprep.mubr.f32.mxu0 0.0
        %3669 = vmatmul.mubr.f32.gmra.mrb[0].mxu0 %v3205
        %v3670 = vpop.f32.mrb[0].mxu0
        %v3671 = vadd.f32 %v3452, %v3670
        %v3672 = vpop.f32.mrb[0].mxu0
        %3673 = vmatprep.mubr.f32.mxu0 0.0
        %3674 = vmatmul.mubr.f32.gmra.mrb[0].mxu0 %v3206
        %v3675 = vpop.f32.mrb[0].mxu0
        %v3676 = vadd.f32 %v3452, %v3675
        %v3677 = vpop.f32.mrb[0].mxu0
        %3678 = vmatprep.mubr.f32.mxu0 0.0
        %3679 = vmatmul.mubr.f32.gmra.mrb[0].mxu0 %v3207
        %v3680 = vpop.f32.mrb[0].mxu0
        %v3681 = vadd.f32 %v3452, %v3680
        %v3682 = vpop.f32.mrb[0].mxu0
        %3683 = vmatprep.mubr.f32.mxu0 0.0
        %3684 = vmatmul.mubr.f32.gmra.mrb[0].mxu0 %v3208
        %v3685 = vpop.f32.mrb[0].mxu0
        %v3686 = vadd.f32 %v3452, %v3685
        %v3687 = vpop.f32.mrb[0].mxu0
        %3688 = vmatprep.mubr.f32.mxu0 0.0
        %3689 = vmatmul.mubr.f32.gmra.mrb[0].mxu0 %v3209
        %v3690 = vpop.f32.mrb[0].mxu0
        %v3691 = vadd.f32 %v3452, %v3690
        %v3692 = vpop.f32.mrb[0].mxu0
        %3693 = vmatprep.mubr.f32.mxu0 0.0
        %3694 = vmatmul.mubr.f32.gmra.mrb[0].mxu0 %v3210
        %v3695 = vpop.f32.mrb[0].mxu0
        %v3696 = vadd.f32 %v3452, %v3695
        %v3697 = vpop.f32.mrb[0].mxu0
        %3698 = vmatprep.mubr.f32.mxu0 0.0
        %3699 = vmatmul.mubr.f32.gmra.mrb[0].mxu0 %v3211
        %v3700 = vpop.f32.mrb[0].mxu0
        %v3701 = vadd.f32 %v3452, %v3700
        %v3702 = vpop.f32.mrb[0].mxu0
        %3703 = vmatprep.mubr.f32.mxu0 0.0
        %3704 = vmatmul.mubr.f32.gmra.mrb[0].mxu0 %v3212
        %v3705 = vpop.f32.mrb[0].mxu0
        %v3706 = vadd.f32 %v3452, %v3705
        %v3707 = vpop.f32.mrb[0].mxu0
        %3708 = vmatprep.mubr.f32.mxu0 0.0
        %3709 = vmatmul.mubr.f32.gmra.mrb[0].mxu0 %v3213
        %v3710 = vpop.f32.mrb[0].mxu0
        %v3711 = vadd.f32 %v3452, %v3710
        %v3712 = vpop.f32.mrb[0].mxu0
        %3713 = vmatprep.mubr.f32.mxu0 0.0
        %3714 = vmatmul.mubr.f32.gmra.mrb[0].mxu0 %v3214
        %v3715 = vpop.f32.mrb[0].mxu0
        %v3716 = vadd.f32 %v3452, %v3715
        %v3717 = vpop.f32.mrb[0].mxu0
        %3718 = vmatprep.mubr.f32.mxu0 0.0
        %3719 = vmatmul.mubr.f32.gmra.mrb[0].mxu0 %v3215
        %v3720 = vpop.f32.mrb[0].mxu0
        %v3721 = vadd.f32 %v3452, %v3720
        %v3722 = vpop.f32.mrb[0].mxu0
        %3723 = vmatprep.mubr.f32.mxu0 0.0
        %3724 = vmatmul.mubr.f32.gmra.mrb[0].mxu0 %v3216
        %v3725 = vpop.f32.mrb[0].mxu0
        %v3726 = vadd.f32 %v3452, %v3725
        %v3727 = vpop.f32.mrb[0].mxu0
        %3728 = vmatprep.mubr.f32.mxu0 0.0
        %3729 = vmatmul.mubr.f32.gmra.mrb[0].mxu0 %v3217
        %v3730 = vpop.f32.mrb[0].mxu0
        %v3731 = vadd.f32 %v3452, %v3730
        %v3732 = vpop.f32.mrb[0].mxu0
        %3733 = vmatprep.mubr.f32.mxu0 0.0
        %3734 = vmatmul.mubr.f32.gmra.mrb[0].mxu0 %v3218
        %v3735 = vpop.f32.mrb[0].mxu0
        %v3736 = vadd.f32 %v3452, %v3735
        %v3737 = vpop.f32.mrb[0].mxu0
        %3738 = vmatprep.mubr.f32.mxu0 0.0
        %3739 = vmatmul.mubr.f32.gmra.mrb[0].mxu0 %v3219
        %v3740 = vpop.f32.mrb[0].mxu0
        %v3741 = vadd.f32 %v3452, %v3740
        %v3742 = vpop.f32.mrb[0].mxu0
        %3743 = vmatprep.mubr.f32.mxu0 0.0
        %3744 = vmatmul.mubr.f32.gmra.mrb[0].mxu0 %v3220
        %v3745 = vpop.f32.mrb[0].mxu0
        %v3746 = vadd.f32 %v3452, %v3745
        %v3747 = vpop.f32.mrb[0].mxu0
        %3748 = vmatprep.mubr.f32.mxu0 0.0
        %3749 = vmatmul.mubr.f32.gmra.mrb[0].mxu0 %v3221
        %v3750 = vpop.f32.mrb[0].mxu0
        %v3751 = vadd.f32 %v3452, %v3750
        %v3752 = vpop.f32.mrb[0].mxu0
        %3753 = vmatprep.mubr.f32.mxu0 0.0
        %3754 = vmatmul.mubr.f32.gmra.mrb[0].mxu0 %v3222
        %v3755 = vpop.f32.mrb[0].mxu0
        %v3756 = vadd.f32 %v3452, %v3755
        %v3757 = vpop.f32.mrb[0].mxu0
        %3758 = vmatprep.mubr.f32.mxu0 0.0
        %3759 = vmatmul.mubr.f32.gmra.mrb[0].mxu0 %v3223
        %v3760 = vpop.f32.mrb[0].mxu0
        %v3761 = vadd.f32 %v3452, %v3760
        %v3762 = vpop.f32.mrb[0].mxu0
        %3763 = vmatprep.mubr.f32.mxu0 0.0
        %3764 = vmatmul.mubr.f32.gmra.mrb[0].mxu0 %v3224
        %v3765 = vpop.f32.mrb[0].mxu0
        %v3766 = vadd.f32 %v3452, %v3765
        %v3767 = vpop.f32.mrb[0].mxu0
        %3768 = vmatprep.mubr.f32.mxu0 0.0
        %3769 = vmatmul.mubr.f32.gmra.mrb[0].mxu0 %v3225
        %v3770 = vpop.f32.mrb[0].mxu0
        %v3771 = vadd.f32 %v3452, %v3770
        %v3772 = vpop.f32.mrb[0].mxu0
        %3773 = vmatprep.mubr.f32.mxu0 0.0
        %3774 = vmatmul.mubr.f32.gmra.mrb[0].mxu0 %v3226
        %v3775 = vpop.f32.mrb[0].mxu0
        %v3776 = vadd.f32 %v3452, %v3775
        %v3777 = vpop.f32.mrb[0].mxu0
        %3778 = vmatprep.mubr.f32.mxu0 0.0
        %3779 = vmatmul.mubr.f32.gmra.mrb[0].mxu0 %v3227
        %v3780 = vpop.f32.mrb[0].mxu0
        %v3781 = vadd.f32 %v3452, %v3780
        %v3782 = vpop.f32.mrb[0].mxu0
        %3783 = vmatprep.mubr.f32.mxu0 0.0
        %3784 = vmatmul.mubr.f32.gmra.mrb[0].mxu0 %v3228
        %v3785 = vpop.f32.mrb[0].mxu0
        %v3786 = vadd.f32 %v3452, %v3785
        %v3787 = vpop.f32.mrb[0].mxu0
        %3788 = vmatprep.mubr.f32.mxu0 0.0
        %3789 = vmatmul.mubr.f32.gmra.mrb[0].mxu0 %v3229
        %v3790 = vpop.f32.mrb[0].mxu0
        %v3791 = vadd.f32 %v3452, %v3790
        %v3792 = vpop.f32.mrb[0].mxu0
        %3793 = vmatprep.mubr.f32.mxu0 0.0
        %3794 = vmatmul.mubr.f32.gmra.mrb[0].mxu0 %v3230
        %v3795 = vpop.f32.mrb[0].mxu0
        %v3796 = vadd.f32 %v3452, %v3795
        %v3797 = vpop.f32.mrb[0].mxu0
        %3798 = vmatprep.mubr.f32.mxu0 0.0
        %3799 = vmatmul.mubr.f32.gmra.mrb[0].mxu0 %v3231
        %v3800 = vpop.f32.mrb[0].mxu0
        %v3801 = vadd.f32 %v3452, %v3800
        %v3802 = vpop.f32.mrb[0].mxu0
        %3803 = vmatprep.mubr.f32.mxu0 0.0
        %3804 = vmatmul.mubr.f32.gmra.mrb[0].mxu0 %v3232
        %v3805 = vpop.f32.mrb[0].mxu0
        %v3806 = vadd.f32 %v3452, %v3805
        %v3807 = vpop.f32.mrb[0].mxu0
        %3808 = vmatprep.mubr.f32.mxu0 0.0
        %3809 = vmatmul.mubr.f32.gmra.mrb[0].mxu0 %v3233
        %v3810 = vpop.f32.mrb[0].mxu0
        %v3811 = vadd.f32 %v3452, %v3810
        %v3812 = vpop.f32.mrb[0].mxu0
        %3813 = vmatprep.mubr.f32.mxu0 0.0
        %3814 = vmatmul.mubr.f32.gmra.mrb[0].mxu0 %v3234
        %v3815 = vpop.f32.mrb[0].mxu0
        %v3816 = vadd.f32 %v3452, %v3815
        %v3817 = vpop.f32.mrb[0].mxu0
        %3818 = vmatprep.mubr.f32.mxu0 0.0
        %3819 = vmatmul.mubr.f32.gmra.mrb[0].mxu0 %v3235
        %v3820 = vpop.f32.mrb[0].mxu0
        %v3821 = vadd.f32 %v3452, %v3820
        %v3822 = vpop.f32.mrb[0].mxu0
        %3823 = vmatprep.mubr.f32.mxu0 0.0
        %3824 = vmatmul.mubr.f32.gmra.mrb[0].mxu0 %v3236
        %v3825 = vpop.f32.mrb[0].mxu0
        %v3826 = vadd.f32 %v3452, %v3825
        %v3827 = vpop.f32.mrb[0].mxu0
        %3828 = vmatprep.mubr.f32.mxu0 0.0
        %3829 = vmatmul.mubr.f32.gmra.mrb[0].mxu0 %v3237
        %v3830 = vpop.f32.mrb[0].mxu0
        %v3831 = vadd.f32 %v3452, %v3830
        %v3832 = vpop.f32.mrb[0].mxu0
        %3833 = vmatprep.mubr.f32.mxu0 0.0
        %3834 = vmatmul.mubr.f32.gmra.mrb[0].mxu0 %v3238
        %v3835 = vpop.f32.mrb[0].mxu0
        %v3836 = vadd.f32 %v3452, %v3835
        %v3837 = vpop.f32.mrb[0].mxu0
        %3838 = vmatprep.mubr.f32.mxu0 0.0
        %3839 = vmatmul.mubr.f32.gmra.mrb[0].mxu0 %v3239
        %v3840 = vpop.f32.mrb[0].mxu0
        %v3841 = vadd.f32 %v3452, %v3840
        %v3842 = vpop.f32.mrb[0].mxu0
        %3843 = vmatprep.mubr.f32.mxu0 0.0
        %3844 = vmatmul.mubr.f32.gmra.mrb[0].mxu0 %v3240
        %v3845 = vpop.f32.mrb[0].mxu0
        %v3846 = vadd.f32 %v3452, %v3845
        %v3847 = vpop.f32.mrb[0].mxu0
        %3848 = vmatprep.mubr.f32.mxu0 0.0
        %3849 = vmatmul.mubr.f32.gmra.mrb[0].mxu0 %v3241
        %v3850 = vpop.f32.mrb[0].mxu0
        %v3851 = vadd.f32 %v3452, %v3850
        %v3852 = vpop.f32.mrb[0].mxu0
        %3853 = vmatprep.mubr.f32.mxu0 0.0
        %3854 = vmatmul.mubr.f32.gmra.mrb[0].mxu0 %v3242
        %v3855 = vpop.f32.mrb[0].mxu0
        %v3856 = vadd.f32 %v3452, %v3855
        %v3857 = vpop.f32.mrb[0].mxu0
        %3858 = vmatprep.mubr.f32.mxu0 0.0
        %3859 = vmatmul.mubr.f32.gmra.mrb[0].mxu0 %v3243
        %v3860 = vpop.f32.mrb[0].mxu0
        %v3861 = vadd.f32 %v3452, %v3860
        %v3862 = vpop.f32.mrb[0].mxu0
        %3863 = vmatprep.mubr.f32.mxu0 0.0
        %3864 = vmatmul.mubr.f32.gmra.mrb[0].mxu0 %v3244
        %v3865 = vpop.f32.mrb[0].mxu0
        %v3866 = vadd.f32 %v3452, %v3865
        %v3867 = vpop.f32.mrb[0].mxu0
        %3868 = vmatprep.mubr.f32.mxu0 0.0
        %3869 = vmatmul.mubr.f32.gmra.mrb[0].mxu0 %v3245
        %v3870 = vpop.f32.mrb[0].mxu0
        %v3871 = vadd.f32 %v3452, %v3870
        %v3872 = vpop.f32.mrb[0].mxu0
        %3873 = vmatprep.mubr.f32.mxu0 0.0
        %3874 = vmatmul.mubr.f32.gmra.mrb[0].mxu0 %v3246
        %v3875 = vpop.f32.mrb[0].mxu0
        %v3876 = vadd.f32 %v3452, %v3875
        %v3877 = vpop.f32.mrb[0].mxu0
        %3878 = vmatprep.mubr.f32.mxu0 0.0
        %3879 = vmatmul.mubr.f32.gmra.mrb[0].mxu0 %v3247
        %v3880 = vpop.f32.mrb[0].mxu0
        %v3881 = vadd.f32 %v3452, %v3880
        %v3882 = vpop.f32.mrb[0].mxu0
        %3883 = vmatprep.mubr.f32.mxu0 0.0
        %3884 = vmatmul.mubr.f32.gmra.mrb[0].mxu0 %v3248
        %v3885 = vpop.f32.mrb[0].mxu0
        %v3886 = vadd.f32 %v3452, %v3885
        %v3887 = vpop.f32.mrb[0].mxu0
        %3888 = vmatprep.mubr.f32.mxu0 0.0
        %3889 = vmatmul.mubr.f32.gmra.mrb[0].mxu0 %v3249
        %v3890 = vpop.f32.mrb[0].mxu0
        %v3891 = vadd.f32 %v3452, %v3890
        %v3892 = vpop.f32.mrb[0].mxu0
        %3893 = vmatprep.mubr.f32.mxu0 0.0
        %3894 = vmatmul.mubr.f32.gmra.mrb[0].mxu0 %v3250
        %v3895 = vpop.f32.mrb[0].mxu0
        %v3896 = vadd.f32 %v3452, %v3895
        %v3897 = vpop.f32.mrb[0].mxu0
        %3898 = vmatprep.mubr.f32.mxu0 0.0
        %3899 = vmatmul.mubr.f32.gmra.mrb[0].mxu0 %v3251
        %v3900 = vpop.f32.mrb[0].mxu0
        %v3901 = vadd.f32 %v3452, %v3900
        %v3902 = vpop.f32.mrb[0].mxu0
        %3903 = vmatprep.mubr.f32.mxu0 0.0
        %3904 = vmatmul.mubr.f32.gmra.mrb[0].mxu0 %v3252
        %v3905 = vpop.f32.mrb[0].mxu0
        %v3906 = vadd.f32 %v3452, %v3905
        %v3907 = vpop.f32.mrb[0].mxu0
        %3908 = vmatprep.mubr.f32.mxu0 0.0
        %3909 = vmatmul.mubr.f32.gmra.mrb[0].mxu0 %v3253
        %v3910 = vpop.f32.mrb[0].mxu0
        %v3911 = vadd.f32 %v3452, %v3910
        %v3912 = vpop.f32.mrb[0].mxu0
        %3913 = vmatprep.mubr.f32.mxu0 0.0
        %3914 = vmatmul.mubr.f32.gmra.mrb[0].mxu0 %v3254
        %v3915 = vpop.f32.mrb[0].mxu0
        %v3916 = vadd.f32 %v3452, %v3915
        %v3917 = vpop.f32.mrb[0].mxu0
        %3918 = vmatprep.mubr.f32.mxu0 0.0
        %3919 = vmatmul.mubr.f32.gmra.mrb[0].mxu0 %v3255
        %v3920 = vpop.f32.mrb[0].mxu0
        %v3921 = vadd.f32 %v3452, %v3920
        %v3922 = vpop.f32.mrb[0].mxu0
        %3923 = vmatprep.mubr.f32.mxu0 0.0
        %3924 = vmatmul.mubr.f32.gmra.mrb[0].mxu0 %v3256
        %v3925 = vpop.f32.mrb[0].mxu0
        %v3926 = vadd.f32 %v3452, %v3925
        %v3927 = vpop.f32.mrb[0].mxu0
        %3928 = vmatprep.mubr.f32.mxu0 0.0
        %3929 = vmatmul.mubr.f32.gmra.mrb[0].mxu0 %v3257
        %v3930 = vpop.f32.mrb[0].mxu0
        %v3931 = vadd.f32 %v3452, %v3930
        %v3932 = vpop.f32.mrb[0].mxu0
        %3933 = vmatprep.mubr.f32.mxu0 0.0
        %3934 = vmatmul.mubr.f32.gmra.mrb[0].mxu0 %v3258
        %v3935 = vpop.f32.mrb[0].mxu0
        %v3936 = vadd.f32 %v3452, %v3935
        %v3937 = vpop.f32.mrb[0].mxu0
        %3938 = vmatprep.mubr.f32.mxu0 0.0
        %3939 = vmatmul.mubr.f32.gmra.mrb[0].mxu0 %v3259
        %v3940 = vpop.f32.mrb[0].mxu0
        %v3941 = vadd.f32 %v3452, %v3940
        %v3942 = vpop.f32.mrb[0].mxu0
        %3943 = vmatprep.mubr.f32.mxu0 0.0
        %3944 = vmatmul.mubr.f32.gmra.mrb[0].mxu0 %v3260
        %v3945 = vpop.f32.mrb[0].mxu0
        %v3946 = vadd.f32 %v3452, %v3945
        %v3947 = vpop.f32.mrb[0].mxu0
        %3948 = vmatprep.mubr.f32.mxu0 0.0
        %3949 = vmatmul.mubr.f32.gmra.mrb[0].mxu0 %v3261
        %v3950 = vpop.f32.mrb[0].mxu0
        %v3951 = vadd.f32 %v3452, %v3950
        %v3952 = vpop.f32.mrb[0].mxu0
        %3953 = vmatprep.mubr.f32.mxu0 0.0
        %3954 = vmatmul.mubr.f32.gmra.mrb[0].mxu0 %v3262
        %v3955 = vpop.f32.mrb[0].mxu0
        %v3956 = vadd.f32 %v3452, %v3955
        %v3957 = vpop.f32.mrb[0].mxu0
        %3958 = vmatprep.mubr.f32.mxu0 0.0
        %3959 = vmatmul.mubr.f32.gmra.mrb[0].mxu0 %v3263
        %v3960 = vpop.f32.mrb[0].mxu0
        %v3961 = vadd.f32 %v3452, %v3960
        %v3962 = vpop.f32.mrb[0].mxu0
        %3963 = vmatprep.mubr.f32.mxu0 0.0
        %3964 = vmatmul.mubr.f32.gmra.mrb[0].mxu0 %v3264
        %v3965 = vpop.f32.mrb[0].mxu0
        %v3966 = vadd.f32 %v3452, %v3965
        %v3967 = vpop.f32.mrb[0].mxu0
        %3968 = vmatprep.mubr.f32.mxu0 0.0
        %3969 = vmatmul.mubr.f32.gmra.mrb[0].mxu0 %v3265
        %v3970 = vpop.f32.mrb[0].mxu0
        %v3971 = vadd.f32 %v3452, %v3970
        %v3972 = vpop.f32.mrb[0].mxu0
        %3973 = vmatprep.mubr.f32.mxu0 0.0
        %3974 = vmatmul.mubr.f32.gmra.mrb[0].mxu0 %v3266
        %v3975 = vpop.f32.mrb[0].mxu0
        %v3976 = vadd.f32 %v3452, %v3975
        %v3977 = vpop.f32.mrb[0].mxu0
        %3978 = vmatprep.mubr.f32.mxu0 0.0
        %3979 = vmatmul.mubr.f32.gmra.mrb[0].mxu0 %v3267
        %v3980 = vpop.f32.mrb[0].mxu0
        %v3981 = vadd.f32 %v3452, %v3980
        %v3982 = vpop.f32.mrb[0].mxu0
        %3983 = vmatprep.mubr.f32.mxu0 0.0
        %3984 = vmatmul.mubr.f32.gmra.mrb[0].mxu0 %v3268
        %v3985 = vpop.f32.mrb[0].mxu0
        %v3986 = vadd.f32 %v3452, %v3985
        %v3987 = vpop.f32.mrb[0].mxu0
        %3988 = vmatprep.mubr.f32.mxu0 0.0
        %3989 = vmatmul.mubr.f32.gmra.mrb[0].mxu0 %v3269
        %v3990 = vpop.f32.mrb[0].mxu0
        %v3991 = vadd.f32 %v3452, %v3990
        %v3992 = vpop.f32.mrb[0].mxu0
        %3993 = vmatprep.mubr.f32.mxu0 0.0
        %3994 = vmatmul.mubr.f32.gmra.mrb[0].mxu0 %v3270
        %v3995 = vpop.f32.mrb[0].mxu0
        %v3996 = vadd.f32 %v3452, %v3995
        %v3997 = vpop.f32.mrb[0].mxu0
        %3998 = vmatprep.mubr.f32.mxu0 0.0
        %3999 = vmatmul.mubr.f32.gmra.mrb[0].mxu0 %v3271
        %v4000 = vpop.f32.mrb[0].mxu0
        %v4001 = vadd.f32 %v3452, %v4000
        %v4002 = vpop.f32.mrb[0].mxu0
        %4003 = vmatprep.mubr.f32.mxu0 0.0
        %4004 = vmatmul.mubr.f32.gmra.mrb[0].mxu0 %v3272
        %v4005 = vpop.f32.mrb[0].mxu0
        %v4006 = vadd.f32 %v3452, %v4005
        %v4007 = vpop.f32.mrb[0].mxu0
        %4008 = vmatprep.mubr.f32.mxu0 0.0
        %4009 = vmatmul.mubr.f32.gmra.mrb[0].mxu0 %v3273
        %v4010 = vpop.f32.mrb[0].mxu0
        %v4011 = vadd.f32 %v3452, %v4010
        %v4012 = vpop.f32.mrb[0].mxu0
        %4013 = vmatprep.mubr.f32.mxu0 0.0
        %4014 = vmatmul.mubr.f32.gmra.mrb[0].mxu0 %v3274
        %v4015 = vpop.f32.mrb[0].mxu0
        %v4016 = vadd.f32 %v3452, %v4015
        %v4017 = vpop.f32.mrb[0].mxu0
        %4018 = vmatprep.mubr.f32.mxu0 0.0
        %4019 = vmatmul.mubr.f32.gmra.mrb[0].mxu0 %v3275
        %v4020 = vpop.f32.mrb[0].mxu0
        %v4021 = vadd.f32 %v3452, %v4020
        %v4022 = vpop.f32.mrb[0].mxu0
        %4023 = vmatprep.mubr.f32.mxu0 0.0
        %4024 = vmatmul.mubr.f32.gmra.mrb[0].mxu0 %v3276
        %v4025 = vpop.f32.mrb[0].mxu0
        %v4026 = vadd.f32 %v3452, %v4025
        %v4027 = vpop.f32.mrb[0].mxu0
        %4028 = vmatprep.mubr.f32.mxu0 0.0
        %4029 = vmatmul.mubr.f32.gmra.mrb[0].mxu0 %v3277
        %v4030 = vpop.f32.mrb[0].mxu0
        %v4031 = vadd.f32 %v3452, %v4030
        %v4032 = vpop.f32.mrb[0].mxu0
        %4033 = vmatprep.mubr.f32.mxu0 0.0
        %4034 = vmatmul.mubr.f32.gmra.mrb[0].mxu0 %v3278
        %v4035 = vpop.f32.mrb[0].mxu0
        %v4036 = vadd.f32 %v3452, %v4035
        %v4037 = vpop.f32.mrb[0].mxu0
        %4038 = vmatprep.mubr.f32.mxu0 0.0
        %4039 = vmatmul.mubr.f32.gmra.mrb[0].mxu0 %v3279
        %v4040 = vpop.f32.mrb[0].mxu0
        %v4041 = vadd.f32 %v3452, %v4040
        %v4042 = vpop.f32.mrb[0].mxu0
        %4043 = vmatprep.mubr.f32.mxu0 0.0
        %4044 = vmatmul.mubr.f32.gmra.mrb[0].mxu0 %v3280
        %v4045 = vpop.f32.mrb[0].mxu0
        %v4046 = vadd.f32 %v3452, %v4045
        %v4047 = vpop.f32.mrb[0].mxu0
        %4048 = vmatprep.mubr.f32.mxu0 0.0
        %4049 = vmatmul.mubr.f32.gmra.mrb[0].mxu0 %v3281
        %v4050 = vpop.f32.mrb[0].mxu0
        %v4051 = vadd.f32 %v3452, %v4050
        %v4052 = vpop.f32.mrb[0].mxu0
        %4053 = vmatprep.mubr.f32.mxu0 0.0
        %4054 = vmatmul.mubr.f32.gmra.mrb[0].mxu0 %v3282
        %v4055 = vpop.f32.mrb[0].mxu0
        %v4056 = vadd.f32 %v3452, %v4055
        %v4057 = vpop.f32.mrb[0].mxu0
        %4058 = vmatprep.mubr.f32.mxu0 0.0
        %4059 = vmatmul.mubr.f32.gmra.mrb[0].mxu0 %v3283
        %v4060 = vpop.f32.mrb[0].mxu0
        %v4061 = vadd.f32 %v3452, %v4060
        %v4062 = vpop.f32.mrb[0].mxu0
        %4063 = vmatprep.mubr.f32.mxu0 0.0
        %4064 = vmatmul.mubr.f32.gmra.mrb[0].mxu0 %v3284
        %v4065 = vpop.f32.mrb[0].mxu0
        %v4066 = vadd.f32 %v3452, %v4065
        %v4067 = vpop.f32.mrb[0].mxu0
        %4068 = vmatprep.mubr.f32.mxu0 0.0
        %4069 = vmatmul.mubr.f32.gmra.mrb[0].mxu0 %v3285
        %v4070 = vpop.f32.mrb[0].mxu0
        %v4071 = vadd.f32 %v3452, %v4070
        %v4072 = vpop.f32.mrb[0].mxu0
        %4073 = vmatprep.mubr.f32.mxu0 0.0
        %4074 = vmatmul.mubr.f32.gmra.mrb[0].mxu0 %v3286
        %v4075 = vpop.f32.mrb[0].mxu0
        %v4076 = vadd.f32 %v3452, %v4075
        %v4077 = vpop.f32.mrb[0].mxu0
        %4078 = vmatprep.mubr.f32.mxu0 0.0
        %4079 = vmatmul.mubr.f32.gmra.mrb[0].mxu0 %v3287
        %v4080 = vpop.f32.mrb[0].mxu0
        %v4081 = vadd.f32 %v3452, %v4080
        %v4082 = vpop.f32.mrb[0].mxu0
        %4083 = vmatprep.mubr.f32.mxu0 0.0
        %4084 = vmatmul.mubr.f32.gmra.mrb[0].mxu0 %v3288
        %v4085 = vpop.f32.mrb[0].mxu0
        %v4086 = vadd.f32 %v3452, %v4085
        %v4087 = vpop.f32.mrb[0].mxu0
        %4088 = vmatprep.mubr.f32.mxu0 0.0
        %4089 = vmatmul.mubr.f32.gmra.mrb[0].mxu0 %v3289
        %v4090 = vpop.f32.mrb[0].mxu0
        %v4091 = vadd.f32 %v3452, %v4090
        %v4092 = vpop.f32.mrb[0].mxu0
        %4093 = vmatprep.mubr.f32.mxu0 0.0
        %4094 = vmatmul.mubr.f32.gmra.mrb[0].mxu0 %v3290
        %v4095 = vpop.f32.mrb[0].mxu0
        %v4096 = vadd.f32 %v3452, %v4095
        %v4097 = vpop.f32.mrb[0].mxu0
        %4098 = vmatprep.mubr.f32.mxu0 0.0
        %4099 = vmatmul.mubr.f32.gmra.mrb[0].mxu0 %v3291
        %v4100 = vpop.f32.mrb[0].mxu0
        %v4101 = vadd.f32 %v3452, %v4100
        %v4102 = vpop.f32.mrb[0].mxu0
        %4103 = vmatprep.mubr.f32.mxu0 0.0
        %4104 = vmatmul.mubr.f32.gmra.mrb[0].mxu0 %v3292
        %v4105 = vpop.f32.mrb[0].mxu0
        %v4106 = vadd.f32 %v3452, %v4105
        %v4107 = vpop.f32.mrb[0].mxu0
        %4108 = vmatprep.mubr.f32.mxu0 0.0
        %4109 = vmatmul.mubr.f32.gmra.mrb[0].mxu0 %v3293
        %v4110 = vpop.f32.mrb[0].mxu0
        %v4111 = vadd.f32 %v3452, %v4110
        %v4112 = vpop.f32.mrb[0].mxu0
        %4113 = vmatprep.mubr.f32.mxu0 0.0
        %4114 = vmatmul.mubr.f32.gmra.mrb[0].mxu0 %v3294
        %v4115 = vpop.f32.mrb[0].mxu0
        %v4116 = vadd.f32 %v3452, %v4115
        %v4117 = vpop.f32.mrb[0].mxu0
        %4118 = vmatprep.mubr.f32.mxu0 0.0
        %4119 = vmatmul.mubr.f32.gmra.mrb[0].mxu0 %v3295
        %v4120 = vpop.f32.mrb[0].mxu0
        %v4121 = vadd.f32 %v3452, %v4120
        %v4122 = vpop.f32.mrb[0].mxu0
        %4123 = vmatprep.mubr.f32.mxu0 0.0
        %4124 = vmatmul.mubr.f32.gmra.mrb[0].mxu0 %v3296
        %v4125 = vpop.f32.mrb[0].mxu0
        %v4126 = vadd.f32 %v3452, %v4125
        %v4127 = vpop.f32.mrb[0].mxu0
        %4128 = vmatprep.mubr.f32.mxu0 0.0
        %4129 = vmatmul.mubr.f32.gmra.mrb[0].mxu0 %v3297
        %v4130 = vpop.f32.mrb[0].mxu0
        %v4131 = vadd.f32 %v3452, %v4130
        %v4132 = vpop.f32.mrb[0].mxu0
        %4133 = vmatprep.mubr.f32.mxu0 0.0
        %4134 = vmatmul.mubr.f32.gmra.mrb[0].mxu0 %v3298
        %v4135 = vpop.f32.mrb[0].mxu0
        %v4136 = vadd.f32 %v3452, %v4135
        %v4137 = vpop.f32.mrb[0].mxu0
        %4138 = vmatprep.mubr.f32.mxu0 0.0
        %4139 = vmatmul.mubr.f32.gmra.mrb[0].mxu0 %v3299
        %v4140 = vpop.f32.mrb[0].mxu0
        %v4141 = vadd.f32 %v3452, %v4140
        %v4142 = vpop.f32.mrb[0].mxu0
        %4143 = vmatprep.mubr.f32.mxu0 0.0
        %4144 = vmatmul.mubr.f32.gmra.mrb[0].mxu0 %v3300
        %v4145 = vpop.f32.mrb[0].mxu0
        %v4146 = vadd.f32 %v3452, %v4145
        %v4147 = vpop.f32.mrb[0].mxu0
        %4148 = vmatprep.mubr.f32.mxu0 0.0
        %4149 = vmatmul.mubr.f32.gmra.mrb[0].mxu0 %v3301
        %v4150 = vpop.f32.mrb[0].mxu0
        %v4151 = vadd.f32 %v3452, %v4150
        %v4152 = vpop.f32.mrb[0].mxu0
        %4153 = vmatprep.mubr.f32.mxu0 0.0
        %4154 = vmatmul.mubr.f32.gmra.mrb[0].mxu0 %v3302
        %v4155 = vpop.f32.mrb[0].mxu0
        %v4156 = vadd.f32 %v3452, %v4155
        %v4157 = vpop.f32.mrb[0].mxu0
        %4158 = vmatprep.mubr.f32.mxu0 0.0
        %4159 = vmatmul.mubr.f32.gmra.mrb[0].mxu0 %v3303
        %v4160 = vpop.f32.mrb[0].mxu0
        %v4161 = vadd.f32 %v3452, %v4160
        %v4162 = vpop.f32.mrb[0].mxu0
        %4163 = vmatprep.mubr.f32.mxu0 0.0
        %4164 = vmatmul.mubr.f32.gmra.mrb[0].mxu0 %v3304
        %v4165 = vpop.f32.mrb[0].mxu0
        %v4166 = vadd.f32 %v3452, %v4165
        %v4167 = vpop.f32.mrb[0].mxu0
        %4168 = vmatprep.mubr.f32.mxu0 0.0
        %4169 = vmatmul.mubr.f32.gmra.mrb[0].mxu0 %v3305
        %v4170 = vpop.f32.mrb[0].mxu0
        %v4171 = vadd.f32 %v3452, %v4170
        %v4172 = vpop.f32.mrb[0].mxu0
        %4173 = vmatprep.mubr.f32.mxu0 0.0
        %4174 = vmatmul.mubr.f32.gmra.mrb[0].mxu0 %v3306
        %v4175 = vpop.f32.mrb[0].mxu0
        %v4176 = vadd.f32 %v3452, %v4175
        %v4177 = vpop.f32.mrb[0].mxu0
        %4178 = vmatprep.mubr.f32.mxu0 0.0
        %4179 = vmatmul.mubr.f32.gmra.mrb[0].mxu0 %v3307
        %v4180 = vpop.f32.mrb[0].mxu0
        %v4181 = vadd.f32 %v3452, %v4180
        %v4182 = vpop.f32.mrb[0].mxu0
        %4183 = vmatprep.mubr.f32.mxu0 0.0
        %4184 = vmatmul.mubr.f32.gmra.mrb[0].mxu0 %v3308
        %v4185 = vpop.f32.mrb[0].mxu0
        %v4186 = vadd.f32 %v3452, %v4185
        %v4187 = vpop.f32.mrb[0].mxu0
        %4188 = vmatprep.mubr.f32.mxu0 0.0
        %4189 = vmatmul.mubr.f32.gmra.mrb[0].mxu0 %v3309
        %v4190 = vpop.f32.mrb[0].mxu0
        %v4191 = vadd.f32 %v3452, %v4190
        %v4192 = vpop.f32.mrb[0].mxu0
        %4193 = vmatprep.mubr.f32.mxu0 0.0
        %4194 = vmatmul.mubr.f32.gmra.mrb[0].mxu0 %v3310
        %v4195 = vpop.f32.mrb[0].mxu0
        %v4196 = vadd.f32 %v3452, %v4195
        %v4197 = vpop.f32.mrb[0].mxu0
        %4198 = vmatprep.mubr.f32.mxu0 0.0
        %4199 = vmatmul.mubr.f32.gmra.mrb[0].mxu0 %v3311
        %v4200 = vpop.f32.mrb[0].mxu0
        %v4201 = vadd.f32 %v3452, %v4200
        %v4202 = vpop.f32.mrb[0].mxu0
        %4203 = vmatprep.mubr.f32.mxu0 0.0
        %4204 = vmatmul.mubr.f32.gmra.mrb[0].mxu0 %v3312
        %v4205 = vpop.f32.mrb[0].mxu0
        %v4206 = vadd.f32 %v3452, %v4205
        %v4207 = vpop.f32.mrb[0].mxu0
        %4208 = vmatprep.mubr.f32.mxu0 0.0
        %4209 = vmatmul.mubr.f32.gmra.mrb[0].mxu0 %v3313
        %v4210 = vpop.f32.mrb[0].mxu0
        %v4211 = vadd.f32 %v3452, %v4210
        %v4212 = vpop.f32.mrb[0].mxu0
        %4213 = vmatprep.mubr.f32.mxu0 0.0
        %4214 = vmatmul.mubr.f32.gmra.mrb[0].mxu0 %v3314
        %v4215 = vpop.f32.mrb[0].mxu0
        %v4216 = vadd.f32 %v3452, %v4215
        %v4217 = vpop.f32.mrb[0].mxu0
        %4218 = vmatprep.mubr.f32.mxu0 0.0
        %4219 = vmatmul.mubr.f32.gmra.mrb[0].mxu0 %v3315
        %v4220 = vpop.f32.mrb[0].mxu0
        %v4221 = vadd.f32 %v3452, %v4220
        %v4222 = vpop.f32.mrb[0].mxu0
        %4223 = vmatprep.mubr.f32.mxu0 0.0
        %4224 = vmatmul.mubr.f32.gmra.mrb[0].mxu0 %v3316
        %v4225 = vpop.f32.mrb[0].mxu0
        %v4226 = vadd.f32 %v3452, %v4225
        %v4227 = vpop.f32.mrb[0].mxu0
        %4228 = vmatprep.mubr.f32.mxu0 0.0
        %4229 = vmatmul.mubr.f32.gmra.mrb[0].mxu0 %v3317
        %v4230 = vpop.f32.mrb[0].mxu0
        %v4231 = vadd.f32 %v3452, %v4230
        %v4232 = vpop.f32.mrb[0].mxu0
        %4233 = vmatprep.mubr.f32.mxu0 0.0
        %4234 = vmatmul.mubr.f32.gmra.mrb[0].mxu0 %v3318
        %v4235 = vpop.f32.mrb[0].mxu0
        %v4236 = vadd.f32 %v3452, %v4235
        %v4237 = vpop.f32.mrb[0].mxu0
        %4238 = vmatprep.mubr.f32.mxu0 0.0
        %4239 = vmatmul.mubr.f32.gmra.mrb[0].mxu0 %v3319
        %v4240 = vpop.f32.mrb[0].mxu0
        %v4241 = vadd.f32 %v3452, %v4240
        %v4242 = vpop.f32.mrb[0].mxu0
        %4243 = vmatprep.mubr.f32.mxu0 0.0
        %4244 = vmatmul.mubr.f32.gmra.mrb[0].mxu0 %v3320
        %v4245 = vpop.f32.mrb[0].mxu0
        %v4246 = vadd.f32 %v3452, %v4245
        %v4247 = vpop.f32.mrb[0].mxu0
        %4248 = vmatprep.mubr.f32.mxu0 0.0
        %4249 = vmatmul.mubr.f32.gmra.mrb[0].mxu0 %v3321
        %v4250 = vpop.f32.mrb[0].mxu0
        %v4251 = vadd.f32 %v3452, %v4250
        %v4252 = vpop.f32.mrb[0].mxu0
        %4253 = vmatprep.mubr.f32.mxu0 0.0
        %4254 = vmatmul.mubr.f32.gmra.mrb[0].mxu0 %v3322
        %v4255 = vpop.f32.mrb[0].mxu0
        %v4256 = vadd.f32 %v3452, %v4255
        %v4257 = vpop.f32.mrb[0].mxu0
        %4258 = vmatprep.mubr.f32.mxu0 0.0
        %4259 = vmatmul.mubr.f32.gmra.mrb[0].mxu0 %v3323
        %v4260 = vpop.f32.mrb[0].mxu0
        %v4261 = vadd.f32 %v3452, %v4260
        %v4262 = vpop.f32.mrb[0].mxu0
        %4263 = vmatprep.mubr.f32.mxu0 0.0
        %4264 = vmatmul.mubr.f32.gmra.mrb[0].mxu0 %v3324
        %v4265 = vpop.f32.mrb[0].mxu0
        %v4266 = vadd.f32 %v3452, %v4265
        %v4267 = vpop.f32.mrb[0].mxu0
        %4268 = vmatprep.mubr.f32.mxu0 0.0
        %4269 = vmatmul.mubr.f32.gmra.mrb[0].mxu0 %v3325
        %v4270 = vpop.f32.mrb[0].mxu0
        %v4271 = vadd.f32 %v3452, %v4270
        %v4272 = vpop.f32.mrb[0].mxu0
        %4273 = vmatprep.mubr.f32.mxu0 0.0
        %4274 = vmatmul.mubr.f32.gmra.mrb[0].mxu0 %v3326
        %v4275 = vpop.f32.mrb[0].mxu0
        %v4276 = vadd.f32 %v3452, %v4275
        %v4277 = vpop.f32.mrb[0].mxu0
        %4278 = vmatprep.mubr.f32.mxu0 0.0
        %4279 = vmatmul.mubr.f32.gmra.mrb[0].mxu0 %v3327
        %v4280 = vpop.f32.mrb[0].mxu0
        %v4281 = vadd.f32 %v3452, %v4280
        %v4282 = vpop.f32.mrb[0].mxu0
        %4283 = vmatprep.mubr.f32.mxu0 0.0
        %4284 = vmatmul.mubr.f32.gmra.mrb[0].mxu0 %v3328
        %v4285 = vpop.f32.mrb[0].mxu0
        %v4286 = vadd.f32 %v3452, %v4285
        %v4287 = vpop.f32.mrb[0].mxu0
        %4288 = vmatprep.mubr.f32.mxu0 0.0
        %4289 = vmatmul.mubr.f32.gmra.mrb[0].mxu0 %v3329
        %v4290 = vpop.f32.mrb[0].mxu0
        %v4291 = vadd.f32 %v3452, %v4290
        %v4292 = vpop.f32.mrb[0].mxu0
        %4293 = vmatprep.mubr.f32.mxu0 0.0
        %4294 = vmatmul.mubr.f32.gmra.mrb[0].mxu0 %v3330
        %v4295 = vpop.f32.mrb[0].mxu0
        %v4296 = vadd.f32 %v3452, %v4295
        %v4297 = vpop.f32.mrb[0].mxu0
        %4298 = vmatprep.mubr.f32.mxu0 0.0
        %4299 = vmatmul.mubr.f32.gmra.mrb[0].mxu0 %v3331
        %v4300 = vpop.f32.mrb[0].mxu0
        %v4301 = vadd.f32 %v3452, %v4300
        %v4302 = vpop.f32.mrb[0].mxu0
        %4303 = vmatprep.mubr.f32.mxu0 0.0
        %4304 = vmatmul.mubr.f32.gmra.mrb[0].mxu0 %v3332
        %v4305 = vpop.f32.mrb[0].mxu0
        %v4306 = vadd.f32 %v3452, %v4305
        %v4307 = vpop.f32.mrb[0].mxu0
        %4308 = vmatprep.mubr.f32.mxu0 0.0
        %4309 = vmatmul.mubr.f32.gmra.mrb[0].mxu0 %v3333
        %v4310 = vpop.f32.mrb[0].mxu0
        %v4311 = vadd.f32 %v3452, %v4310
        %v4312 = vpop.f32.mrb[0].mxu0
        %4313 = vmatprep.mubr.f32.mxu0 0.0
        %4314 = vmatmul.mubr.f32.gmra.mrb[0].mxu0 %v3334
        %v4315 = vpop.f32.mrb[0].mxu0
        %v4316 = vadd.f32 %v3452, %v4315
        %v4317 = vpop.f32.mrb[0].mxu0
        %4318 = vmatprep.mubr.f32.mxu0 0.0
        %4319 = vmatmul.mubr.f32.gmra.mrb[0].mxu0 %v3335
        %v4320 = vpop.f32.mrb[0].mxu0
        %v4321 = vadd.f32 %v3452, %v4320
        %v4322 = vpop.f32.mrb[0].mxu0
        %4323 = vmatprep.mubr.f32.mxu0 0.0
        %4324 = vmatmul.mubr.f32.gmra.mrb[0].mxu0 %v3336
        %v4325 = vpop.f32.mrb[0].mxu0
        %v4326 = vadd.f32 %v3452, %v4325
        %v4327 = vpop.f32.mrb[0].mxu0
        %4328 = vmatprep.mubr.f32.mxu0 0.0
        %4329 = vmatmul.mubr.f32.gmra.mrb[0].mxu0 %v3337
        %v4330 = vpop.f32.mrb[0].mxu0
        %v4331 = vadd.f32 %v3452, %v4330
        %v4332 = vpop.f32.mrb[0].mxu0
        %4333 = vmatprep.mubr.f32.mxu0 0.0
        %4334 = vmatmul.mubr.f32.gmra.mrb[0].mxu0 %v3338
        %v4335 = vpop.f32.mrb[0].mxu0
        %v4336 = vadd.f32 %v3452, %v4335
        %v4337 = vpop.f32.mrb[0].mxu0
        %4338 = vmatprep.mubr.f32.mxu0 0.0
        %4339 = vmatmul.mubr.f32.gmra.mrb[0].mxu0 %v3339
        %v4340 = vpop.f32.mrb[0].mxu0
        %v4341 = vadd.f32 %v3452, %v4340
        %v4342 = vpop.f32.mrb[0].mxu0
        %4343 = vmatprep.mubr.f32.mxu0 0.0
        %4344 = vmatmul.mubr.f32.gmra.mrb[0].mxu0 %v3340
        %v4345 = vpop.f32.mrb[0].mxu0
        %v4346 = vadd.f32 %v3452, %v4345
        %v4347 = vpop.f32.mrb[0].mxu0
        %4348 = vmatprep.mubr.f32.mxu0 0.0
        %4349 = vmatmul.mubr.f32.gmra.mrb[0].mxu0 %v3341
        %v4350 = vpop.f32.mrb[0].mxu0
        %v4351 = vadd.f32 %v3452, %v4350
        %v4352 = vpop.f32.mrb[0].mxu0
        %4353 = vmatprep.mubr.f32.mxu0 0.0
        %4354 = vmatmul.mubr.f32.gmra.mrb[0].mxu0 %v3342
        %v4355 = vpop.f32.mrb[0].mxu0
        %v4356 = vadd.f32 %v3452, %v4355
        %v4357 = vpop.f32.mrb[0].mxu0
        %4358 = vmatprep.mubr.f32.mxu0 0.0
        %4359 = vmatmul.mubr.f32.gmra.mrb[0].mxu0 %v3343
        %v4360 = vpop.f32.mrb[0].mxu0
        %v4361 = vadd.f32 %v3452, %v4360
        %v4362 = vpop.f32.mrb[0].mxu0
        %4363 = vmatprep.mubr.f32.mxu0 0.0
        %4364 = vmatmul.mubr.f32.gmra.mrb[0].mxu0 %v3344
        %v4365 = vpop.f32.mrb[0].mxu0
        %v4366 = vadd.f32 %v3452, %v4365
        %v4367 = vpop.f32.mrb[0].mxu0
        %4368 = vmatprep.mubr.f32.mxu0 0.0
        %4369 = vmatmul.mubr.f32.gmra.mrb[0].mxu0 %v3345
        %v4370 = vpop.f32.mrb[0].mxu0
        %v4371 = vadd.f32 %v3452, %v4370
        %v4372 = vpop.f32.mrb[0].mxu0
        %4373 = vmatprep.mubr.f32.mxu0 0.0
        %4374 = vmatmul.mubr.f32.gmra.mrb[0].mxu0 %v3346
        %v4375 = vpop.f32.mrb[0].mxu0
        %v4376 = vadd.f32 %v3452, %v4375
        %v4377 = vpop.f32.mrb[0].mxu0
        %4378 = vmatprep.mubr.f32.mxu0 0.0
        %4379 = vmatmul.mubr.f32.gmra.mrb[0].mxu0 %v3347
        %v4380 = vpop.f32.mrb[0].mxu0
        %v4381 = vadd.f32 %v3452, %v4380
        %v4382 = vpop.f32.mrb[0].mxu0
        %4383 = vmatprep.mubr.f32.mxu0 0.0
        %4384 = vmatmul.mubr.f32.gmra.mrb[0].mxu0 %v3348
        %v4385 = vpop.f32.mrb[0].mxu0
        %v4386 = vadd.f32 %v3452, %v4385
        %v4387 = vpop.f32.mrb[0].mxu0
        %4388 = vmatprep.mubr.f32.mxu0 0.0
        %4389 = vmatmul.mubr.f32.gmra.mrb[0].mxu0 %v3349
        %v4390 = vpop.f32.mrb[0].mxu0
        %v4391 = vadd.f32 %v3452, %v4390
        %v4392 = vpop.f32.mrb[0].mxu0
        %4393 = vmatprep.mubr.f32.mxu0 0.0
        %4394 = vmatmul.mubr.f32.gmra.mrb[0].mxu0 %v3350
        %v4395 = vpop.f32.mrb[0].mxu0
        %v4396 = vadd.f32 %v3452, %v4395
        %v4397 = vpop.f32.mrb[0].mxu0
        %4398 = vmatprep.mubr.f32.mxu0 0.0
        %4399 = vmatmul.mubr.f32.gmra.mrb[0].mxu0 %v3351
        %v4400 = vpop.f32.mrb[0].mxu0
        %v4401 = vadd.f32 %v3452, %v4400
        %v4402 = vpop.f32.mrb[0].mxu0
        %4403 = vmatprep.mubr.f32.mxu0 0.0
        %4404 = vmatmul.mubr.f32.gmra.mrb[0].mxu0 %v3352
        %v4405 = vpop.f32.mrb[0].mxu0
        %v4406 = vadd.f32 %v3452, %v4405
        %v4407 = vpop.f32.mrb[0].mxu0
        %4408 = vmatprep.mubr.f32.mxu0 0.0
        %4409 = vmatmul.mubr.f32.gmra.mrb[0].mxu0 %v3353
        %v4410 = vpop.f32.mrb[0].mxu0
        %v4411 = vadd.f32 %v3452, %v4410
        %v4412 = vpop.f32.mrb[0].mxu0
        %4413 = vmatprep.mubr.f32.mxu0 0.0
        %4414 = vmatmul.mubr.f32.gmra.mrb[0].mxu0 %v3354
        %v4415 = vpop.f32.mrb[0].mxu0
        %v4416 = vadd.f32 %v3452, %v4415
        %v4417 = vpop.f32.mrb[0].mxu0
        %4418 = vmatprep.mubr.f32.mxu0 0.0
        %4419 = vmatmul.mubr.f32.gmra.mrb[0].mxu0 %v3355
        %v4420 = vpop.f32.mrb[0].mxu0
        %v4421 = vadd.f32 %v3452, %v4420
        %v4422 = vpop.f32.mrb[0].mxu0
        %4423 = vmatprep.mubr.f32.mxu0 0.0
        %4424 = vmatmul.mubr.f32.gmra.mrb[0].mxu0 %v3356
        %v4425 = vpop.f32.mrb[0].mxu0
        %v4426 = vadd.f32 %v3452, %v4425
        %v4427 = vpop.f32.mrb[0].mxu0
        %4428 = vmatprep.mubr.f32.mxu0 0.0
        %4429 = vmatmul.mubr.f32.gmra.mrb[0].mxu0 %v3357
        %v4430 = vpop.f32.mrb[0].mxu0
        %v4431 = vadd.f32 %v3452, %v4430
        %v4432 = vpop.f32.mrb[0].mxu0
        %4433 = vmatprep.mubr.f32.mxu0 0.0
        %4434 = vmatmul.mubr.f32.gmra.mrb[0].mxu0 %v3358
        %v4435 = vpop.f32.mrb[0].mxu0
        %v4436 = vadd.f32 %v3452, %v4435
        %v4437 = vpop.f32.mrb[0].mxu0
        %4438 = vmatprep.mubr.f32.mxu0 0.0
        %4439 = vmatmul.mubr.f32.gmra.mrb[0].mxu0 %v3359
        %v4440 = vpop.f32.mrb[0].mxu0
        %v4441 = vadd.f32 %v3452, %v4440
        %v4442 = vpop.f32.mrb[0].mxu0
        %4443 = vmatprep.mubr.f32.mxu0 0.0
        %4444 = vmatmul.mubr.f32.gmra.mrb[0].mxu0 %v3360
        %v4445 = vpop.f32.mrb[0].mxu0
        %v4446 = vadd.f32 %v3452, %v4445
        %v4447 = vpop.f32.mrb[0].mxu0
        %4448 = vmatprep.mubr.f32.mxu0 0.0
        %4449 = vmatmul.mubr.f32.gmra.mrb[0].mxu0 %v3361
        %v4450 = vpop.f32.mrb[0].mxu0
        %v4451 = vadd.f32 %v3452, %v4450
        %v4452 = vpop.f32.mrb[0].mxu0
        %4453 = vmatprep.mubr.f32.mxu0 0.0
        %4454 = vmatmul.mubr.f32.gmra.mrb[0].mxu0 %v3362
        %v4455 = vpop.f32.mrb[0].mxu0
        %v4456 = vadd.f32 %v3452, %v4455
        %v4457 = vpop.f32.mrb[0].mxu0
        %4458 = vmatprep.mubr.f32.mxu0 0.0
        %4459 = vmatmul.mubr.f32.gmra.mrb[0].mxu0 %v3363
        %v4460 = vpop.f32.mrb[0].mxu0
        %v4461 = vadd.f32 %v3452, %v4460
        %v4462 = vpop.f32.mrb[0].mxu0
        %4463 = vmatprep.mubr.f32.mxu0 0.0
        %4464 = vmatmul.mubr.f32.gmra.mrb[0].mxu0 %v3364
        %v4465 = vpop.f32.mrb[0].mxu0
        %v4466 = vadd.f32 %v3452, %v4465
        %v4467 = vpop.f32.mrb[0].mxu0
        %4468 = vmatprep.mubr.f32.mxu0 0.0
        %4469 = vmatmul.mubr.f32.gmra.mrb[0].mxu0 %v3365
        %v4470 = vpop.f32.mrb[0].mxu0
        %v4471 = vadd.f32 %v3452, %v4470
        %v4472 = vpop.f32.mrb[0].mxu0
        %4473 = vmatprep.mubr.f32.mxu0 0.0
        %4474 = vmatmul.mubr.f32.gmra.mrb[0].mxu0 %v3366
        %v4475 = vpop.f32.mrb[0].mxu0
        %v4476 = vadd.f32 %v3452, %v4475
        %v4477 = vpop.f32.mrb[0].mxu0
        %4478 = vmatprep.mubr.f32.mxu0 0.0
        %4479 = vmatmul.mubr.f32.gmra.mrb[0].mxu0 %v3367
        %v4480 = vpop.f32.mrb[0].mxu0
        %v4481 = vadd.f32 %v3452, %v4480
        %v4482 = vpop.f32.mrb[0].mxu0
        %4483 = vmatprep.mubr.f32.mxu0 0.0
        %4484 = vmatmul.mubr.f32.gmra.mrb[0].mxu0 %v3368
        %v4485 = vpop.f32.mrb[0].mxu0
        %v4486 = vadd.f32 %v3452, %v4485
        %v4487 = vpop.f32.mrb[0].mxu0
        %4488 = vmatprep.mubr.f32.mxu0 0.0
        %4489 = vmatmul.mubr.f32.gmra.mrb[0].mxu0 %v3369
        %v4490 = vpop.f32.mrb[0].mxu0
        %v4491 = vadd.f32 %v3452, %v4490
        %v4492 = vpop.f32.mrb[0].mxu0
        %4493 = vmatprep.mubr.f32.mxu0 0.0
        %4494 = vmatmul.mubr.f32.gmra.mrb[0].mxu0 %v3370
        %v4495 = vpop.f32.mrb[0].mxu0
        %v4496 = vadd.f32 %v3452, %v4495
        %v4497 = vpop.f32.mrb[0].mxu0
        %4498 = vmatprep.mubr.f32.mxu0 0.0
        %4499 = vmatmul.mubr.f32.gmra.mrb[0].mxu0 %v3371
        %v4500 = vpop.f32.mrb[0].mxu0
        %v4501 = vadd.f32 %v3452, %v4500
        %v4502 = vpop.f32.mrb[0].mxu0
        %4503 = vmatprep.mubr.f32.mxu0 0.0
        %4504 = vmatmul.mubr.f32.gmra.mrb[0].mxu0 %v3372
        %v4505 = vpop.f32.mrb[0].mxu0
        %v4506 = vadd.f32 %v3452, %v4505
        %v4507 = vpop.f32.mrb[0].mxu0
        %4508 = vmatprep.mubr.f32.mxu0 0.0
        %4509 = vmatmul.mubr.f32.gmra.mrb[0].mxu0 %v3373
        %v4510 = vpop.f32.mrb[0].mxu0
        %v4511 = vadd.f32 %v3452, %v4510
        %v4512 = vpop.f32.mrb[0].mxu0
        %4513 = vmatprep.mubr.f32.mxu0 0.0
        %4514 = vmatmul.mubr.f32.gmra.mrb[0].mxu0 %v3374
        %v4515 = vpop.f32.mrb[0].mxu0
        %v4516 = vadd.f32 %v3452, %v4515
        %v4517 = vpop.f32.mrb[0].mxu0
        %4518 = vmatprep.mubr.f32.mxu0 0.0
        %4519 = vmatmul.mubr.f32.gmra.mrb[0].mxu0 %v3375
        %v4520 = vpop.f32.mrb[0].mxu0
        %v4521 = vadd.f32 %v3452, %v4520
        %v4522 = vpop.f32.mrb[0].mxu0
        %4523 = vmatprep.mubr.f32.mxu0 0.0
        %4524 = vmatmul.mubr.f32.gmra.mrb[0].mxu0 %v3376
        %v4525 = vpop.f32.mrb[0].mxu0
        %v4526 = vadd.f32 %v3452, %v4525
        %v4527 = vpop.f32.mrb[0].mxu0
        %4528 = vmatprep.mubr.f32.mxu0 0.0
        %4529 = vmatmul.mubr.f32.gmra.mrb[0].mxu0 %v3377
        %v4530 = vpop.f32.mrb[0].mxu0
        %v4531 = vadd.f32 %v3452, %v4530
        %v4532 = vpop.f32.mrb[0].mxu0
        %4533 = vmatprep.mubr.f32.mxu0 0.0
        %4534 = vmatmul.mubr.f32.gmra.mrb[0].mxu0 %v3378
        %v4535 = vpop.f32.mrb[0].mxu0
        %v4536 = vadd.f32 %v3452, %v4535
        %v4537 = vpop.f32.mrb[0].mxu0
        %4538 = vmatprep.mubr.f32.mxu0 0.0
        %4539 = vmatmul.mubr.f32.gmra.mrb[0].mxu0 %v3379
        %v4540 = vpop.f32.mrb[0].mxu0
        %v4541 = vadd.f32 %v3452, %v4540
        %v4542 = vpop.f32.mrb[0].mxu0
        %4543 = vmatprep.mubr.f32.mxu0 0.0
        %4544 = vmatmul.mubr.f32.gmra.mrb[0].mxu0 %v3380
        %v4545 = vpop.f32.mrb[0].mxu0
        %v4546 = vadd.f32 %v3452, %v4545
        %v4547 = vpop.f32.mrb[0].mxu0
        %4548 = vmatprep.mubr.f32.mxu0 0.0
        %4549 = vmatmul.mubr.f32.gmra.mrb[0].mxu0 %v3381
        %v4550 = vpop.f32.mrb[0].mxu0
        %v4551 = vadd.f32 %v3452, %v4550
        %v4552 = vpop.f32.mrb[0].mxu0
        %4553 = vmatprep.mubr.f32.mxu0 0.0
        %4554 = vmatmul.mubr.f32.gmra.mrb[0].mxu0 %v3382
        %v4555 = vpop.f32.mrb[0].mxu0
        %v4556 = vadd.f32 %v3452, %v4555
        %v4557 = vpop.f32.mrb[0].mxu0
        %4558 = vmatprep.mubr.f32.mxu0 0.0
        %4559 = vmatmul.mubr.f32.gmra.mrb[0].mxu0 %v3383
        %v4560 = vpop.f32.mrb[0].mxu0
        %v4561 = vadd.f32 %v3452, %v4560
        %v4562 = vpop.f32.mrb[0].mxu0
        %4563 = vmatprep.mubr.f32.mxu0 0.0
        %4564 = vmatmul.mubr.f32.gmra.mrb[0].mxu0 %v3384
        %v4565 = vpop.f32.mrb[0].mxu0
        %v4566 = vadd.f32 %v3452, %v4565
        %v4567 = vpop.f32.mrb[0].mxu0
        %4568 = vmatprep.mubr.f32.mxu0 0.0
        %4569 = vmatmul.mubr.f32.gmra.mrb[0].mxu0 %v3385
        %v4570 = vpop.f32.mrb[0].mxu0
        %v4571 = vadd.f32 %v3452, %v4570
        %v4572 = vpop.f32.mrb[0].mxu0
        %4573 = vmatprep.mubr.f32.mxu0 0.0
        %4574 = vmatmul.mubr.f32.gmra.mrb[0].mxu0 %v3386
        %v4575 = vpop.f32.mrb[0].mxu0
        %v4576 = vadd.f32 %v3452, %v4575
        %v4577 = vpop.f32.mrb[0].mxu0
        %4578 = vmatprep.mubr.f32.mxu0 0.0
        %4579 = vmatmul.mubr.f32.gmra.mrb[0].mxu0 %v3387
        %v4580 = vpop.f32.mrb[0].mxu0
        %v4581 = vadd.f32 %v3452, %v4580
        %v4582 = vpop.f32.mrb[0].mxu0
        %4583 = vmatprep.mubr.f32.mxu0 0.0
        %4584 = vmatmul.mubr.f32.gmra.mrb[0].mxu0 %v3388
        %v4585 = vpop.f32.mrb[0].mxu0
        %v4586 = vadd.f32 %v3452, %v4585
        %v4587 = vpop.f32.mrb[0].mxu0
        %4588 = vmatprep.mubr.f32.mxu0 0.0
        %4589 = vmatmul.mubr.f32.gmra.mrb[0].mxu0 %v3389
        %v4590 = vpop.f32.mrb[0].mxu0
        %v4591 = vadd.f32 %v3452, %v4590
        %v4592 = vpop.f32.mrb[0].mxu0
        %4593 = vmatprep.mubr.f32.mxu0 0.0
        %4594 = vmatmul.mubr.f32.gmra.mrb[0].mxu0 %v3390
        %v4595 = vpop.f32.mrb[0].mxu0
        %v4596 = vadd.f32 %v3452, %v4595
        %v4597 = vpop.f32.mrb[0].mxu0
        %4598 = vmatprep.mubr.f32.mxu0 0.0
        %4599 = vmatmul.mubr.f32.gmra.mrb[0].mxu0 %v3391
        %v4600 = vpop.f32.mrb[0].mxu0
        %v4601 = vadd.f32 %v3452, %v4600
        %v4602 = vpop.f32.mrb[0].mxu0
        %4603 = vmatprep.mubr.f32.mxu0 0.0
        %4604 = vmatmul.mubr.f32.gmra.mrb[0].mxu0 %v3392
        %v4605 = vpop.f32.mrb[0].mxu0
        %v4606 = vadd.f32 %v3452, %v4605
        %v4607 = vpop.f32.mrb[0].mxu0
        %4608 = vmatprep.mubr.f32.mxu0 0.0
        %4609 = vmatmul.mubr.f32.gmra.mrb[0].mxu0 %v3393
        %v4610 = vpop.f32.mrb[0].mxu0
        %v4611 = vadd.f32 %v3452, %v4610
        %v4612 = vpop.f32.mrb[0].mxu0
        %4613 = vmatprep.mubr.f32.mxu0 0.0
        %4614 = vmatmul.mubr.f32.gmra.mrb[0].mxu0 %v3394
        %v4615 = vpop.f32.mrb[0].mxu0
        %v4616 = vadd.f32 %v3452, %v4615
        %v4617 = vpop.f32.mrb[0].mxu0
        %4618 = vmatprep.mubr.f32.mxu0 0.0
        %4619 = vmatmul.mubr.f32.gmra.mrb[0].mxu0 %v3395
        %v4620 = vpop.f32.mrb[0].mxu0
        %v4621 = vadd.f32 %v3452, %v4620
        %v4622 = vpop.f32.mrb[0].mxu0
        %4623 = vmatprep.mubr.f32.mxu0 0.0
        %4624 = vmatmul.mubr.f32.gmra.mrb[0].mxu0 %v3396
        %v4625 = vpop.f32.mrb[0].mxu0
        %v4626 = vadd.f32 %v3452, %v4625
        %v4627 = vpop.f32.mrb[0].mxu0
        %4628 = vmatprep.mubr.f32.mxu0 0.0
        %4629 = vmatmul.mubr.f32.gmra.mrb[0].mxu0 %v3397
        %v4630 = vpop.f32.mrb[0].mxu0
        %v4631 = vadd.f32 %v3452, %v4630
        %v4632 = vpop.f32.mrb[0].mxu0
        %4633 = vmatprep.mubr.f32.mxu0 0.0
        %4634 = vmatmul.mubr.f32.gmra.mrb[0].mxu0 %v3398
        %v4635 = vpop.f32.mrb[0].mxu0
        %v4636 = vadd.f32 %v3452, %v4635
        %v4637 = vpop.f32.mrb[0].mxu0
        %4638 = vmatprep.mubr.f32.mxu0 0.0
        %4639 = vmatmul.mubr.f32.gmra.mrb[0].mxu0 %v3399
        %v4640 = vpop.f32.mrb[0].mxu0
        %v4641 = vadd.f32 %v3452, %v4640
        %v4642 = vpop.f32.mrb[0].mxu0
        %4643 = vmatprep.mubr.f32.mxu0 0.0
        %4644 = vmatmul.mubr.f32.gmra.mrb[0].mxu0 %v3400
        %v4645 = vpop.f32.mrb[0].mxu0
        %v4646 = vadd.f32 %v3452, %v4645
        %v4647 = vpop.f32.mrb[0].mxu0
        %4648 = vmatprep.mubr.f32.mxu0 0.0
        %4649 = vmatmul.mubr.f32.gmra.mrb[0].mxu0 %v3401
        %v4650 = vpop.f32.mrb[0].mxu0
        %v4651 = vadd.f32 %v3452, %v4650
        %v4652 = vpop.f32.mrb[0].mxu0
        %4653 = vmatprep.mubr.f32.mxu0 0.0
        %4654 = vmatmul.mubr.f32.gmra.mrb[0].mxu0 %v3402
        %v4655 = vpop.f32.mrb[0].mxu0
        %v4656 = vadd.f32 %v3452, %v4655
        %v4657 = vpop.f32.mrb[0].mxu0
        %4658 = vmatprep.mubr.f32.mxu0 0.0
        %4659 = vmatmul.mubr.f32.gmra.mrb[0].mxu0 %v3403
        %v4660 = vpop.f32.mrb[0].mxu0
        %v4661 = vadd.f32 %v3452, %v4660
        %v4662 = vpop.f32.mrb[0].mxu0
        %4663 = vmatprep.mubr.f32.mxu0 0.0
        %4664 = vmatmul.mubr.f32.gmra.mrb[0].mxu0 %v3404
        %v4665 = vpop.f32.mrb[0].mxu0
        %v4666 = vadd.f32 %v3452, %v4665
        %v4667 = vpop.f32.mrb[0].mxu0
        %4668 = vmatprep.mubr.f32.mxu0 0.0
        %4669 = vmatmul.mubr.f32.gmra.mrb[0].mxu0 %v3405
        %v4670 = vpop.f32.mrb[0].mxu0
        %v4671 = vadd.f32 %v3452, %v4670
        %v4672 = vpop.f32.mrb[0].mxu0
        %4673 = vmatprep.mubr.f32.mxu0 0.0
        %4674 = vmatmul.mubr.f32.gmra.mrb[0].mxu0 %v3406
        %v4675 = vpop.f32.mrb[0].mxu0
        %v4676 = vadd.f32 %v3452, %v4675
        %v4677 = vpop.f32.mrb[0].mxu0
        %4678 = vmatprep.mubr.f32.mxu0 0.0
        %4679 = vmatmul.mubr.f32.gmra.mrb[0].mxu0 %v3407
        %v4680 = vpop.f32.mrb[0].mxu0
        %v4681 = vadd.f32 %v3452, %v4680
        %v4682 = vpop.f32.mrb[0].mxu0
        %4683 = vmatprep.mubr.f32.mxu0 0.0
        %4684 = vmatmul.mubr.f32.gmra.mrb[0].mxu0 %v3408
        %v4685 = vpop.f32.mrb[0].mxu0
        %v4686 = vadd.f32 %v3452, %v4685
        %v4687 = vpop.f32.mrb[0].mxu0
        %4688 = vmatprep.mubr.f32.mxu0 0.0
        %4689 = vmatmul.mubr.f32.gmra.mrb[0].mxu0 %v3409
        %v4690 = vpop.f32.mrb[0].mxu0
        %v4691 = vadd.f32 %v3452, %v4690
        %v4692 = vpop.f32.mrb[0].mxu0
        %4693 = vmatprep.mubr.f32.mxu0 0.0
        %4694 = vmatmul.mubr.f32.gmra.mrb[0].mxu0 %v3410
        %v4695 = vpop.f32.mrb[0].mxu0
        %v4696 = vadd.f32 %v3452, %v4695
        %v4697 = vpop.f32.mrb[0].mxu0
        %4698 = vmatprep.mubr.f32.mxu0 0.0
        %4699 = vmatmul.mubr.f32.gmra.mrb[0].mxu0 %v3411
        %v4700 = vpop.f32.mrb[0].mxu0
        %v4701 = vadd.f32 %v3452, %v4700
        %v4702 = vpop.f32.mrb[0].mxu0
        %4703 = vmatprep.mubr.f32.mxu0 0.0
        %4704 = vmatmul.mubr.f32.gmra.mrb[0].mxu0 %v3412
        %v4705 = vpop.f32.mrb[0].mxu0
        %v4706 = vadd.f32 %v3452, %v4705
        %v4707 = vpop.f32.mrb[0].mxu0
        %4708 = vmatprep.mubr.f32.mxu0 0.0
        %4709 = vmatmul.mubr.f32.gmra.mrb[0].mxu0 %v3413
        %v4710 = vpop.f32.mrb[0].mxu0
        %v4711 = vadd.f32 %v3452, %v4710
        %v4712 = vpop.f32.mrb[0].mxu0
        %4713 = vmatprep.mubr.f32.mxu0 0.0
        %4714 = vmatmul.mubr.f32.gmra.mrb[0].mxu0 %v3414
        %v4715 = vpop.f32.mrb[0].mxu0
        %v4716 = vadd.f32 %v3452, %v4715
        %v4717 = vpop.f32.mrb[0].mxu0
        %4718 = vmatprep.mubr.f32.mxu0 0.0
        %4719 = vmatmul.mubr.f32.gmra.mrb[0].mxu0 %v3415
        %v4720 = vpop.f32.mrb[0].mxu0
        %v4721 = vadd.f32 %v3452, %v4720
        %v4722 = vpop.f32.mrb[0].mxu0
        %4723 = vmatprep.mubr.f32.mxu0 0.0
        %4724 = vmatmul.mubr.f32.gmra.mrb[0].mxu0 %v3416
        %v4725 = vpop.f32.mrb[0].mxu0
        %v4726 = vadd.f32 %v3452, %v4725
        %v4727 = vpop.f32.mrb[0].mxu0
        %4728 = vmatprep.mubr.f32.mxu0 0.0
        %4729 = vmatmul.mubr.f32.gmra.mrb[0].mxu0 %v3417
        %v4730 = vpop.f32.mrb[0].mxu0
        %v4731 = vadd.f32 %v3452, %v4730
        %v4732 = vpop.f32.mrb[0].mxu0
        %4733 = vmatprep.mubr.f32.mxu0 0.0
        %4734 = vmatmul.mubr.f32.gmra.mrb[0].mxu0 %v3418
        %v4735 = vpop.f32.mrb[0].mxu0
        %v4736 = vadd.f32 %v3452, %v4735
        %v4737 = vpop.f32.mrb[0].mxu0
        %4738 = vmatprep.mubr.f32.mxu0 0.0
        %4739 = vmatmul.mubr.f32.gmra.mrb[0].mxu0 %v3419
        %v4740 = vpop.f32.mrb[0].mxu0
        %v4741 = vadd.f32 %v3452, %v4740
        %v4742 = vpop.f32.mrb[0].mxu0
        %4743 = vmatprep.mubr.f32.mxu0 0.0
        %4744 = vmatmul.mubr.f32.gmra.mrb[0].mxu0 %v3420
        %v4745 = vpop.f32.mrb[0].mxu0
        %v4746 = vadd.f32 %v3452, %v4745
        %v4747 = vpop.f32.mrb[0].mxu0
        %4748 = vmatprep.mubr.f32.mxu0 0.0
        %4749 = vmatmul.mubr.f32.gmra.mrb[0].mxu0 %v3421
        %v4750 = vpop.f32.mrb[0].mxu0
        %v4751 = vadd.f32 %v3452, %v4750
        %v4752 = vpop.f32.mrb[0].mxu0
        %4753 = vmatprep.mubr.f32.mxu0 0.0
        %4754 = vmatmul.mubr.f32.gmra.mrb[0].mxu0 %v3422
        %v4755 = vpop.f32.mrb[0].mxu0
        %v4756 = vadd.f32 %v3452, %v4755
        %v4757 = vpop.f32.mrb[0].mxu0
        %4758 = vmatprep.mubr.f32.mxu0 0.0
        %4759 = vmatmul.mubr.f32.gmra.mrb[0].mxu0 %v3423
        %v4760 = vpop.f32.mrb[0].mxu0
        %v4761 = vadd.f32 %v3452, %v4760
        %v4762 = vpop.f32.mrb[0].mxu0
        %4763 = vmatprep.mubr.f32.mxu0 0.0
        %4764 = vmatmul.mubr.f32.gmra.mrb[0].mxu0 %v3424
        %v4765 = vpop.f32.mrb[0].mxu0
        %v4766 = vadd.f32 %v3452, %v4765
        %v4767 = vpop.f32.mrb[0].mxu0
        %4768 = vmatprep.mubr.f32.mxu0 0.0
        %4769 = vmatmul.mubr.f32.gmra.mrb[0].mxu0 %v3425
        %v4770 = vpop.f32.mrb[0].mxu0
        %v4771 = vadd.f32 %v3452, %v4770
        %v4772 = vpop.f32.mrb[0].mxu0
        %4773 = vmatprep.mubr.f32.mxu0 0.0
        %4774 = vmatmul.mubr.f32.gmra.mrb[0].mxu0 %v3426
        %v4775 = vpop.f32.mrb[0].mxu0
        %v4776 = vadd.f32 %v3452, %v4775
        %v4777 = vpop.f32.mrb[0].mxu0
        %4778 = vmatprep.mubr.f32.mxu0 0.0
        %4779 = vmatmul.mubr.f32.gmra.mrb[0].mxu0 %v3427
        %v4780 = vpop.f32.mrb[0].mxu0
        %v4781 = vadd.f32 %v3452, %v4780
        %v4782 = vpop.f32.mrb[0].mxu0
        %4783 = vmatprep.mubr.f32.mxu0 0.0
        %4784 = vmatmul.mubr.f32.gmra.mrb[0].mxu0 %v3428
        %v4785 = vpop.f32.mrb[0].mxu0
        %v4786 = vadd.f32 %v3452, %v4785
        %v4787 = vpop.f32.mrb[0].mxu0
        %4788 = vmatprep.mubr.f32.mxu0 0.0
        %4789 = vmatmul.mubr.f32.gmra.mrb[0].mxu0 %v3429
        %v4790 = vpop.f32.mrb[0].mxu0
        %v4791 = vadd.f32 %v3452, %v4790
        %v4792 = vpop.f32.mrb[0].mxu0
        %4793 = vmatprep.mubr.f32.mxu0 0.0
        %4794 = vmatmul.mubr.f32.gmra.mrb[0].mxu0 %v3430
        %v4795 = vpop.f32.mrb[0].mxu0
        %v4796 = vadd.f32 %v3452, %v4795
        %v4797 = vpop.f32.mrb[0].mxu0
        %4798 = vdwg.mxu0
        %v4799 = vmax.f32 %v3521, 0.0
        %v4800 = vmax.f32 %v3526, 0.0
        %v4801 = vmax.f32 %v3531, 0.0
        %v4802 = vmax.f32 %v3536, 0.0
        %v4803 = vmax.f32 %v3541, 0.0
        %v4804 = vmax.f32 %v3546, 0.0
        %v4805 = vmax.f32 %v3551, 0.0
        %v4806 = vmax.f32 %v3556, 0.0
        %v4807 = vmax.f32 %v3561, 0.0
        %v4808 = vmax.f32 %v3566, 0.0
        %v4809 = vmax.f32 %v3571, 0.0
        %v4810 = vmax.f32 %v3576, 0.0
        %v4811 = vmax.f32 %v3581, 0.0
        %v4812 = vmax.f32 %v3586, 0.0
        %v4813 = vmax.f32 %v3591, 0.0
        %v4814 = vmax.f32 %v3596, 0.0
        %v4815 = vmax.f32 %v3601, 0.0
        %v4816 = vmax.f32 %v3606, 0.0
        %v4817 = vmax.f32 %v3611, 0.0
        %v4818 = vmax.f32 %v3616, 0.0
        %v4819 = vmax.f32 %v3621, 0.0
        %v4820 = vmax.f32 %v3626, 0.0
        %v4821 = vmax.f32 %v3631, 0.0
        %v4822 = vmax.f32 %v3636, 0.0
        %v4823 = vmax.f32 %v3641, 0.0
        %v4824 = vmax.f32 %v3646, 0.0
        %v4825 = vmax.f32 %v3651, 0.0
        %v4826 = vmax.f32 %v3656, 0.0
        %v4827 = vmax.f32 %v3661, 0.0
        %v4828 = vmax.f32 %v3666, 0.0
        %v4829 = vmax.f32 %v3671, 0.0
        %v4830 = vmax.f32 %v3676, 0.0
        %v4831 = vmax.f32 %v3681, 0.0
        %v4832 = vmax.f32 %v3686, 0.0
        %v4833 = vmax.f32 %v3691, 0.0
        %v4834 = vmax.f32 %v3696, 0.0
        %v4835 = vmax.f32 %v3701, 0.0
        %v4836 = vmax.f32 %v3706, 0.0
        %v4837 = vmax.f32 %v3711, 0.0
        %v4838 = vmax.f32 %v3716, 0.0
        %v4839 = vmax.f32 %v3721, 0.0
        %v4840 = vmax.f32 %v3726, 0.0
        %v4841 = vmax.f32 %v3731, 0.0
        %v4842 = vmax.f32 %v3736, 0.0
        %v4843 = vmax.f32 %v3741, 0.0
        %v4844 = vmax.f32 %v3746, 0.0
        %v4845 = vmax.f32 %v3751, 0.0
        %v4846 = vmax.f32 %v3756, 0.0
        %v4847 = vmax.f32 %v3761, 0.0
        %v4848 = vmax.f32 %v3766, 0.0
        %v4849 = vmax.f32 %v3771, 0.0
        %v4850 = vmax.f32 %v3776, 0.0
        %v4851 = vmax.f32 %v3781, 0.0
        %v4852 = vmax.f32 %v3786, 0.0
        %v4853 = vmax.f32 %v3791, 0.0
        %v4854 = vmax.f32 %v3796, 0.0
        %v4855 = vmax.f32 %v3801, 0.0
        %v4856 = vmax.f32 %v3806, 0.0
        %v4857 = vmax.f32 %v3811, 0.0
        %v4858 = vmax.f32 %v3816, 0.0
        %v4859 = vmax.f32 %v3821, 0.0
        %v4860 = vmax.f32 %v3826, 0.0
        %v4861 = vmax.f32 %v3831, 0.0
        %v4862 = vmax.f32 %v3836, 0.0
        %v4863 = vmax.f32 %v3841, 0.0
        %v4864 = vmax.f32 %v3846, 0.0
        %v4865 = vmax.f32 %v3851, 0.0
        %v4866 = vmax.f32 %v3856, 0.0
        %v4867 = vmax.f32 %v3861, 0.0
        %v4868 = vmax.f32 %v3866, 0.0
        %v4869 = vmax.f32 %v3871, 0.0
        %v4870 = vmax.f32 %v3876, 0.0
        %v4871 = vmax.f32 %v3881, 0.0
        %v4872 = vmax.f32 %v3886, 0.0
        %v4873 = vmax.f32 %v3891, 0.0
        %v4874 = vmax.f32 %v3896, 0.0
        %v4875 = vmax.f32 %v3901, 0.0
        %v4876 = vmax.f32 %v3906, 0.0
        %v4877 = vmax.f32 %v3911, 0.0
        %v4878 = vmax.f32 %v3916, 0.0
        %v4879 = vmax.f32 %v3921, 0.0
        %v4880 = vmax.f32 %v3926, 0.0
        %v4881 = vmax.f32 %v3931, 0.0
        %v4882 = vmax.f32 %v3936, 0.0
        %v4883 = vmax.f32 %v3941, 0.0
        %v4884 = vmax.f32 %v3946, 0.0
        %v4885 = vmax.f32 %v3951, 0.0
        %v4886 = vmax.f32 %v3956, 0.0
        %v4887 = vmax.f32 %v3961, 0.0
        %v4888 = vmax.f32 %v3966, 0.0
        %v4889 = vmax.f32 %v3971, 0.0
        %v4890 = vmax.f32 %v3976, 0.0
        %v4891 = vmax.f32 %v3981, 0.0
        %v4892 = vmax.f32 %v3986, 0.0
        %v4893 = vmax.f32 %v3991, 0.0
        %v4894 = vmax.f32 %v3996, 0.0
        %v4895 = vmax.f32 %v4001, 0.0
        %v4896 = vmax.f32 %v4006, 0.0
        %v4897 = vmax.f32 %v4011, 0.0
        %v4898 = vmax.f32 %v4016, 0.0
        %v4899 = vmax.f32 %v4021, 0.0
        %v4900 = vmax.f32 %v4026, 0.0
        %v4901 = vmax.f32 %v4031, 0.0
        %v4902 = vmax.f32 %v4036, 0.0
        %v4903 = vmax.f32 %v4041, 0.0
        %v4904 = vmax.f32 %v4046, 0.0
        %v4905 = vmax.f32 %v4051, 0.0
        %v4906 = vmax.f32 %v4056, 0.0
        %v4907 = vmax.f32 %v4061, 0.0
        %v4908 = vmax.f32 %v4066, 0.0
        %v4909 = vmax.f32 %v4071, 0.0
        %v4910 = vmax.f32 %v4076, 0.0
        %v4911 = vmax.f32 %v4081, 0.0
        %v4912 = vmax.f32 %v4086, 0.0
        %v4913 = vmax.f32 %v4091, 0.0
        %v4914 = vmax.f32 %v4096, 0.0
        %v4915 = vmax.f32 %v4101, 0.0
        %v4916 = vmax.f32 %v4106, 0.0
        %v4917 = vmax.f32 %v4111, 0.0
        %v4918 = vmax.f32 %v4116, 0.0
        %v4919 = vmax.f32 %v4121, 0.0
        %v4920 = vmax.f32 %v4126, 0.0
        %v4921 = vmax.f32 %v4131, 0.0
        %v4922 = vmax.f32 %v4136, 0.0
        %v4923 = vmax.f32 %v4141, 0.0
        %v4924 = vmax.f32 %v4146, 0.0
        %v4925 = vmax.f32 %v4151, 0.0
        %v4926 = vmax.f32 %v4156, 0.0
        %v4927 = vmax.f32 %v4161, 0.0
        %v4928 = vmax.f32 %v4166, 0.0
        %v4929 = vmax.f32 %v4171, 0.0
        %v4930 = vmax.f32 %v4176, 0.0
        %v4931 = vmax.f32 %v4181, 0.0
        %v4932 = vmax.f32 %v4186, 0.0
        %v4933 = vmax.f32 %v4191, 0.0
        %v4934 = vmax.f32 %v4196, 0.0
        %v4935 = vmax.f32 %v4201, 0.0
        %v4936 = vmax.f32 %v4206, 0.0
        %v4937 = vmax.f32 %v4211, 0.0
        %v4938 = vmax.f32 %v4216, 0.0
        %v4939 = vmax.f32 %v4221, 0.0
        %v4940 = vmax.f32 %v4226, 0.0
        %v4941 = vmax.f32 %v4231, 0.0
        %v4942 = vmax.f32 %v4236, 0.0
        %v4943 = vmax.f32 %v4241, 0.0
        %v4944 = vmax.f32 %v4246, 0.0
        %v4945 = vmax.f32 %v4251, 0.0
        %v4946 = vmax.f32 %v4256, 0.0
        %v4947 = vmax.f32 %v4261, 0.0
        %v4948 = vmax.f32 %v4266, 0.0
        %v4949 = vmax.f32 %v4271, 0.0
        %v4950 = vmax.f32 %v4276, 0.0
        %v4951 = vmax.f32 %v4281, 0.0
        %v4952 = vmax.f32 %v4286, 0.0
        %v4953 = vmax.f32 %v4291, 0.0
        %v4954 = vmax.f32 %v4296, 0.0
        %v4955 = vmax.f32 %v4301, 0.0
        %v4956 = vmax.f32 %v4306, 0.0
        %v4957 = vmax.f32 %v4311, 0.0
        %v4958 = vmax.f32 %v4316, 0.0
        %v4959 = vmax.f32 %v4321, 0.0
        %v4960 = vmax.f32 %v4326, 0.0
        %v4961 = vmax.f32 %v4331, 0.0
        %v4962 = vmax.f32 %v4336, 0.0
        %v4963 = vmax.f32 %v4341, 0.0
        %v4964 = vmax.f32 %v4346, 0.0
        %v4965 = vmax.f32 %v4351, 0.0
        %v4966 = vmax.f32 %v4356, 0.0
        %v4967 = vmax.f32 %v4361, 0.0
        %v4968 = vmax.f32 %v4366, 0.0
        %v4969 = vmax.f32 %v4371, 0.0
        %v4970 = vmax.f32 %v4376, 0.0
        %v4971 = vmax.f32 %v4381, 0.0
        %v4972 = vmax.f32 %v4386, 0.0
        %v4973 = vmax.f32 %v4391, 0.0
        %v4974 = vmax.f32 %v4396, 0.0
        %v4975 = vmax.f32 %v4401, 0.0
        %v4976 = vmax.f32 %v4406, 0.0
        %v4977 = vmax.f32 %v4411, 0.0
        %v4978 = vmax.f32 %v4416, 0.0
        %v4979 = vmax.f32 %v4421, 0.0
        %v4980 = vmax.f32 %v4426, 0.0
        %v4981 = vmax.f32 %v4431, 0.0
        %v4982 = vmax.f32 %v4436, 0.0
        %v4983 = vmax.f32 %v4441, 0.0
        %v4984 = vmax.f32 %v4446, 0.0
        %v4985 = vmax.f32 %v4451, 0.0
        %v4986 = vmax.f32 %v4456, 0.0
        %v4987 = vmax.f32 %v4461, 0.0
        %v4988 = vmax.f32 %v4466, 0.0
        %v4989 = vmax.f32 %v4471, 0.0
        %v4990 = vmax.f32 %v4476, 0.0
        %v4991 = vmax.f32 %v4481, 0.0
        %v4992 = vmax.f32 %v4486, 0.0
        %v4993 = vmax.f32 %v4491, 0.0
        %v4994 = vmax.f32 %v4496, 0.0
        %v4995 = vmax.f32 %v4501, 0.0
        %v4996 = vmax.f32 %v4506, 0.0
        %v4997 = vmax.f32 %v4511, 0.0
        %v4998 = vmax.f32 %v4516, 0.0
        %v4999 = vmax.f32 %v4521, 0.0
        %v5000 = vmax.f32 %v4526, 0.0
        %v5001 = vmax.f32 %v4531, 0.0
        %v5002 = vmax.f32 %v4536, 0.0
        %v5003 = vmax.f32 %v4541, 0.0
        %v5004 = vmax.f32 %v4546, 0.0
        %v5005 = vmax.f32 %v4551, 0.0
        %v5006 = vmax.f32 %v4556, 0.0
        %v5007 = vmax.f32 %v4561, 0.0
        %v5008 = vmax.f32 %v4566, 0.0
        %v5009 = vmax.f32 %v4571, 0.0
        %v5010 = vmax.f32 %v4576, 0.0
        %v5011 = vmax.f32 %v4581, 0.0
        %v5012 = vmax.f32 %v4586, 0.0
        %v5013 = vmax.f32 %v4591, 0.0
        %v5014 = vmax.f32 %v4596, 0.0
        %v5015 = vmax.f32 %v4601, 0.0
        %v5016 = vmax.f32 %v4606, 0.0
        %v5017 = vmax.f32 %v4611, 0.0
        %v5018 = vmax.f32 %v4616, 0.0
        %v5019 = vmax.f32 %v4621, 0.0
        %v5020 = vmax.f32 %v4626, 0.0
        %v5021 = vmax.f32 %v4631, 0.0
        %v5022 = vmax.f32 %v4636, 0.0
        %v5023 = vmax.f32 %v4641, 0.0
        %v5024 = vmax.f32 %v4646, 0.0
        %v5025 = vmax.f32 %v4651, 0.0
        %v5026 = vmax.f32 %v4656, 0.0
        %v5027 = vmax.f32 %v4661, 0.0
        %v5028 = vmax.f32 %v4666, 0.0
        %v5029 = vmax.f32 %v4671, 0.0
        %v5030 = vmax.f32 %v4676, 0.0
        %v5031 = vmax.f32 %v4681, 0.0
        %v5032 = vmax.f32 %v4686, 0.0
        %v5033 = vmax.f32 %v4691, 0.0
        %v5034 = vmax.f32 %v4696, 0.0
        %v5035 = vmax.f32 %v4701, 0.0
        %v5036 = vmax.f32 %v4706, 0.0
        %v5037 = vmax.f32 %v4711, 0.0
        %v5038 = vmax.f32 %v4716, 0.0
        %v5039 = vmax.f32 %v4721, 0.0
        %v5040 = vmax.f32 %v4726, 0.0
        %v5041 = vmax.f32 %v4731, 0.0
        %v5042 = vmax.f32 %v4736, 0.0
        %v5043 = vmax.f32 %v4741, 0.0
        %v5044 = vmax.f32 %v4746, 0.0
        %v5045 = vmax.f32 %v4751, 0.0
        %v5046 = vmax.f32 %v4756, 0.0
        %v5047 = vmax.f32 %v4761, 0.0
        %v5048 = vmax.f32 %v4766, 0.0
        %v5049 = vmax.f32 %v4771, 0.0
        %v5050 = vmax.f32 %v4776, 0.0
        %v5051 = vmax.f32 %v4781, 0.0
        %v5052 = vmax.f32 %v4786, 0.0
        %v5053 = vmax.f32 %v4791, 0.0
        %v5054 = vmax.f32 %v4796, 0.0
        %v5055 = vld [vmem:[#allocation14] sm:$0x1]
        %v5057 = vlaneseq
        %v5058 = vshrl.u32 %v5057, 7
        %v5059 = vsub.s32 0, %v5058
        %v5060 = vrot.slane %v5055, %v5059
        %v5062 = vmul.f32 %v4799, %v5060
        %v5063 = vmul.f32 %v4800, %v5060
        %v5064 = vmul.f32 %v4801, %v5060
        %v5065 = vmul.f32 %v4802, %v5060
        %v5066 = vmul.f32 %v4803, %v5060
        %v5067 = vmul.f32 %v4804, %v5060
        %v5068 = vmul.f32 %v4805, %v5060
        %v5069 = vmul.f32 %v4806, %v5060
        %v5070 = vmul.f32 %v4807, %v5060
        %v5071 = vmul.f32 %v4808, %v5060
        %v5072 = vmul.f32 %v4809, %v5060
        %v5073 = vmul.f32 %v4810, %v5060
        %v5074 = vmul.f32 %v4811, %v5060
        %v5075 = vmul.f32 %v4812, %v5060
        %v5076 = vmul.f32 %v4813, %v5060
        %v5077 = vmul.f32 %v4814, %v5060
        %v5078 = vmul.f32 %v4815, %v5060
        %v5079 = vmul.f32 %v4816, %v5060
        %v5080 = vmul.f32 %v4817, %v5060
        %v5081 = vmul.f32 %v4818, %v5060
        %v5082 = vmul.f32 %v4819, %v5060
        %v5083 = vmul.f32 %v4820, %v5060
        %v5084 = vmul.f32 %v4821, %v5060
        %v5085 = vmul.f32 %v4822, %v5060
        %v5086 = vmul.f32 %v4823, %v5060
        %v5087 = vmul.f32 %v4824, %v5060
        %v5088 = vmul.f32 %v4825, %v5060
        %v5089 = vmul.f32 %v4826, %v5060
        %v5090 = vmul.f32 %v4827, %v5060
        %v5091 = vmul.f32 %v4828, %v5060
        %v5092 = vmul.f32 %v4829, %v5060
        %v5093 = vmul.f32 %v4830, %v5060
        %v5094 = vmul.f32 %v4831, %v5060
        %v5095 = vmul.f32 %v4832, %v5060
        %v5096 = vmul.f32 %v4833, %v5060
        %v5097 = vmul.f32 %v4834, %v5060
        %v5098 = vmul.f32 %v4835, %v5060
        %v5099 = vmul.f32 %v4836, %v5060
        %v5100 = vmul.f32 %v4837, %v5060
        %v5101 = vmul.f32 %v4838, %v5060
        %v5102 = vmul.f32 %v4839, %v5060
        %v5103 = vmul.f32 %v4840, %v5060
        %v5104 = vmul.f32 %v4841, %v5060
        %v5105 = vmul.f32 %v4842, %v5060
        %v5106 = vmul.f32 %v4843, %v5060
        %v5107 = vmul.f32 %v4844, %v5060
        %v5108 = vmul.f32 %v4845, %v5060
        %v5109 = vmul.f32 %v4846, %v5060
        %v5110 = vmul.f32 %v4847, %v5060
        %v5111 = vmul.f32 %v4848, %v5060
        %v5112 = vmul.f32 %v4849, %v5060
        %v5113 = vmul.f32 %v4850, %v5060
        %v5114 = vmul.f32 %v4851, %v5060
        %v5115 = vmul.f32 %v4852, %v5060
        %v5116 = vmul.f32 %v4853, %v5060
        %v5117 = vmul.f32 %v4854, %v5060
        %v5118 = vmul.f32 %v4855, %v5060
        %v5119 = vmul.f32 %v4856, %v5060
        %v5120 = vmul.f32 %v4857, %v5060
        %v5121 = vmul.f32 %v4858, %v5060
        %v5122 = vmul.f32 %v4859, %v5060
        %v5123 = vmul.f32 %v4860, %v5060
        %v5124 = vmul.f32 %v4861, %v5060
        %v5125 = vmul.f32 %v4862, %v5060
        %v5126 = vmul.f32 %v4863, %v5060
        %v5127 = vmul.f32 %v4864, %v5060
        %v5128 = vmul.f32 %v4865, %v5060
        %v5129 = vmul.f32 %v4866, %v5060
        %v5130 = vmul.f32 %v4867, %v5060
        %v5131 = vmul.f32 %v4868, %v5060
        %v5132 = vmul.f32 %v4869, %v5060
        %v5133 = vmul.f32 %v4870, %v5060
        %v5134 = vmul.f32 %v4871, %v5060
        %v5135 = vmul.f32 %v4872, %v5060
        %v5136 = vmul.f32 %v4873, %v5060
        %v5137 = vmul.f32 %v4874, %v5060
        %v5138 = vmul.f32 %v4875, %v5060
        %v5139 = vmul.f32 %v4876, %v5060
        %v5140 = vmul.f32 %v4877, %v5060
        %v5141 = vmul.f32 %v4878, %v5060
        %v5142 = vmul.f32 %v4879, %v5060
        %v5143 = vmul.f32 %v4880, %v5060
        %v5144 = vmul.f32 %v4881, %v5060
        %v5145 = vmul.f32 %v4882, %v5060
        %v5146 = vmul.f32 %v4883, %v5060
        %v5147 = vmul.f32 %v4884, %v5060
        %v5148 = vmul.f32 %v4885, %v5060
        %v5149 = vmul.f32 %v4886, %v5060
        %v5150 = vmul.f32 %v4887, %v5060
        %v5151 = vmul.f32 %v4888, %v5060
        %v5152 = vmul.f32 %v4889, %v5060
        %v5153 = vmul.f32 %v4890, %v5060
        %v5154 = vmul.f32 %v4891, %v5060
        %v5155 = vmul.f32 %v4892, %v5060
        %v5156 = vmul.f32 %v4893, %v5060
        %v5157 = vmul.f32 %v4894, %v5060
        %v5158 = vmul.f32 %v4895, %v5060
        %v5159 = vmul.f32 %v4896, %v5060
        %v5160 = vmul.f32 %v4897, %v5060
        %v5161 = vmul.f32 %v4898, %v5060
        %v5162 = vmul.f32 %v4899, %v5060
        %v5163 = vmul.f32 %v4900, %v5060
        %v5164 = vmul.f32 %v4901, %v5060
        %v5165 = vmul.f32 %v4902, %v5060
        %v5166 = vmul.f32 %v4903, %v5060
        %v5167 = vmul.f32 %v4904, %v5060
        %v5168 = vmul.f32 %v4905, %v5060
        %v5169 = vmul.f32 %v4906, %v5060
        %v5170 = vmul.f32 %v4907, %v5060
        %v5171 = vmul.f32 %v4908, %v5060
        %v5172 = vmul.f32 %v4909, %v5060
        %v5173 = vmul.f32 %v4910, %v5060
        %v5174 = vmul.f32 %v4911, %v5060
        %v5175 = vmul.f32 %v4912, %v5060
        %v5176 = vmul.f32 %v4913, %v5060
        %v5177 = vmul.f32 %v4914, %v5060
        %v5178 = vmul.f32 %v4915, %v5060
        %v5179 = vmul.f32 %v4916, %v5060
        %v5180 = vmul.f32 %v4917, %v5060
        %v5181 = vmul.f32 %v4918, %v5060
        %v5182 = vmul.f32 %v4919, %v5060
        %v5183 = vmul.f32 %v4920, %v5060
        %v5184 = vmul.f32 %v4921, %v5060
        %v5185 = vmul.f32 %v4922, %v5060
        %v5186 = vmul.f32 %v4923, %v5060
        %v5187 = vmul.f32 %v4924, %v5060
        %v5188 = vmul.f32 %v4925, %v5060
        %v5189 = vmul.f32 %v4926, %v5060
        %v5190 = vmul.f32 %v4927, %v5060
        %v5191 = vmul.f32 %v4928, %v5060
        %v5192 = vmul.f32 %v4929, %v5060
        %v5193 = vmul.f32 %v4930, %v5060
        %v5194 = vmul.f32 %v4931, %v5060
        %v5195 = vmul.f32 %v4932, %v5060
        %v5196 = vmul.f32 %v4933, %v5060
        %v5197 = vmul.f32 %v4934, %v5060
        %v5198 = vmul.f32 %v4935, %v5060
        %v5199 = vmul.f32 %v4936, %v5060
        %v5200 = vmul.f32 %v4937, %v5060
        %v5201 = vmul.f32 %v4938, %v5060
        %v5202 = vmul.f32 %v4939, %v5060
        %v5203 = vmul.f32 %v4940, %v5060
        %v5204 = vmul.f32 %v4941, %v5060
        %v5205 = vmul.f32 %v4942, %v5060
        %v5206 = vmul.f32 %v4943, %v5060
        %v5207 = vmul.f32 %v4944, %v5060
        %v5208 = vmul.f32 %v4945, %v5060
        %v5209 = vmul.f32 %v4946, %v5060
        %v5210 = vmul.f32 %v4947, %v5060
        %v5211 = vmul.f32 %v4948, %v5060
        %v5212 = vmul.f32 %v4949, %v5060
        %v5213 = vmul.f32 %v4950, %v5060
        %v5214 = vmul.f32 %v4951, %v5060
        %v5215 = vmul.f32 %v4952, %v5060
        %v5216 = vmul.f32 %v4953, %v5060
        %v5217 = vmul.f32 %v4954, %v5060
        %v5218 = vmul.f32 %v4955, %v5060
        %v5219 = vmul.f32 %v4956, %v5060
        %v5220 = vmul.f32 %v4957, %v5060
        %v5221 = vmul.f32 %v4958, %v5060
        %v5222 = vmul.f32 %v4959, %v5060
        %v5223 = vmul.f32 %v4960, %v5060
        %v5224 = vmul.f32 %v4961, %v5060
        %v5225 = vmul.f32 %v4962, %v5060
        %v5226 = vmul.f32 %v4963, %v5060
        %v5227 = vmul.f32 %v4964, %v5060
        %v5228 = vmul.f32 %v4965, %v5060
        %v5229 = vmul.f32 %v4966, %v5060
        %v5230 = vmul.f32 %v4967, %v5060
        %v5231 = vmul.f32 %v4968, %v5060
        %v5232 = vmul.f32 %v4969, %v5060
        %v5233 = vmul.f32 %v4970, %v5060
        %v5234 = vmul.f32 %v4971, %v5060
        %v5235 = vmul.f32 %v4972, %v5060
        %v5236 = vmul.f32 %v4973, %v5060
        %v5237 = vmul.f32 %v4974, %v5060
        %v5238 = vmul.f32 %v4975, %v5060
        %v5239 = vmul.f32 %v4976, %v5060
        %v5240 = vmul.f32 %v4977, %v5060
        %v5241 = vmul.f32 %v4978, %v5060
        %v5242 = vmul.f32 %v4979, %v5060
        %v5243 = vmul.f32 %v4980, %v5060
        %v5244 = vmul.f32 %v4981, %v5060
        %v5245 = vmul.f32 %v4982, %v5060
        %v5246 = vmul.f32 %v4983, %v5060
        %v5247 = vmul.f32 %v4984, %v5060
        %v5248 = vmul.f32 %v4985, %v5060
        %v5249 = vmul.f32 %v4986, %v5060
        %v5250 = vmul.f32 %v4987, %v5060
        %v5251 = vmul.f32 %v4988, %v5060
        %v5252 = vmul.f32 %v4989, %v5060
        %v5253 = vmul.f32 %v4990, %v5060
        %v5254 = vmul.f32 %v4991, %v5060
        %v5255 = vmul.f32 %v4992, %v5060
        %v5256 = vmul.f32 %v4993, %v5060
        %v5257 = vmul.f32 %v4994, %v5060
        %v5258 = vmul.f32 %v4995, %v5060
        %v5259 = vmul.f32 %v4996, %v5060
        %v5260 = vmul.f32 %v4997, %v5060
        %v5261 = vmul.f32 %v4998, %v5060
        %v5262 = vmul.f32 %v4999, %v5060
        %v5263 = vmul.f32 %v5000, %v5060
        %v5264 = vmul.f32 %v5001, %v5060
        %v5265 = vmul.f32 %v5002, %v5060
        %v5266 = vmul.f32 %v5003, %v5060
        %v5267 = vmul.f32 %v5004, %v5060
        %v5268 = vmul.f32 %v5005, %v5060
        %v5269 = vmul.f32 %v5006, %v5060
        %v5270 = vmul.f32 %v5007, %v5060
        %v5271 = vmul.f32 %v5008, %v5060
        %v5272 = vmul.f32 %v5009, %v5060
        %v5273 = vmul.f32 %v5010, %v5060
        %v5274 = vmul.f32 %v5011, %v5060
        %v5275 = vmul.f32 %v5012, %v5060
        %v5276 = vmul.f32 %v5013, %v5060
        %v5277 = vmul.f32 %v5014, %v5060
        %v5278 = vmul.f32 %v5015, %v5060
        %v5279 = vmul.f32 %v5016, %v5060
        %v5280 = vmul.f32 %v5017, %v5060
        %v5281 = vmul.f32 %v5018, %v5060
        %v5282 = vmul.f32 %v5019, %v5060
        %v5283 = vmul.f32 %v5020, %v5060
        %v5284 = vmul.f32 %v5021, %v5060
        %v5285 = vmul.f32 %v5022, %v5060
        %v5286 = vmul.f32 %v5023, %v5060
        %v5287 = vmul.f32 %v5024, %v5060
        %v5288 = vmul.f32 %v5025, %v5060
        %v5289 = vmul.f32 %v5026, %v5060
        %v5290 = vmul.f32 %v5027, %v5060
        %v5291 = vmul.f32 %v5028, %v5060
        %v5292 = vmul.f32 %v5029, %v5060
        %v5293 = vmul.f32 %v5030, %v5060
        %v5294 = vmul.f32 %v5031, %v5060
        %v5295 = vmul.f32 %v5032, %v5060
        %v5296 = vmul.f32 %v5033, %v5060
        %v5297 = vmul.f32 %v5034, %v5060
        %v5298 = vmul.f32 %v5035, %v5060
        %v5299 = vmul.f32 %v5036, %v5060
        %v5300 = vmul.f32 %v5037, %v5060
        %v5301 = vmul.f32 %v5038, %v5060
        %v5302 = vmul.f32 %v5039, %v5060
        %v5303 = vmul.f32 %v5040, %v5060
        %v5304 = vmul.f32 %v5041, %v5060
        %v5305 = vmul.f32 %v5042, %v5060
        %v5306 = vmul.f32 %v5043, %v5060
        %v5307 = vmul.f32 %v5044, %v5060
        %v5308 = vmul.f32 %v5045, %v5060
        %v5309 = vmul.f32 %v5046, %v5060
        %v5310 = vmul.f32 %v5047, %v5060
        %v5311 = vmul.f32 %v5048, %v5060
        %v5312 = vmul.f32 %v5049, %v5060
        %v5313 = vmul.f32 %v5050, %v5060
        %v5314 = vmul.f32 %v5051, %v5060
        %v5315 = vmul.f32 %v5052, %v5060
        %v5316 = vmul.f32 %v5053, %v5060
        %v5317 = vmul.f32 %v5054, %v5060
        %vm5318 = vcmask 523264
        %v5319 = vsel %vm5318, %v5062, 0.0
        %5320 = vadd.xlane.f32.xlu0 %v5319
        %v5321 = vpop.xlane.xlu0 %5320
        %v5322 = vsel %vm5318, %v5063, 0.0
        %5323 = vadd.xlane.f32.xlu0 %v5322
        %v5324 = vpop.xlane.xlu0 %5323
        %v5325 = vsel %vm5318, %v5064, 0.0
        %5326 = vadd.xlane.f32.xlu0 %v5325
        %v5327 = vpop.xlane.xlu0 %5326
        %v5328 = vsel %vm5318, %v5065, 0.0
        %5329 = vadd.xlane.f32.xlu0 %v5328
        %v5330 = vpop.xlane.xlu0 %5329
        %v5331 = vsel %vm5318, %v5066, 0.0
        %5332 = vadd.xlane.f32.xlu0 %v5331
        %v5333 = vpop.xlane.xlu0 %5332
        %v5334 = vsel %vm5318, %v5067, 0.0
        %5335 = vadd.xlane.f32.xlu0 %v5334
        %v5336 = vpop.xlane.xlu0 %5335
        %v5337 = vsel %vm5318, %v5068, 0.0
        %5338 = vadd.xlane.f32.xlu0 %v5337
        %v5339 = vpop.xlane.xlu0 %5338
        %v5340 = vsel %vm5318, %v5069, 0.0
        %5341 = vadd.xlane.f32.xlu0 %v5340
        %v5342 = vpop.xlane.xlu0 %5341
        %v5343 = vsel %vm5318, %v5070, 0.0
        %5344 = vadd.xlane.f32.xlu0 %v5343
        %v5345 = vpop.xlane.xlu0 %5344
        %v5346 = vsel %vm5318, %v5071, 0.0
        %5347 = vadd.xlane.f32.xlu0 %v5346
        %v5348 = vpop.xlane.xlu0 %5347
        %v5349 = vsel %vm5318, %v5072, 0.0
        %5350 = vadd.xlane.f32.xlu0 %v5349
        %v5351 = vpop.xlane.xlu0 %5350
        %v5352 = vsel %vm5318, %v5073, 0.0
        %5353 = vadd.xlane.f32.xlu0 %v5352
        %v5354 = vpop.xlane.xlu0 %5353
        %v5355 = vsel %vm5318, %v5074, 0.0
        %5356 = vadd.xlane.f32.xlu0 %v5355
        %v5357 = vpop.xlane.xlu0 %5356
        %v5358 = vsel %vm5318, %v5075, 0.0
        %5359 = vadd.xlane.f32.xlu0 %v5358
        %v5360 = vpop.xlane.xlu0 %5359
        %v5361 = vsel %vm5318, %v5076, 0.0
        %5362 = vadd.xlane.f32.xlu0 %v5361
        %v5363 = vpop.xlane.xlu0 %5362
        %v5364 = vsel %vm5318, %v5077, 0.0
        %5365 = vadd.xlane.f32.xlu0 %v5364
        %v5366 = vpop.xlane.xlu0 %5365
        %v5367 = vsel %vm5318, %v5078, 0.0
        %5368 = vadd.xlane.f32.xlu0 %v5367
        %v5369 = vpop.xlane.xlu0 %5368
        %v5370 = vsel %vm5318, %v5079, 0.0
        %5371 = vadd.xlane.f32.xlu0 %v5370
        %v5372 = vpop.xlane.xlu0 %5371
        %v5373 = vsel %vm5318, %v5080, 0.0
        %5374 = vadd.xlane.f32.xlu0 %v5373
        %v5375 = vpop.xlane.xlu0 %5374
        %v5376 = vsel %vm5318, %v5081, 0.0
        %5377 = vadd.xlane.f32.xlu0 %v5376
        %v5378 = vpop.xlane.xlu0 %5377
        %v5379 = vsel %vm5318, %v5082, 0.0
        %5380 = vadd.xlane.f32.xlu0 %v5379
        %v5381 = vpop.xlane.xlu0 %5380
        %v5382 = vsel %vm5318, %v5083, 0.0
        %5383 = vadd.xlane.f32.xlu0 %v5382
        %v5384 = vpop.xlane.xlu0 %5383
        %v5385 = vsel %vm5318, %v5084, 0.0
        %5386 = vadd.xlane.f32.xlu0 %v5385
        %v5387 = vpop.xlane.xlu0 %5386
        %v5388 = vsel %vm5318, %v5085, 0.0
        %5389 = vadd.xlane.f32.xlu0 %v5388
        %v5390 = vpop.xlane.xlu0 %5389
        %v5391 = vsel %vm5318, %v5086, 0.0
        %5392 = vadd.xlane.f32.xlu0 %v5391
        %v5393 = vpop.xlane.xlu0 %5392
        %v5394 = vsel %vm5318, %v5087, 0.0
        %5395 = vadd.xlane.f32.xlu0 %v5394
        %v5396 = vpop.xlane.xlu0 %5395
        %v5397 = vsel %vm5318, %v5088, 0.0
        %5398 = vadd.xlane.f32.xlu0 %v5397
        %v5399 = vpop.xlane.xlu0 %5398
        %v5400 = vsel %vm5318, %v5089, 0.0
        %5401 = vadd.xlane.f32.xlu0 %v5400
        %v5402 = vpop.xlane.xlu0 %5401
        %v5403 = vsel %vm5318, %v5090, 0.0
        %5404 = vadd.xlane.f32.xlu0 %v5403
        %v5405 = vpop.xlane.xlu0 %5404
        %v5406 = vsel %vm5318, %v5091, 0.0
        %5407 = vadd.xlane.f32.xlu0 %v5406
        %v5408 = vpop.xlane.xlu0 %5407
        %v5409 = vsel %vm5318, %v5092, 0.0
        %5410 = vadd.xlane.f32.xlu0 %v5409
        %v5411 = vpop.xlane.xlu0 %5410
        %v5412 = vsel %vm5318, %v5093, 0.0
        %5413 = vadd.xlane.f32.xlu0 %v5412
        %v5414 = vpop.xlane.xlu0 %5413
        %v5415 = vsel %vm5318, %v5094, 0.0
        %5416 = vadd.xlane.f32.xlu0 %v5415
        %v5417 = vpop.xlane.xlu0 %5416
        %v5418 = vsel %vm5318, %v5095, 0.0
        %5419 = vadd.xlane.f32.xlu0 %v5418
        %v5420 = vpop.xlane.xlu0 %5419
        %v5421 = vsel %vm5318, %v5096, 0.0
        %5422 = vadd.xlane.f32.xlu0 %v5421
        %v5423 = vpop.xlane.xlu0 %5422
        %v5424 = vsel %vm5318, %v5097, 0.0
        %5425 = vadd.xlane.f32.xlu0 %v5424
        %v5426 = vpop.xlane.xlu0 %5425
        %v5427 = vsel %vm5318, %v5098, 0.0
        %5428 = vadd.xlane.f32.xlu0 %v5427
        %v5429 = vpop.xlane.xlu0 %5428
        %v5430 = vsel %vm5318, %v5099, 0.0
        %5431 = vadd.xlane.f32.xlu0 %v5430
        %v5432 = vpop.xlane.xlu0 %5431
        %v5433 = vsel %vm5318, %v5100, 0.0
        %5434 = vadd.xlane.f32.xlu0 %v5433
        %v5435 = vpop.xlane.xlu0 %5434
        %v5436 = vsel %vm5318, %v5101, 0.0
        %5437 = vadd.xlane.f32.xlu0 %v5436
        %v5438 = vpop.xlane.xlu0 %5437
        %v5439 = vsel %vm5318, %v5102, 0.0
        %5440 = vadd.xlane.f32.xlu0 %v5439
        %v5441 = vpop.xlane.xlu0 %5440
        %v5442 = vsel %vm5318, %v5103, 0.0
        %5443 = vadd.xlane.f32.xlu0 %v5442
        %v5444 = vpop.xlane.xlu0 %5443
        %v5445 = vsel %vm5318, %v5104, 0.0
        %5446 = vadd.xlane.f32.xlu0 %v5445
        %v5447 = vpop.xlane.xlu0 %5446
        %v5448 = vsel %vm5318, %v5105, 0.0
        %5449 = vadd.xlane.f32.xlu0 %v5448
        %v5450 = vpop.xlane.xlu0 %5449
        %v5451 = vsel %vm5318, %v5106, 0.0
        %5452 = vadd.xlane.f32.xlu0 %v5451
        %v5453 = vpop.xlane.xlu0 %5452
        %v5454 = vsel %vm5318, %v5107, 0.0
        %5455 = vadd.xlane.f32.xlu0 %v5454
        %v5456 = vpop.xlane.xlu0 %5455
        %v5457 = vsel %vm5318, %v5108, 0.0
        %5458 = vadd.xlane.f32.xlu0 %v5457
        %v5459 = vpop.xlane.xlu0 %5458
        %v5460 = vsel %vm5318, %v5109, 0.0
        %5461 = vadd.xlane.f32.xlu0 %v5460
        %v5462 = vpop.xlane.xlu0 %5461
        %v5463 = vsel %vm5318, %v5110, 0.0
        %5464 = vadd.xlane.f32.xlu0 %v5463
        %v5465 = vpop.xlane.xlu0 %5464
        %v5466 = vsel %vm5318, %v5111, 0.0
        %5467 = vadd.xlane.f32.xlu0 %v5466
        %v5468 = vpop.xlane.xlu0 %5467
        %v5469 = vsel %vm5318, %v5112, 0.0
        %5470 = vadd.xlane.f32.xlu0 %v5469
        %v5471 = vpop.xlane.xlu0 %5470
        %v5472 = vsel %vm5318, %v5113, 0.0
        %5473 = vadd.xlane.f32.xlu0 %v5472
        %v5474 = vpop.xlane.xlu0 %5473
        %v5475 = vsel %vm5318, %v5114, 0.0
        %5476 = vadd.xlane.f32.xlu0 %v5475
        %v5477 = vpop.xlane.xlu0 %5476
        %v5478 = vsel %vm5318, %v5115, 0.0
        %5479 = vadd.xlane.f32.xlu0 %v5478
        %v5480 = vpop.xlane.xlu0 %5479
        %v5481 = vsel %vm5318, %v5116, 0.0
        %5482 = vadd.xlane.f32.xlu0 %v5481
        %v5483 = vpop.xlane.xlu0 %5482
        %v5484 = vsel %vm5318, %v5117, 0.0
        %5485 = vadd.xlane.f32.xlu0 %v5484
        %v5486 = vpop.xlane.xlu0 %5485
        %v5487 = vsel %vm5318, %v5118, 0.0
        %5488 = vadd.xlane.f32.xlu0 %v5487
        %v5489 = vpop.xlane.xlu0 %5488
        %v5490 = vsel %vm5318, %v5119, 0.0
        %5491 = vadd.xlane.f32.xlu0 %v5490
        %v5492 = vpop.xlane.xlu0 %5491
        %v5493 = vsel %vm5318, %v5120, 0.0
        %5494 = vadd.xlane.f32.xlu0 %v5493
        %v5495 = vpop.xlane.xlu0 %5494
        %v5496 = vsel %vm5318, %v5121, 0.0
        %5497 = vadd.xlane.f32.xlu0 %v5496
        %v5498 = vpop.xlane.xlu0 %5497
        %v5499 = vsel %vm5318, %v5122, 0.0
        %5500 = vadd.xlane.f32.xlu0 %v5499
        %v5501 = vpop.xlane.xlu0 %5500
        %v5502 = vsel %vm5318, %v5123, 0.0
        %5503 = vadd.xlane.f32.xlu0 %v5502
        %v5504 = vpop.xlane.xlu0 %5503
        %v5505 = vsel %vm5318, %v5124, 0.0
        %5506 = vadd.xlane.f32.xlu0 %v5505
        %v5507 = vpop.xlane.xlu0 %5506
        %v5508 = vsel %vm5318, %v5125, 0.0
        %5509 = vadd.xlane.f32.xlu0 %v5508
        %v5510 = vpop.xlane.xlu0 %5509
        %v5511 = vsel %vm5318, %v5126, 0.0
        %5512 = vadd.xlane.f32.xlu0 %v5511
        %v5513 = vpop.xlane.xlu0 %5512
        %v5514 = vsel %vm5318, %v5127, 0.0
        %5515 = vadd.xlane.f32.xlu0 %v5514
        %v5516 = vpop.xlane.xlu0 %5515
        %v5517 = vsel %vm5318, %v5128, 0.0
        %5518 = vadd.xlane.f32.xlu0 %v5517
        %v5519 = vpop.xlane.xlu0 %5518
        %v5520 = vsel %vm5318, %v5129, 0.0
        %5521 = vadd.xlane.f32.xlu0 %v5520
        %v5522 = vpop.xlane.xlu0 %5521
        %v5523 = vsel %vm5318, %v5130, 0.0
        %5524 = vadd.xlane.f32.xlu0 %v5523
        %v5525 = vpop.xlane.xlu0 %5524
        %v5526 = vsel %vm5318, %v5131, 0.0
        %5527 = vadd.xlane.f32.xlu0 %v5526
        %v5528 = vpop.xlane.xlu0 %5527
        %v5529 = vsel %vm5318, %v5132, 0.0
        %5530 = vadd.xlane.f32.xlu0 %v5529
        %v5531 = vpop.xlane.xlu0 %5530
        %v5532 = vsel %vm5318, %v5133, 0.0
        %5533 = vadd.xlane.f32.xlu0 %v5532
        %v5534 = vpop.xlane.xlu0 %5533
        %v5535 = vsel %vm5318, %v5134, 0.0
        %5536 = vadd.xlane.f32.xlu0 %v5535
        %v5537 = vpop.xlane.xlu0 %5536
        %v5538 = vsel %vm5318, %v5135, 0.0
        %5539 = vadd.xlane.f32.xlu0 %v5538
        %v5540 = vpop.xlane.xlu0 %5539
        %v5541 = vsel %vm5318, %v5136, 0.0
        %5542 = vadd.xlane.f32.xlu0 %v5541
        %v5543 = vpop.xlane.xlu0 %5542
        %v5544 = vsel %vm5318, %v5137, 0.0
        %5545 = vadd.xlane.f32.xlu0 %v5544
        %v5546 = vpop.xlane.xlu0 %5545
        %v5547 = vsel %vm5318, %v5138, 0.0
        %5548 = vadd.xlane.f32.xlu0 %v5547
        %v5549 = vpop.xlane.xlu0 %5548
        %v5550 = vsel %vm5318, %v5139, 0.0
        %5551 = vadd.xlane.f32.xlu0 %v5550
        %v5552 = vpop.xlane.xlu0 %5551
        %v5553 = vsel %vm5318, %v5140, 0.0
        %5554 = vadd.xlane.f32.xlu0 %v5553
        %v5555 = vpop.xlane.xlu0 %5554
        %v5556 = vsel %vm5318, %v5141, 0.0
        %5557 = vadd.xlane.f32.xlu0 %v5556
        %v5558 = vpop.xlane.xlu0 %5557
        %v5559 = vsel %vm5318, %v5142, 0.0
        %5560 = vadd.xlane.f32.xlu0 %v5559
        %v5561 = vpop.xlane.xlu0 %5560
        %v5562 = vsel %vm5318, %v5143, 0.0
        %5563 = vadd.xlane.f32.xlu0 %v5562
        %v5564 = vpop.xlane.xlu0 %5563
        %v5565 = vsel %vm5318, %v5144, 0.0
        %5566 = vadd.xlane.f32.xlu0 %v5565
        %v5567 = vpop.xlane.xlu0 %5566
        %v5568 = vsel %vm5318, %v5145, 0.0
        %5569 = vadd.xlane.f32.xlu0 %v5568
        %v5570 = vpop.xlane.xlu0 %5569
        %v5571 = vsel %vm5318, %v5146, 0.0
        %5572 = vadd.xlane.f32.xlu0 %v5571
        %v5573 = vpop.xlane.xlu0 %5572
        %v5574 = vsel %vm5318, %v5147, 0.0
        %5575 = vadd.xlane.f32.xlu0 %v5574
        %v5576 = vpop.xlane.xlu0 %5575
        %v5577 = vsel %vm5318, %v5148, 0.0
        %5578 = vadd.xlane.f32.xlu0 %v5577
        %v5579 = vpop.xlane.xlu0 %5578
        %v5580 = vsel %vm5318, %v5149, 0.0
        %5581 = vadd.xlane.f32.xlu0 %v5580
        %v5582 = vpop.xlane.xlu0 %5581
        %v5583 = vsel %vm5318, %v5150, 0.0
        %5584 = vadd.xlane.f32.xlu0 %v5583
        %v5585 = vpop.xlane.xlu0 %5584
        %v5586 = vsel %vm5318, %v5151, 0.0
        %5587 = vadd.xlane.f32.xlu0 %v5586
        %v5588 = vpop.xlane.xlu0 %5587
        %v5589 = vsel %vm5318, %v5152, 0.0
        %5590 = vadd.xlane.f32.xlu0 %v5589
        %v5591 = vpop.xlane.xlu0 %5590
        %v5592 = vsel %vm5318, %v5153, 0.0
        %5593 = vadd.xlane.f32.xlu0 %v5592
        %v5594 = vpop.xlane.xlu0 %5593
        %v5595 = vsel %vm5318, %v5154, 0.0
        %5596 = vadd.xlane.f32.xlu0 %v5595
        %v5597 = vpop.xlane.xlu0 %5596
        %v5598 = vsel %vm5318, %v5155, 0.0
        %5599 = vadd.xlane.f32.xlu0 %v5598
        %v5600 = vpop.xlane.xlu0 %5599
        %v5601 = vsel %vm5318, %v5156, 0.0
        %5602 = vadd.xlane.f32.xlu0 %v5601
        %v5603 = vpop.xlane.xlu0 %5602
        %v5604 = vsel %vm5318, %v5157, 0.0
        %5605 = vadd.xlane.f32.xlu0 %v5604
        %v5606 = vpop.xlane.xlu0 %5605
        %v5607 = vsel %vm5318, %v5158, 0.0
        %5608 = vadd.xlane.f32.xlu0 %v5607
        %v5609 = vpop.xlane.xlu0 %5608
        %v5610 = vsel %vm5318, %v5159, 0.0
        %5611 = vadd.xlane.f32.xlu0 %v5610
        %v5612 = vpop.xlane.xlu0 %5611
        %v5613 = vsel %vm5318, %v5160, 0.0
        %5614 = vadd.xlane.f32.xlu0 %v5613
        %v5615 = vpop.xlane.xlu0 %5614
        %v5616 = vsel %vm5318, %v5161, 0.0
        %5617 = vadd.xlane.f32.xlu0 %v5616
        %v5618 = vpop.xlane.xlu0 %5617
        %v5619 = vsel %vm5318, %v5162, 0.0
        %5620 = vadd.xlane.f32.xlu0 %v5619
        %v5621 = vpop.xlane.xlu0 %5620
        %v5622 = vsel %vm5318, %v5163, 0.0
        %5623 = vadd.xlane.f32.xlu0 %v5622
        %v5624 = vpop.xlane.xlu0 %5623
        %v5625 = vsel %vm5318, %v5164, 0.0
        %5626 = vadd.xlane.f32.xlu0 %v5625
        %v5627 = vpop.xlane.xlu0 %5626
        %v5628 = vsel %vm5318, %v5165, 0.0
        %5629 = vadd.xlane.f32.xlu0 %v5628
        %v5630 = vpop.xlane.xlu0 %5629
        %v5631 = vsel %vm5318, %v5166, 0.0
        %5632 = vadd.xlane.f32.xlu0 %v5631
        %v5633 = vpop.xlane.xlu0 %5632
        %v5634 = vsel %vm5318, %v5167, 0.0
        %5635 = vadd.xlane.f32.xlu0 %v5634
        %v5636 = vpop.xlane.xlu0 %5635
        %v5637 = vsel %vm5318, %v5168, 0.0
        %5638 = vadd.xlane.f32.xlu0 %v5637
        %v5639 = vpop.xlane.xlu0 %5638
        %v5640 = vsel %vm5318, %v5169, 0.0
        %5641 = vadd.xlane.f32.xlu0 %v5640
        %v5642 = vpop.xlane.xlu0 %5641
        %v5643 = vsel %vm5318, %v5170, 0.0
        %5644 = vadd.xlane.f32.xlu0 %v5643
        %v5645 = vpop.xlane.xlu0 %5644
        %v5646 = vsel %vm5318, %v5171, 0.0
        %5647 = vadd.xlane.f32.xlu0 %v5646
        %v5648 = vpop.xlane.xlu0 %5647
        %v5649 = vsel %vm5318, %v5172, 0.0
        %5650 = vadd.xlane.f32.xlu0 %v5649
        %v5651 = vpop.xlane.xlu0 %5650
        %v5652 = vsel %vm5318, %v5173, 0.0
        %5653 = vadd.xlane.f32.xlu0 %v5652
        %v5654 = vpop.xlane.xlu0 %5653
        %v5655 = vsel %vm5318, %v5174, 0.0
        %5656 = vadd.xlane.f32.xlu0 %v5655
        %v5657 = vpop.xlane.xlu0 %5656
        %v5658 = vsel %vm5318, %v5175, 0.0
        %5659 = vadd.xlane.f32.xlu0 %v5658
        %v5660 = vpop.xlane.xlu0 %5659
        %v5661 = vsel %vm5318, %v5176, 0.0
        %5662 = vadd.xlane.f32.xlu0 %v5661
        %v5663 = vpop.xlane.xlu0 %5662
        %v5664 = vsel %vm5318, %v5177, 0.0
        %5665 = vadd.xlane.f32.xlu0 %v5664
        %v5666 = vpop.xlane.xlu0 %5665
        %v5667 = vsel %vm5318, %v5178, 0.0
        %5668 = vadd.xlane.f32.xlu0 %v5667
        %v5669 = vpop.xlane.xlu0 %5668
        %v5670 = vsel %vm5318, %v5179, 0.0
        %5671 = vadd.xlane.f32.xlu0 %v5670
        %v5672 = vpop.xlane.xlu0 %5671
        %v5673 = vsel %vm5318, %v5180, 0.0
        %5674 = vadd.xlane.f32.xlu0 %v5673
        %v5675 = vpop.xlane.xlu0 %5674
        %v5676 = vsel %vm5318, %v5181, 0.0
        %5677 = vadd.xlane.f32.xlu0 %v5676
        %v5678 = vpop.xlane.xlu0 %5677
        %v5679 = vsel %vm5318, %v5182, 0.0
        %5680 = vadd.xlane.f32.xlu0 %v5679
        %v5681 = vpop.xlane.xlu0 %5680
        %v5682 = vsel %vm5318, %v5183, 0.0
        %5683 = vadd.xlane.f32.xlu0 %v5682
        %v5684 = vpop.xlane.xlu0 %5683
        %v5685 = vsel %vm5318, %v5184, 0.0
        %5686 = vadd.xlane.f32.xlu0 %v5685
        %v5687 = vpop.xlane.xlu0 %5686
        %v5688 = vsel %vm5318, %v5185, 0.0
        %5689 = vadd.xlane.f32.xlu0 %v5688
        %v5690 = vpop.xlane.xlu0 %5689
        %v5691 = vsel %vm5318, %v5186, 0.0
        %5692 = vadd.xlane.f32.xlu0 %v5691
        %v5693 = vpop.xlane.xlu0 %5692
        %v5694 = vsel %vm5318, %v5187, 0.0
        %5695 = vadd.xlane.f32.xlu0 %v5694
        %v5696 = vpop.xlane.xlu0 %5695
        %v5697 = vsel %vm5318, %v5188, 0.0
        %5698 = vadd.xlane.f32.xlu0 %v5697
        %v5699 = vpop.xlane.xlu0 %5698
        %v5700 = vsel %vm5318, %v5189, 0.0
        %5701 = vadd.xlane.f32.xlu0 %v5700
        %v5702 = vpop.xlane.xlu0 %5701
        %v5703 = vsel %vm5318, %v5190, 0.0
        %5704 = vadd.xlane.f32.xlu0 %v5703
        %v5705 = vpop.xlane.xlu0 %5704
        %v5706 = vsel %vm5318, %v5191, 0.0
        %5707 = vadd.xlane.f32.xlu0 %v5706
        %v5708 = vpop.xlane.xlu0 %5707
        %v5709 = vsel %vm5318, %v5192, 0.0
        %5710 = vadd.xlane.f32.xlu0 %v5709
        %v5711 = vpop.xlane.xlu0 %5710
        %v5712 = vsel %vm5318, %v5193, 0.0
        %5713 = vadd.xlane.f32.xlu0 %v5712
        %v5714 = vpop.xlane.xlu0 %5713
        %v5715 = vsel %vm5318, %v5194, 0.0
        %5716 = vadd.xlane.f32.xlu0 %v5715
        %v5717 = vpop.xlane.xlu0 %5716
        %v5718 = vsel %vm5318, %v5195, 0.0
        %5719 = vadd.xlane.f32.xlu0 %v5718
        %v5720 = vpop.xlane.xlu0 %5719
        %v5721 = vsel %vm5318, %v5196, 0.0
        %5722 = vadd.xlane.f32.xlu0 %v5721
        %v5723 = vpop.xlane.xlu0 %5722
        %v5724 = vsel %vm5318, %v5197, 0.0
        %5725 = vadd.xlane.f32.xlu0 %v5724
        %v5726 = vpop.xlane.xlu0 %5725
        %v5727 = vsel %vm5318, %v5198, 0.0
        %5728 = vadd.xlane.f32.xlu0 %v5727
        %v5729 = vpop.xlane.xlu0 %5728
        %v5730 = vsel %vm5318, %v5199, 0.0
        %5731 = vadd.xlane.f32.xlu0 %v5730
        %v5732 = vpop.xlane.xlu0 %5731
        %v5733 = vsel %vm5318, %v5200, 0.0
        %5734 = vadd.xlane.f32.xlu0 %v5733
        %v5735 = vpop.xlane.xlu0 %5734
        %v5736 = vsel %vm5318, %v5201, 0.0
        %5737 = vadd.xlane.f32.xlu0 %v5736
        %v5738 = vpop.xlane.xlu0 %5737
        %v5739 = vsel %vm5318, %v5202, 0.0
        %5740 = vadd.xlane.f32.xlu0 %v5739
        %v5741 = vpop.xlane.xlu0 %5740
        %v5742 = vsel %vm5318, %v5203, 0.0
        %5743 = vadd.xlane.f32.xlu0 %v5742
        %v5744 = vpop.xlane.xlu0 %5743
        %v5745 = vsel %vm5318, %v5204, 0.0
        %5746 = vadd.xlane.f32.xlu0 %v5745
        %v5747 = vpop.xlane.xlu0 %5746
        %v5748 = vsel %vm5318, %v5205, 0.0
        %5749 = vadd.xlane.f32.xlu0 %v5748
        %v5750 = vpop.xlane.xlu0 %5749
        %v5751 = vsel %vm5318, %v5206, 0.0
        %5752 = vadd.xlane.f32.xlu0 %v5751
        %v5753 = vpop.xlane.xlu0 %5752
        %v5754 = vsel %vm5318, %v5207, 0.0
        %5755 = vadd.xlane.f32.xlu0 %v5754
        %v5756 = vpop.xlane.xlu0 %5755
        %v5757 = vsel %vm5318, %v5208, 0.0
        %5758 = vadd.xlane.f32.xlu0 %v5757
        %v5759 = vpop.xlane.xlu0 %5758
        %v5760 = vsel %vm5318, %v5209, 0.0
        %5761 = vadd.xlane.f32.xlu0 %v5760
        %v5762 = vpop.xlane.xlu0 %5761
        %v5763 = vsel %vm5318, %v5210, 0.0
        %5764 = vadd.xlane.f32.xlu0 %v5763
        %v5765 = vpop.xlane.xlu0 %5764
        %v5766 = vsel %vm5318, %v5211, 0.0
        %5767 = vadd.xlane.f32.xlu0 %v5766
        %v5768 = vpop.xlane.xlu0 %5767
        %v5769 = vsel %vm5318, %v5212, 0.0
        %5770 = vadd.xlane.f32.xlu0 %v5769
        %v5771 = vpop.xlane.xlu0 %5770
        %v5772 = vsel %vm5318, %v5213, 0.0
        %5773 = vadd.xlane.f32.xlu0 %v5772
        %v5774 = vpop.xlane.xlu0 %5773
        %v5775 = vsel %vm5318, %v5214, 0.0
        %5776 = vadd.xlane.f32.xlu0 %v5775
        %v5777 = vpop.xlane.xlu0 %5776
        %v5778 = vsel %vm5318, %v5215, 0.0
        %5779 = vadd.xlane.f32.xlu0 %v5778
        %v5780 = vpop.xlane.xlu0 %5779
        %v5781 = vsel %vm5318, %v5216, 0.0
        %5782 = vadd.xlane.f32.xlu0 %v5781
        %v5783 = vpop.xlane.xlu0 %5782
        %v5784 = vsel %vm5318, %v5217, 0.0
        %5785 = vadd.xlane.f32.xlu0 %v5784
        %v5786 = vpop.xlane.xlu0 %5785
        %v5787 = vsel %vm5318, %v5218, 0.0
        %5788 = vadd.xlane.f32.xlu0 %v5787
        %v5789 = vpop.xlane.xlu0 %5788
        %v5790 = vsel %vm5318, %v5219, 0.0
        %5791 = vadd.xlane.f32.xlu0 %v5790
        %v5792 = vpop.xlane.xlu0 %5791
        %v5793 = vsel %vm5318, %v5220, 0.0
        %5794 = vadd.xlane.f32.xlu0 %v5793
        %v5795 = vpop.xlane.xlu0 %5794
        %v5796 = vsel %vm5318, %v5221, 0.0
        %5797 = vadd.xlane.f32.xlu0 %v5796
        %v5798 = vpop.xlane.xlu0 %5797
        %v5799 = vsel %vm5318, %v5222, 0.0
        %5800 = vadd.xlane.f32.xlu0 %v5799
        %v5801 = vpop.xlane.xlu0 %5800
        %v5802 = vsel %vm5318, %v5223, 0.0
        %5803 = vadd.xlane.f32.xlu0 %v5802
        %v5804 = vpop.xlane.xlu0 %5803
        %v5805 = vsel %vm5318, %v5224, 0.0
        %5806 = vadd.xlane.f32.xlu0 %v5805
        %v5807 = vpop.xlane.xlu0 %5806
        %v5808 = vsel %vm5318, %v5225, 0.0
        %5809 = vadd.xlane.f32.xlu0 %v5808
        %v5810 = vpop.xlane.xlu0 %5809
        %v5811 = vsel %vm5318, %v5226, 0.0
        %5812 = vadd.xlane.f32.xlu0 %v5811
        %v5813 = vpop.xlane.xlu0 %5812
        %v5814 = vsel %vm5318, %v5227, 0.0
        %5815 = vadd.xlane.f32.xlu0 %v5814
        %v5816 = vpop.xlane.xlu0 %5815
        %v5817 = vsel %vm5318, %v5228, 0.0
        %5818 = vadd.xlane.f32.xlu0 %v5817
        %v5819 = vpop.xlane.xlu0 %5818
        %v5820 = vsel %vm5318, %v5229, 0.0
        %5821 = vadd.xlane.f32.xlu0 %v5820
        %v5822 = vpop.xlane.xlu0 %5821
        %v5823 = vsel %vm5318, %v5230, 0.0
        %5824 = vadd.xlane.f32.xlu0 %v5823
        %v5825 = vpop.xlane.xlu0 %5824
        %v5826 = vsel %vm5318, %v5231, 0.0
        %5827 = vadd.xlane.f32.xlu0 %v5826
        %v5828 = vpop.xlane.xlu0 %5827
        %v5829 = vsel %vm5318, %v5232, 0.0
        %5830 = vadd.xlane.f32.xlu0 %v5829
        %v5831 = vpop.xlane.xlu0 %5830
        %v5832 = vsel %vm5318, %v5233, 0.0
        %5833 = vadd.xlane.f32.xlu0 %v5832
        %v5834 = vpop.xlane.xlu0 %5833
        %v5835 = vsel %vm5318, %v5234, 0.0
        %5836 = vadd.xlane.f32.xlu0 %v5835
        %v5837 = vpop.xlane.xlu0 %5836
        %v5838 = vsel %vm5318, %v5235, 0.0
        %5839 = vadd.xlane.f32.xlu0 %v5838
        %v5840 = vpop.xlane.xlu0 %5839
        %v5841 = vsel %vm5318, %v5236, 0.0
        %5842 = vadd.xlane.f32.xlu0 %v5841
        %v5843 = vpop.xlane.xlu0 %5842
        %v5844 = vsel %vm5318, %v5237, 0.0
        %5845 = vadd.xlane.f32.xlu0 %v5844
        %v5846 = vpop.xlane.xlu0 %5845
        %v5847 = vsel %vm5318, %v5238, 0.0
        %5848 = vadd.xlane.f32.xlu0 %v5847
        %v5849 = vpop.xlane.xlu0 %5848
        %v5850 = vsel %vm5318, %v5239, 0.0
        %5851 = vadd.xlane.f32.xlu0 %v5850
        %v5852 = vpop.xlane.xlu0 %5851
        %v5853 = vsel %vm5318, %v5240, 0.0
        %5854 = vadd.xlane.f32.xlu0 %v5853
        %v5855 = vpop.xlane.xlu0 %5854
        %v5856 = vsel %vm5318, %v5241, 0.0
        %5857 = vadd.xlane.f32.xlu0 %v5856
        %v5858 = vpop.xlane.xlu0 %5857
        %v5859 = vsel %vm5318, %v5242, 0.0
        %5860 = vadd.xlane.f32.xlu0 %v5859
        %v5861 = vpop.xlane.xlu0 %5860
        %v5862 = vsel %vm5318, %v5243, 0.0
        %5863 = vadd.xlane.f32.xlu0 %v5862
        %v5864 = vpop.xlane.xlu0 %5863
        %v5865 = vsel %vm5318, %v5244, 0.0
        %5866 = vadd.xlane.f32.xlu0 %v5865
        %v5867 = vpop.xlane.xlu0 %5866
        %v5868 = vsel %vm5318, %v5245, 0.0
        %5869 = vadd.xlane.f32.xlu0 %v5868
        %v5870 = vpop.xlane.xlu0 %5869
        %v5871 = vsel %vm5318, %v5246, 0.0
        %5872 = vadd.xlane.f32.xlu0 %v5871
        %v5873 = vpop.xlane.xlu0 %5872
        %v5874 = vsel %vm5318, %v5247, 0.0
        %5875 = vadd.xlane.f32.xlu0 %v5874
        %v5876 = vpop.xlane.xlu0 %5875
        %v5877 = vsel %vm5318, %v5248, 0.0
        %5878 = vadd.xlane.f32.xlu0 %v5877
        %v5879 = vpop.xlane.xlu0 %5878
        %v5880 = vsel %vm5318, %v5249, 0.0
        %5881 = vadd.xlane.f32.xlu0 %v5880
        %v5882 = vpop.xlane.xlu0 %5881
        %v5883 = vsel %vm5318, %v5250, 0.0
        %5884 = vadd.xlane.f32.xlu0 %v5883
        %v5885 = vpop.xlane.xlu0 %5884
        %v5886 = vsel %vm5318, %v5251, 0.0
        %5887 = vadd.xlane.f32.xlu0 %v5886
        %v5888 = vpop.xlane.xlu0 %5887
        %v5889 = vsel %vm5318, %v5252, 0.0
        %5890 = vadd.xlane.f32.xlu0 %v5889
        %v5891 = vpop.xlane.xlu0 %5890
        %v5892 = vsel %vm5318, %v5253, 0.0
        %5893 = vadd.xlane.f32.xlu0 %v5892
        %v5894 = vpop.xlane.xlu0 %5893
        %v5895 = vsel %vm5318, %v5254, 0.0
        %5896 = vadd.xlane.f32.xlu0 %v5895
        %v5897 = vpop.xlane.xlu0 %5896
        %v5898 = vsel %vm5318, %v5255, 0.0
        %5899 = vadd.xlane.f32.xlu0 %v5898
        %v5900 = vpop.xlane.xlu0 %5899
        %v5901 = vsel %vm5318, %v5256, 0.0
        %5902 = vadd.xlane.f32.xlu0 %v5901
        %v5903 = vpop.xlane.xlu0 %5902
        %v5904 = vsel %vm5318, %v5257, 0.0
        %5905 = vadd.xlane.f32.xlu0 %v5904
        %v5906 = vpop.xlane.xlu0 %5905
        %v5907 = vsel %vm5318, %v5258, 0.0
        %5908 = vadd.xlane.f32.xlu0 %v5907
        %v5909 = vpop.xlane.xlu0 %5908
        %v5910 = vsel %vm5318, %v5259, 0.0
        %5911 = vadd.xlane.f32.xlu0 %v5910
        %v5912 = vpop.xlane.xlu0 %5911
        %v5913 = vsel %vm5318, %v5260, 0.0
        %5914 = vadd.xlane.f32.xlu0 %v5913
        %v5915 = vpop.xlane.xlu0 %5914
        %v5916 = vsel %vm5318, %v5261, 0.0
        %5917 = vadd.xlane.f32.xlu0 %v5916
        %v5918 = vpop.xlane.xlu0 %5917
        %v5919 = vsel %vm5318, %v5262, 0.0
        %5920 = vadd.xlane.f32.xlu0 %v5919
        %v5921 = vpop.xlane.xlu0 %5920
        %v5922 = vsel %vm5318, %v5263, 0.0
        %5923 = vadd.xlane.f32.xlu0 %v5922
        %v5924 = vpop.xlane.xlu0 %5923
        %v5925 = vsel %vm5318, %v5264, 0.0
        %5926 = vadd.xlane.f32.xlu0 %v5925
        %v5927 = vpop.xlane.xlu0 %5926
        %v5928 = vsel %vm5318, %v5265, 0.0
        %5929 = vadd.xlane.f32.xlu0 %v5928
        %v5930 = vpop.xlane.xlu0 %5929
        %v5931 = vsel %vm5318, %v5266, 0.0
        %5932 = vadd.xlane.f32.xlu0 %v5931
        %v5933 = vpop.xlane.xlu0 %5932
        %v5934 = vsel %vm5318, %v5267, 0.0
        %5935 = vadd.xlane.f32.xlu0 %v5934
        %v5936 = vpop.xlane.xlu0 %5935
        %v5937 = vsel %vm5318, %v5268, 0.0
        %5938 = vadd.xlane.f32.xlu0 %v5937
        %v5939 = vpop.xlane.xlu0 %5938
        %v5940 = vsel %vm5318, %v5269, 0.0
        %5941 = vadd.xlane.f32.xlu0 %v5940
        %v5942 = vpop.xlane.xlu0 %5941
        %v5943 = vsel %vm5318, %v5270, 0.0
        %5944 = vadd.xlane.f32.xlu0 %v5943
        %v5945 = vpop.xlane.xlu0 %5944
        %v5946 = vsel %vm5318, %v5271, 0.0
        %5947 = vadd.xlane.f32.xlu0 %v5946
        %v5948 = vpop.xlane.xlu0 %5947
        %v5949 = vsel %vm5318, %v5272, 0.0
        %5950 = vadd.xlane.f32.xlu0 %v5949
        %v5951 = vpop.xlane.xlu0 %5950
        %v5952 = vsel %vm5318, %v5273, 0.0
        %5953 = vadd.xlane.f32.xlu0 %v5952
        %v5954 = vpop.xlane.xlu0 %5953
        %v5955 = vsel %vm5318, %v5274, 0.0
        %5956 = vadd.xlane.f32.xlu0 %v5955
        %v5957 = vpop.xlane.xlu0 %5956
        %v5958 = vsel %vm5318, %v5275, 0.0
        %5959 = vadd.xlane.f32.xlu0 %v5958
        %v5960 = vpop.xlane.xlu0 %5959
        %v5961 = vsel %vm5318, %v5276, 0.0
        %5962 = vadd.xlane.f32.xlu0 %v5961
        %v5963 = vpop.xlane.xlu0 %5962
        %v5964 = vsel %vm5318, %v5277, 0.0
        %5965 = vadd.xlane.f32.xlu0 %v5964
        %v5966 = vpop.xlane.xlu0 %5965
        %v5967 = vsel %vm5318, %v5278, 0.0
        %5968 = vadd.xlane.f32.xlu0 %v5967
        %v5969 = vpop.xlane.xlu0 %5968
        %v5970 = vsel %vm5318, %v5279, 0.0
        %5971 = vadd.xlane.f32.xlu0 %v5970
        %v5972 = vpop.xlane.xlu0 %5971
        %v5973 = vsel %vm5318, %v5280, 0.0
        %5974 = vadd.xlane.f32.xlu0 %v5973
        %v5975 = vpop.xlane.xlu0 %5974
        %v5976 = vsel %vm5318, %v5281, 0.0
        %5977 = vadd.xlane.f32.xlu0 %v5976
        %v5978 = vpop.xlane.xlu0 %5977
        %v5979 = vsel %vm5318, %v5282, 0.0
        %5980 = vadd.xlane.f32.xlu0 %v5979
        %v5981 = vpop.xlane.xlu0 %5980
        %v5982 = vsel %vm5318, %v5283, 0.0
        %5983 = vadd.xlane.f32.xlu0 %v5982
        %v5984 = vpop.xlane.xlu0 %5983
        %v5985 = vsel %vm5318, %v5284, 0.0
        %5986 = vadd.xlane.f32.xlu0 %v5985
        %v5987 = vpop.xlane.xlu0 %5986
        %v5988 = vsel %vm5318, %v5285, 0.0
        %5989 = vadd.xlane.f32.xlu0 %v5988
        %v5990 = vpop.xlane.xlu0 %5989
        %v5991 = vsel %vm5318, %v5286, 0.0
        %5992 = vadd.xlane.f32.xlu0 %v5991
        %v5993 = vpop.xlane.xlu0 %5992
        %v5994 = vsel %vm5318, %v5287, 0.0
        %5995 = vadd.xlane.f32.xlu0 %v5994
        %v5996 = vpop.xlane.xlu0 %5995
        %v5997 = vsel %vm5318, %v5288, 0.0
        %5998 = vadd.xlane.f32.xlu0 %v5997
        %v5999 = vpop.xlane.xlu0 %5998
        %v6000 = vsel %vm5318, %v5289, 0.0
        %6001 = vadd.xlane.f32.xlu0 %v6000
        %v6002 = vpop.xlane.xlu0 %6001
        %v6003 = vsel %vm5318, %v5290, 0.0
        %6004 = vadd.xlane.f32.xlu0 %v6003
        %v6005 = vpop.xlane.xlu0 %6004
        %v6006 = vsel %vm5318, %v5291, 0.0
        %6007 = vadd.xlane.f32.xlu0 %v6006
        %v6008 = vpop.xlane.xlu0 %6007
        %v6009 = vsel %vm5318, %v5292, 0.0
        %6010 = vadd.xlane.f32.xlu0 %v6009
        %v6011 = vpop.xlane.xlu0 %6010
        %v6012 = vsel %vm5318, %v5293, 0.0
        %6013 = vadd.xlane.f32.xlu0 %v6012
        %v6014 = vpop.xlane.xlu0 %6013
        %v6015 = vsel %vm5318, %v5294, 0.0
        %6016 = vadd.xlane.f32.xlu0 %v6015
        %v6017 = vpop.xlane.xlu0 %6016
        %v6018 = vsel %vm5318, %v5295, 0.0
        %6019 = vadd.xlane.f32.xlu0 %v6018
        %v6020 = vpop.xlane.xlu0 %6019
        %v6021 = vsel %vm5318, %v5296, 0.0
        %6022 = vadd.xlane.f32.xlu0 %v6021
        %v6023 = vpop.xlane.xlu0 %6022
        %v6024 = vsel %vm5318, %v5297, 0.0
        %6025 = vadd.xlane.f32.xlu0 %v6024
        %v6026 = vpop.xlane.xlu0 %6025
        %v6027 = vsel %vm5318, %v5298, 0.0
        %6028 = vadd.xlane.f32.xlu0 %v6027
        %v6029 = vpop.xlane.xlu0 %6028
        %v6030 = vsel %vm5318, %v5299, 0.0
        %6031 = vadd.xlane.f32.xlu0 %v6030
        %v6032 = vpop.xlane.xlu0 %6031
        %v6033 = vsel %vm5318, %v5300, 0.0
        %6034 = vadd.xlane.f32.xlu0 %v6033
        %v6035 = vpop.xlane.xlu0 %6034
        %v6036 = vsel %vm5318, %v5301, 0.0
        %6037 = vadd.xlane.f32.xlu0 %v6036
        %v6038 = vpop.xlane.xlu0 %6037
        %v6039 = vsel %vm5318, %v5302, 0.0
        %6040 = vadd.xlane.f32.xlu0 %v6039
        %v6041 = vpop.xlane.xlu0 %6040
        %v6042 = vsel %vm5318, %v5303, 0.0
        %6043 = vadd.xlane.f32.xlu0 %v6042
        %v6044 = vpop.xlane.xlu0 %6043
        %v6045 = vsel %vm5318, %v5304, 0.0
        %6046 = vadd.xlane.f32.xlu0 %v6045
        %v6047 = vpop.xlane.xlu0 %6046
        %v6048 = vsel %vm5318, %v5305, 0.0
        %6049 = vadd.xlane.f32.xlu0 %v6048
        %v6050 = vpop.xlane.xlu0 %6049
        %v6051 = vsel %vm5318, %v5306, 0.0
        %6052 = vadd.xlane.f32.xlu0 %v6051
        %v6053 = vpop.xlane.xlu0 %6052
        %v6054 = vsel %vm5318, %v5307, 0.0
        %6055 = vadd.xlane.f32.xlu0 %v6054
        %v6056 = vpop.xlane.xlu0 %6055
        %v6057 = vsel %vm5318, %v5308, 0.0
        %6058 = vadd.xlane.f32.xlu0 %v6057
        %v6059 = vpop.xlane.xlu0 %6058
        %v6060 = vsel %vm5318, %v5309, 0.0
        %6061 = vadd.xlane.f32.xlu0 %v6060
        %v6062 = vpop.xlane.xlu0 %6061
        %v6063 = vsel %vm5318, %v5310, 0.0
        %6064 = vadd.xlane.f32.xlu0 %v6063
        %v6065 = vpop.xlane.xlu0 %6064
        %v6066 = vsel %vm5318, %v5311, 0.0
        %6067 = vadd.xlane.f32.xlu0 %v6066
        %v6068 = vpop.xlane.xlu0 %6067
        %v6069 = vsel %vm5318, %v5312, 0.0
        %6070 = vadd.xlane.f32.xlu0 %v6069
        %v6071 = vpop.xlane.xlu0 %6070
        %v6072 = vsel %vm5318, %v5313, 0.0
        %6073 = vadd.xlane.f32.xlu0 %v6072
        %v6074 = vpop.xlane.xlu0 %6073
        %v6075 = vsel %vm5318, %v5314, 0.0
        %6076 = vadd.xlane.f32.xlu0 %v6075
        %v6077 = vpop.xlane.xlu0 %6076
        %v6078 = vsel %vm5318, %v5315, 0.0
        %6079 = vadd.xlane.f32.xlu0 %v6078
        %v6080 = vpop.xlane.xlu0 %6079
        %v6081 = vsel %vm5318, %v5316, 0.0
        %6082 = vadd.xlane.f32.xlu0 %v6081
        %v6083 = vpop.xlane.xlu0 %6082
        %v6084 = vsel %vm5318, %v5317, 0.0
        %6085 = vadd.xlane.f32.xlu0 %v6084
        %v6086 = vpop.xlane.xlu0 %6085
        %s6087 = sld [smem:[#allocation2]]
        %v6088 = vstv %s6087
        %v6089 = vadd.f32 %v5321, %v6088
        %v6090 = vadd.f32 %v5324, %v6088
        %v6091 = vadd.f32 %v5327, %v6088
        %v6092 = vadd.f32 %v5330, %v6088
        %v6093 = vadd.f32 %v5333, %v6088
        %v6094 = vadd.f32 %v5336, %v6088
        %v6095 = vadd.f32 %v5339, %v6088
        %v6096 = vadd.f32 %v5342, %v6088
        %v6097 = vadd.f32 %v5345, %v6088
        %v6098 = vadd.f32 %v5348, %v6088
        %v6099 = vadd.f32 %v5351, %v6088
        %v6100 = vadd.f32 %v5354, %v6088
        %v6101 = vadd.f32 %v5357, %v6088
        %v6102 = vadd.f32 %v5360, %v6088
        %v6103 = vadd.f32 %v5363, %v6088
        %v6104 = vadd.f32 %v5366, %v6088
        %v6105 = vadd.f32 %v5369, %v6088
        %v6106 = vadd.f32 %v5372, %v6088
        %v6107 = vadd.f32 %v5375, %v6088
        %v6108 = vadd.f32 %v5378, %v6088
        %v6109 = vadd.f32 %v5381, %v6088
        %v6110 = vadd.f32 %v5384, %v6088
        %v6111 = vadd.f32 %v5387, %v6088
        %v6112 = vadd.f32 %v5390, %v6088
        %v6113 = vadd.f32 %v5393, %v6088
        %v6114 = vadd.f32 %v5396, %v6088
        %v6115 = vadd.f32 %v5399, %v6088
        %v6116 = vadd.f32 %v5402, %v6088
        %v6117 = vadd.f32 %v5405, %v6088
        %v6118 = vadd.f32 %v5408, %v6088
        %v6119 = vadd.f32 %v5411, %v6088
        %v6120 = vadd.f32 %v5414, %v6088
        %v6121 = vadd.f32 %v5417, %v6088
        %v6122 = vadd.f32 %v5420, %v6088
        %v6123 = vadd.f32 %v5423, %v6088
        %v6124 = vadd.f32 %v5426, %v6088
        %v6125 = vadd.f32 %v5429, %v6088
        %v6126 = vadd.f32 %v5432, %v6088
        %v6127 = vadd.f32 %v5435, %v6088
        %v6128 = vadd.f32 %v5438, %v6088
        %v6129 = vadd.f32 %v5441, %v6088
        %v6130 = vadd.f32 %v5444, %v6088
        %v6131 = vadd.f32 %v5447, %v6088
        %v6132 = vadd.f32 %v5450, %v6088
        %v6133 = vadd.f32 %v5453, %v6088
        %v6134 = vadd.f32 %v5456, %v6088
        %v6135 = vadd.f32 %v5459, %v6088
        %v6136 = vadd.f32 %v5462, %v6088
        %v6137 = vadd.f32 %v5465, %v6088
        %v6138 = vadd.f32 %v5468, %v6088
        %v6139 = vadd.f32 %v5471, %v6088
        %v6140 = vadd.f32 %v5474, %v6088
        %v6141 = vadd.f32 %v5477, %v6088
        %v6142 = vadd.f32 %v5480, %v6088
        %v6143 = vadd.f32 %v5483, %v6088
        %v6144 = vadd.f32 %v5486, %v6088
        %v6145 = vadd.f32 %v5489, %v6088
        %v6146 = vadd.f32 %v5492, %v6088
        %v6147 = vadd.f32 %v5495, %v6088
        %v6148 = vadd.f32 %v5498, %v6088
        %v6149 = vadd.f32 %v5501, %v6088
        %v6150 = vadd.f32 %v5504, %v6088
        %v6151 = vadd.f32 %v5507, %v6088
        %v6152 = vadd.f32 %v5510, %v6088
        %v6153 = vadd.f32 %v5513, %v6088
        %v6154 = vadd.f32 %v5516, %v6088
        %v6155 = vadd.f32 %v5519, %v6088
        %v6156 = vadd.f32 %v5522, %v6088
        %v6157 = vadd.f32 %v5525, %v6088
        %v6158 = vadd.f32 %v5528, %v6088
        %v6159 = vadd.f32 %v5531, %v6088
        %v6160 = vadd.f32 %v5534, %v6088
        %v6161 = vadd.f32 %v5537, %v6088
        %v6162 = vadd.f32 %v5540, %v6088
        %v6163 = vadd.f32 %v5543, %v6088
        %v6164 = vadd.f32 %v5546, %v6088
        %v6165 = vadd.f32 %v5549, %v6088
        %v6166 = vadd.f32 %v5552, %v6088
        %v6167 = vadd.f32 %v5555, %v6088
        %v6168 = vadd.f32 %v5558, %v6088
        %v6169 = vadd.f32 %v5561, %v6088
        %v6170 = vadd.f32 %v5564, %v6088
        %v6171 = vadd.f32 %v5567, %v6088
        %v6172 = vadd.f32 %v5570, %v6088
        %v6173 = vadd.f32 %v5573, %v6088
        %v6174 = vadd.f32 %v5576, %v6088
        %v6175 = vadd.f32 %v5579, %v6088
        %v6176 = vadd.f32 %v5582, %v6088
        %v6177 = vadd.f32 %v5585, %v6088
        %v6178 = vadd.f32 %v5588, %v6088
        %v6179 = vadd.f32 %v5591, %v6088
        %v6180 = vadd.f32 %v5594, %v6088
        %v6181 = vadd.f32 %v5597, %v6088
        %v6182 = vadd.f32 %v5600, %v6088
        %v6183 = vadd.f32 %v5603, %v6088
        %v6184 = vadd.f32 %v5606, %v6088
        %v6185 = vadd.f32 %v5609, %v6088
        %v6186 = vadd.f32 %v5612, %v6088
        %v6187 = vadd.f32 %v5615, %v6088
        %v6188 = vadd.f32 %v5618, %v6088
        %v6189 = vadd.f32 %v5621, %v6088
        %v6190 = vadd.f32 %v5624, %v6088
        %v6191 = vadd.f32 %v5627, %v6088
        %v6192 = vadd.f32 %v5630, %v6088
        %v6193 = vadd.f32 %v5633, %v6088
        %v6194 = vadd.f32 %v5636, %v6088
        %v6195 = vadd.f32 %v5639, %v6088
        %v6196 = vadd.f32 %v5642, %v6088
        %v6197 = vadd.f32 %v5645, %v6088
        %v6198 = vadd.f32 %v5648, %v6088
        %v6199 = vadd.f32 %v5651, %v6088
        %v6200 = vadd.f32 %v5654, %v6088
        %v6201 = vadd.f32 %v5657, %v6088
        %v6202 = vadd.f32 %v5660, %v6088
        %v6203 = vadd.f32 %v5663, %v6088
        %v6204 = vadd.f32 %v5666, %v6088
        %v6205 = vadd.f32 %v5669, %v6088
        %v6206 = vadd.f32 %v5672, %v6088
        %v6207 = vadd.f32 %v5675, %v6088
        %v6208 = vadd.f32 %v5678, %v6088
        %v6209 = vadd.f32 %v5681, %v6088
        %v6210 = vadd.f32 %v5684, %v6088
        %v6211 = vadd.f32 %v5687, %v6088
        %v6212 = vadd.f32 %v5690, %v6088
        %v6213 = vadd.f32 %v5693, %v6088
        %v6214 = vadd.f32 %v5696, %v6088
        %v6215 = vadd.f32 %v5699, %v6088
        %v6216 = vadd.f32 %v5702, %v6088
        %v6217 = vadd.f32 %v5705, %v6088
        %v6218 = vadd.f32 %v5708, %v6088
        %v6219 = vadd.f32 %v5711, %v6088
        %v6220 = vadd.f32 %v5714, %v6088
        %v6221 = vadd.f32 %v5717, %v6088
        %v6222 = vadd.f32 %v5720, %v6088
        %v6223 = vadd.f32 %v5723, %v6088
        %v6224 = vadd.f32 %v5726, %v6088
        %v6225 = vadd.f32 %v5729, %v6088
        %v6226 = vadd.f32 %v5732, %v6088
        %v6227 = vadd.f32 %v5735, %v6088
        %v6228 = vadd.f32 %v5738, %v6088
        %v6229 = vadd.f32 %v5741, %v6088
        %v6230 = vadd.f32 %v5744, %v6088
        %v6231 = vadd.f32 %v5747, %v6088
        %v6232 = vadd.f32 %v5750, %v6088
        %v6233 = vadd.f32 %v5753, %v6088
        %v6234 = vadd.f32 %v5756, %v6088
        %v6235 = vadd.f32 %v5759, %v6088
        %v6236 = vadd.f32 %v5762, %v6088
        %v6237 = vadd.f32 %v5765, %v6088
        %v6238 = vadd.f32 %v5768, %v6088
        %v6239 = vadd.f32 %v5771, %v6088
        %v6240 = vadd.f32 %v5774, %v6088
        %v6241 = vadd.f32 %v5777, %v6088
        %v6242 = vadd.f32 %v5780, %v6088
        %v6243 = vadd.f32 %v5783, %v6088
        %v6244 = vadd.f32 %v5786, %v6088
        %v6245 = vadd.f32 %v5789, %v6088
        %v6246 = vadd.f32 %v5792, %v6088
        %v6247 = vadd.f32 %v5795, %v6088
        %v6248 = vadd.f32 %v5798, %v6088
        %v6249 = vadd.f32 %v5801, %v6088
        %v6250 = vadd.f32 %v5804, %v6088
        %v6251 = vadd.f32 %v5807, %v6088
        %v6252 = vadd.f32 %v5810, %v6088
        %v6253 = vadd.f32 %v5813, %v6088
        %v6254 = vadd.f32 %v5816, %v6088
        %v6255 = vadd.f32 %v5819, %v6088
        %v6256 = vadd.f32 %v5822, %v6088
        %v6257 = vadd.f32 %v5825, %v6088
        %v6258 = vadd.f32 %v5828, %v6088
        %v6259 = vadd.f32 %v5831, %v6088
        %v6260 = vadd.f32 %v5834, %v6088
        %v6261 = vadd.f32 %v5837, %v6088
        %v6262 = vadd.f32 %v5840, %v6088
        %v6263 = vadd.f32 %v5843, %v6088
        %v6264 = vadd.f32 %v5846, %v6088
        %v6265 = vadd.f32 %v5849, %v6088
        %v6266 = vadd.f32 %v5852, %v6088
        %v6267 = vadd.f32 %v5855, %v6088
        %v6268 = vadd.f32 %v5858, %v6088
        %v6269 = vadd.f32 %v5861, %v6088
        %v6270 = vadd.f32 %v5864, %v6088
        %v6271 = vadd.f32 %v5867, %v6088
        %v6272 = vadd.f32 %v5870, %v6088
        %v6273 = vadd.f32 %v5873, %v6088
        %v6274 = vadd.f32 %v5876, %v6088
        %v6275 = vadd.f32 %v5879, %v6088
        %v6276 = vadd.f32 %v5882, %v6088
        %v6277 = vadd.f32 %v5885, %v6088
        %v6278 = vadd.f32 %v5888, %v6088
        %v6279 = vadd.f32 %v5891, %v6088
        %v6280 = vadd.f32 %v5894, %v6088
        %v6281 = vadd.f32 %v5897, %v6088
        %v6282 = vadd.f32 %v5900, %v6088
        %v6283 = vadd.f32 %v5903, %v6088
        %v6284 = vadd.f32 %v5906, %v6088
        %v6285 = vadd.f32 %v5909, %v6088
        %v6286 = vadd.f32 %v5912, %v6088
        %v6287 = vadd.f32 %v5915, %v6088
        %v6288 = vadd.f32 %v5918, %v6088
        %v6289 = vadd.f32 %v5921, %v6088
        %v6290 = vadd.f32 %v5924, %v6088
        %v6291 = vadd.f32 %v5927, %v6088
        %v6292 = vadd.f32 %v5930, %v6088
        %v6293 = vadd.f32 %v5933, %v6088
        %v6294 = vadd.f32 %v5936, %v6088
        %v6295 = vadd.f32 %v5939, %v6088
        %v6296 = vadd.f32 %v5942, %v6088
        %v6297 = vadd.f32 %v5945, %v6088
        %v6298 = vadd.f32 %v5948, %v6088
        %v6299 = vadd.f32 %v5951, %v6088
        %v6300 = vadd.f32 %v5954, %v6088
        %v6301 = vadd.f32 %v5957, %v6088
        %v6302 = vadd.f32 %v5960, %v6088
        %v6303 = vadd.f32 %v5963, %v6088
        %v6304 = vadd.f32 %v5966, %v6088
        %v6305 = vadd.f32 %v5969, %v6088
        %v6306 = vadd.f32 %v5972, %v6088
        %v6307 = vadd.f32 %v5975, %v6088
        %v6308 = vadd.f32 %v5978, %v6088
        %v6309 = vadd.f32 %v5981, %v6088
        %v6310 = vadd.f32 %v5984, %v6088
        %v6311 = vadd.f32 %v5987, %v6088
        %v6312 = vadd.f32 %v5990, %v6088
        %v6313 = vadd.f32 %v5993, %v6088
        %v6314 = vadd.f32 %v5996, %v6088
        %v6315 = vadd.f32 %v5999, %v6088
        %v6316 = vadd.f32 %v6002, %v6088
        %v6317 = vadd.f32 %v6005, %v6088
        %v6318 = vadd.f32 %v6008, %v6088
        %v6319 = vadd.f32 %v6011, %v6088
        %v6320 = vadd.f32 %v6014, %v6088
        %v6321 = vadd.f32 %v6017, %v6088
        %v6322 = vadd.f32 %v6020, %v6088
        %v6323 = vadd.f32 %v6023, %v6088
        %v6324 = vadd.f32 %v6026, %v6088
        %v6325 = vadd.f32 %v6029, %v6088
        %v6326 = vadd.f32 %v6032, %v6088
        %v6327 = vadd.f32 %v6035, %v6088
        %v6328 = vadd.f32 %v6038, %v6088
        %v6329 = vadd.f32 %v6041, %v6088
        %v6330 = vadd.f32 %v6044, %v6088
        %v6331 = vadd.f32 %v6047, %v6088
        %v6332 = vadd.f32 %v6050, %v6088
        %v6333 = vadd.f32 %v6053, %v6088
        %v6334 = vadd.f32 %v6056, %v6088
        %v6335 = vadd.f32 %v6059, %v6088
        %v6336 = vadd.f32 %v6062, %v6088
        %v6337 = vadd.f32 %v6065, %v6088
        %v6338 = vadd.f32 %v6068, %v6088
        %v6339 = vadd.f32 %v6071, %v6088
        %v6340 = vadd.f32 %v6074, %v6088
        %v6341 = vadd.f32 %v6077, %v6088
        %v6342 = vadd.f32 %v6080, %v6088
        %v6343 = vadd.f32 %v6083, %v6088
        %v6344 = vadd.f32 %v6086, %v6088
        %v6601 = vlaneseq
        %v6602 = vand.u32 %v6601, 127
        %v6603 = vlaneseq
        %v6604 = vshrl.u32 %v6603, 7
        %v6605 = vsub.s32 %v6602, %v6604
        %v6606 = vrot.slane %v6089, %v6605
        %v6607 = vadd.s32 %v6602, 4294967288
        %v6608 = vlaneseq
        %v6609 = vshrl.u32 %v6608, 7
        %v6610 = vsub.s32 %v6607, %v6609
        %v6611 = vrot.slane %v6090, %v6610
        %vm6612 = vcmask 130112
        %v6613 = vsel %vm6612, %v6611, %v6606
        %v6614 = vadd.s32 %v6602, 4294967280
        %v6615 = vlaneseq
        %v6616 = vshrl.u32 %v6615, 7
        %v6617 = vsub.s32 %v6614, %v6616
        %v6618 = vrot.slane %v6091, %v6617
        %vm6619 = vcmask 195712
        %v6620 = vsel %vm6619, %v6618, %v6613
        %v6621 = vadd.s32 %v6602, 4294967272
        %v6622 = vlaneseq
        %v6623 = vshrl.u32 %v6622, 7
        %v6624 = vsub.s32 %v6621, %v6623
        %v6625 = vrot.slane %v6092, %v6624
        %vm6626 = vcmask 261312
        %v6627 = vsel %vm6626, %v6625, %v6620
        %v6628 = vadd.s32 %v6602, 4294967264
        %v6629 = vlaneseq
        %v6630 = vshrl.u32 %v6629, 7
        %v6631 = vsub.s32 %v6628, %v6630
        %v6632 = vrot.slane %v6093, %v6631
        %vm6633 = vcmask 326912
        %v6634 = vsel %vm6633, %v6632, %v6627
        %v6635 = vadd.s32 %v6602, 4294967256
        %v6636 = vlaneseq
        %v6637 = vshrl.u32 %v6636, 7
        %v6638 = vsub.s32 %v6635, %v6637
        %v6639 = vrot.slane %v6094, %v6638
        %vm6640 = vcmask 392512
        %v6641 = vsel %vm6640, %v6639, %v6634
        %v6642 = vadd.s32 %v6602, 4294967248
        %v6643 = vlaneseq
        %v6644 = vshrl.u32 %v6643, 7
        %v6645 = vsub.s32 %v6642, %v6644
        %v6646 = vrot.slane %v6095, %v6645
        %vm6647 = vcmask 458112
        %v6648 = vsel %vm6647, %v6646, %v6641
        %v6649 = vadd.s32 %v6602, 4294967240
        %v6650 = vlaneseq
        %v6651 = vshrl.u32 %v6650, 7
        %v6652 = vsub.s32 %v6649, %v6651
        %v6653 = vrot.slane %v6096, %v6652
        %vm6654 = vcmask 523712
        %v6655 = vsel %vm6654, %v6653, %v6648
        %v6656 = vadd.s32 %v6602, 4294967232
        %v6657 = vlaneseq
        %v6658 = vshrl.u32 %v6657, 7
        %v6659 = vsub.s32 %v6656, %v6658
        %v6660 = vrot.slane %v6097, %v6659
        %vm6661 = vcmask 589312
        %v6662 = vsel %vm6661, %v6660, %v6655
        %v6663 = vadd.s32 %v6602, 4294967224
        %v6664 = vlaneseq
        %v6665 = vshrl.u32 %v6664, 7
        %v6666 = vsub.s32 %v6663, %v6665
        %v6667 = vrot.slane %v6098, %v6666
        %vm6668 = vcmask 654912
        %v6669 = vsel %vm6668, %v6667, %v6662
        %v6670 = vadd.s32 %v6602, 4294967216
        %v6671 = vlaneseq
        %v6672 = vshrl.u32 %v6671, 7
        %v6673 = vsub.s32 %v6670, %v6672
        %v6674 = vrot.slane %v6099, %v6673
        %vm6675 = vcmask 720512
        %v6676 = vsel %vm6675, %v6674, %v6669
        %v6677 = vadd.s32 %v6602, 4294967208
        %v6678 = vlaneseq
        %v6679 = vshrl.u32 %v6678, 7
        %v6680 = vsub.s32 %v6677, %v6679
        %v6681 = vrot.slane %v6100, %v6680
        %vm6682 = vcmask 786112
        %v6683 = vsel %vm6682, %v6681, %v6676
        %v6684 = vadd.s32 %v6602, 4294967200
        %v6685 = vlaneseq
        %v6686 = vshrl.u32 %v6685, 7
        %v6687 = vsub.s32 %v6684, %v6686
        %v6688 = vrot.slane %v6101, %v6687
        %vm6689 = vcmask 851712
        %v6690 = vsel %vm6689, %v6688, %v6683
        %v6691 = vadd.s32 %v6602, 4294967192
        %v6692 = vlaneseq
        %v6693 = vshrl.u32 %v6692, 7
        %v6694 = vsub.s32 %v6691, %v6693
        %v6695 = vrot.slane %v6102, %v6694
        %vm6696 = vcmask 917312
        %v6697 = vsel %vm6696, %v6695, %v6690
        %v6698 = vadd.s32 %v6602, 4294967184
        %v6699 = vlaneseq
        %v6700 = vshrl.u32 %v6699, 7
        %v6701 = vsub.s32 %v6698, %v6700
        %v6702 = vrot.slane %v6103, %v6701
        %vm6703 = vcmask 982912
        %v6704 = vsel %vm6703, %v6702, %v6697
        %v6705 = vadd.s32 %v6602, 4294967176
        %v6706 = vlaneseq
        %v6707 = vshrl.u32 %v6706, 7
        %v6708 = vsub.s32 %v6705, %v6707
        %v6709 = vrot.slane %v6104, %v6708
        %vm6710 = vcmask 1048512
        %v6711 = vsel %vm6710, %v6709, %v6704
        %v6712 = vlaneseq
        %v6713 = vshrl.u32 %v6712, 7
        %v6714 = vsub.s32 %v6602, %v6713
        %v6715 = vrot.slane %v6105, %v6714
        %v6716 = vlaneseq
        %v6717 = vshrl.u32 %v6716, 7
        %v6718 = vsub.s32 %v6607, %v6717
        %v6719 = vrot.slane %v6106, %v6718
        %v6720 = vsel %vm6612, %v6719, %v6715
        %v6721 = vlaneseq
        %v6722 = vshrl.u32 %v6721, 7
        %v6723 = vsub.s32 %v6614, %v6722
        %v6724 = vrot.slane %v6107, %v6723
        %v6725 = vsel %vm6619, %v6724, %v6720
        %v6726 = vlaneseq
        %v6727 = vshrl.u32 %v6726, 7
        %v6728 = vsub.s32 %v6621, %v6727
        %v6729 = vrot.slane %v6108, %v6728
        %v6730 = vsel %vm6626, %v6729, %v6725
        %v6731 = vlaneseq
        %v6732 = vshrl.u32 %v6731, 7
        %v6733 = vsub.s32 %v6628, %v6732
        %v6734 = vrot.slane %v6109, %v6733
        %v6735 = vsel %vm6633, %v6734, %v6730
        %v6736 = vlaneseq
        %v6737 = vshrl.u32 %v6736, 7
        %v6738 = vsub.s32 %v6635, %v6737
        %v6739 = vrot.slane %v6110, %v6738
        %v6740 = vsel %vm6640, %v6739, %v6735
        %v6741 = vlaneseq
        %v6742 = vshrl.u32 %v6741, 7
        %v6743 = vsub.s32 %v6642, %v6742
        %v6744 = vrot.slane %v6111, %v6743
        %v6745 = vsel %vm6647, %v6744, %v6740
        %v6746 = vlaneseq
        %v6747 = vshrl.u32 %v6746, 7
        %v6748 = vsub.s32 %v6649, %v6747
        %v6749 = vrot.slane %v6112, %v6748
        %v6750 = vsel %vm6654, %v6749, %v6745
        %v6751 = vlaneseq
        %v6752 = vshrl.u32 %v6751, 7
        %v6753 = vsub.s32 %v6656, %v6752
        %v6754 = vrot.slane %v6113, %v6753
        %v6755 = vsel %vm6661, %v6754, %v6750
        %v6756 = vlaneseq
        %v6757 = vshrl.u32 %v6756, 7
        %v6758 = vsub.s32 %v6663, %v6757
        %v6759 = vrot.slane %v6114, %v6758
        %v6760 = vsel %vm6668, %v6759, %v6755
        %v6761 = vlaneseq
        %v6762 = vshrl.u32 %v6761, 7
        %v6763 = vsub.s32 %v6670, %v6762
        %v6764 = vrot.slane %v6115, %v6763
        %v6765 = vsel %vm6675, %v6764, %v6760
        %v6766 = vlaneseq
        %v6767 = vshrl.u32 %v6766, 7
        %v6768 = vsub.s32 %v6677, %v6767
        %v6769 = vrot.slane %v6116, %v6768
        %v6770 = vsel %vm6682, %v6769, %v6765
        %v6771 = vlaneseq
        %v6772 = vshrl.u32 %v6771, 7
        %v6773 = vsub.s32 %v6684, %v6772
        %v6774 = vrot.slane %v6117, %v6773
        %v6775 = vsel %vm6689, %v6774, %v6770
        %v6776 = vlaneseq
        %v6777 = vshrl.u32 %v6776, 7
        %v6778 = vsub.s32 %v6691, %v6777
        %v6779 = vrot.slane %v6118, %v6778
        %v6780 = vsel %vm6696, %v6779, %v6775
        %v6781 = vlaneseq
        %v6782 = vshrl.u32 %v6781, 7
        %v6783 = vsub.s32 %v6698, %v6782
        %v6784 = vrot.slane %v6119, %v6783
        %v6785 = vsel %vm6703, %v6784, %v6780
        %v6786 = vlaneseq
        %v6787 = vshrl.u32 %v6786, 7
        %v6788 = vsub.s32 %v6705, %v6787
        %v6789 = vrot.slane %v6120, %v6788
        %v6790 = vsel %vm6710, %v6789, %v6785
        %v6791 = vlaneseq
        %v6792 = vshrl.u32 %v6791, 7
        %v6793 = vsub.s32 %v6602, %v6792
        %v6794 = vrot.slane %v6121, %v6793
        %v6795 = vlaneseq
        %v6796 = vshrl.u32 %v6795, 7
        %v6797 = vsub.s32 %v6607, %v6796
        %v6798 = vrot.slane %v6122, %v6797
        %v6799 = vsel %vm6612, %v6798, %v6794
        %v6800 = vlaneseq
        %v6801 = vshrl.u32 %v6800, 7
        %v6802 = vsub.s32 %v6614, %v6801
        %v6803 = vrot.slane %v6123, %v6802
        %v6804 = vsel %vm6619, %v6803, %v6799
        %v6805 = vlaneseq
        %v6806 = vshrl.u32 %v6805, 7
        %v6807 = vsub.s32 %v6621, %v6806
        %v6808 = vrot.slane %v6124, %v6807
        %v6809 = vsel %vm6626, %v6808, %v6804
        %v6810 = vlaneseq
        %v6811 = vshrl.u32 %v6810, 7
        %v6812 = vsub.s32 %v6628, %v6811
        %v6813 = vrot.slane %v6125, %v6812
        %v6814 = vsel %vm6633, %v6813, %v6809
        %v6815 = vlaneseq
        %v6816 = vshrl.u32 %v6815, 7
        %v6817 = vsub.s32 %v6635, %v6816
        %v6818 = vrot.slane %v6126, %v6817
        %v6819 = vsel %vm6640, %v6818, %v6814
        %v6820 = vlaneseq
        %v6821 = vshrl.u32 %v6820, 7
        %v6822 = vsub.s32 %v6642, %v6821
        %v6823 = vrot.slane %v6127, %v6822
        %v6824 = vsel %vm6647, %v6823, %v6819
        %v6825 = vlaneseq
        %v6826 = vshrl.u32 %v6825, 7
        %v6827 = vsub.s32 %v6649, %v6826
        %v6828 = vrot.slane %v6128, %v6827
        %v6829 = vsel %vm6654, %v6828, %v6824
        %v6830 = vlaneseq
        %v6831 = vshrl.u32 %v6830, 7
        %v6832 = vsub.s32 %v6656, %v6831
        %v6833 = vrot.slane %v6129, %v6832
        %v6834 = vsel %vm6661, %v6833, %v6829
        %v6835 = vlaneseq
        %v6836 = vshrl.u32 %v6835, 7
        %v6837 = vsub.s32 %v6663, %v6836
        %v6838 = vrot.slane %v6130, %v6837
        %v6839 = vsel %vm6668, %v6838, %v6834
        %v6840 = vlaneseq
        %v6841 = vshrl.u32 %v6840, 7
        %v6842 = vsub.s32 %v6670, %v6841
        %v6843 = vrot.slane %v6131, %v6842
        %v6844 = vsel %vm6675, %v6843, %v6839
        %v6845 = vlaneseq
        %v6846 = vshrl.u32 %v6845, 7
        %v6847 = vsub.s32 %v6677, %v6846
        %v6848 = vrot.slane %v6132, %v6847
        %v6849 = vsel %vm6682, %v6848, %v6844
        %v6850 = vlaneseq
        %v6851 = vshrl.u32 %v6850, 7
        %v6852 = vsub.s32 %v6684, %v6851
        %v6853 = vrot.slane %v6133, %v6852
        %v6854 = vsel %vm6689, %v6853, %v6849
        %v6855 = vlaneseq
        %v6856 = vshrl.u32 %v6855, 7
        %v6857 = vsub.s32 %v6691, %v6856
        %v6858 = vrot.slane %v6134, %v6857
        %v6859 = vsel %vm6696, %v6858, %v6854
        %v6860 = vlaneseq
        %v6861 = vshrl.u32 %v6860, 7
        %v6862 = vsub.s32 %v6698, %v6861
        %v6863 = vrot.slane %v6135, %v6862
        %v6864 = vsel %vm6703, %v6863, %v6859
        %v6865 = vlaneseq
        %v6866 = vshrl.u32 %v6865, 7
        %v6867 = vsub.s32 %v6705, %v6866
        %v6868 = vrot.slane %v6136, %v6867
        %v6869 = vsel %vm6710, %v6868, %v6864
        %v6870 = vlaneseq
        %v6871 = vshrl.u32 %v6870, 7
        %v6872 = vsub.s32 %v6602, %v6871
        %v6873 = vrot.slane %v6137, %v6872
        %v6874 = vlaneseq
        %v6875 = vshrl.u32 %v6874, 7
        %v6876 = vsub.s32 %v6607, %v6875
        %v6877 = vrot.slane %v6138, %v6876
        %v6878 = vsel %vm6612, %v6877, %v6873
        %v6879 = vlaneseq
        %v6880 = vshrl.u32 %v6879, 7
        %v6881 = vsub.s32 %v6614, %v6880
        %v6882 = vrot.slane %v6139, %v6881
        %v6883 = vsel %vm6619, %v6882, %v6878
        %v6884 = vlaneseq
        %v6885 = vshrl.u32 %v6884, 7
        %v6886 = vsub.s32 %v6621, %v6885
        %v6887 = vrot.slane %v6140, %v6886
        %v6888 = vsel %vm6626, %v6887, %v6883
        %v6889 = vlaneseq
        %v6890 = vshrl.u32 %v6889, 7
        %v6891 = vsub.s32 %v6628, %v6890
        %v6892 = vrot.slane %v6141, %v6891
        %v6893 = vsel %vm6633, %v6892, %v6888
        %v6894 = vlaneseq
        %v6895 = vshrl.u32 %v6894, 7
        %v6896 = vsub.s32 %v6635, %v6895
        %v6897 = vrot.slane %v6142, %v6896
        %v6898 = vsel %vm6640, %v6897, %v6893
        %v6899 = vlaneseq
        %v6900 = vshrl.u32 %v6899, 7
        %v6901 = vsub.s32 %v6642, %v6900
        %v6902 = vrot.slane %v6143, %v6901
        %v6903 = vsel %vm6647, %v6902, %v6898
        %v6904 = vlaneseq
        %v6905 = vshrl.u32 %v6904, 7
        %v6906 = vsub.s32 %v6649, %v6905
        %v6907 = vrot.slane %v6144, %v6906
        %v6908 = vsel %vm6654, %v6907, %v6903
        %v6909 = vlaneseq
        %v6910 = vshrl.u32 %v6909, 7
        %v6911 = vsub.s32 %v6656, %v6910
        %v6912 = vrot.slane %v6145, %v6911
        %v6913 = vsel %vm6661, %v6912, %v6908
        %v6914 = vlaneseq
        %v6915 = vshrl.u32 %v6914, 7
        %v6916 = vsub.s32 %v6663, %v6915
        %v6917 = vrot.slane %v6146, %v6916
        %v6918 = vsel %vm6668, %v6917, %v6913
        %v6919 = vlaneseq
        %v6920 = vshrl.u32 %v6919, 7
        %v6921 = vsub.s32 %v6670, %v6920
        %v6922 = vrot.slane %v6147, %v6921
        %v6923 = vsel %vm6675, %v6922, %v6918
        %v6924 = vlaneseq
        %v6925 = vshrl.u32 %v6924, 7
        %v6926 = vsub.s32 %v6677, %v6925
        %v6927 = vrot.slane %v6148, %v6926
        %v6928 = vsel %vm6682, %v6927, %v6923
        %v6929 = vlaneseq
        %v6930 = vshrl.u32 %v6929, 7
        %v6931 = vsub.s32 %v6684, %v6930
        %v6932 = vrot.slane %v6149, %v6931
        %v6933 = vsel %vm6689, %v6932, %v6928
        %v6934 = vlaneseq
        %v6935 = vshrl.u32 %v6934, 7
        %v6936 = vsub.s32 %v6691, %v6935
        %v6937 = vrot.slane %v6150, %v6936
        %v6938 = vsel %vm6696, %v6937, %v6933
        %v6939 = vlaneseq
        %v6940 = vshrl.u32 %v6939, 7
        %v6941 = vsub.s32 %v6698, %v6940
        %v6942 = vrot.slane %v6151, %v6941
        %v6943 = vsel %vm6703, %v6942, %v6938
        %v6944 = vlaneseq
        %v6945 = vshrl.u32 %v6944, 7
        %v6946 = vsub.s32 %v6705, %v6945
        %v6947 = vrot.slane %v6152, %v6946
        %v6948 = vsel %vm6710, %v6947, %v6943
        %v6949 = vlaneseq
        %v6950 = vshrl.u32 %v6949, 7
        %v6951 = vsub.s32 %v6602, %v6950
        %v6952 = vrot.slane %v6153, %v6951
        %v6953 = vlaneseq
        %v6954 = vshrl.u32 %v6953, 7
        %v6955 = vsub.s32 %v6607, %v6954
        %v6956 = vrot.slane %v6154, %v6955
        %v6957 = vsel %vm6612, %v6956, %v6952
        %v6958 = vlaneseq
        %v6959 = vshrl.u32 %v6958, 7
        %v6960 = vsub.s32 %v6614, %v6959
        %v6961 = vrot.slane %v6155, %v6960
        %v6962 = vsel %vm6619, %v6961, %v6957
        %v6963 = vlaneseq
        %v6964 = vshrl.u32 %v6963, 7
        %v6965 = vsub.s32 %v6621, %v6964
        %v6966 = vrot.slane %v6156, %v6965
        %v6967 = vsel %vm6626, %v6966, %v6962
        %v6968 = vlaneseq
        %v6969 = vshrl.u32 %v6968, 7
        %v6970 = vsub.s32 %v6628, %v6969
        %v6971 = vrot.slane %v6157, %v6970
        %v6972 = vsel %vm6633, %v6971, %v6967
        %v6973 = vlaneseq
        %v6974 = vshrl.u32 %v6973, 7
        %v6975 = vsub.s32 %v6635, %v6974
        %v6976 = vrot.slane %v6158, %v6975
        %v6977 = vsel %vm6640, %v6976, %v6972
        %v6978 = vlaneseq
        %v6979 = vshrl.u32 %v6978, 7
        %v6980 = vsub.s32 %v6642, %v6979
        %v6981 = vrot.slane %v6159, %v6980
        %v6982 = vsel %vm6647, %v6981, %v6977
        %v6983 = vlaneseq
        %v6984 = vshrl.u32 %v6983, 7
        %v6985 = vsub.s32 %v6649, %v6984
        %v6986 = vrot.slane %v6160, %v6985
        %v6987 = vsel %vm6654, %v6986, %v6982
        %v6988 = vlaneseq
        %v6989 = vshrl.u32 %v6988, 7
        %v6990 = vsub.s32 %v6656, %v6989
        %v6991 = vrot.slane %v6161, %v6990
        %v6992 = vsel %vm6661, %v6991, %v6987
        %v6993 = vlaneseq
        %v6994 = vshrl.u32 %v6993, 7
        %v6995 = vsub.s32 %v6663, %v6994
        %v6996 = vrot.slane %v6162, %v6995
        %v6997 = vsel %vm6668, %v6996, %v6992
        %v6998 = vlaneseq
        %v6999 = vshrl.u32 %v6998, 7
        %v7000 = vsub.s32 %v6670, %v6999
        %v7001 = vrot.slane %v6163, %v7000
        %v7002 = vsel %vm6675, %v7001, %v6997
        %v7003 = vlaneseq
        %v7004 = vshrl.u32 %v7003, 7
        %v7005 = vsub.s32 %v6677, %v7004
        %v7006 = vrot.slane %v6164, %v7005
        %v7007 = vsel %vm6682, %v7006, %v7002
        %v7008 = vlaneseq
        %v7009 = vshrl.u32 %v7008, 7
        %v7010 = vsub.s32 %v6684, %v7009
        %v7011 = vrot.slane %v6165, %v7010
        %v7012 = vsel %vm6689, %v7011, %v7007
        %v7013 = vlaneseq
        %v7014 = vshrl.u32 %v7013, 7
        %v7015 = vsub.s32 %v6691, %v7014
        %v7016 = vrot.slane %v6166, %v7015
        %v7017 = vsel %vm6696, %v7016, %v7012
        %v7018 = vlaneseq
        %v7019 = vshrl.u32 %v7018, 7
        %v7020 = vsub.s32 %v6698, %v7019
        %v7021 = vrot.slane %v6167, %v7020
        %v7022 = vsel %vm6703, %v7021, %v7017
        %v7023 = vlaneseq
        %v7024 = vshrl.u32 %v7023, 7
        %v7025 = vsub.s32 %v6705, %v7024
        %v7026 = vrot.slane %v6168, %v7025
        %v7027 = vsel %vm6710, %v7026, %v7022
        %v7028 = vlaneseq
        %v7029 = vshrl.u32 %v7028, 7
        %v7030 = vsub.s32 %v6602, %v7029
        %v7031 = vrot.slane %v6169, %v7030
        %v7032 = vlaneseq
        %v7033 = vshrl.u32 %v7032, 7
        %v7034 = vsub.s32 %v6607, %v7033
        %v7035 = vrot.slane %v6170, %v7034
        %v7036 = vsel %vm6612, %v7035, %v7031
        %v7037 = vlaneseq
        %v7038 = vshrl.u32 %v7037, 7
        %v7039 = vsub.s32 %v6614, %v7038
        %v7040 = vrot.slane %v6171, %v7039
        %v7041 = vsel %vm6619, %v7040, %v7036
        %v7042 = vlaneseq
        %v7043 = vshrl.u32 %v7042, 7
        %v7044 = vsub.s32 %v6621, %v7043
        %v7045 = vrot.slane %v6172, %v7044
        %v7046 = vsel %vm6626, %v7045, %v7041
        %v7047 = vlaneseq
        %v7048 = vshrl.u32 %v7047, 7
        %v7049 = vsub.s32 %v6628, %v7048
        %v7050 = vrot.slane %v6173, %v7049
        %v7051 = vsel %vm6633, %v7050, %v7046
        %v7052 = vlaneseq
        %v7053 = vshrl.u32 %v7052, 7
        %v7054 = vsub.s32 %v6635, %v7053
        %v7055 = vrot.slane %v6174, %v7054
        %v7056 = vsel %vm6640, %v7055, %v7051
        %v7057 = vlaneseq
        %v7058 = vshrl.u32 %v7057, 7
        %v7059 = vsub.s32 %v6642, %v7058
        %v7060 = vrot.slane %v6175, %v7059
        %v7061 = vsel %vm6647, %v7060, %v7056
        %v7062 = vlaneseq
        %v7063 = vshrl.u32 %v7062, 7
        %v7064 = vsub.s32 %v6649, %v7063
        %v7065 = vrot.slane %v6176, %v7064
        %v7066 = vsel %vm6654, %v7065, %v7061
        %v7067 = vlaneseq
        %v7068 = vshrl.u32 %v7067, 7
        %v7069 = vsub.s32 %v6656, %v7068
        %v7070 = vrot.slane %v6177, %v7069
        %v7071 = vsel %vm6661, %v7070, %v7066
        %v7072 = vlaneseq
        %v7073 = vshrl.u32 %v7072, 7
        %v7074 = vsub.s32 %v6663, %v7073
        %v7075 = vrot.slane %v6178, %v7074
        %v7076 = vsel %vm6668, %v7075, %v7071
        %v7077 = vlaneseq
        %v7078 = vshrl.u32 %v7077, 7
        %v7079 = vsub.s32 %v6670, %v7078
        %v7080 = vrot.slane %v6179, %v7079
        %v7081 = vsel %vm6675, %v7080, %v7076
        %v7082 = vlaneseq
        %v7083 = vshrl.u32 %v7082, 7
        %v7084 = vsub.s32 %v6677, %v7083
        %v7085 = vrot.slane %v6180, %v7084
        %v7086 = vsel %vm6682, %v7085, %v7081
        %v7087 = vlaneseq
        %v7088 = vshrl.u32 %v7087, 7
        %v7089 = vsub.s32 %v6684, %v7088
        %v7090 = vrot.slane %v6181, %v7089
        %v7091 = vsel %vm6689, %v7090, %v7086
        %v7092 = vlaneseq
        %v7093 = vshrl.u32 %v7092, 7
        %v7094 = vsub.s32 %v6691, %v7093
        %v7095 = vrot.slane %v6182, %v7094
        %v7096 = vsel %vm6696, %v7095, %v7091
        %v7097 = vlaneseq
        %v7098 = vshrl.u32 %v7097, 7
        %v7099 = vsub.s32 %v6698, %v7098
        %v7100 = vrot.slane %v6183, %v7099
        %v7101 = vsel %vm6703, %v7100, %v7096
        %v7102 = vlaneseq
        %v7103 = vshrl.u32 %v7102, 7
        %v7104 = vsub.s32 %v6705, %v7103
        %v7105 = vrot.slane %v6184, %v7104
        %v7106 = vsel %vm6710, %v7105, %v7101
        %v7107 = vlaneseq
        %v7108 = vshrl.u32 %v7107, 7
        %v7109 = vsub.s32 %v6602, %v7108
        %v7110 = vrot.slane %v6185, %v7109
        %v7111 = vlaneseq
        %v7112 = vshrl.u32 %v7111, 7
        %v7113 = vsub.s32 %v6607, %v7112
        %v7114 = vrot.slane %v6186, %v7113
        %v7115 = vsel %vm6612, %v7114, %v7110
        %v7116 = vlaneseq
        %v7117 = vshrl.u32 %v7116, 7
        %v7118 = vsub.s32 %v6614, %v7117
        %v7119 = vrot.slane %v6187, %v7118
        %v7120 = vsel %vm6619, %v7119, %v7115
        %v7121 = vlaneseq
        %v7122 = vshrl.u32 %v7121, 7
        %v7123 = vsub.s32 %v6621, %v7122
        %v7124 = vrot.slane %v6188, %v7123
        %v7125 = vsel %vm6626, %v7124, %v7120
        %v7126 = vlaneseq
        %v7127 = vshrl.u32 %v7126, 7
        %v7128 = vsub.s32 %v6628, %v7127
        %v7129 = vrot.slane %v6189, %v7128
        %v7130 = vsel %vm6633, %v7129, %v7125
        %v7131 = vlaneseq
        %v7132 = vshrl.u32 %v7131, 7
        %v7133 = vsub.s32 %v6635, %v7132
        %v7134 = vrot.slane %v6190, %v7133
        %v7135 = vsel %vm6640, %v7134, %v7130
        %v7136 = vlaneseq
        %v7137 = vshrl.u32 %v7136, 7
        %v7138 = vsub.s32 %v6642, %v7137
        %v7139 = vrot.slane %v6191, %v7138
        %v7140 = vsel %vm6647, %v7139, %v7135
        %v7141 = vlaneseq
        %v7142 = vshrl.u32 %v7141, 7
        %v7143 = vsub.s32 %v6649, %v7142
        %v7144 = vrot.slane %v6192, %v7143
        %v7145 = vsel %vm6654, %v7144, %v7140
        %v7146 = vlaneseq
        %v7147 = vshrl.u32 %v7146, 7
        %v7148 = vsub.s32 %v6656, %v7147
        %v7149 = vrot.slane %v6193, %v7148
        %v7150 = vsel %vm6661, %v7149, %v7145
        %v7151 = vlaneseq
        %v7152 = vshrl.u32 %v7151, 7
        %v7153 = vsub.s32 %v6663, %v7152
        %v7154 = vrot.slane %v6194, %v7153
        %v7155 = vsel %vm6668, %v7154, %v7150
        %v7156 = vlaneseq
        %v7157 = vshrl.u32 %v7156, 7
        %v7158 = vsub.s32 %v6670, %v7157
        %v7159 = vrot.slane %v6195, %v7158
        %v7160 = vsel %vm6675, %v7159, %v7155
        %v7161 = vlaneseq
        %v7162 = vshrl.u32 %v7161, 7
        %v7163 = vsub.s32 %v6677, %v7162
        %v7164 = vrot.slane %v6196, %v7163
        %v7165 = vsel %vm6682, %v7164, %v7160
        %v7166 = vlaneseq
        %v7167 = vshrl.u32 %v7166, 7
        %v7168 = vsub.s32 %v6684, %v7167
        %v7169 = vrot.slane %v6197, %v7168
        %v7170 = vsel %vm6689, %v7169, %v7165
        %v7171 = vlaneseq
        %v7172 = vshrl.u32 %v7171, 7
        %v7173 = vsub.s32 %v6691, %v7172
        %v7174 = vrot.slane %v6198, %v7173
        %v7175 = vsel %vm6696, %v7174, %v7170
        %v7176 = vlaneseq
        %v7177 = vshrl.u32 %v7176, 7
        %v7178 = vsub.s32 %v6698, %v7177
        %v7179 = vrot.slane %v6199, %v7178
        %v7180 = vsel %vm6703, %v7179, %v7175
        %v7181 = vlaneseq
        %v7182 = vshrl.u32 %v7181, 7
        %v7183 = vsub.s32 %v6705, %v7182
        %v7184 = vrot.slane %v6200, %v7183
        %v7185 = vsel %vm6710, %v7184, %v7180
        %v7186 = vlaneseq
        %v7187 = vshrl.u32 %v7186, 7
        %v7188 = vsub.s32 %v6602, %v7187
        %v7189 = vrot.slane %v6201, %v7188
        %v7190 = vlaneseq
        %v7191 = vshrl.u32 %v7190, 7
        %v7192 = vsub.s32 %v6607, %v7191
        %v7193 = vrot.slane %v6202, %v7192
        %v7194 = vsel %vm6612, %v7193, %v7189
        %v7195 = vlaneseq
        %v7196 = vshrl.u32 %v7195, 7
        %v7197 = vsub.s32 %v6614, %v7196
        %v7198 = vrot.slane %v6203, %v7197
        %v7199 = vsel %vm6619, %v7198, %v7194
        %v7200 = vlaneseq
        %v7201 = vshrl.u32 %v7200, 7
        %v7202 = vsub.s32 %v6621, %v7201
        %v7203 = vrot.slane %v6204, %v7202
        %v7204 = vsel %vm6626, %v7203, %v7199
        %v7205 = vlaneseq
        %v7206 = vshrl.u32 %v7205, 7
        %v7207 = vsub.s32 %v6628, %v7206
        %v7208 = vrot.slane %v6205, %v7207
        %v7209 = vsel %vm6633, %v7208, %v7204
        %v7210 = vlaneseq
        %v7211 = vshrl.u32 %v7210, 7
        %v7212 = vsub.s32 %v6635, %v7211
        %v7213 = vrot.slane %v6206, %v7212
        %v7214 = vsel %vm6640, %v7213, %v7209
        %v7215 = vlaneseq
        %v7216 = vshrl.u32 %v7215, 7
        %v7217 = vsub.s32 %v6642, %v7216
        %v7218 = vrot.slane %v6207, %v7217
        %v7219 = vsel %vm6647, %v7218, %v7214
        %v7220 = vlaneseq
        %v7221 = vshrl.u32 %v7220, 7
        %v7222 = vsub.s32 %v6649, %v7221
        %v7223 = vrot.slane %v6208, %v7222
        %v7224 = vsel %vm6654, %v7223, %v7219
        %v7225 = vlaneseq
        %v7226 = vshrl.u32 %v7225, 7
        %v7227 = vsub.s32 %v6656, %v7226
        %v7228 = vrot.slane %v6209, %v7227
        %v7229 = vsel %vm6661, %v7228, %v7224
        %v7230 = vlaneseq
        %v7231 = vshrl.u32 %v7230, 7
        %v7232 = vsub.s32 %v6663, %v7231
        %v7233 = vrot.slane %v6210, %v7232
        %v7234 = vsel %vm6668, %v7233, %v7229
        %v7235 = vlaneseq
        %v7236 = vshrl.u32 %v7235, 7
        %v7237 = vsub.s32 %v6670, %v7236
        %v7238 = vrot.slane %v6211, %v7237
        %v7239 = vsel %vm6675, %v7238, %v7234
        %v7240 = vlaneseq
        %v7241 = vshrl.u32 %v7240, 7
        %v7242 = vsub.s32 %v6677, %v7241
        %v7243 = vrot.slane %v6212, %v7242
        %v7244 = vsel %vm6682, %v7243, %v7239
        %v7245 = vlaneseq
        %v7246 = vshrl.u32 %v7245, 7
        %v7247 = vsub.s32 %v6684, %v7246
        %v7248 = vrot.slane %v6213, %v7247
        %v7249 = vsel %vm6689, %v7248, %v7244
        %v7250 = vlaneseq
        %v7251 = vshrl.u32 %v7250, 7
        %v7252 = vsub.s32 %v6691, %v7251
        %v7253 = vrot.slane %v6214, %v7252
        %v7254 = vsel %vm6696, %v7253, %v7249
        %v7255 = vlaneseq
        %v7256 = vshrl.u32 %v7255, 7
        %v7257 = vsub.s32 %v6698, %v7256
        %v7258 = vrot.slane %v6215, %v7257
        %v7259 = vsel %vm6703, %v7258, %v7254
        %v7260 = vlaneseq
        %v7261 = vshrl.u32 %v7260, 7
        %v7262 = vsub.s32 %v6705, %v7261
        %v7263 = vrot.slane %v6216, %v7262
        %v7264 = vsel %vm6710, %v7263, %v7259
        %v7265 = vlaneseq
        %v7266 = vshrl.u32 %v7265, 7
        %v7267 = vsub.s32 %v6602, %v7266
        %v7268 = vrot.slane %v6217, %v7267
        %v7269 = vlaneseq
        %v7270 = vshrl.u32 %v7269, 7
        %v7271 = vsub.s32 %v6607, %v7270
        %v7272 = vrot.slane %v6218, %v7271
        %v7273 = vsel %vm6612, %v7272, %v7268
        %v7274 = vlaneseq
        %v7275 = vshrl.u32 %v7274, 7
        %v7276 = vsub.s32 %v6614, %v7275
        %v7277 = vrot.slane %v6219, %v7276
        %v7278 = vsel %vm6619, %v7277, %v7273
        %v7279 = vlaneseq
        %v7280 = vshrl.u32 %v7279, 7
        %v7281 = vsub.s32 %v6621, %v7280
        %v7282 = vrot.slane %v6220, %v7281
        %v7283 = vsel %vm6626, %v7282, %v7278
        %v7284 = vlaneseq
        %v7285 = vshrl.u32 %v7284, 7
        %v7286 = vsub.s32 %v6628, %v7285
        %v7287 = vrot.slane %v6221, %v7286
        %v7288 = vsel %vm6633, %v7287, %v7283
        %v7289 = vlaneseq
        %v7290 = vshrl.u32 %v7289, 7
        %v7291 = vsub.s32 %v6635, %v7290
        %v7292 = vrot.slane %v6222, %v7291
        %v7293 = vsel %vm6640, %v7292, %v7288
        %v7294 = vlaneseq
        %v7295 = vshrl.u32 %v7294, 7
        %v7296 = vsub.s32 %v6642, %v7295
        %v7297 = vrot.slane %v6223, %v7296
        %v7298 = vsel %vm6647, %v7297, %v7293
        %v7299 = vlaneseq
        %v7300 = vshrl.u32 %v7299, 7
        %v7301 = vsub.s32 %v6649, %v7300
        %v7302 = vrot.slane %v6224, %v7301
        %v7303 = vsel %vm6654, %v7302, %v7298
        %v7304 = vlaneseq
        %v7305 = vshrl.u32 %v7304, 7
        %v7306 = vsub.s32 %v6656, %v7305
        %v7307 = vrot.slane %v6225, %v7306
        %v7308 = vsel %vm6661, %v7307, %v7303
        %v7309 = vlaneseq
        %v7310 = vshrl.u32 %v7309, 7
        %v7311 = vsub.s32 %v6663, %v7310
        %v7312 = vrot.slane %v6226, %v7311
        %v7313 = vsel %vm6668, %v7312, %v7308
        %v7314 = vlaneseq
        %v7315 = vshrl.u32 %v7314, 7
        %v7316 = vsub.s32 %v6670, %v7315
        %v7317 = vrot.slane %v6227, %v7316
        %v7318 = vsel %vm6675, %v7317, %v7313
        %v7319 = vlaneseq
        %v7320 = vshrl.u32 %v7319, 7
        %v7321 = vsub.s32 %v6677, %v7320
        %v7322 = vrot.slane %v6228, %v7321
        %v7323 = vsel %vm6682, %v7322, %v7318
        %v7324 = vlaneseq
        %v7325 = vshrl.u32 %v7324, 7
        %v7326 = vsub.s32 %v6684, %v7325
        %v7327 = vrot.slane %v6229, %v7326
        %v7328 = vsel %vm6689, %v7327, %v7323
        %v7329 = vlaneseq
        %v7330 = vshrl.u32 %v7329, 7
        %v7331 = vsub.s32 %v6691, %v7330
        %v7332 = vrot.slane %v6230, %v7331
        %v7333 = vsel %vm6696, %v7332, %v7328
        %v7334 = vlaneseq
        %v7335 = vshrl.u32 %v7334, 7
        %v7336 = vsub.s32 %v6698, %v7335
        %v7337 = vrot.slane %v6231, %v7336
        %v7338 = vsel %vm6703, %v7337, %v7333
        %v7339 = vlaneseq
        %v7340 = vshrl.u32 %v7339, 7
        %v7341 = vsub.s32 %v6705, %v7340
        %v7342 = vrot.slane %v6232, %v7341
        %v7343 = vsel %vm6710, %v7342, %v7338
        %v7344 = vlaneseq
        %v7345 = vshrl.u32 %v7344, 7
        %v7346 = vsub.s32 %v6602, %v7345
        %v7347 = vrot.slane %v6233, %v7346
        %v7348 = vlaneseq
        %v7349 = vshrl.u32 %v7348, 7
        %v7350 = vsub.s32 %v6607, %v7349
        %v7351 = vrot.slane %v6234, %v7350
        %v7352 = vsel %vm6612, %v7351, %v7347
        %v7353 = vlaneseq
        %v7354 = vshrl.u32 %v7353, 7
        %v7355 = vsub.s32 %v6614, %v7354
        %v7356 = vrot.slane %v6235, %v7355
        %v7357 = vsel %vm6619, %v7356, %v7352
        %v7358 = vlaneseq
        %v7359 = vshrl.u32 %v7358, 7
        %v7360 = vsub.s32 %v6621, %v7359
        %v7361 = vrot.slane %v6236, %v7360
        %v7362 = vsel %vm6626, %v7361, %v7357
        %v7363 = vlaneseq
        %v7364 = vshrl.u32 %v7363, 7
        %v7365 = vsub.s32 %v6628, %v7364
        %v7366 = vrot.slane %v6237, %v7365
        %v7367 = vsel %vm6633, %v7366, %v7362
        %v7368 = vlaneseq
        %v7369 = vshrl.u32 %v7368, 7
        %v7370 = vsub.s32 %v6635, %v7369
        %v7371 = vrot.slane %v6238, %v7370
        %v7372 = vsel %vm6640, %v7371, %v7367
        %v7373 = vlaneseq
        %v7374 = vshrl.u32 %v7373, 7
        %v7375 = vsub.s32 %v6642, %v7374
        %v7376 = vrot.slane %v6239, %v7375
        %v7377 = vsel %vm6647, %v7376, %v7372
        %v7378 = vlaneseq
        %v7379 = vshrl.u32 %v7378, 7
        %v7380 = vsub.s32 %v6649, %v7379
        %v7381 = vrot.slane %v6240, %v7380
        %v7382 = vsel %vm6654, %v7381, %v7377
        %v7383 = vlaneseq
        %v7384 = vshrl.u32 %v7383, 7
        %v7385 = vsub.s32 %v6656, %v7384
        %v7386 = vrot.slane %v6241, %v7385
        %v7387 = vsel %vm6661, %v7386, %v7382
        %v7388 = vlaneseq
        %v7389 = vshrl.u32 %v7388, 7
        %v7390 = vsub.s32 %v6663, %v7389
        %v7391 = vrot.slane %v6242, %v7390
        %v7392 = vsel %vm6668, %v7391, %v7387
        %v7393 = vlaneseq
        %v7394 = vshrl.u32 %v7393, 7
        %v7395 = vsub.s32 %v6670, %v7394
        %v7396 = vrot.slane %v6243, %v7395
        %v7397 = vsel %vm6675, %v7396, %v7392
        %v7398 = vlaneseq
        %v7399 = vshrl.u32 %v7398, 7
        %v7400 = vsub.s32 %v6677, %v7399
        %v7401 = vrot.slane %v6244, %v7400
        %v7402 = vsel %vm6682, %v7401, %v7397
        %v7403 = vlaneseq
        %v7404 = vshrl.u32 %v7403, 7
        %v7405 = vsub.s32 %v6684, %v7404
        %v7406 = vrot.slane %v6245, %v7405
        %v7407 = vsel %vm6689, %v7406, %v7402
        %v7408 = vlaneseq
        %v7409 = vshrl.u32 %v7408, 7
        %v7410 = vsub.s32 %v6691, %v7409
        %v7411 = vrot.slane %v6246, %v7410
        %v7412 = vsel %vm6696, %v7411, %v7407
        %v7413 = vlaneseq
        %v7414 = vshrl.u32 %v7413, 7
        %v7415 = vsub.s32 %v6698, %v7414
        %v7416 = vrot.slane %v6247, %v7415
        %v7417 = vsel %vm6703, %v7416, %v7412
        %v7418 = vlaneseq
        %v7419 = vshrl.u32 %v7418, 7
        %v7420 = vsub.s32 %v6705, %v7419
        %v7421 = vrot.slane %v6248, %v7420
        %v7422 = vsel %vm6710, %v7421, %v7417
        %v7423 = vlaneseq
        %v7424 = vshrl.u32 %v7423, 7
        %v7425 = vsub.s32 %v6602, %v7424
        %v7426 = vrot.slane %v6249, %v7425
        %v7427 = vlaneseq
        %v7428 = vshrl.u32 %v7427, 7
        %v7429 = vsub.s32 %v6607, %v7428
        %v7430 = vrot.slane %v6250, %v7429
        %v7431 = vsel %vm6612, %v7430, %v7426
        %v7432 = vlaneseq
        %v7433 = vshrl.u32 %v7432, 7
        %v7434 = vsub.s32 %v6614, %v7433
        %v7435 = vrot.slane %v6251, %v7434
        %v7436 = vsel %vm6619, %v7435, %v7431
        %v7437 = vlaneseq
        %v7438 = vshrl.u32 %v7437, 7
        %v7439 = vsub.s32 %v6621, %v7438
        %v7440 = vrot.slane %v6252, %v7439
        %v7441 = vsel %vm6626, %v7440, %v7436
        %v7442 = vlaneseq
        %v7443 = vshrl.u32 %v7442, 7
        %v7444 = vsub.s32 %v6628, %v7443
        %v7445 = vrot.slane %v6253, %v7444
        %v7446 = vsel %vm6633, %v7445, %v7441
        %v7447 = vlaneseq
        %v7448 = vshrl.u32 %v7447, 7
        %v7449 = vsub.s32 %v6635, %v7448
        %v7450 = vrot.slane %v6254, %v7449
        %v7451 = vsel %vm6640, %v7450, %v7446
        %v7452 = vlaneseq
        %v7453 = vshrl.u32 %v7452, 7
        %v7454 = vsub.s32 %v6642, %v7453
        %v7455 = vrot.slane %v6255, %v7454
        %v7456 = vsel %vm6647, %v7455, %v7451
        %v7457 = vlaneseq
        %v7458 = vshrl.u32 %v7457, 7
        %v7459 = vsub.s32 %v6649, %v7458
        %v7460 = vrot.slane %v6256, %v7459
        %v7461 = vsel %vm6654, %v7460, %v7456
        %v7462 = vlaneseq
        %v7463 = vshrl.u32 %v7462, 7
        %v7464 = vsub.s32 %v6656, %v7463
        %v7465 = vrot.slane %v6257, %v7464
        %v7466 = vsel %vm6661, %v7465, %v7461
        %v7467 = vlaneseq
        %v7468 = vshrl.u32 %v7467, 7
        %v7469 = vsub.s32 %v6663, %v7468
        %v7470 = vrot.slane %v6258, %v7469
        %v7471 = vsel %vm6668, %v7470, %v7466
        %v7472 = vlaneseq
        %v7473 = vshrl.u32 %v7472, 7
        %v7474 = vsub.s32 %v6670, %v7473
        %v7475 = vrot.slane %v6259, %v7474
        %v7476 = vsel %vm6675, %v7475, %v7471
        %v7477 = vlaneseq
        %v7478 = vshrl.u32 %v7477, 7
        %v7479 = vsub.s32 %v6677, %v7478
        %v7480 = vrot.slane %v6260, %v7479
        %v7481 = vsel %vm6682, %v7480, %v7476
        %v7482 = vlaneseq
        %v7483 = vshrl.u32 %v7482, 7
        %v7484 = vsub.s32 %v6684, %v7483
        %v7485 = vrot.slane %v6261, %v7484
        %v7486 = vsel %vm6689, %v7485, %v7481
        %v7487 = vlaneseq
        %v7488 = vshrl.u32 %v7487, 7
        %v7489 = vsub.s32 %v6691, %v7488
        %v7490 = vrot.slane %v6262, %v7489
        %v7491 = vsel %vm6696, %v7490, %v7486
        %v7492 = vlaneseq
        %v7493 = vshrl.u32 %v7492, 7
        %v7494 = vsub.s32 %v6698, %v7493
        %v7495 = vrot.slane %v6263, %v7494
        %v7496 = vsel %vm6703, %v7495, %v7491
        %v7497 = vlaneseq
        %v7498 = vshrl.u32 %v7497, 7
        %v7499 = vsub.s32 %v6705, %v7498
        %v7500 = vrot.slane %v6264, %v7499
        %v7501 = vsel %vm6710, %v7500, %v7496
        %v7502 = vlaneseq
        %v7503 = vshrl.u32 %v7502, 7
        %v7504 = vsub.s32 %v6602, %v7503
        %v7505 = vrot.slane %v6265, %v7504
        %v7506 = vlaneseq
        %v7507 = vshrl.u32 %v7506, 7
        %v7508 = vsub.s32 %v6607, %v7507
        %v7509 = vrot.slane %v6266, %v7508
        %v7510 = vsel %vm6612, %v7509, %v7505
        %v7511 = vlaneseq
        %v7512 = vshrl.u32 %v7511, 7
        %v7513 = vsub.s32 %v6614, %v7512
        %v7514 = vrot.slane %v6267, %v7513
        %v7515 = vsel %vm6619, %v7514, %v7510
        %v7516 = vlaneseq
        %v7517 = vshrl.u32 %v7516, 7
        %v7518 = vsub.s32 %v6621, %v7517
        %v7519 = vrot.slane %v6268, %v7518
        %v7520 = vsel %vm6626, %v7519, %v7515
        %v7521 = vlaneseq
        %v7522 = vshrl.u32 %v7521, 7
        %v7523 = vsub.s32 %v6628, %v7522
        %v7524 = vrot.slane %v6269, %v7523
        %v7525 = vsel %vm6633, %v7524, %v7520
        %v7526 = vlaneseq
        %v7527 = vshrl.u32 %v7526, 7
        %v7528 = vsub.s32 %v6635, %v7527
        %v7529 = vrot.slane %v6270, %v7528
        %v7530 = vsel %vm6640, %v7529, %v7525
        %v7531 = vlaneseq
        %v7532 = vshrl.u32 %v7531, 7
        %v7533 = vsub.s32 %v6642, %v7532
        %v7534 = vrot.slane %v6271, %v7533
        %v7535 = vsel %vm6647, %v7534, %v7530
        %v7536 = vlaneseq
        %v7537 = vshrl.u32 %v7536, 7
        %v7538 = vsub.s32 %v6649, %v7537
        %v7539 = vrot.slane %v6272, %v7538
        %v7540 = vsel %vm6654, %v7539, %v7535
        %v7541 = vlaneseq
        %v7542 = vshrl.u32 %v7541, 7
        %v7543 = vsub.s32 %v6656, %v7542
        %v7544 = vrot.slane %v6273, %v7543
        %v7545 = vsel %vm6661, %v7544, %v7540
        %v7546 = vlaneseq
        %v7547 = vshrl.u32 %v7546, 7
        %v7548 = vsub.s32 %v6663, %v7547
        %v7549 = vrot.slane %v6274, %v7548
        %v7550 = vsel %vm6668, %v7549, %v7545
        %v7551 = vlaneseq
        %v7552 = vshrl.u32 %v7551, 7
        %v7553 = vsub.s32 %v6670, %v7552
        %v7554 = vrot.slane %v6275, %v7553
        %v7555 = vsel %vm6675, %v7554, %v7550
        %v7556 = vlaneseq
        %v7557 = vshrl.u32 %v7556, 7
        %v7558 = vsub.s32 %v6677, %v7557
        %v7559 = vrot.slane %v6276, %v7558
        %v7560 = vsel %vm6682, %v7559, %v7555
        %v7561 = vlaneseq
        %v7562 = vshrl.u32 %v7561, 7
        %v7563 = vsub.s32 %v6684, %v7562
        %v7564 = vrot.slane %v6277, %v7563
        %v7565 = vsel %vm6689, %v7564, %v7560
        %v7566 = vlaneseq
        %v7567 = vshrl.u32 %v7566, 7
        %v7568 = vsub.s32 %v6691, %v7567
        %v7569 = vrot.slane %v6278, %v7568
        %v7570 = vsel %vm6696, %v7569, %v7565
        %v7571 = vlaneseq
        %v7572 = vshrl.u32 %v7571, 7
        %v7573 = vsub.s32 %v6698, %v7572
        %v7574 = vrot.slane %v6279, %v7573
        %v7575 = vsel %vm6703, %v7574, %v7570
        %v7576 = vlaneseq
        %v7577 = vshrl.u32 %v7576, 7
        %v7578 = vsub.s32 %v6705, %v7577
        %v7579 = vrot.slane %v6280, %v7578
        %v7580 = vsel %vm6710, %v7579, %v7575
        %v7581 = vlaneseq
        %v7582 = vshrl.u32 %v7581, 7
        %v7583 = vsub.s32 %v6602, %v7582
        %v7584 = vrot.slane %v6281, %v7583
        %v7585 = vlaneseq
        %v7586 = vshrl.u32 %v7585, 7
        %v7587 = vsub.s32 %v6607, %v7586
        %v7588 = vrot.slane %v6282, %v7587
        %v7589 = vsel %vm6612, %v7588, %v7584
        %v7590 = vlaneseq
        %v7591 = vshrl.u32 %v7590, 7
        %v7592 = vsub.s32 %v6614, %v7591
        %v7593 = vrot.slane %v6283, %v7592
        %v7594 = vsel %vm6619, %v7593, %v7589
        %v7595 = vlaneseq
        %v7596 = vshrl.u32 %v7595, 7
        %v7597 = vsub.s32 %v6621, %v7596
        %v7598 = vrot.slane %v6284, %v7597
        %v7599 = vsel %vm6626, %v7598, %v7594
        %v7600 = vlaneseq
        %v7601 = vshrl.u32 %v7600, 7
        %v7602 = vsub.s32 %v6628, %v7601
        %v7603 = vrot.slane %v6285, %v7602
        %v7604 = vsel %vm6633, %v7603, %v7599
        %v7605 = vlaneseq
        %v7606 = vshrl.u32 %v7605, 7
        %v7607 = vsub.s32 %v6635, %v7606
        %v7608 = vrot.slane %v6286, %v7607
        %v7609 = vsel %vm6640, %v7608, %v7604
        %v7610 = vlaneseq
        %v7611 = vshrl.u32 %v7610, 7
        %v7612 = vsub.s32 %v6642, %v7611
        %v7613 = vrot.slane %v6287, %v7612
        %v7614 = vsel %vm6647, %v7613, %v7609
        %v7615 = vlaneseq
        %v7616 = vshrl.u32 %v7615, 7
        %v7617 = vsub.s32 %v6649, %v7616
        %v7618 = vrot.slane %v6288, %v7617
        %v7619 = vsel %vm6654, %v7618, %v7614
        %v7620 = vlaneseq
        %v7621 = vshrl.u32 %v7620, 7
        %v7622 = vsub.s32 %v6656, %v7621
        %v7623 = vrot.slane %v6289, %v7622
        %v7624 = vsel %vm6661, %v7623, %v7619
        %v7625 = vlaneseq
        %v7626 = vshrl.u32 %v7625, 7
        %v7627 = vsub.s32 %v6663, %v7626
        %v7628 = vrot.slane %v6290, %v7627
        %v7629 = vsel %vm6668, %v7628, %v7624
        %v7630 = vlaneseq
        %v7631 = vshrl.u32 %v7630, 7
        %v7632 = vsub.s32 %v6670, %v7631
        %v7633 = vrot.slane %v6291, %v7632
        %v7634 = vsel %vm6675, %v7633, %v7629
        %v7635 = vlaneseq
        %v7636 = vshrl.u32 %v7635, 7
        %v7637 = vsub.s32 %v6677, %v7636
        %v7638 = vrot.slane %v6292, %v7637
        %v7639 = vsel %vm6682, %v7638, %v7634
        %v7640 = vlaneseq
        %v7641 = vshrl.u32 %v7640, 7
        %v7642 = vsub.s32 %v6684, %v7641
        %v7643 = vrot.slane %v6293, %v7642
        %v7644 = vsel %vm6689, %v7643, %v7639
        %v7645 = vlaneseq
        %v7646 = vshrl.u32 %v7645, 7
        %v7647 = vsub.s32 %v6691, %v7646
        %v7648 = vrot.slane %v6294, %v7647
        %v7649 = vsel %vm6696, %v7648, %v7644
        %v7650 = vlaneseq
        %v7651 = vshrl.u32 %v7650, 7
        %v7652 = vsub.s32 %v6698, %v7651
        %v7653 = vrot.slane %v6295, %v7652
        %v7654 = vsel %vm6703, %v7653, %v7649
        %v7655 = vlaneseq
        %v7656 = vshrl.u32 %v7655, 7
        %v7657 = vsub.s32 %v6705, %v7656
        %v7658 = vrot.slane %v6296, %v7657
        %v7659 = vsel %vm6710, %v7658, %v7654
        %v7660 = vlaneseq
        %v7661 = vshrl.u32 %v7660, 7
        %v7662 = vsub.s32 %v6602, %v7661
        %v7663 = vrot.slane %v6297, %v7662
        %v7664 = vlaneseq
        %v7665 = vshrl.u32 %v7664, 7
        %v7666 = vsub.s32 %v6607, %v7665
        %v7667 = vrot.slane %v6298, %v7666
        %v7668 = vsel %vm6612, %v7667, %v7663
        %v7669 = vlaneseq
        %v7670 = vshrl.u32 %v7669, 7
        %v7671 = vsub.s32 %v6614, %v7670
        %v7672 = vrot.slane %v6299, %v7671
        %v7673 = vsel %vm6619, %v7672, %v7668
        %v7674 = vlaneseq
        %v7675 = vshrl.u32 %v7674, 7
        %v7676 = vsub.s32 %v6621, %v7675
        %v7677 = vrot.slane %v6300, %v7676
        %v7678 = vsel %vm6626, %v7677, %v7673
        %v7679 = vlaneseq
        %v7680 = vshrl.u32 %v7679, 7
        %v7681 = vsub.s32 %v6628, %v7680
        %v7682 = vrot.slane %v6301, %v7681
        %v7683 = vsel %vm6633, %v7682, %v7678
        %v7684 = vlaneseq
        %v7685 = vshrl.u32 %v7684, 7
        %v7686 = vsub.s32 %v6635, %v7685
        %v7687 = vrot.slane %v6302, %v7686
        %v7688 = vsel %vm6640, %v7687, %v7683
        %v7689 = vlaneseq
        %v7690 = vshrl.u32 %v7689, 7
        %v7691 = vsub.s32 %v6642, %v7690
        %v7692 = vrot.slane %v6303, %v7691
        %v7693 = vsel %vm6647, %v7692, %v7688
        %v7694 = vlaneseq
        %v7695 = vshrl.u32 %v7694, 7
        %v7696 = vsub.s32 %v6649, %v7695
        %v7697 = vrot.slane %v6304, %v7696
        %v7698 = vsel %vm6654, %v7697, %v7693
        %v7699 = vlaneseq
        %v7700 = vshrl.u32 %v7699, 7
        %v7701 = vsub.s32 %v6656, %v7700
        %v7702 = vrot.slane %v6305, %v7701
        %v7703 = vsel %vm6661, %v7702, %v7698
        %v7704 = vlaneseq
        %v7705 = vshrl.u32 %v7704, 7
        %v7706 = vsub.s32 %v6663, %v7705
        %v7707 = vrot.slane %v6306, %v7706
        %v7708 = vsel %vm6668, %v7707, %v7703
        %v7709 = vlaneseq
        %v7710 = vshrl.u32 %v7709, 7
        %v7711 = vsub.s32 %v6670, %v7710
        %v7712 = vrot.slane %v6307, %v7711
        %v7713 = vsel %vm6675, %v7712, %v7708
        %v7714 = vlaneseq
        %v7715 = vshrl.u32 %v7714, 7
        %v7716 = vsub.s32 %v6677, %v7715
        %v7717 = vrot.slane %v6308, %v7716
        %v7718 = vsel %vm6682, %v7717, %v7713
        %v7719 = vlaneseq
        %v7720 = vshrl.u32 %v7719, 7
        %v7721 = vsub.s32 %v6684, %v7720
        %v7722 = vrot.slane %v6309, %v7721
        %v7723 = vsel %vm6689, %v7722, %v7718
        %v7724 = vlaneseq
        %v7725 = vshrl.u32 %v7724, 7
        %v7726 = vsub.s32 %v6691, %v7725
        %v7727 = vrot.slane %v6310, %v7726
        %v7728 = vsel %vm6696, %v7727, %v7723
        %v7729 = vlaneseq
        %v7730 = vshrl.u32 %v7729, 7
        %v7731 = vsub.s32 %v6698, %v7730
        %v7732 = vrot.slane %v6311, %v7731
        %v7733 = vsel %vm6703, %v7732, %v7728
        %v7734 = vlaneseq
        %v7735 = vshrl.u32 %v7734, 7
        %v7736 = vsub.s32 %v6705, %v7735
        %v7737 = vrot.slane %v6312, %v7736
        %v7738 = vsel %vm6710, %v7737, %v7733
        %v7739 = vlaneseq
        %v7740 = vshrl.u32 %v7739, 7
        %v7741 = vsub.s32 %v6602, %v7740
        %v7742 = vrot.slane %v6313, %v7741
        %v7743 = vlaneseq
        %v7744 = vshrl.u32 %v7743, 7
        %v7745 = vsub.s32 %v6607, %v7744
        %v7746 = vrot.slane %v6314, %v7745
        %v7747 = vsel %vm6612, %v7746, %v7742
        %v7748 = vlaneseq
        %v7749 = vshrl.u32 %v7748, 7
        %v7750 = vsub.s32 %v6614, %v7749
        %v7751 = vrot.slane %v6315, %v7750
        %v7752 = vsel %vm6619, %v7751, %v7747
        %v7753 = vlaneseq
        %v7754 = vshrl.u32 %v7753, 7
        %v7755 = vsub.s32 %v6621, %v7754
        %v7756 = vrot.slane %v6316, %v7755
        %v7757 = vsel %vm6626, %v7756, %v7752
        %v7758 = vlaneseq
        %v7759 = vshrl.u32 %v7758, 7
        %v7760 = vsub.s32 %v6628, %v7759
        %v7761 = vrot.slane %v6317, %v7760
        %v7762 = vsel %vm6633, %v7761, %v7757
        %v7763 = vlaneseq
        %v7764 = vshrl.u32 %v7763, 7
        %v7765 = vsub.s32 %v6635, %v7764
        %v7766 = vrot.slane %v6318, %v7765
        %v7767 = vsel %vm6640, %v7766, %v7762
        %v7768 = vlaneseq
        %v7769 = vshrl.u32 %v7768, 7
        %v7770 = vsub.s32 %v6642, %v7769
        %v7771 = vrot.slane %v6319, %v7770
        %v7772 = vsel %vm6647, %v7771, %v7767
        %v7773 = vlaneseq
        %v7774 = vshrl.u32 %v7773, 7
        %v7775 = vsub.s32 %v6649, %v7774
        %v7776 = vrot.slane %v6320, %v7775
        %v7777 = vsel %vm6654, %v7776, %v7772
        %v7778 = vlaneseq
        %v7779 = vshrl.u32 %v7778, 7
        %v7780 = vsub.s32 %v6656, %v7779
        %v7781 = vrot.slane %v6321, %v7780
        %v7782 = vsel %vm6661, %v7781, %v7777
        %v7783 = vlaneseq
        %v7784 = vshrl.u32 %v7783, 7
        %v7785 = vsub.s32 %v6663, %v7784
        %v7786 = vrot.slane %v6322, %v7785
        %v7787 = vsel %vm6668, %v7786, %v7782
        %v7788 = vlaneseq
        %v7789 = vshrl.u32 %v7788, 7
        %v7790 = vsub.s32 %v6670, %v7789
        %v7791 = vrot.slane %v6323, %v7790
        %v7792 = vsel %vm6675, %v7791, %v7787
        %v7793 = vlaneseq
        %v7794 = vshrl.u32 %v7793, 7
        %v7795 = vsub.s32 %v6677, %v7794
        %v7796 = vrot.slane %v6324, %v7795
        %v7797 = vsel %vm6682, %v7796, %v7792
        %v7798 = vlaneseq
        %v7799 = vshrl.u32 %v7798, 7
        %v7800 = vsub.s32 %v6684, %v7799
        %v7801 = vrot.slane %v6325, %v7800
        %v7802 = vsel %vm6689, %v7801, %v7797
        %v7803 = vlaneseq
        %v7804 = vshrl.u32 %v7803, 7
        %v7805 = vsub.s32 %v6691, %v7804
        %v7806 = vrot.slane %v6326, %v7805
        %v7807 = vsel %vm6696, %v7806, %v7802
        %v7808 = vlaneseq
        %v7809 = vshrl.u32 %v7808, 7
        %v7810 = vsub.s32 %v6698, %v7809
        %v7811 = vrot.slane %v6327, %v7810
        %v7812 = vsel %vm6703, %v7811, %v7807
        %v7813 = vlaneseq
        %v7814 = vshrl.u32 %v7813, 7
        %v7815 = vsub.s32 %v6705, %v7814
        %v7816 = vrot.slane %v6328, %v7815
        %v7817 = vsel %vm6710, %v7816, %v7812
        %v7818 = vlaneseq
        %v7819 = vshrl.u32 %v7818, 7
        %v7820 = vsub.s32 %v6602, %v7819
        %v7821 = vrot.slane %v6329, %v7820
        %v7822 = vlaneseq
        %v7823 = vshrl.u32 %v7822, 7
        %v7824 = vsub.s32 %v6607, %v7823
        %v7825 = vrot.slane %v6330, %v7824
        %v7826 = vsel %vm6612, %v7825, %v7821
        %v7827 = vlaneseq
        %v7828 = vshrl.u32 %v7827, 7
        %v7829 = vsub.s32 %v6614, %v7828
        %v7830 = vrot.slane %v6331, %v7829
        %v7831 = vsel %vm6619, %v7830, %v7826
        %v7832 = vlaneseq
        %v7833 = vshrl.u32 %v7832, 7
        %v7834 = vsub.s32 %v6621, %v7833
        %v7835 = vrot.slane %v6332, %v7834
        %v7836 = vsel %vm6626, %v7835, %v7831
        %v7837 = vlaneseq
        %v7838 = vshrl.u32 %v7837, 7
        %v7839 = vsub.s32 %v6628, %v7838
        %v7840 = vrot.slane %v6333, %v7839
        %v7841 = vsel %vm6633, %v7840, %v7836
        %v7842 = vlaneseq
        %v7843 = vshrl.u32 %v7842, 7
        %v7844 = vsub.s32 %v6635, %v7843
        %v7845 = vrot.slane %v6334, %v7844
        %v7846 = vsel %vm6640, %v7845, %v7841
        %v7847 = vlaneseq
        %v7848 = vshrl.u32 %v7847, 7
        %v7849 = vsub.s32 %v6642, %v7848
        %v7850 = vrot.slane %v6335, %v7849
        %v7851 = vsel %vm6647, %v7850, %v7846
        %v7852 = vlaneseq
        %v7853 = vshrl.u32 %v7852, 7
        %v7854 = vsub.s32 %v6649, %v7853
        %v7855 = vrot.slane %v6336, %v7854
        %v7856 = vsel %vm6654, %v7855, %v7851
        %v7857 = vlaneseq
        %v7858 = vshrl.u32 %v7857, 7
        %v7859 = vsub.s32 %v6656, %v7858
        %v7860 = vrot.slane %v6337, %v7859
        %v7861 = vsel %vm6661, %v7860, %v7856
        %v7862 = vlaneseq
        %v7863 = vshrl.u32 %v7862, 7
        %v7864 = vsub.s32 %v6663, %v7863
        %v7865 = vrot.slane %v6338, %v7864
        %v7866 = vsel %vm6668, %v7865, %v7861
        %v7867 = vlaneseq
        %v7868 = vshrl.u32 %v7867, 7
        %v7869 = vsub.s32 %v6670, %v7868
        %v7870 = vrot.slane %v6339, %v7869
        %v7871 = vsel %vm6675, %v7870, %v7866
        %v7872 = vlaneseq
        %v7873 = vshrl.u32 %v7872, 7
        %v7874 = vsub.s32 %v6677, %v7873
        %v7875 = vrot.slane %v6340, %v7874
        %v7876 = vsel %vm6682, %v7875, %v7871
        %v7877 = vlaneseq
        %v7878 = vshrl.u32 %v7877, 7
        %v7879 = vsub.s32 %v6684, %v7878
        %v7880 = vrot.slane %v6341, %v7879
        %v7881 = vsel %vm6689, %v7880, %v7876
        %v7882 = vlaneseq
        %v7883 = vshrl.u32 %v7882, 7
        %v7884 = vsub.s32 %v6691, %v7883
        %v7885 = vrot.slane %v6342, %v7884
        %v7886 = vsel %vm6696, %v7885, %v7881
        %v7887 = vlaneseq
        %v7888 = vshrl.u32 %v7887, 7
        %v7889 = vsub.s32 %v6698, %v7888
        %v7890 = vrot.slane %v6343, %v7889
        %v7891 = vsel %vm6703, %v7890, %v7886
        %v7892 = vlaneseq
        %v7893 = vshrl.u32 %v7892, 7
        %v7894 = vsub.s32 %v6705, %v7893
        %v7895 = vrot.slane %v6344, %v7894
        %v7896 = vsel %vm6710, %v7895, %v7891
        %vm7897 = vcmask 1041409
        %v7898 = vsel %vm7897, %v6790, %v6711
        %vm7899 = vcmask 1042434
        %v7900 = vsel %vm7899, %v6869, %v7898
        %vm7901 = vcmask 1043459
        %v7902 = vsel %vm7901, %v6948, %v7900
        %vm7903 = vcmask 1044484
        %v7904 = vsel %vm7903, %v7027, %v7902
        %vm7905 = vcmask 1045509
        %v7906 = vsel %vm7905, %v7106, %v7904
        %vm7907 = vcmask 1046534
        %v7908 = vsel %vm7907, %v7185, %v7906
        %vm7909 = vcmask 1047559
        %v7910 = vsel %vm7909, %v7264, %v7908
        %v7911 = vsel %vm7897, %v7422, %v7343
        %v7912 = vsel %vm7899, %v7501, %v7911
        %v7913 = vsel %vm7901, %v7580, %v7912
        %v7914 = vsel %vm7903, %v7659, %v7913
        %v7915 = vsel %vm7905, %v7738, %v7914
        %v7916 = vsel %vm7907, %v7817, %v7915
        %v7917 = vsel %vm7909, %v7896, %v7916
        %7920 = vst [vmem:[%s463] sm:$0xff] %v7910
        %7921 = vst [vmem:[%s463 + $0x8] sm:$0xff] %v7917
        %s7922 = sand.u32 %s244, 1
        %s7923 = scalar_lea.sflag [#allocation5], %s7922
        %s7924 = sand.u32 %s244, 1
        %s7925 = smul.addr %s7924, 16
        %s7926 = scalar_lea.vmem [#allocation15], %s7925
        // Predicated region
        $region81: #{scorenet_forward.1} parent=51 // pred_check
          %p7927 = pneg %p254
        $region82: #{scorenet_forward.1} parent=51 // pred_check_branch
          %7929 = sbr.rel (%p7927) target = $region84
        $region83: #{scorenet_forward.1} parent=51 // pred_region
          %s7930 = smul.u32 2, %s38
          %s7932 = ssub.s32 256, 256
          %7933 = vsyncadd %s7923, %s7932
          %s7934 = sadd.s32 %s37, %s7930
          %s7935 = smul.addr %s36, 2
          %s7936 = sadd.s32 %s7934, %s7935
          %s7937 = smul.addr %s7936, 128
          %s7938 = scalar_lea.hbm %s8, %s7937
          %s7939 = sshll.u32 %s7926, 4
          %s7940 = int_to_ptr.vmem [resolvable:$true] %s7939
          %7945 = dma.vmem_to_hbm [thread:$0]  %s7940, 256, %s7938, %s7923, 128, 128, 8
        $region84: #{scorenet_forward.1} parent=51 // pred_fallthru
          _
      $region52: #{scorenet_forward.1} parent=5 // pred_fallthru
        _
      %p7946 = scmp.le.s32.totalorder 2, %s26
      // Predicated region
      $region85: #{scorenet_forward.1} parent=5 // pred_check
        %p7947 = pneg %p7946
      $region86: #{scorenet_forward.1} parent=5 // pred_check_branch
        %7949 = sbr.rel (%p7947) target = $region88
      $region87: #{scorenet_forward.1} parent=5 // pred_region
        %s7950 = ssub.s32 %s26, 2
        // Predicated region
        $region89: #{scorenet_forward.1} parent=87 // pred_check
          %p7951 = pneg %p260
        $region90: #{scorenet_forward.1} parent=87 // pred_check_branch
          %7953 = sbr.rel (%p7951) target = $region92
        $region91: #{scorenet_forward.1} parent=87 // pred_region
          %s7954 = sand.u32 %s245, 1
          %s7955 = scalar_lea.sflag [#allocation5], %s7954
          %s7956 = sand.u32 %s245, 1
          %s7957 = smul.addr %s7956, 16
          %s7958 = scalar_lea.vmem [#allocation15], %s7957
          %7959 = dma.done %s7955, 256
        $region92: #{scorenet_forward.1} parent=87 // pred_fallthru
          _
      $region88: #{scorenet_forward.1} parent=5 // pred_fallthru
        _
    $region6: #{scorenet_forward.1} parent=1 // loop_footer
      %s30 = sadd.s32 1, %s26
    $region7: #{scorenet_forward.1} parent=1 // loop_footer_branch
      %25 = sbr.rel target = $region3
    $region8: #{scorenet_forward.1} parent=1 // loop_exit
      _
    %7960 = vsyncpa [#allocation4], 1
    %s7961 = scalar_lea.sflag [#allocation4], 1
    %7962 = vsyncpa %s7961, 1
    %7963 = vsyncpa [#allocation7], 1
    %s7964 = scalar_lea.sflag [#allocation7], 1
    %7965 = vsyncpa %s7964, 1
    %7966 = vsyncpa [#allocation10], 1
    %7967 = vsyncpa [#allocation13], 1
    %7968 = vsyncpa [#allocation5], 1
    %s7969 = scalar_lea.sflag [#allocation5], 1
    %7970 = vsyncpa %s7969, 1

</llo_original>
